<compile_context>
chip_gen: v6e
topology: v6e:2x2x1
jax: 0.10.0
libtpu: 0.0.40
codegen_flags: <defaults>
</compile_context>

<pallas_src>
import jax
import jax.numpy as jnp
from jax import lax
from jax.experimental import pallas as pl
from jax.experimental.pallas import tpu as pltpu

NOISE_DIM = 64
EPS = 1e-5

_VMEM = pl.BlockSpec(memory_space=pltpu.MemorySpace.VMEM)


# ------------------------------- kernels ------------------------------------

def _make_bn_relu_kernel(m_rows):
    """Fused ConvTranspose(GEMM, bf16 in / f32 acc) + bias + BatchNorm(train) + ReLU."""
    inv_n = 1.0 / float(m_rows)

    def kernel(p_ref, w_ref, b_ref, g_ref, be_ref, o_ref):
        # (M, K*K*Cin) @ (K*K*Cin, Co) -> (M, Co); bf16 operands, f32 MXU accum.
        y = jnp.dot(p_ref[...], w_ref[...], preferred_element_type=jnp.float32)
        y = y + b_ref[...]
        # One-pass batch stats (biased, train mode); clamp var >= 0 (review fix).
        s1 = jnp.sum(y, axis=0, keepdims=True)
        s2 = jnp.sum(y * y, axis=0, keepdims=True)
        mean = s1 * inv_n
        var = jnp.maximum(s2 * inv_n - mean * mean, 0.0)
        y = (y - mean) * lax.rsqrt(var + EPS)
        y = y * g_ref[...] + be_ref[...]
        o_ref[...] = jnp.maximum(y, 0.0).astype(o_ref.dtype)

    return kernel


def _tanh_kernel(w_ref, p_ref, b_ref, o_ref):
    """Final block (phase-decomposed, lane-dense): (4, 4*Cin) @ (4*Cin, B*Mh*Mw) + bias, tanh."""
    y = jnp.dot(w_ref[...], p_ref[...], preferred_element_type=jnp.float32)
    o_ref[...] = jnp.tanh(y + b_ref[...]).astype(o_ref.dtype)


# ------------------------------- wrappers ------------------------------------

def _round_up(n, m):
    return ((n + m - 1) // m) * m


def _pad_last(v, n):
    pad = n - v.shape[-1]
    if pad == 0:
        return v
    return jnp.pad(v, [(0, 0)] * (v.ndim - 1) + [(0, pad)])


def _im2col_transposed(x_nhwc, K, s):
    """ConvTranspose patches: (B*OH*OW, K*K*Cin), contraction order (kh, kw, ci)."""
    B, H, W, Cin = x_nhwc.shape
    OH = (H - 1) * s + K
    OW = (W - 1) * s + K
    dh, dw = (H - 1) * s + 1, (W - 1) * s + 1
    xd = jnp.zeros((B, dh, dw, Cin), x_nhwc.dtype).at[:, ::s, ::s, :].set(x_nhwc)
    xp = jnp.pad(xd, ((0, 0), (K - 1, K - 1), (K - 1, K - 1), (0, 0)))
    patches = jnp.stack(
        [xp[:, kh:kh + OH, kw:kw + OW, :] for kh in range(K) for kw in range(K)],
        axis=3)                                     # (B, OH, OW, K*K, Cin)
    return patches.reshape(B * OH * OW, K * K * Cin), OH, OW


def _flipped_weight(w_pt):
    """(Cin, Co, K, K) ConvTranspose weight -> (K*K*Cin, Co), order (kh, kw, ci)."""
    Cin, Co, K, _ = w_pt.shape
    return jnp.flip(w_pt, axis=(2, 3)).transpose(2, 3, 0, 1).reshape(K * K * Cin, Co)


def conv_transpose_bn_relu(x_nhwc, w_pt, bias, gamma, beta, stride):
    B, H, W, Cin = x_nhwc.shape
    _, Co, K, _ = w_pt.shape
    patches, OH, OW = _im2col_transposed(x_nhwc.astype(jnp.bfloat16), K, stride)
    M = B * OH * OW
    Cop = _round_up(Co, 128)                        # lane-dense output columns
    wf = _pad_last(_flipped_weight(w_pt), Cop).astype(jnp.bfloat16)
    b2 = _pad_last(bias, Cop).reshape(1, Cop).astype(jnp.float32)
    g2 = _pad_last(gamma, Cop).reshape(1, Cop).astype(jnp.float32)
    be2 = _pad_last(beta, Cop).reshape(1, Cop).astype(jnp.float32)

    y2 = pl.pallas_call(
        _make_bn_relu_kernel(M),
        out_shape=jax.ShapeDtypeStruct((M, Cop), jnp.bfloat16),
        in_specs=[_VMEM] * 5,
        out_specs=_VMEM,
    )(patches, wf, b2, g2, be2)
    if Cop != Co:
        y2 = y2[:, :Co]                             # drop zero-padded channels
    return y2.reshape(B, OH, OW, Co)


def conv_transpose_tanh_phase(x_nhwc, w_pt, bias):
    """Final block, K=4, stride=2, Co=1, via 2x2 sub-pixel phase decomposition.

    y[b, 2m+p, 2n+q, 0] = sum_{dh,dw,ci} xpad[b, m+dh, n+dw, ci]
                          * w[ci, 0, p + 2*(1-dh), q + 2*(1-dw)]
    with xpad = x zero-padded by 1 on each spatial side, m in [0, H], n in [0, W].
    """
    B, H, W, Cin = x_nhwc.shape
    Cin_w, Co, K, _ = w_pt.shape
    assert (K, Co, Cin_w) == (4, 1, Cin)
    Mh, Mw = H + 1, W + 1
    Mcols = B * Mh * Mw

    xpad = jnp.pad(x_nhwc.astype(jnp.bfloat16),
                   ((0, 0), (1, 1), (1, 1), (0, 0)))          # (B, H+2, W+2, Cin)
    windows = jnp.stack(
        [xpad[:, dh:dh + Mh, dw:dw + Mw, :] for dh in (0, 1) for dw in (0, 1)],
        axis=0)                                               # (4, B, Mh, Mw, Cin)
    # GEMM RHS rows = (dh, dw, ci), cols = (b, m, n)  -> lane-dense output cols.
    pt = windows.transpose(0, 4, 1, 2, 3).reshape(4 * Cin, Mcols)

    # Phase weights: Wp[2*p+q, (2*dh+dw)*Cin + ci] = w[ci, 0, p+2-2*dh, q+2-2*dw].
    wr5 = w_pt[:, 0, :, :].reshape(Cin, 2, 2, 2, 2)           # (ci, ah, p, aw, q), kh=2*ah+p
    wr5 = wr5[:, ::-1, :, ::-1, :]                            # ah -> dh = 1 - ah
    wp = wr5.transpose(2, 4, 1, 3, 0).reshape(4, 4 * Cin).astype(jnp.bfloat16)
    b2 = bias.reshape(1, 1).astype(jnp.float32)

    out = pl.pallas_call(
        _tanh_kernel,
        out_shape=jax.ShapeDtypeStruct((4, Mcols), jnp.float32),
        in_specs=[_VMEM] * 3,
        out_specs=_VMEM,
    )(wp, pt, b2)
    # out[2p+q, (b,m,n)] -> y[b, 2m+p, 2n+q, 0]; 2*Mh == (H-1)*2 + 4 == OH exactly.
    y = out.reshape(2, 2, B, Mh, Mw).transpose(2, 3, 0, 4, 1)
    return y.reshape(B, 2 * Mh, 2 * Mw, 1)


# ------------------------------ model setup ----------------------------------

_BLOCK_SPECS = [
    # name,     cin,       cout, K, stride, mode
    ("block_1", NOISE_DIM, 256, 3, 2, "bn_relu"),
    ("block_2", 256,       128, 4, 1, "bn_relu"),
    ("block_3", 128,        64, 3, 2, "bn_relu"),
    ("block_4", 64,          1, 4, 2, "tanh"),
]


def init_params(key):
    params = {}
    for name, cin, cout, k, s, mode in _BLOCK_SPECS:
        key, kw, kb = jax.random.split(key, 3)
        p = dict(
            w=jax.random.normal(kw, (cin, cout, k, k), jnp.float32) * 0.05,
            b=jax.random.normal(kb, (cout,), jnp.float32) * 0.05,
        )
        if mode == "bn_relu":
            p["gamma"] = jnp.ones((cout,), jnp.float32)   # BatchNorm default init
            p["beta"] = jnp.zeros((cout,), jnp.float32)
        params[name] = p
    return params


def generator_forward(params, noise):
    B = noise.shape[0]
    x = noise.reshape(B, NOISE_DIM, 1, 1)            # .view(-1, noise_dim, 1, 1) NCHW
    x = jnp.transpose(x, (0, 2, 3, 1))               # -> NHWC
    for name, cin, cout, k, s, mode in _BLOCK_SPECS:
        p = params[name]
        if mode == "bn_relu":
            x = conv_transpose_bn_relu(x, p["w"], p["b"], p["gamma"], p["beta"], s)
        else:
            x = conv_transpose_tanh_phase(x, p["w"], p["b"])
    return jnp.transpose(x, (0, 3, 1, 2))            # -> NCHW  (B, 1, 28, 28) float32


def reference_forward(params, noise):
    """Plain-JAX f32 reference (lax.conv_general_dilated) for correctness check."""
    B = noise.shape[0]
    x = jnp.transpose(noise.reshape(B, NOISE_DIM, 1, 1), (0, 2, 3, 1))
    for name, cin, cout, K, s, mode in _BLOCK_SPECS:
        p = params[name]
        Co = cout
        wf = jnp.flip(p["w"], axis=(2, 3)).transpose(2, 3, 0, 1)  # (K,K,Cin,Co)
        y = lax.conv_general_dilated(
            x, wf, window_strides=(1, 1),
            padding=[(K - 1, K - 1), (K - 1, K - 1)],
            lhs_dilation=(s, s),
            dimension_numbers=("NHWC", "HWIO", "NHWC"))
        y = y + p["b"].reshape(1, 1, 1, Co)
        if mode == "bn_relu":
            mean = jnp.mean(y, axis=(0, 1, 2), keepdims=True)
            var = jnp.mean((y - mean) ** 2, axis=(0, 1, 2), keepdims=True)
            y = (y - mean) * lax.rsqrt(var + EPS)
            y = y * p["gamma"].reshape(1, 1, 1, Co) + p["beta"].reshape(1, 1, 1, Co)
            y = jnp.maximum(y, 0.0)
        else:
            y = jnp.tanh(y)
        x = y
    return jnp.transpose(x, (0, 3, 1, 2))


if __name__ == "__main__":
    key = jax.random.PRNGKey(0)
    pkey, nkey = jax.random.split(key)
    params = init_params(pkey)
    noise = jax.random.normal(nkey, (2, NOISE_DIM), jnp.float32)  # (B, noise_dim)

    fwd = jax.jit(generator_forward)
    out = jax.block_until_ready(fwd(params, noise))
    assert out.shape == (2, 1, 28, 28), out.shape

    ref = jax.block_until_ready(jax.jit(reference_forward)(params, noise))
    err = float(jnp.max(jnp.abs(out - ref)))
    # bf16 GEMM operands vs. f32 reference: tolerance sized for bf16 rounding,
    # still ~20x tighter than any structural/index error would produce.
    assert err < 5e-2, f"mismatch vs f32 reference: {err}"

    print("KERNEL_OK")
</pallas_src>

<mosaic_0001>
module attributes {stable_mosaic.version = 11 : i64} {
  func.func @kernel(%arg0: memref<18x576xbf16, #tpu.memory_space<vmem>>, %arg1: memref<576x256xbf16, #tpu.memory_space<vmem>>, %arg2: memref<1x256xf32, #tpu.memory_space<vmem>>, %arg3: memref<1x256xf32, #tpu.memory_space<vmem>>, %arg4: memref<1x256xf32, #tpu.memory_space<vmem>>, %arg5: memref<18x256xbf16, #tpu.memory_space<vmem>>) attributes {dimension_semantics = [], scalar_prefetch = 0 : i64, scratch_operands = 0 : i64, tpu.core_type = #tpu.core_type<tc>} {
    %c0 = arith.constant 0 : index
    %c0_0 = arith.constant 0 : index
    %0 = vector.load %arg0[%c0, %c0_0] : memref<18x576xbf16, #tpu.memory_space<vmem>>, vector<18x576xbf16>
    %c0_1 = arith.constant 0 : index
    %c0_2 = arith.constant 0 : index
    %1 = vector.load %arg1[%c0_1, %c0_2] : memref<576x256xbf16, #tpu.memory_space<vmem>>, vector<576x256xbf16>
    %cst = arith.constant dense<0.000000e+00> : vector<18x256xf32>
    %2 = tpu.matmul %0, %1, %cst {dimension_numbers = #tpu.dot_dimension_numbers<[1], [0], [0], [1], [0, 0, 1, 1], [], []>} : vector<18x576xbf16>, vector<576x256xbf16>, vector<18x256xf32> -> vector<18x256xf32>
    %c0_3 = arith.constant 0 : index
    %c0_4 = arith.constant 0 : index
    %3 = vector.load %arg2[%c0_3, %c0_4] : memref<1x256xf32, #tpu.memory_space<vmem>>, vector<1x256xf32>
    %4 = vector.broadcast %3 : vector<1x256xf32> to vector<18x256xf32>
    %5 = arith.addf %2, %4 : vector<18x256xf32>
    %cst_5 = arith.constant dense<0.000000e+00> : vector<256xf32>
    %6 = vector.multi_reduction <add>, %5, %cst_5 [0] : vector<18x256xf32> to vector<256xf32>
    %7 = vector.shape_cast %6 : vector<256xf32> to vector<1x256xf32>
    %8 = arith.mulf %5, %5 : vector<18x256xf32>
    %cst_6 = arith.constant dense<0.000000e+00> : vector<256xf32>
    %9 = vector.multi_reduction <add>, %8, %cst_6 [0] : vector<18x256xf32> to vector<256xf32>
    %10 = vector.shape_cast %9 : vector<256xf32> to vector<1x256xf32>
    %cst_7 = arith.constant 0.055555556 : f32
    %11 = vector.broadcast %cst_7 : f32 to vector<1x256xf32>
    %12 = arith.mulf %7, %11 : vector<1x256xf32>
    %cst_8 = arith.constant 0.055555556 : f32
    %13 = vector.broadcast %cst_8 : f32 to vector<1x256xf32>
    %14 = arith.mulf %10, %13 : vector<1x256xf32>
    %15 = arith.mulf %12, %12 : vector<1x256xf32>
    %16 = arith.subf %14, %15 : vector<1x256xf32>
    %cst_9 = arith.constant 0.000000e+00 : f32
    %17 = vector.broadcast %cst_9 : f32 to vector<1x256xf32>
    %18 = arith.maximumf %16, %17 : vector<1x256xf32>
    %19 = vector.broadcast %12 : vector<1x256xf32> to vector<18x256xf32>
    %20 = arith.subf %5, %19 : vector<18x256xf32>
    %cst_10 = arith.constant 9.99999974E-6 : f32
    %21 = vector.broadcast %cst_10 : f32 to vector<1x256xf32>
    %22 = arith.addf %18, %21 : vector<1x256xf32>
    %23 = math.rsqrt %22 : vector<1x256xf32>
    %24 = vector.broadcast %23 : vector<1x256xf32> to vector<18x256xf32>
    %25 = arith.mulf %20, %24 : vector<18x256xf32>
    %c0_11 = arith.constant 0 : index
    %c0_12 = arith.constant 0 : index
    %26 = vector.load %arg3[%c0_11, %c0_12] : memref<1x256xf32, #tpu.memory_space<vmem>>, vector<1x256xf32>
    %27 = vector.broadcast %26 : vector<1x256xf32> to vector<18x256xf32>
    %28 = arith.mulf %25, %27 : vector<18x256xf32>
    %c0_13 = arith.constant 0 : index
    %c0_14 = arith.constant 0 : index
    %29 = vector.load %arg4[%c0_13, %c0_14] : memref<1x256xf32, #tpu.memory_space<vmem>>, vector<1x256xf32>
    %30 = vector.broadcast %29 : vector<1x256xf32> to vector<18x256xf32>
    %31 = arith.addf %28, %30 : vector<18x256xf32>
    %cst_15 = arith.constant 0.000000e+00 : f32
    %32 = vector.broadcast %cst_15 : f32 to vector<18x256xf32>
    %33 = arith.maximumf %31, %32 : vector<18x256xf32>
    %34 = arith.truncf %33 : vector<18x256xf32> to vector<18x256xbf16>
    %c0_16 = arith.constant 0 : index
    %c0_17 = arith.constant 0 : index
    %35 = vector.load %arg5[%c0_16, %c0_17] : memref<18x256xbf16, #tpu.memory_space<vmem>>, vector<18x256xbf16>
    tpu.vector_store %arg5[%c0_16, %c0_17], %34 {strides = array<i32>} : memref<18x256xbf16, #tpu.memory_space<vmem>>, vector<18x256xbf16>,
    return
  }
}

module attributes {stable_mosaic.version = 11 : i64} {
  func.func @kernel(%arg0: memref<72x4096xbf16, #tpu.memory_space<vmem>>, %arg1: memref<4096x128xbf16, #tpu.memory_space<vmem>>, %arg2: memref<1x128xf32, #tpu.memory_space<vmem>>, %arg3: memref<1x128xf32, #tpu.memory_space<vmem>>, %arg4: memref<1x128xf32, #tpu.memory_space<vmem>>, %arg5: memref<72x128xbf16, #tpu.memory_space<vmem>>) attributes {dimension_semantics = [], scalar_prefetch = 0 : i64, scratch_operands = 0 : i64, tpu.core_type = #tpu.core_type<tc>} {
    %c0 = arith.constant 0 : index
    %c0_0 = arith.constant 0 : index
    %0 = vector.load %arg0[%c0, %c0_0] : memref<72x4096xbf16, #tpu.memory_space<vmem>>, vector<72x4096xbf16>
    %c0_1 = arith.constant 0 : index
    %c0_2 = arith.constant 0 : index
    %1 = vector.load %arg1[%c0_1, %c0_2] : memref<4096x128xbf16, #tpu.memory_space<vmem>>, vector<4096x128xbf16>
    %cst = arith.constant dense<0.000000e+00> : vector<72x128xf32>
    %2 = tpu.matmul %0, %1, %cst {dimension_numbers = #tpu.dot_dimension_numbers<[1], [0], [0], [1], [0, 0, 1, 1], [], []>} : vector<72x4096xbf16>, vector<4096x128xbf16>, vector<72x128xf32> -> vector<72x128xf32>
    %c0_3 = arith.constant 0 : index
    %c0_4 = arith.constant 0 : index
    %3 = vector.load %arg2[%c0_3, %c0_4] : memref<1x128xf32, #tpu.memory_space<vmem>>, vector<1x128xf32>
    %4 = vector.broadcast %3 : vector<1x128xf32> to vector<72x128xf32>
    %5 = arith.addf %2, %4 : vector<72x128xf32>
    %cst_5 = arith.constant dense<0.000000e+00> : vector<128xf32>
    %6 = vector.multi_reduction <add>, %5, %cst_5 [0] : vector<72x128xf32> to vector<128xf32>
    %7 = vector.shape_cast %6 : vector<128xf32> to vector<1x128xf32>
    %8 = arith.mulf %5, %5 : vector<72x128xf32>
    %cst_6 = arith.constant dense<0.000000e+00> : vector<128xf32>
    %9 = vector.multi_reduction <add>, %8, %cst_6 [0] : vector<72x128xf32> to vector<128xf32>
    %10 = vector.shape_cast %9 : vector<128xf32> to vector<1x128xf32>
    %cst_7 = arith.constant 0.013888889 : f32
    %11 = vector.broadcast %cst_7 : f32 to vector<1x128xf32>
    %12 = arith.mulf %7, %11 : vector<1x128xf32>
    %cst_8 = arith.constant 0.013888889 : f32
    %13 = vector.broadcast %cst_8 : f32 to vector<1x128xf32>
    %14 = arith.mulf %10, %13 : vector<1x128xf32>
    %15 = arith.mulf %12, %12 : vector<1x128xf32>
    %16 = arith.subf %14, %15 : vector<1x128xf32>
    %cst_9 = arith.constant 0.000000e+00 : f32
    %17 = vector.broadcast %cst_9 : f32 to vector<1x128xf32>
    %18 = arith.maximumf %16, %17 : vector<1x128xf32>
    %19 = vector.broadcast %12 : vector<1x128xf32> to vector<72x128xf32>
    %20 = arith.subf %5, %19 : vector<72x128xf32>
    %cst_10 = arith.constant 9.99999974E-6 : f32
    %21 = vector.broadcast %cst_10 : f32 to vector<1x128xf32>
    %22 = arith.addf %18, %21 : vector<1x128xf32>
    %23 = math.rsqrt %22 : vector<1x128xf32>
    %24 = vector.broadcast %23 : vector<1x128xf32> to vector<72x128xf32>
    %25 = arith.mulf %20, %24 : vector<72x128xf32>
    %c0_11 = arith.constant 0 : index
    %c0_12 = arith.constant 0 : index
    %26 = vector.load %arg3[%c0_11, %c0_12] : memref<1x128xf32, #tpu.memory_space<vmem>>, vector<1x128xf32>
    %27 = vector.broadcast %26 : vector<1x128xf32> to vector<72x128xf32>
    %28 = arith.mulf %25, %27 : vector<72x128xf32>
    %c0_13 = arith.constant 0 : index
    %c0_14 = arith.constant 0 : index
    %29 = vector.load %arg4[%c0_13, %c0_14] : memref<1x128xf32, #tpu.memory_space<vmem>>, vector<1x128xf32>
    %30 = vector.broadcast %29 : vector<1x128xf32> to vector<72x128xf32>
    %31 = arith.addf %28, %30 : vector<72x128xf32>
    %cst_15 = arith.constant 0.000000e+00 : f32
    %32 = vector.broadcast %cst_15 : f32 to vector<72x128xf32>
    %33 = arith.maximumf %31, %32 : vector<72x128xf32>
    %34 = arith.truncf %33 : vector<72x128xf32> to vector<72x128xbf16>
    %c0_16 = arith.constant 0 : index
    %c0_17 = arith.constant 0 : index
    %35 = vector.load %arg5[%c0_16, %c0_17] : memref<72x128xbf16, #tpu.memory_space<vmem>>, vector<72x128xbf16>
    tpu.vector_store %arg5[%c0_16, %c0_17], %34 {strides = array<i32>} : memref<72x128xbf16, #tpu.memory_space<vmem>>, vector<72x128xbf16>,
    return
  }
}

module attributes {stable_mosaic.version = 11 : i64} {
  func.func @kernel(%arg0: memref<338x1152xbf16, #tpu.memory_space<vmem>>, %arg1: memref<1152x128xbf16, #tpu.memory_space<vmem>>, %arg2: memref<1x128xf32, #tpu.memory_space<vmem>>, %arg3: memref<1x128xf32, #tpu.memory_space<vmem>>, %arg4: memref<1x128xf32, #tpu.memory_space<vmem>>, %arg5: memref<338x128xbf16, #tpu.memory_space<vmem>>) attributes {dimension_semantics = [], scalar_prefetch = 0 : i64, scratch_operands = 0 : i64, tpu.core_type = #tpu.core_type<tc>} {
    %c0 = arith.constant 0 : index
    %c0_0 = arith.constant 0 : index
    %0 = vector.load %arg0[%c0, %c0_0] : memref<338x1152xbf16, #tpu.memory_space<vmem>>, vector<338x1152xbf16>
    %c0_1 = arith.constant 0 : index
    %c0_2 = arith.constant 0 : index
    %1 = vector.load %arg1[%c0_1, %c0_2] : memref<1152x128xbf16, #tpu.memory_space<vmem>>, vector<1152x128xbf16>
    %cst = arith.constant dense<0.000000e+00> : vector<338x128xf32>
    %2 = tpu.matmul %0, %1, %cst {dimension_numbers = #tpu.dot_dimension_numbers<[1], [0], [0], [1], [0, 0, 1, 1], [], []>} : vector<338x1152xbf16>, vector<1152x128xbf16>, vector<338x128xf32> -> vector<338x128xf32>
    %c0_3 = arith.constant 0 : index
    %c0_4 = arith.constant 0 : index
    %3 = vector.load %arg2[%c0_3, %c0_4] : memref<1x128xf32, #tpu.memory_space<vmem>>, vector<1x128xf32>
    %4 = vector.broadcast %3 : vector<1x128xf32> to vector<338x128xf32>
    %5 = arith.addf %2, %4 : vector<338x128xf32>
    %cst_5 = arith.constant dense<0.000000e+00> : vector<128xf32>
    %6 = vector.multi_reduction <add>, %5, %cst_5 [0] : vector<338x128xf32> to vector<128xf32>
    %7 = vector.shape_cast %6 : vector<128xf32> to vector<1x128xf32>
    %8 = arith.mulf %5, %5 : vector<338x128xf32>
    %cst_6 = arith.constant dense<0.000000e+00> : vector<128xf32>
    %9 = vector.multi_reduction <add>, %8, %cst_6 [0] : vector<338x128xf32> to vector<128xf32>
    %10 = vector.shape_cast %9 : vector<128xf32> to vector<1x128xf32>
    %cst_7 = arith.constant 2.958580e-03 : f32
    %11 = vector.broadcast %cst_7 : f32 to vector<1x128xf32>
    %12 = arith.mulf %7, %11 : vector<1x128xf32>
    %cst_8 = arith.constant 2.958580e-03 : f32
    %13 = vector.broadcast %cst_8 : f32 to vector<1x128xf32>
    %14 = arith.mulf %10, %13 : vector<1x128xf32>
    %15 = arith.mulf %12, %12 : vector<1x128xf32>
    %16 = arith.subf %14, %15 : vector<1x128xf32>
    %cst_9 = arith.constant 0.000000e+00 : f32
    %17 = vector.broadcast %cst_9 : f32 to vector<1x128xf32>
    %18 = arith.maximumf %16, %17 : vector<1x128xf32>
    %19 = vector.broadcast %12 : vector<1x128xf32> to vector<338x128xf32>
    %20 = arith.subf %5, %19 : vector<338x128xf32>
    %cst_10 = arith.constant 9.99999974E-6 : f32
    %21 = vector.broadcast %cst_10 : f32 to vector<1x128xf32>
    %22 = arith.addf %18, %21 : vector<1x128xf32>
    %23 = math.rsqrt %22 : vector<1x128xf32>
    %24 = vector.broadcast %23 : vector<1x128xf32> to vector<338x128xf32>
    %25 = arith.mulf %20, %24 : vector<338x128xf32>
    %c0_11 = arith.constant 0 : index
    %c0_12 = arith.constant 0 : index
    %26 = vector.load %arg3[%c0_11, %c0_12] : memref<1x128xf32, #tpu.memory_space<vmem>>, vector<1x128xf32>
    %27 = vector.broadcast %26 : vector<1x128xf32> to vector<338x128xf32>
    %28 = arith.mulf %25, %27 : vector<338x128xf32>
    %c0_13 = arith.constant 0 : index
    %c0_14 = arith.constant 0 : index
    %29 = vector.load %arg4[%c0_13, %c0_14] : memref<1x128xf32, #tpu.memory_space<vmem>>, vector<1x128xf32>
    %30 = vector.broadcast %29 : vector<1x128xf32> to vector<338x128xf32>
    %31 = arith.addf %28, %30 : vector<338x128xf32>
    %cst_15 = arith.constant 0.000000e+00 : f32
    %32 = vector.broadcast %cst_15 : f32 to vector<338x128xf32>
    %33 = arith.maximumf %31, %32 : vector<338x128xf32>
    %34 = arith.truncf %33 : vector<338x128xf32> to vector<338x128xbf16>
    %c0_16 = arith.constant 0 : index
    %c0_17 = arith.constant 0 : index
    %35 = vector.load %arg5[%c0_16, %c0_17] : memref<338x128xbf16, #tpu.memory_space<vmem>>, vector<338x128xbf16>
    tpu.vector_store %arg5[%c0_16, %c0_17], %34 {strides = array<i32>} : memref<338x128xbf16, #tpu.memory_space<vmem>>, vector<338x128xbf16>,
    return
  }
}

module attributes {stable_mosaic.version = 11 : i64} {
  func.func @_tanh_kernel(%arg0: memref<4x256xbf16, #tpu.memory_space<vmem>>, %arg1: memref<256x392xbf16, #tpu.memory_space<vmem>>, %arg2: memref<1x1xf32, #tpu.memory_space<vmem>>, %arg3: memref<4x392xf32, #tpu.memory_space<vmem>>) attributes {dimension_semantics = [], scalar_prefetch = 0 : i64, scratch_operands = 0 : i64, tpu.core_type = #tpu.core_type<tc>} {
    %c0 = arith.constant 0 : index
    %c0_0 = arith.constant 0 : index
    %0 = vector.load %arg0[%c0, %c0_0] : memref<4x256xbf16, #tpu.memory_space<vmem>>, vector<4x256xbf16>
    %c0_1 = arith.constant 0 : index
    %c0_2 = arith.constant 0 : index
    %1 = vector.load %arg1[%c0_1, %c0_2] : memref<256x392xbf16, #tpu.memory_space<vmem>>, vector<256x392xbf16>
    %cst = arith.constant dense<0.000000e+00> : vector<4x392xf32>
    %2 = tpu.matmul %0, %1, %cst {dimension_numbers = #tpu.dot_dimension_numbers<[1], [0], [0], [1], [0, 0, 1, 1], [], []>} : vector<4x256xbf16>, vector<256x392xbf16>, vector<4x392xf32> -> vector<4x392xf32>
    %c0_3 = arith.constant 0 : index
    %c0_4 = arith.constant 0 : index
    %3 = vector.load %arg2[%c0_3, %c0_4] : memref<1x1xf32, #tpu.memory_space<vmem>>, vector<1x1xf32>
    %4 = vector.broadcast %3 : vector<1x1xf32> to vector<4x392xf32>
    %5 = arith.addf %2, %4 : vector<4x392xf32>
    %6 = math.tanh %5 : vector<4x392xf32>
    %c0_5 = arith.constant 0 : index
    %c0_6 = arith.constant 0 : index
    %7 = vector.load %arg3[%c0_5, %c0_6] : memref<4x392xf32, #tpu.memory_space<vmem>>, vector<4x392xf32>
    tpu.vector_store %arg3[%c0_5, %c0_6], %6 {strides = array<i32>} : memref<4x392xf32, #tpu.memory_space<vmem>>, vector<4x392xf32>,
    return
  }
}

</mosaic_0001>

<llo_original>
// kernel: generator_forward.4
$region0: #{generator_forward.4}
  #allocation0 [shape = 'u32[]', space=smem, size = 0x4, offset = 0x4, fixed_abs, tag = 'smem constant byte address 0x4 - core index']
  #allocation1 [shape = 'u32[144,128]{1,0:T(1,128)}', space=vmem, size = 0x12000, scoped, tag = 'internal scratch']
  %s0 = inlined_call_operand.vmem [shape: bf16[18,576], index: 0, kind: input, shape index: {}]
  %s1 = inlined_call_operand.vmem [shape: bf16[576,256], index: 1, kind: input, shape index: {}]
  %s2 = inlined_call_operand.hbm [shape: f32[1,256], index: 2, kind: input, shape index: {}]
  %s3 = inlined_call_operand.hbm [shape: f32[1,256], index: 3, kind: input, shape index: {}]
  %s4 = inlined_call_operand.hbm [shape: f32[1,256], index: 4, kind: input, shape index: {}]
  %s5 = inlined_call_operand.vmem [shape: bf16[18,256], index: 5, kind: output, shape index: {}]
  %s6 = sld [smem:[#allocation0]]
  $region42: #{generator_forward.4} parent=0
    _
  %s8 = ssub.s32 1, %s6
  %s9 = scalar_select 0, %s8, %s6
  $region1: #{generator_forward.4} parent=0
    #allocation2 [shape = 'u8[1024]{0}', space=vmem, size = 0x400, scoped, tag = 'input window, operand 2, single buffered']
    #allocation3 [shape = 's32[1]{0}', space=sflag, size = 0x4, scoped, tag = 'scoped memory for generator_forward.4']
    #allocation4 [shape = 'u8[1024]{0}', space=vmem, size = 0x400, scoped, tag = 'input window, operand 3, single buffered']
    #allocation5 [shape = 's32[1]{0}', space=sflag, size = 0x4, scoped, tag = 'scoped memory for generator_forward.4']
    #allocation6 [shape = 'u8[1024]{0}', space=vmem, size = 0x400, scoped, tag = 'input window, operand 4, single buffered']
    %10 = vsyncpa [#allocation3], 0
    %11 = vsyncpa [#allocation5], 0
    // Predicated region
    $region2: #{generator_forward.4} parent=1 // pred_check
      _
    $region3: #{generator_forward.4} parent=1 // pred_check_branch
      %13 = sbr.rel (0) target = $region5
    $region4: #{generator_forward.4} parent=1 // pred_region
      _
    $region5: #{generator_forward.4} parent=1 // pred_fallthru
      _
    // Predicated region
    $region6: #{generator_forward.4} parent=1 // pred_check
      _
    $region7: #{generator_forward.4} parent=1 // pred_check_branch
      %15 = sbr.rel (0) target = $region9
    $region8: #{generator_forward.4} parent=1 // pred_region
      _
    $region9: #{generator_forward.4} parent=1 // pred_fallthru
      _
    // Predicated region
    $region10: #{generator_forward.4} parent=1 // pred_check
      _
    $region11: #{generator_forward.4} parent=1 // pred_check_branch
      %17 = sbr.rel (0) target = $region13
    $region12: #{generator_forward.4} parent=1 // pred_region
      %s19 = ssub.s32 32, 32
      %20 = vsyncadd [#allocation3], %s19
      %s22 = sshll.u32 [#allocation2], 4
      %s23 = int_to_ptr.vmem [resolvable:$true] %s22
      %25 = dma.hbm_to_vmem [thread:$0]  %s2, 32, %s23, [#allocation3]
    $region13: #{generator_forward.4} parent=1 // pred_fallthru
      _
    // Predicated region
    $region14: #{generator_forward.4} parent=1 // pred_check
      _
    $region15: #{generator_forward.4} parent=1 // pred_check_branch
      %27 = sbr.rel (0) target = $region17
    $region16: #{generator_forward.4} parent=1 // pred_region
      %s29 = ssub.s32 32, 32
      %30 = vsyncadd [#allocation5], %s29
      %s32 = sshll.u32 [#allocation4], 4
      %s33 = int_to_ptr.vmem [resolvable:$true] %s32
      %35 = dma.hbm_to_vmem [thread:$0]  %s3, 32, %s33, [#allocation5]
    $region17: #{generator_forward.4} parent=1 // pred_fallthru
      _
    // Predicated region
    $region18: #{generator_forward.4} parent=1 // pred_check
      _
    $region19: #{generator_forward.4} parent=1 // pred_check_branch
      %37 = sbr.rel (0) target = $region21
    $region20: #{generator_forward.4} parent=1 // pred_region
      %s39 = ssub.s32 32, 32
      %40 = vsyncadd [#allocation5], %s39
      %s42 = sshll.u32 [#allocation6], 4
      %s43 = int_to_ptr.vmem [resolvable:$true] %s42
      %45 = dma.hbm_to_vmem [thread:$0]  %s4, 32, %s43, [#allocation5]
    $region21: #{generator_forward.4} parent=1 // pred_fallthru
      _
    // Predicated region
    $region22: #{generator_forward.4} parent=1 // pred_check
      _
    $region23: #{generator_forward.4} parent=1 // pred_check_branch
      %47 = sbr.rel (0) target = $region25
    $region24: #{generator_forward.4} parent=1 // pred_region
      %48 = dma.done [#allocation3], 32
    $region25: #{generator_forward.4} parent=1 // pred_fallthru
      _
    // Predicated region
    $region26: #{generator_forward.4} parent=1 // pred_check
      _
    $region27: #{generator_forward.4} parent=1 // pred_check_branch
      %50 = sbr.rel (0) target = $region29
    $region28: #{generator_forward.4} parent=1 // pred_region
      %51 = dma.done [#allocation5], 32
    $region29: #{generator_forward.4} parent=1 // pred_fallthru
      _
    // Predicated region
    $region30: #{generator_forward.4} parent=1 // pred_check
      _
    $region31: #{generator_forward.4} parent=1 // pred_check_branch
      %53 = sbr.rel (0) target = $region33
    $region32: #{generator_forward.4} parent=1 // pred_region
      %54 = dma.done [#allocation5], 32
    $region33: #{generator_forward.4} parent=1 // pred_fallthru
      _
    %v56 = vld [vmem:[%s0] sm:$0xff]
    %v57 = vld [vmem:[%s0 + $0x8] sm:$0xff]
    %v58 = vld [vmem:[%s0 + $0x10] sm:$0xf]
    %v59 = vld [vmem:[%s0 + $0x14] sm:$0xff]
    %v60 = vld [vmem:[%s0 + $0x1c] sm:$0xff]
    %v61 = vld [vmem:[%s0 + $0x24] sm:$0xf]
    %v62 = vld [vmem:[%s0 + $0x28] sm:$0x11]
    %v63 = vld [vmem:[%s0 + $0x30] sm:$0x11]
    %v64 = vld [vmem:[%s0 + $0x38] sm:$0x1]
    %v65 = vld [vmem:[%s1] sm:$0xff]
    %v66 = vld [vmem:[%s1 + $0x8] sm:$0xff]
    %v67 = vld [vmem:[%s1 + $0x10] sm:$0xff]
    %v68 = vld [vmem:[%s1 + $0x18] sm:$0xff]
    %v69 = vld [vmem:[%s1 + $0x20] sm:$0xff]
    %v70 = vld [vmem:[%s1 + $0x28] sm:$0xff]
    %v71 = vld [vmem:[%s1 + $0x30] sm:$0xff]
    %v72 = vld [vmem:[%s1 + $0x38] sm:$0xff]
    %v73 = vld [vmem:[%s1 + $0x40] sm:$0xff]
    %v74 = vld [vmem:[%s1 + $0x48] sm:$0xff]
    %v75 = vld [vmem:[%s1 + $0x50] sm:$0xff]
    %v76 = vld [vmem:[%s1 + $0x58] sm:$0xff]
    %v77 = vld [vmem:[%s1 + $0x60] sm:$0xff]
    %v78 = vld [vmem:[%s1 + $0x68] sm:$0xff]
    %v79 = vld [vmem:[%s1 + $0x70] sm:$0xff]
    %v80 = vld [vmem:[%s1 + $0x78] sm:$0xff]
    %v81 = vld [vmem:[%s1 + $0x80] sm:$0xff]
    %v82 = vld [vmem:[%s1 + $0x88] sm:$0xff]
    %v83 = vld [vmem:[%s1 + $0x90] sm:$0xff]
    %v84 = vld [vmem:[%s1 + $0x98] sm:$0xff]
    %v85 = vld [vmem:[%s1 + $0xa0] sm:$0xff]
    %v86 = vld [vmem:[%s1 + $0xa8] sm:$0xff]
    %v87 = vld [vmem:[%s1 + $0xb0] sm:$0xff]
    %v88 = vld [vmem:[%s1 + $0xb8] sm:$0xff]
    %v89 = vld [vmem:[%s1 + $0xc0] sm:$0xff]
    %v90 = vld [vmem:[%s1 + $0xc8] sm:$0xff]
    %v91 = vld [vmem:[%s1 + $0xd0] sm:$0xff]
    %v92 = vld [vmem:[%s1 + $0xd8] sm:$0xff]
    %v93 = vld [vmem:[%s1 + $0xe0] sm:$0xff]
    %v94 = vld [vmem:[%s1 + $0xe8] sm:$0xff]
    %v95 = vld [vmem:[%s1 + $0xf0] sm:$0xff]
    %v96 = vld [vmem:[%s1 + $0xf8] sm:$0xff]
    %v97 = vld [vmem:[%s1 + $0x100] sm:$0xff]
    %v98 = vld [vmem:[%s1 + $0x108] sm:$0xff]
    %v99 = vld [vmem:[%s1 + $0x110] sm:$0xff]
    %v100 = vld [vmem:[%s1 + $0x118] sm:$0xff]
    %v101 = vld [vmem:[%s1 + $0x120] sm:$0xff]
    %v102 = vld [vmem:[%s1 + $0x128] sm:$0xff]
    %v103 = vld [vmem:[%s1 + $0x130] sm:$0xff]
    %v104 = vld [vmem:[%s1 + $0x138] sm:$0xff]
    %v105 = vld [vmem:[%s1 + $0x140] sm:$0xff]
    %v106 = vld [vmem:[%s1 + $0x148] sm:$0xff]
    %v107 = vld [vmem:[%s1 + $0x150] sm:$0xff]
    %v108 = vld [vmem:[%s1 + $0x158] sm:$0xff]
    %v109 = vld [vmem:[%s1 + $0x160] sm:$0xff]
    %v110 = vld [vmem:[%s1 + $0x168] sm:$0xff]
    %v111 = vld [vmem:[%s1 + $0x170] sm:$0xff]
    %v112 = vld [vmem:[%s1 + $0x178] sm:$0xff]
    %v113 = vld [vmem:[%s1 + $0x180] sm:$0xff]
    %v114 = vld [vmem:[%s1 + $0x188] sm:$0xff]
    %v115 = vld [vmem:[%s1 + $0x190] sm:$0xff]
    %v116 = vld [vmem:[%s1 + $0x198] sm:$0xff]
    %v117 = vld [vmem:[%s1 + $0x1a0] sm:$0xff]
    %v118 = vld [vmem:[%s1 + $0x1a8] sm:$0xff]
    %v119 = vld [vmem:[%s1 + $0x1b0] sm:$0xff]
    %v120 = vld [vmem:[%s1 + $0x1b8] sm:$0xff]
    %v121 = vld [vmem:[%s1 + $0x1c0] sm:$0xff]
    %v122 = vld [vmem:[%s1 + $0x1c8] sm:$0xff]
    %v123 = vld [vmem:[%s1 + $0x1d0] sm:$0xff]
    %v124 = vld [vmem:[%s1 + $0x1d8] sm:$0xff]
    %v125 = vld [vmem:[%s1 + $0x1e0] sm:$0xff]
    %v126 = vld [vmem:[%s1 + $0x1e8] sm:$0xff]
    %v127 = vld [vmem:[%s1 + $0x1f0] sm:$0xff]
    %v128 = vld [vmem:[%s1 + $0x1f8] sm:$0xff]
    %v129 = vld [vmem:[%s1 + $0x200] sm:$0xff]
    %v130 = vld [vmem:[%s1 + $0x208] sm:$0xff]
    %v131 = vld [vmem:[%s1 + $0x210] sm:$0xff]
    %v132 = vld [vmem:[%s1 + $0x218] sm:$0xff]
    %v133 = vld [vmem:[%s1 + $0x220] sm:$0xff]
    %v134 = vld [vmem:[%s1 + $0x228] sm:$0xff]
    %v135 = vld [vmem:[%s1 + $0x230] sm:$0xff]
    %v136 = vld [vmem:[%s1 + $0x238] sm:$0xff]
    %v137 = vld [vmem:[#allocation2] sm:$0x3]
    %v139 = vlaneseq
    %v140 = vshrl.u32 %v139, 7
    %v141 = vsub.s32 0, %v140
    %v142 = vrot.slane %v137, %v141
    %v143 = vlaneseq
    %v144 = vshrl.u32 %v143, 7
    %v145 = vsub.s32 1, %v144
    %v146 = vrot.slane %v137, %v145
    %v158 = vunpack.c.l.b16 %v56
    %v159 = vunpack.c.h.b16 %v56
    %v160 = vunpack.c.l.b16 %v57
    %v161 = vunpack.c.h.b16 %v57
    %v162 = vunpack.c.l.b16 %v58
    %v163 = vunpack.c.l.b16 %v59
    %v164 = vunpack.c.h.b16 %v59
    %v165 = vunpack.c.l.b16 %v60
    %v166 = vunpack.c.h.b16 %v60
    %v167 = vunpack.c.l.b16 %v61
    %v168 = vunpack.c.l.b16 %v62
    %v169 = vunpack.c.h.b16 %v62
    %v170 = vunpack.c.l.b16 %v63
    %v171 = vunpack.c.h.b16 %v63
    %v172 = vunpack.c.l.b16 %v64
    %v173 = vpack.c.b16 %v163, %v158
    %v174 = vpack.c.b16 %v164, %v159
    %v175 = vpack.c.b16 %v165, %v160
    %v176 = vpack.c.b16 %v166, %v161
    %v177 = vpack.c.b16 %v167, %v162
    %v178 = vpack.c.b16 %v168, %v168
    %v179 = vpack.c.b16 %v169, %v169
    %v180 = vpack.c.b16 %v170, %v170
    %v181 = vpack.c.b16 %v171, %v171
    %v182 = vpack.c.b16 %v172, %v172
    %v263 = vunpack.c.l.b16 %v65
    %v264 = vunpack.c.h.b16 %v65
    %v265 = vunpack.c.l.b16 %v66
    %v266 = vunpack.c.h.b16 %v66
    %v267 = vunpack.c.l.b16 %v67
    %v268 = vunpack.c.h.b16 %v67
    %v269 = vunpack.c.l.b16 %v68
    %v270 = vunpack.c.h.b16 %v68
    %v271 = vunpack.c.l.b16 %v69
    %v272 = vunpack.c.h.b16 %v69
    %v273 = vunpack.c.l.b16 %v70
    %v274 = vunpack.c.h.b16 %v70
    %v275 = vunpack.c.l.b16 %v71
    %v276 = vunpack.c.h.b16 %v71
    %v277 = vunpack.c.l.b16 %v72
    %v278 = vunpack.c.h.b16 %v72
    %v279 = vunpack.c.l.b16 %v73
    %v280 = vunpack.c.h.b16 %v73
    %v281 = vunpack.c.l.b16 %v74
    %v282 = vunpack.c.h.b16 %v74
    %v283 = vunpack.c.l.b16 %v75
    %v284 = vunpack.c.h.b16 %v75
    %v285 = vunpack.c.l.b16 %v76
    %v286 = vunpack.c.h.b16 %v76
    %v287 = vunpack.c.l.b16 %v77
    %v288 = vunpack.c.h.b16 %v77
    %v289 = vunpack.c.l.b16 %v78
    %v290 = vunpack.c.h.b16 %v78
    %v291 = vunpack.c.l.b16 %v79
    %v292 = vunpack.c.h.b16 %v79
    %v293 = vunpack.c.l.b16 %v80
    %v294 = vunpack.c.h.b16 %v80
    %v295 = vunpack.c.l.b16 %v81
    %v296 = vunpack.c.h.b16 %v81
    %v297 = vunpack.c.l.b16 %v82
    %v298 = vunpack.c.h.b16 %v82
    %v299 = vunpack.c.l.b16 %v83
    %v300 = vunpack.c.h.b16 %v83
    %v301 = vunpack.c.l.b16 %v84
    %v302 = vunpack.c.h.b16 %v84
    %v303 = vunpack.c.l.b16 %v85
    %v304 = vunpack.c.h.b16 %v85
    %v305 = vunpack.c.l.b16 %v86
    %v306 = vunpack.c.h.b16 %v86
    %v307 = vunpack.c.l.b16 %v87
    %v308 = vunpack.c.h.b16 %v87
    %v309 = vunpack.c.l.b16 %v88
    %v310 = vunpack.c.h.b16 %v88
    %v311 = vunpack.c.l.b16 %v89
    %v312 = vunpack.c.h.b16 %v89
    %v313 = vunpack.c.l.b16 %v90
    %v314 = vunpack.c.h.b16 %v90
    %v315 = vunpack.c.l.b16 %v91
    %v316 = vunpack.c.h.b16 %v91
    %v317 = vunpack.c.l.b16 %v92
    %v318 = vunpack.c.h.b16 %v92
    %v319 = vunpack.c.l.b16 %v93
    %v320 = vunpack.c.h.b16 %v93
    %v321 = vunpack.c.l.b16 %v94
    %v322 = vunpack.c.h.b16 %v94
    %v323 = vunpack.c.l.b16 %v95
    %v324 = vunpack.c.h.b16 %v95
    %v325 = vunpack.c.l.b16 %v96
    %v326 = vunpack.c.h.b16 %v96
    %v327 = vunpack.c.l.b16 %v97
    %v328 = vunpack.c.h.b16 %v97
    %v329 = vunpack.c.l.b16 %v98
    %v330 = vunpack.c.h.b16 %v98
    %v331 = vunpack.c.l.b16 %v99
    %v332 = vunpack.c.h.b16 %v99
    %v333 = vunpack.c.l.b16 %v100
    %v334 = vunpack.c.h.b16 %v100
    %v335 = vunpack.c.l.b16 %v101
    %v336 = vunpack.c.h.b16 %v101
    %v337 = vunpack.c.l.b16 %v102
    %v338 = vunpack.c.h.b16 %v102
    %v339 = vunpack.c.l.b16 %v103
    %v340 = vunpack.c.h.b16 %v103
    %v341 = vunpack.c.l.b16 %v104
    %v342 = vunpack.c.h.b16 %v104
    %v343 = vunpack.c.l.b16 %v105
    %v344 = vunpack.c.h.b16 %v105
    %v345 = vunpack.c.l.b16 %v106
    %v346 = vunpack.c.h.b16 %v106
    %v347 = vunpack.c.l.b16 %v107
    %v348 = vunpack.c.h.b16 %v107
    %v349 = vunpack.c.l.b16 %v108
    %v350 = vunpack.c.h.b16 %v108
    %v351 = vunpack.c.l.b16 %v109
    %v352 = vunpack.c.h.b16 %v109
    %v353 = vunpack.c.l.b16 %v110
    %v354 = vunpack.c.h.b16 %v110
    %v355 = vunpack.c.l.b16 %v111
    %v356 = vunpack.c.h.b16 %v111
    %v357 = vunpack.c.l.b16 %v112
    %v358 = vunpack.c.h.b16 %v112
    %v359 = vunpack.c.l.b16 %v113
    %v360 = vunpack.c.h.b16 %v113
    %v361 = vunpack.c.l.b16 %v114
    %v362 = vunpack.c.h.b16 %v114
    %v363 = vunpack.c.l.b16 %v115
    %v364 = vunpack.c.h.b16 %v115
    %v365 = vunpack.c.l.b16 %v116
    %v366 = vunpack.c.h.b16 %v116
    %v367 = vunpack.c.l.b16 %v117
    %v368 = vunpack.c.h.b16 %v117
    %v369 = vunpack.c.l.b16 %v118
    %v370 = vunpack.c.h.b16 %v118
    %v371 = vunpack.c.l.b16 %v119
    %v372 = vunpack.c.h.b16 %v119
    %v373 = vunpack.c.l.b16 %v120
    %v374 = vunpack.c.h.b16 %v120
    %v375 = vunpack.c.l.b16 %v121
    %v376 = vunpack.c.h.b16 %v121
    %v377 = vunpack.c.l.b16 %v122
    %v378 = vunpack.c.h.b16 %v122
    %v379 = vunpack.c.l.b16 %v123
    %v380 = vunpack.c.h.b16 %v123
    %v381 = vunpack.c.l.b16 %v124
    %v382 = vunpack.c.h.b16 %v124
    %v383 = vunpack.c.l.b16 %v125
    %v384 = vunpack.c.h.b16 %v125
    %v385 = vunpack.c.l.b16 %v126
    %v386 = vunpack.c.h.b16 %v126
    %v387 = vunpack.c.l.b16 %v127
    %v388 = vunpack.c.h.b16 %v127
    %v389 = vunpack.c.l.b16 %v128
    %v390 = vunpack.c.h.b16 %v128
    %v391 = vunpack.c.l.b16 %v129
    %v392 = vunpack.c.h.b16 %v129
    %v393 = vunpack.c.l.b16 %v130
    %v394 = vunpack.c.h.b16 %v130
    %v395 = vunpack.c.l.b16 %v131
    %v396 = vunpack.c.h.b16 %v131
    %v397 = vunpack.c.l.b16 %v132
    %v398 = vunpack.c.h.b16 %v132
    %v399 = vunpack.c.l.b16 %v133
    %v400 = vunpack.c.h.b16 %v133
    %v401 = vunpack.c.l.b16 %v134
    %v402 = vunpack.c.h.b16 %v134
    %v403 = vunpack.c.l.b16 %v135
    %v404 = vunpack.c.h.b16 %v135
    %v405 = vunpack.c.l.b16 %v136
    %v406 = vunpack.c.h.b16 %v136
    %v407 = vpack.c.b16 %v265, %v263
    %v408 = vpack.c.b16 %v266, %v264
    %v409 = vpack.c.b16 %v269, %v267
    %v410 = vpack.c.b16 %v270, %v268
    %v411 = vpack.c.b16 %v273, %v271
    %v412 = vpack.c.b16 %v274, %v272
    %v413 = vpack.c.b16 %v277, %v275
    %v414 = vpack.c.b16 %v278, %v276
    %v415 = vpack.c.b16 %v281, %v279
    %v416 = vpack.c.b16 %v282, %v280
    %v417 = vpack.c.b16 %v285, %v283
    %v418 = vpack.c.b16 %v286, %v284
    %v419 = vpack.c.b16 %v289, %v287
    %v420 = vpack.c.b16 %v290, %v288
    %v421 = vpack.c.b16 %v293, %v291
    %v422 = vpack.c.b16 %v294, %v292
    %v423 = vpack.c.b16 %v297, %v295
    %v424 = vpack.c.b16 %v298, %v296
    %v425 = vpack.c.b16 %v301, %v299
    %v426 = vpack.c.b16 %v302, %v300
    %v427 = vpack.c.b16 %v305, %v303
    %v428 = vpack.c.b16 %v306, %v304
    %v429 = vpack.c.b16 %v309, %v307
    %v430 = vpack.c.b16 %v310, %v308
    %v431 = vpack.c.b16 %v313, %v311
    %v432 = vpack.c.b16 %v314, %v312
    %v433 = vpack.c.b16 %v317, %v315
    %v434 = vpack.c.b16 %v318, %v316
    %v435 = vpack.c.b16 %v321, %v319
    %v436 = vpack.c.b16 %v322, %v320
    %v437 = vpack.c.b16 %v325, %v323
    %v438 = vpack.c.b16 %v326, %v324
    %v439 = vpack.c.b16 %v329, %v327
    %v440 = vpack.c.b16 %v330, %v328
    %v441 = vpack.c.b16 %v333, %v331
    %v442 = vpack.c.b16 %v334, %v332
    %v443 = vpack.c.b16 %v337, %v335
    %v444 = vpack.c.b16 %v338, %v336
    %v445 = vpack.c.b16 %v341, %v339
    %v446 = vpack.c.b16 %v342, %v340
    %v447 = vpack.c.b16 %v345, %v343
    %v448 = vpack.c.b16 %v346, %v344
    %v449 = vpack.c.b16 %v349, %v347
    %v450 = vpack.c.b16 %v350, %v348
    %v451 = vpack.c.b16 %v353, %v351
    %v452 = vpack.c.b16 %v354, %v352
    %v453 = vpack.c.b16 %v357, %v355
    %v454 = vpack.c.b16 %v358, %v356
    %v455 = vpack.c.b16 %v361, %v359
    %v456 = vpack.c.b16 %v362, %v360
    %v457 = vpack.c.b16 %v365, %v363
    %v458 = vpack.c.b16 %v366, %v364
    %v459 = vpack.c.b16 %v369, %v367
    %v460 = vpack.c.b16 %v370, %v368
    %v461 = vpack.c.b16 %v373, %v371
    %v462 = vpack.c.b16 %v374, %v372
    %v463 = vpack.c.b16 %v377, %v375
    %v464 = vpack.c.b16 %v378, %v376
    %v465 = vpack.c.b16 %v381, %v379
    %v466 = vpack.c.b16 %v382, %v380
    %v467 = vpack.c.b16 %v385, %v383
    %v468 = vpack.c.b16 %v386, %v384
    %v469 = vpack.c.b16 %v389, %v387
    %v470 = vpack.c.b16 %v390, %v388
    %v471 = vpack.c.b16 %v393, %v391
    %v472 = vpack.c.b16 %v394, %v392
    %v473 = vpack.c.b16 %v397, %v395
    %v474 = vpack.c.b16 %v398, %v396
    %v475 = vpack.c.b16 %v401, %v399
    %v476 = vpack.c.b16 %v402, %v400
    %v477 = vpack.c.b16 %v405, %v403
    %v478 = vpack.c.b16 %v406, %v404
    %vm551 = vcmask 523264
    %v553 = vsel %vm551, %v177, 0
    %v556 = vsel %vm551, %v182, 0
    %558 = vmatprep.subr.bf16.mxu0 %v422
    %559 = vmatpush1.bf16.msra.mxu0 %v421
    %560 = vmatprep.subr.bf16.mxu0 %v420
    %561 = vmatpush1.bf16.msra.mxu0 %v419
    %562 = vmatprep.subr.bf16.mxu0 %v418
    %563 = vmatpush1.bf16.msra.mxu0 %v417
    %564 = vmatprep.subr.bf16.mxu0 %v416
    %565 = vmatpush1.bf16.msra.mxu0 %v415
    %566 = vmatprep.subr.bf16.mxu0 %v414
    %567 = vmatpush1.bf16.msra.mxu0 %v413
    %568 = vmatprep.subr.bf16.mxu0 %v412
    %569 = vmatpush1.bf16.msra.mxu0 %v411
    %570 = vmatprep.subr.bf16.mxu0 %v410
    %571 = vmatpush1.bf16.msra.mxu0 %v409
    %572 = vmatprep.subr.bf16.mxu0 %v408
    %573 = vmatpush1.bf16.msra.mxu0 %v407
    %574 = vmatprep.subr.bf16.mxu0 %v438
    %575 = vmatpush2.bf16.msra.mxu0 %v437
    %576 = vmatprep.subr.bf16.mxu0 %v436
    %577 = vmatpush2.bf16.msra.mxu0 %v435
    %578 = vmatprep.subr.bf16.mxu0 %v434
    %579 = vmatpush2.bf16.msra.mxu0 %v433
    %580 = vmatprep.subr.bf16.mxu0 %v432
    %581 = vmatpush2.bf16.msra.mxu0 %v431
    %582 = vmatprep.subr.bf16.mxu0 %v430
    %583 = vmatpush2.bf16.msra.mxu0 %v429
    %584 = vmatprep.subr.bf16.mxu0 %v428
    %585 = vmatpush2.bf16.msra.mxu0 %v427
    %586 = vmatprep.subr.bf16.mxu0 %v426
    %587 = vmatpush2.bf16.msra.mxu0 %v425
    %588 = vmatprep.subr.bf16.mxu0 %v424
    %589 = vmatpush2.bf16.msra.mxu0 %v423
    %590 = vmatprep.mubr.bf16.mxu0 %v174
    %591 = vmatmul.mubr.bf16.gmra.mxu0 %v173
    %v592 = vpop.f32.mrf.mxu0
    %v593 = vadd.f32 %v142, %v592
    %v594 = vpop.f32.mrf.mxu0
    %v595 = vadd.f32 %v146, %v594
    %v596 = vpop.f32.mrf.mxu0
    %v597 = vadd.f32 %v142, %v596
    %v598 = vpop.f32.mrf.mxu0
    %v599 = vadd.f32 %v146, %v598
    %600 = vmatprep.mubr.bf16.mxu0 %v179
    %601 = vmatmul.mubr.bf16.gmra.mxu0 %v178
    %v602 = vpop.f32.mrf.mxu0
    %v603 = vadd.f32 %v142, %v602
    %v604 = vpop.f32.mrf.mxu0
    %v605 = vadd.f32 %v146, %v604
    %v606 = vpop.f32.mrf.mxu0
    %v607 = vpop.f32.mrf.mxu0
    %608 = vdwg.mxu0
    %609 = vmatprep.subr.bf16.mxu0 %v454
    %610 = vmatpush1.bf16.msra.mxu0 %v453
    %611 = vmatprep.subr.bf16.mxu0 %v452
    %612 = vmatpush1.bf16.msra.mxu0 %v451
    %613 = vmatprep.subr.bf16.mxu0 %v450
    %614 = vmatpush1.bf16.msra.mxu0 %v449
    %615 = vmatprep.subr.bf16.mxu0 %v448
    %616 = vmatpush1.bf16.msra.mxu0 %v447
    %617 = vmatprep.subr.bf16.mxu0 %v446
    %618 = vmatpush1.bf16.msra.mxu0 %v445
    %619 = vmatprep.subr.bf16.mxu0 %v444
    %620 = vmatpush1.bf16.msra.mxu0 %v443
    %621 = vmatprep.subr.bf16.mxu0 %v442
    %622 = vmatpush1.bf16.msra.mxu0 %v441
    %623 = vmatprep.subr.bf16.mxu0 %v440
    %624 = vmatpush1.bf16.msra.mxu0 %v439
    %625 = vmatprep.subr.bf16.mxu0 %v470
    %626 = vmatpush2.bf16.msra.mxu0 %v469
    %627 = vmatprep.subr.bf16.mxu0 %v468
    %628 = vmatpush2.bf16.msra.mxu0 %v467
    %629 = vmatprep.subr.bf16.mxu0 %v466
    %630 = vmatpush2.bf16.msra.mxu0 %v465
    %631 = vmatprep.subr.bf16.mxu0 %v464
    %632 = vmatpush2.bf16.msra.mxu0 %v463
    %633 = vmatprep.subr.bf16.mxu0 %v462
    %634 = vmatpush2.bf16.msra.mxu0 %v461
    %635 = vmatprep.subr.bf16.mxu0 %v460
    %636 = vmatpush2.bf16.msra.mxu0 %v459
    %637 = vmatprep.subr.bf16.mxu0 %v458
    %638 = vmatpush2.bf16.msra.mxu0 %v457
    %639 = vmatprep.subr.bf16.mxu0 %v456
    %640 = vmatpush2.bf16.msra.mxu0 %v455
    %641 = vmatprep.mubr.bf16.mxu0 %v176
    %642 = vmatmul.mubr.bf16.gmra.mxu0 %v175
    %v643 = vpop.f32.mrf.mxu0
    %v644 = vadd.f32 %v593, %v643
    %v645 = vpop.f32.mrf.mxu0
    %v646 = vadd.f32 %v595, %v645
    %v647 = vpop.f32.mrf.mxu0
    %v648 = vadd.f32 %v597, %v647
    %v649 = vpop.f32.mrf.mxu0
    %v650 = vadd.f32 %v599, %v649
    %651 = vmatprep.mubr.bf16.mxu0 %v181
    %652 = vmatmul.mubr.bf16.gmra.mxu0 %v180
    %v653 = vpop.f32.mrf.mxu0
    %v654 = vadd.f32 %v603, %v653
    %v655 = vpop.f32.mrf.mxu0
    %v656 = vadd.f32 %v605, %v655
    %v657 = vpop.f32.mrf.mxu0
    %v658 = vpop.f32.mrf.mxu0
    %659 = vdwg.mxu0
    %660 = vmatprep.subr.bf16.mxu0 0
    %661 = vmatpush1.bf16.msra.mxu0 0
    %662 = vmatprep.subr.bf16.mxu0 0
    %663 = vmatpush1.bf16.msra.mxu0 0
    %664 = vmatprep.subr.bf16.mxu0 0
    %665 = vmatpush1.bf16.msra.mxu0 0
    %666 = vmatprep.subr.bf16.mxu0 0
    %667 = vmatpush1.bf16.msra.mxu0 0
    %668 = vmatprep.subr.bf16.mxu0 %v478
    %669 = vmatpush1.bf16.msra.mxu0 %v477
    %670 = vmatprep.subr.bf16.mxu0 %v476
    %671 = vmatpush1.bf16.msra.mxu0 %v475
    %672 = vmatprep.subr.bf16.mxu0 %v474
    %673 = vmatpush1.bf16.msra.mxu0 %v473
    %674 = vmatprep.subr.bf16.mxu0 %v472
    %675 = vmatpush1.bf16.msra.mxu0 %v471
    %676 = vmatprep.subr.bf16.mxu0 0
    %677 = vmatpush2.bf16.msra.mxu0 0
    %678 = vmatprep.subr.bf16.mxu0 0
    %679 = vmatpush2.bf16.msra.mxu0 0
    %680 = vmatprep.subr.bf16.mxu0 0
    %681 = vmatpush2.bf16.msra.mxu0 0
    %682 = vmatprep.subr.bf16.mxu0 0
    %683 = vmatpush2.bf16.msra.mxu0 0
    %684 = vmatprep.subr.bf16.mxu0 0
    %685 = vmatpush2.bf16.msra.mxu0 0
    %686 = vmatprep.subr.bf16.mxu0 0
    %687 = vmatpush2.bf16.msra.mxu0 0
    %688 = vmatprep.subr.bf16.mxu0 0
    %689 = vmatpush2.bf16.msra.mxu0 0
    %690 = vmatprep.subr.bf16.mxu0 0
    %691 = vmatpush2.bf16.msra.mxu0 0
    %692 = vmatprep.mubr.bf16.mxu0 0
    %693 = vmatmul.mubr.bf16.gmra.mxu0 %v553
    %v694 = vpop.f32.mrf.mxu0
    %v695 = vadd.f32 %v644, %v694
    %v696 = vpop.f32.mrf.mxu0
    %v697 = vadd.f32 %v646, %v696
    %v698 = vpop.f32.mrf.mxu0
    %v699 = vadd.f32 %v648, %v698
    %v700 = vpop.f32.mrf.mxu0
    %v701 = vadd.f32 %v650, %v700
    %702 = vmatprep.mubr.bf16.mxu0 0
    %703 = vmatmul.mubr.bf16.gmra.mxu0 %v556
    %v704 = vpop.f32.mrf.mxu0
    %v705 = vadd.f32 %v654, %v704
    %v706 = vpop.f32.mrf.mxu0
    %v707 = vadd.f32 %v656, %v706
    %v708 = vpop.f32.mrf.mxu0
    %v709 = vpop.f32.mrf.mxu0
    %710 = vdwg.mxu0
    %v711 = vadd.f32 %v695, %v699
    %vm712 = vcmask 1041408
    %v713 = vsel %vm712, %v705, 0.0
    %v714 = vadd.f32 %v711, %v713
    %v715 = vrot.slane %v714, 4
    %v716 = vadd.f32 %v714, %v715
    %v717 = vrot.slane %v716, 2
    %v718 = vadd.f32 %v716, %v717
    %v719 = vrot.slane %v718, 1
    %v720 = vadd.f32 %v718, %v719
    %v721 = vadd.f32 %v697, %v701
    %v722 = vsel %vm712, %v707, 0.0
    %v723 = vadd.f32 %v721, %v722
    %v724 = vrot.slane %v723, 4
    %v725 = vadd.f32 %v723, %v724
    %v726 = vrot.slane %v725, 2
    %v727 = vadd.f32 %v725, %v726
    %v728 = vrot.slane %v727, 1
    %v729 = vadd.f32 %v727, %v728
    %v730 = vmul.f32 %v695, %v695
    %v731 = vmul.f32 %v697, %v697
    %v732 = vmul.f32 %v699, %v699
    %v733 = vmul.f32 %v701, %v701
    %v734 = vmul.f32 %v705, %v705
    %v735 = vmul.f32 %v707, %v707
    %v736 = vadd.f32 %v730, %v732
    %v737 = vsel %vm712, %v734, 0.0
    %v738 = vadd.f32 %v736, %v737
    %v739 = vrot.slane %v738, 4
    %v740 = vadd.f32 %v738, %v739
    %v741 = vrot.slane %v740, 2
    %v742 = vadd.f32 %v740, %v741
    %v743 = vrot.slane %v742, 1
    %v744 = vadd.f32 %v742, %v743
    %v745 = vadd.f32 %v731, %v733
    %v746 = vsel %vm712, %v735, 0.0
    %v747 = vadd.f32 %v745, %v746
    %v748 = vrot.slane %v747, 4
    %v749 = vadd.f32 %v747, %v748
    %v750 = vrot.slane %v749, 2
    %v751 = vadd.f32 %v749, %v750
    %v752 = vrot.slane %v751, 1
    %v753 = vadd.f32 %v751, %v752
    %v754 = vmul.f32 %v720, 0.055555556
    %v755 = vmul.f32 %v729, 0.055555556
    %v756 = vmul.f32 %v744, 0.055555556
    %v757 = vmul.f32 %v753, 0.055555556
    %v758 = vmul.f32 %v754, %v754
    %v759 = vmul.f32 %v755, %v755
    %v760 = vsub.f32 %v756, %v758
    %v761 = vsub.f32 %v757, %v759
    %v762 = vmax.f32 %v760, 0.0
    %v763 = vmax.f32 %v761, 0.0
    %v764 = vsub.f32 %v695, %v754
    %v765 = vsub.f32 %v697, %v755
    %v766 = vsub.f32 %v699, %v754
    %v767 = vsub.f32 %v701, %v755
    %v768 = vsub.f32 %v705, %v754
    %v769 = vsub.f32 %v707, %v755
    %v770 = vadd.f32 %v762, 1e-05
    %v771 = vadd.f32 %v763, 1e-05
    %v772 = vrsqrt.pop %v770
    %v773 = vrsqrt.pop %v771
    %v774 = vmul.f32 %v764, %v772
    %v775 = vmul.f32 %v765, %v773
    %v776 = vmul.f32 %v766, %v772
    %v777 = vmul.f32 %v767, %v773
    %v778 = vmul.f32 %v768, %v772
    %v779 = vmul.f32 %v769, %v773
    %v780 = vld [vmem:[#allocation4] sm:$0x3]
    %v782 = vlaneseq
    %v783 = vshrl.u32 %v782, 7
    %v784 = vsub.s32 0, %v783
    %v785 = vrot.slane %v780, %v784
    %v786 = vlaneseq
    %v787 = vshrl.u32 %v786, 7
    %v788 = vsub.s32 1, %v787
    %v789 = vrot.slane %v780, %v788
    %v792 = vmul.f32 %v774, %v785
    %v793 = vmul.f32 %v775, %v789
    %v794 = vmul.f32 %v776, %v785
    %v795 = vmul.f32 %v777, %v789
    %v796 = vmul.f32 %v778, %v785
    %v797 = vmul.f32 %v779, %v789
    %v798 = vld [vmem:[#allocation6] sm:$0x3]
    %v800 = vlaneseq
    %v801 = vshrl.u32 %v800, 7
    %v802 = vsub.s32 0, %v801
    %v803 = vrot.slane %v798, %v802
    %v804 = vlaneseq
    %v805 = vshrl.u32 %v804, 7
    %v806 = vsub.s32 1, %v805
    %v807 = vrot.slane %v798, %v806
    %v810 = vadd.f32 %v792, %v803
    %v811 = vadd.f32 %v793, %v807
    %v812 = vadd.f32 %v794, %v803
    %v813 = vadd.f32 %v795, %v807
    %v814 = vadd.f32 %v796, %v803
    %v815 = vadd.f32 %v797, %v807
    %v816 = vmax.f32 %v810, 0.0
    %v817 = vmax.f32 %v811, 0.0
    %v818 = vmax.f32 %v812, 0.0
    %v819 = vmax.f32 %v813, 0.0
    %v820 = vmax.f32 %v814, 0.0
    %v821 = vmax.f32 %v815, 0.0
    %v822 = vpack.c.bf16 %v818, %v816
    %v823 = vpack.c.bf16 %v819, %v817
    %v824 = vpack.c.bf16 %v820, %v820
    %v825 = vpack.c.bf16 %v821, %v821
    %v830 = vunpack.c.l.b16 %v822
    %v831 = vunpack.c.l.b16 %v823
    %v832 = vunpack.c.h.b16 %v822
    %v833 = vunpack.c.h.b16 %v823
    %v834 = vunpack.c.l.b16 %v824
    %v835 = vunpack.c.l.b16 %v825
    %v836 = vpack.c.b16 %v831, %v830
    %v837 = vpack.c.b16 %v833, %v832
    %v838 = vpack.c.b16 %v835, %v834
    %842 = vst [vmem:[%s5] sm:$0xff] %v836
    %843 = vst [vmem:[%s5 + $0x8] sm:$0xff] %v837
    %844 = vst [vmem:[%s5 + $0x10] sm:$0x11] %v838
    // Predicated region
    $region34: #{generator_forward.4} parent=1 // pred_check
      _
    $region35: #{generator_forward.4} parent=1 // pred_check_branch
      %846 = sbr.rel (0) target = $region37
    $region36: #{generator_forward.4} parent=1 // pred_region
      _
    $region37: #{generator_forward.4} parent=1 // pred_fallthru
      _
    // Predicated region
    $region38: #{generator_forward.4} parent=1 // pred_check
      _
    $region39: #{generator_forward.4} parent=1 // pred_check_branch
      %848 = sbr.rel (0) target = $region41
    $region40: #{generator_forward.4} parent=1 // pred_region
      _
    $region41: #{generator_forward.4} parent=1 // pred_fallthru
      _
    %849 = vsyncpa [#allocation3], 1
    %850 = vsyncpa [#allocation5], 1

// kernel: generator_forward.5
$region0: #{generator_forward.5}
  #allocation0 [shape = 'u32[]', space=smem, size = 0x4, offset = 0x4, fixed_abs, tag = 'smem constant byte address 0x4 - core index']
  #allocation1 [shape = 'u32[144,128]{1,0:T(1,128)}', space=vmem, size = 0x12000, scoped, tag = 'internal scratch']
  %s0 = inlined_call_operand.vmem [shape: bf16[72,4096], index: 0, kind: input, shape index: {}]
  %s1 = inlined_call_operand.vmem [shape: bf16[4096,128], index: 1, kind: input, shape index: {}]
  %s2 = inlined_call_operand.vmem [shape: f32[1,128], index: 2, kind: input, shape index: {}]
  %s3 = inlined_call_operand.vmem [shape: f32[1,128], index: 3, kind: input, shape index: {}]
  %s4 = inlined_call_operand.vmem [shape: f32[1,128], index: 4, kind: input, shape index: {}]
  %s5 = inlined_call_operand.vmem [shape: bf16[72,128], index: 5, kind: output, shape index: {}]
  %s6 = sld [smem:[#allocation0]]
  $region30: #{generator_forward.5} parent=0
    _
  %s8 = ssub.s32 1, %s6
  %s9 = scalar_select 0, %s8, %s6
  // Predicated region
  $region2: #{generator_forward.5} parent=0 // pred_check
    _
  $region3: #{generator_forward.5} parent=0 // pred_check_branch
    %11 = sbr.rel (0) target = $region5
  $region4: #{generator_forward.5} parent=0 // pred_region
    _
  $region5: #{generator_forward.5} parent=0 // pred_fallthru
    _
  // Predicated region
  $region6: #{generator_forward.5} parent=0 // pred_check
    _
  $region7: #{generator_forward.5} parent=0 // pred_check_branch
    %13 = sbr.rel (0) target = $region9
  $region8: #{generator_forward.5} parent=0 // pred_region
    _
  $region9: #{generator_forward.5} parent=0 // pred_fallthru
    _
  // Predicated region
  $region10: #{generator_forward.5} parent=0 // pred_check
    _
  $region11: #{generator_forward.5} parent=0 // pred_check_branch
    %15 = sbr.rel (0) target = $region13
  $region12: #{generator_forward.5} parent=0 // pred_region
    _
  $region13: #{generator_forward.5} parent=0 // pred_fallthru
    _
  // Predicated region
  $region14: #{generator_forward.5} parent=0 // pred_check
    _
  $region15: #{generator_forward.5} parent=0 // pred_check_branch
    %17 = sbr.rel (0) target = $region17
  $region16: #{generator_forward.5} parent=0 // pred_region
    _
  $region17: #{generator_forward.5} parent=0 // pred_fallthru
    _
  // Predicated region
  $region18: #{generator_forward.5} parent=0 // pred_check
    _
  $region19: #{generator_forward.5} parent=0 // pred_check_branch
    %19 = sbr.rel (0) target = $region21
  $region20: #{generator_forward.5} parent=0 // pred_region
    _
  $region21: #{generator_forward.5} parent=0 // pred_fallthru
    _
  %v21 = vld [vmem:[%s0] sm:$0xff]
  %v22 = vld [vmem:[%s0 + $0x8] sm:$0xff]
  %v23 = vld [vmem:[%s0 + $0x10] sm:$0xff]
  %v24 = vld [vmem:[%s0 + $0x18] sm:$0xff]
  %v25 = vld [vmem:[%s0 + $0x20] sm:$0xff]
  %v26 = vld [vmem:[%s0 + $0x28] sm:$0xff]
  %v27 = vld [vmem:[%s0 + $0x30] sm:$0xff]
  %v28 = vld [vmem:[%s0 + $0x38] sm:$0xff]
  %v29 = vld [vmem:[%s0 + $0x40] sm:$0xff]
  %v30 = vld [vmem:[%s0 + $0x48] sm:$0xff]
  %v31 = vld [vmem:[%s0 + $0x50] sm:$0xff]
  %v32 = vld [vmem:[%s0 + $0x58] sm:$0xff]
  %v33 = vld [vmem:[%s0 + $0x60] sm:$0xff]
  %v34 = vld [vmem:[%s0 + $0x68] sm:$0xff]
  %v35 = vld [vmem:[%s0 + $0x70] sm:$0xff]
  %v36 = vld [vmem:[%s0 + $0x78] sm:$0xff]
  %v37 = vld [vmem:[%s0 + $0x80] sm:$0xff]
  %v38 = vld [vmem:[%s0 + $0x88] sm:$0xff]
  %v39 = vld [vmem:[%s0 + $0x90] sm:$0xff]
  %v40 = vld [vmem:[%s0 + $0x98] sm:$0xff]
  %v41 = vld [vmem:[%s0 + $0xa0] sm:$0xff]
  %v42 = vld [vmem:[%s0 + $0xa8] sm:$0xff]
  %v43 = vld [vmem:[%s0 + $0xb0] sm:$0xff]
  %v44 = vld [vmem:[%s0 + $0xb8] sm:$0xff]
  %v45 = vld [vmem:[%s0 + $0xc0] sm:$0xff]
  %v46 = vld [vmem:[%s0 + $0xc8] sm:$0xff]
  %v47 = vld [vmem:[%s0 + $0xd0] sm:$0xff]
  %v48 = vld [vmem:[%s0 + $0xd8] sm:$0xff]
  %v49 = vld [vmem:[%s0 + $0xe0] sm:$0xff]
  %v50 = vld [vmem:[%s0 + $0xe8] sm:$0xff]
  %v51 = vld [vmem:[%s0 + $0xf0] sm:$0xff]
  %v52 = vld [vmem:[%s0 + $0xf8] sm:$0xff]
  %v53 = vld [vmem:[%s0 + $0x100] sm:$0xff]
  %v54 = vld [vmem:[%s0 + $0x108] sm:$0xff]
  %v55 = vld [vmem:[%s0 + $0x110] sm:$0xff]
  %v56 = vld [vmem:[%s0 + $0x118] sm:$0xff]
  %v57 = vld [vmem:[%s0 + $0x120] sm:$0xff]
  %v58 = vld [vmem:[%s0 + $0x128] sm:$0xff]
  %v59 = vld [vmem:[%s0 + $0x130] sm:$0xff]
  %v60 = vld [vmem:[%s0 + $0x138] sm:$0xff]
  %v61 = vld [vmem:[%s0 + $0x140] sm:$0xff]
  %v62 = vld [vmem:[%s0 + $0x148] sm:$0xff]
  %v63 = vld [vmem:[%s0 + $0x150] sm:$0xff]
  %v64 = vld [vmem:[%s0 + $0x158] sm:$0xff]
  %v65 = vld [vmem:[%s0 + $0x160] sm:$0xff]
  %v66 = vld [vmem:[%s0 + $0x168] sm:$0xff]
  %v67 = vld [vmem:[%s0 + $0x170] sm:$0xff]
  %v68 = vld [vmem:[%s0 + $0x178] sm:$0xff]
  %v69 = vld [vmem:[%s0 + $0x180] sm:$0xff]
  %v70 = vld [vmem:[%s0 + $0x188] sm:$0xff]
  %v71 = vld [vmem:[%s0 + $0x190] sm:$0xff]
  %v72 = vld [vmem:[%s0 + $0x198] sm:$0xff]
  %v73 = vld [vmem:[%s0 + $0x1a0] sm:$0xff]
  %v74 = vld [vmem:[%s0 + $0x1a8] sm:$0xff]
  %v75 = vld [vmem:[%s0 + $0x1b0] sm:$0xff]
  %v76 = vld [vmem:[%s0 + $0x1b8] sm:$0xff]
  %v77 = vld [vmem:[%s0 + $0x1c0] sm:$0xff]
  %v78 = vld [vmem:[%s0 + $0x1c8] sm:$0xff]
  %v79 = vld [vmem:[%s0 + $0x1d0] sm:$0xff]
  %v80 = vld [vmem:[%s0 + $0x1d8] sm:$0xff]
  %v81 = vld [vmem:[%s0 + $0x1e0] sm:$0xff]
  %v82 = vld [vmem:[%s0 + $0x1e8] sm:$0xff]
  %v83 = vld [vmem:[%s0 + $0x1f0] sm:$0xff]
  %v84 = vld [vmem:[%s0 + $0x1f8] sm:$0xff]
  %v85 = vld [vmem:[%s0 + $0x200] sm:$0xff]
  %v86 = vld [vmem:[%s0 + $0x208] sm:$0xff]
  %v87 = vld [vmem:[%s0 + $0x210] sm:$0xff]
  %v88 = vld [vmem:[%s0 + $0x218] sm:$0xff]
  %v89 = vld [vmem:[%s0 + $0x220] sm:$0xff]
  %v90 = vld [vmem:[%s0 + $0x228] sm:$0xff]
  %v91 = vld [vmem:[%s0 + $0x230] sm:$0xff]
  %v92 = vld [vmem:[%s0 + $0x238] sm:$0xff]
  %v93 = vld [vmem:[%s0 + $0x240] sm:$0xff]
  %v94 = vld [vmem:[%s0 + $0x248] sm:$0xff]
  %v95 = vld [vmem:[%s0 + $0x250] sm:$0xff]
  %v96 = vld [vmem:[%s0 + $0x258] sm:$0xff]
  %v97 = vld [vmem:[%s0 + $0x260] sm:$0xff]
  %v98 = vld [vmem:[%s0 + $0x268] sm:$0xff]
  %v99 = vld [vmem:[%s0 + $0x270] sm:$0xff]
  %v100 = vld [vmem:[%s0 + $0x278] sm:$0xff]
  %v101 = vld [vmem:[%s0 + $0x280] sm:$0xff]
  %v102 = vld [vmem:[%s0 + $0x288] sm:$0xff]
  %v103 = vld [vmem:[%s0 + $0x290] sm:$0xff]
  %v104 = vld [vmem:[%s0 + $0x298] sm:$0xff]
  %v105 = vld [vmem:[%s0 + $0x2a0] sm:$0xff]
  %v106 = vld [vmem:[%s0 + $0x2a8] sm:$0xff]
  %v107 = vld [vmem:[%s0 + $0x2b0] sm:$0xff]
  %v108 = vld [vmem:[%s0 + $0x2b8] sm:$0xff]
  %v109 = vld [vmem:[%s0 + $0x2c0] sm:$0xff]
  %v110 = vld [vmem:[%s0 + $0x2c8] sm:$0xff]
  %v111 = vld [vmem:[%s0 + $0x2d0] sm:$0xff]
  %v112 = vld [vmem:[%s0 + $0x2d8] sm:$0xff]
  %v113 = vld [vmem:[%s0 + $0x2e0] sm:$0xff]
  %v114 = vld [vmem:[%s0 + $0x2e8] sm:$0xff]
  %v115 = vld [vmem:[%s0 + $0x2f0] sm:$0xff]
  %v116 = vld [vmem:[%s0 + $0x2f8] sm:$0xff]
  %v117 = vld [vmem:[%s0 + $0x300] sm:$0xff]
  %v118 = vld [vmem:[%s0 + $0x308] sm:$0xff]
  %v119 = vld [vmem:[%s0 + $0x310] sm:$0xff]
  %v120 = vld [vmem:[%s0 + $0x318] sm:$0xff]
  %v121 = vld [vmem:[%s0 + $0x320] sm:$0xff]
  %v122 = vld [vmem:[%s0 + $0x328] sm:$0xff]
  %v123 = vld [vmem:[%s0 + $0x330] sm:$0xff]
  %v124 = vld [vmem:[%s0 + $0x338] sm:$0xff]
  %v125 = vld [vmem:[%s0 + $0x340] sm:$0xff]
  %v126 = vld [vmem:[%s0 + $0x348] sm:$0xff]
  %v127 = vld [vmem:[%s0 + $0x350] sm:$0xff]
  %v128 = vld [vmem:[%s0 + $0x358] sm:$0xff]
  %v129 = vld [vmem:[%s0 + $0x360] sm:$0xff]
  %v130 = vld [vmem:[%s0 + $0x368] sm:$0xff]
  %v131 = vld [vmem:[%s0 + $0x370] sm:$0xff]
  %v132 = vld [vmem:[%s0 + $0x378] sm:$0xff]
  %v133 = vld [vmem:[%s0 + $0x380] sm:$0xff]
  %v134 = vld [vmem:[%s0 + $0x388] sm:$0xff]
  %v135 = vld [vmem:[%s0 + $0x390] sm:$0xff]
  %v136 = vld [vmem:[%s0 + $0x398] sm:$0xff]
  %v137 = vld [vmem:[%s0 + $0x3a0] sm:$0xff]
  %v138 = vld [vmem:[%s0 + $0x3a8] sm:$0xff]
  %v139 = vld [vmem:[%s0 + $0x3b0] sm:$0xff]
  %v140 = vld [vmem:[%s0 + $0x3b8] sm:$0xff]
  %v141 = vld [vmem:[%s0 + $0x3c0] sm:$0xff]
  %v142 = vld [vmem:[%s0 + $0x3c8] sm:$0xff]
  %v143 = vld [vmem:[%s0 + $0x3d0] sm:$0xff]
  %v144 = vld [vmem:[%s0 + $0x3d8] sm:$0xff]
  %v145 = vld [vmem:[%s0 + $0x3e0] sm:$0xff]
  %v146 = vld [vmem:[%s0 + $0x3e8] sm:$0xff]
  %v147 = vld [vmem:[%s0 + $0x3f0] sm:$0xff]
  %v148 = vld [vmem:[%s0 + $0x3f8] sm:$0xff]
  %v149 = vld [vmem:[%s0 + $0x400] sm:$0xff]
  %v150 = vld [vmem:[%s0 + $0x408] sm:$0xff]
  %v151 = vld [vmem:[%s0 + $0x410] sm:$0xff]
  %v152 = vld [vmem:[%s0 + $0x418] sm:$0xff]
  %v153 = vld [vmem:[%s0 + $0x420] sm:$0xff]
  %v154 = vld [vmem:[%s0 + $0x428] sm:$0xff]
  %v155 = vld [vmem:[%s0 + $0x430] sm:$0xff]
  %v156 = vld [vmem:[%s0 + $0x438] sm:$0xff]
  %v157 = vld [vmem:[%s0 + $0x440] sm:$0xff]
  %v158 = vld [vmem:[%s0 + $0x448] sm:$0xff]
  %v159 = vld [vmem:[%s0 + $0x450] sm:$0xff]
  %v160 = vld [vmem:[%s0 + $0x458] sm:$0xff]
  %v161 = vld [vmem:[%s0 + $0x460] sm:$0xff]
  %v162 = vld [vmem:[%s0 + $0x468] sm:$0xff]
  %v163 = vld [vmem:[%s0 + $0x470] sm:$0xff]
  %v164 = vld [vmem:[%s0 + $0x478] sm:$0xff]
  %v165 = vld [vmem:[%s1] sm:$0xf]
  %v166 = vld [vmem:[%s1 + $0x4] sm:$0xf]
  %v167 = vld [vmem:[%s1 + $0x8] sm:$0xf]
  %v168 = vld [vmem:[%s1 + $0xc] sm:$0xf]
  %v169 = vld [vmem:[%s1 + $0x10] sm:$0xf]
  %v170 = vld [vmem:[%s1 + $0x14] sm:$0xf]
  %v171 = vld [vmem:[%s1 + $0x18] sm:$0xf]
  %v172 = vld [vmem:[%s1 + $0x1c] sm:$0xf]
  %v173 = vld [vmem:[%s1 + $0x20] sm:$0xf]
  %v174 = vld [vmem:[%s1 + $0x24] sm:$0xf]
  %v175 = vld [vmem:[%s1 + $0x28] sm:$0xf]
  %v176 = vld [vmem:[%s1 + $0x2c] sm:$0xf]
  %v177 = vld [vmem:[%s1 + $0x30] sm:$0xf]
  %v178 = vld [vmem:[%s1 + $0x34] sm:$0xf]
  %v179 = vld [vmem:[%s1 + $0x38] sm:$0xf]
  %v180 = vld [vmem:[%s1 + $0x3c] sm:$0xf]
  %v181 = vld [vmem:[%s1 + $0x40] sm:$0xf]
  %v182 = vld [vmem:[%s1 + $0x44] sm:$0xf]
  %v183 = vld [vmem:[%s1 + $0x48] sm:$0xf]
  %v184 = vld [vmem:[%s1 + $0x4c] sm:$0xf]
  %v185 = vld [vmem:[%s1 + $0x50] sm:$0xf]
  %v186 = vld [vmem:[%s1 + $0x54] sm:$0xf]
  %v187 = vld [vmem:[%s1 + $0x58] sm:$0xf]
  %v188 = vld [vmem:[%s1 + $0x5c] sm:$0xf]
  %v189 = vld [vmem:[%s1 + $0x60] sm:$0xf]
  %v190 = vld [vmem:[%s1 + $0x64] sm:$0xf]
  %v191 = vld [vmem:[%s1 + $0x68] sm:$0xf]
  %v192 = vld [vmem:[%s1 + $0x6c] sm:$0xf]
  %v193 = vld [vmem:[%s1 + $0x70] sm:$0xf]
  %v194 = vld [vmem:[%s1 + $0x74] sm:$0xf]
  %v195 = vld [vmem:[%s1 + $0x78] sm:$0xf]
  %v196 = vld [vmem:[%s1 + $0x7c] sm:$0xf]
  %v197 = vld [vmem:[%s1 + $0x80] sm:$0xf]
  %v198 = vld [vmem:[%s1 + $0x84] sm:$0xf]
  %v199 = vld [vmem:[%s1 + $0x88] sm:$0xf]
  %v200 = vld [vmem:[%s1 + $0x8c] sm:$0xf]
  %v201 = vld [vmem:[%s1 + $0x90] sm:$0xf]
  %v202 = vld [vmem:[%s1 + $0x94] sm:$0xf]
  %v203 = vld [vmem:[%s1 + $0x98] sm:$0xf]
  %v204 = vld [vmem:[%s1 + $0x9c] sm:$0xf]
  %v205 = vld [vmem:[%s1 + $0xa0] sm:$0xf]
  %v206 = vld [vmem:[%s1 + $0xa4] sm:$0xf]
  %v207 = vld [vmem:[%s1 + $0xa8] sm:$0xf]
  %v208 = vld [vmem:[%s1 + $0xac] sm:$0xf]
  %v209 = vld [vmem:[%s1 + $0xb0] sm:$0xf]
  %v210 = vld [vmem:[%s1 + $0xb4] sm:$0xf]
  %v211 = vld [vmem:[%s1 + $0xb8] sm:$0xf]
  %v212 = vld [vmem:[%s1 + $0xbc] sm:$0xf]
  %v213 = vld [vmem:[%s1 + $0xc0] sm:$0xf]
  %v214 = vld [vmem:[%s1 + $0xc4] sm:$0xf]
  %v215 = vld [vmem:[%s1 + $0xc8] sm:$0xf]
  %v216 = vld [vmem:[%s1 + $0xcc] sm:$0xf]
  %v217 = vld [vmem:[%s1 + $0xd0] sm:$0xf]
  %v218 = vld [vmem:[%s1 + $0xd4] sm:$0xf]
  %v219 = vld [vmem:[%s1 + $0xd8] sm:$0xf]
  %v220 = vld [vmem:[%s1 + $0xdc] sm:$0xf]
  %v221 = vld [vmem:[%s1 + $0xe0] sm:$0xf]
  %v222 = vld [vmem:[%s1 + $0xe4] sm:$0xf]
  %v223 = vld [vmem:[%s1 + $0xe8] sm:$0xf]
  %v224 = vld [vmem:[%s1 + $0xec] sm:$0xf]
  %v225 = vld [vmem:[%s1 + $0xf0] sm:$0xf]
  %v226 = vld [vmem:[%s1 + $0xf4] sm:$0xf]
  %v227 = vld [vmem:[%s1 + $0xf8] sm:$0xf]
  %v228 = vld [vmem:[%s1 + $0xfc] sm:$0xf]
  %v229 = vld [vmem:[%s1 + $0x100] sm:$0xf]
  %v230 = vld [vmem:[%s1 + $0x104] sm:$0xf]
  %v231 = vld [vmem:[%s1 + $0x108] sm:$0xf]
  %v232 = vld [vmem:[%s1 + $0x10c] sm:$0xf]
  %v233 = vld [vmem:[%s1 + $0x110] sm:$0xf]
  %v234 = vld [vmem:[%s1 + $0x114] sm:$0xf]
  %v235 = vld [vmem:[%s1 + $0x118] sm:$0xf]
  %v236 = vld [vmem:[%s1 + $0x11c] sm:$0xf]
  %v237 = vld [vmem:[%s1 + $0x120] sm:$0xf]
  %v238 = vld [vmem:[%s1 + $0x124] sm:$0xf]
  %v239 = vld [vmem:[%s1 + $0x128] sm:$0xf]
  %v240 = vld [vmem:[%s1 + $0x12c] sm:$0xf]
  %v241 = vld [vmem:[%s1 + $0x130] sm:$0xf]
  %v242 = vld [vmem:[%s1 + $0x134] sm:$0xf]
  %v243 = vld [vmem:[%s1 + $0x138] sm:$0xf]
  %v244 = vld [vmem:[%s1 + $0x13c] sm:$0xf]
  %v245 = vld [vmem:[%s1 + $0x140] sm:$0xf]
  %v246 = vld [vmem:[%s1 + $0x144] sm:$0xf]
  %v247 = vld [vmem:[%s1 + $0x148] sm:$0xf]
  %v248 = vld [vmem:[%s1 + $0x14c] sm:$0xf]
  %v249 = vld [vmem:[%s1 + $0x150] sm:$0xf]
  %v250 = vld [vmem:[%s1 + $0x154] sm:$0xf]
  %v251 = vld [vmem:[%s1 + $0x158] sm:$0xf]
  %v252 = vld [vmem:[%s1 + $0x15c] sm:$0xf]
  %v253 = vld [vmem:[%s1 + $0x160] sm:$0xf]
  %v254 = vld [vmem:[%s1 + $0x164] sm:$0xf]
  %v255 = vld [vmem:[%s1 + $0x168] sm:$0xf]
  %v256 = vld [vmem:[%s1 + $0x16c] sm:$0xf]
  %v257 = vld [vmem:[%s1 + $0x170] sm:$0xf]
  %v258 = vld [vmem:[%s1 + $0x174] sm:$0xf]
  %v259 = vld [vmem:[%s1 + $0x178] sm:$0xf]
  %v260 = vld [vmem:[%s1 + $0x17c] sm:$0xf]
  %v261 = vld [vmem:[%s1 + $0x180] sm:$0xf]
  %v262 = vld [vmem:[%s1 + $0x184] sm:$0xf]
  %v263 = vld [vmem:[%s1 + $0x188] sm:$0xf]
  %v264 = vld [vmem:[%s1 + $0x18c] sm:$0xf]
  %v265 = vld [vmem:[%s1 + $0x190] sm:$0xf]
  %v266 = vld [vmem:[%s1 + $0x194] sm:$0xf]
  %v267 = vld [vmem:[%s1 + $0x198] sm:$0xf]
  %v268 = vld [vmem:[%s1 + $0x19c] sm:$0xf]
  %v269 = vld [vmem:[%s1 + $0x1a0] sm:$0xf]
  %v270 = vld [vmem:[%s1 + $0x1a4] sm:$0xf]
  %v271 = vld [vmem:[%s1 + $0x1a8] sm:$0xf]
  %v272 = vld [vmem:[%s1 + $0x1ac] sm:$0xf]
  %v273 = vld [vmem:[%s1 + $0x1b0] sm:$0xf]
  %v274 = vld [vmem:[%s1 + $0x1b4] sm:$0xf]
  %v275 = vld [vmem:[%s1 + $0x1b8] sm:$0xf]
  %v276 = vld [vmem:[%s1 + $0x1bc] sm:$0xf]
  %v277 = vld [vmem:[%s1 + $0x1c0] sm:$0xf]
  %v278 = vld [vmem:[%s1 + $0x1c4] sm:$0xf]
  %v279 = vld [vmem:[%s1 + $0x1c8] sm:$0xf]
  %v280 = vld [vmem:[%s1 + $0x1cc] sm:$0xf]
  %v281 = vld [vmem:[%s1 + $0x1d0] sm:$0xf]
  %v282 = vld [vmem:[%s1 + $0x1d4] sm:$0xf]
  %v283 = vld [vmem:[%s1 + $0x1d8] sm:$0xf]
  %v284 = vld [vmem:[%s1 + $0x1dc] sm:$0xf]
  %v285 = vld [vmem:[%s1 + $0x1e0] sm:$0xf]
  %v286 = vld [vmem:[%s1 + $0x1e4] sm:$0xf]
  %v287 = vld [vmem:[%s1 + $0x1e8] sm:$0xf]
  %v288 = vld [vmem:[%s1 + $0x1ec] sm:$0xf]
  %v289 = vld [vmem:[%s1 + $0x1f0] sm:$0xf]
  %v290 = vld [vmem:[%s1 + $0x1f4] sm:$0xf]
  %v291 = vld [vmem:[%s1 + $0x1f8] sm:$0xf]
  %v292 = vld [vmem:[%s1 + $0x1fc] sm:$0xf]
  %v293 = vld [vmem:[%s1 + $0x200] sm:$0xf]
  %v294 = vld [vmem:[%s1 + $0x204] sm:$0xf]
  %v295 = vld [vmem:[%s1 + $0x208] sm:$0xf]
  %v296 = vld [vmem:[%s1 + $0x20c] sm:$0xf]
  %v297 = vld [vmem:[%s1 + $0x210] sm:$0xf]
  %v298 = vld [vmem:[%s1 + $0x214] sm:$0xf]
  %v299 = vld [vmem:[%s1 + $0x218] sm:$0xf]
  %v300 = vld [vmem:[%s1 + $0x21c] sm:$0xf]
  %v301 = vld [vmem:[%s1 + $0x220] sm:$0xf]
  %v302 = vld [vmem:[%s1 + $0x224] sm:$0xf]
  %v303 = vld [vmem:[%s1 + $0x228] sm:$0xf]
  %v304 = vld [vmem:[%s1 + $0x22c] sm:$0xf]
  %v305 = vld [vmem:[%s1 + $0x230] sm:$0xf]
  %v306 = vld [vmem:[%s1 + $0x234] sm:$0xf]
  %v307 = vld [vmem:[%s1 + $0x238] sm:$0xf]
  %v308 = vld [vmem:[%s1 + $0x23c] sm:$0xf]
  %v309 = vld [vmem:[%s1 + $0x240] sm:$0xf]
  %v310 = vld [vmem:[%s1 + $0x244] sm:$0xf]
  %v311 = vld [vmem:[%s1 + $0x248] sm:$0xf]
  %v312 = vld [vmem:[%s1 + $0x24c] sm:$0xf]
  %v313 = vld [vmem:[%s1 + $0x250] sm:$0xf]
  %v314 = vld [vmem:[%s1 + $0x254] sm:$0xf]
  %v315 = vld [vmem:[%s1 + $0x258] sm:$0xf]
  %v316 = vld [vmem:[%s1 + $0x25c] sm:$0xf]
  %v317 = vld [vmem:[%s1 + $0x260] sm:$0xf]
  %v318 = vld [vmem:[%s1 + $0x264] sm:$0xf]
  %v319 = vld [vmem:[%s1 + $0x268] sm:$0xf]
  %v320 = vld [vmem:[%s1 + $0x26c] sm:$0xf]
  %v321 = vld [vmem:[%s1 + $0x270] sm:$0xf]
  %v322 = vld [vmem:[%s1 + $0x274] sm:$0xf]
  %v323 = vld [vmem:[%s1 + $0x278] sm:$0xf]
  %v324 = vld [vmem:[%s1 + $0x27c] sm:$0xf]
  %v325 = vld [vmem:[%s1 + $0x280] sm:$0xf]
  %v326 = vld [vmem:[%s1 + $0x284] sm:$0xf]
  %v327 = vld [vmem:[%s1 + $0x288] sm:$0xf]
  %v328 = vld [vmem:[%s1 + $0x28c] sm:$0xf]
  %v329 = vld [vmem:[%s1 + $0x290] sm:$0xf]
  %v330 = vld [vmem:[%s1 + $0x294] sm:$0xf]
  %v331 = vld [vmem:[%s1 + $0x298] sm:$0xf]
  %v332 = vld [vmem:[%s1 + $0x29c] sm:$0xf]
  %v333 = vld [vmem:[%s1 + $0x2a0] sm:$0xf]
  %v334 = vld [vmem:[%s1 + $0x2a4] sm:$0xf]
  %v335 = vld [vmem:[%s1 + $0x2a8] sm:$0xf]
  %v336 = vld [vmem:[%s1 + $0x2ac] sm:$0xf]
  %v337 = vld [vmem:[%s1 + $0x2b0] sm:$0xf]
  %v338 = vld [vmem:[%s1 + $0x2b4] sm:$0xf]
  %v339 = vld [vmem:[%s1 + $0x2b8] sm:$0xf]
  %v340 = vld [vmem:[%s1 + $0x2bc] sm:$0xf]
  %v341 = vld [vmem:[%s1 + $0x2c0] sm:$0xf]
  %v342 = vld [vmem:[%s1 + $0x2c4] sm:$0xf]
  %v343 = vld [vmem:[%s1 + $0x2c8] sm:$0xf]
  %v344 = vld [vmem:[%s1 + $0x2cc] sm:$0xf]
  %v345 = vld [vmem:[%s1 + $0x2d0] sm:$0xf]
  %v346 = vld [vmem:[%s1 + $0x2d4] sm:$0xf]
  %v347 = vld [vmem:[%s1 + $0x2d8] sm:$0xf]
  %v348 = vld [vmem:[%s1 + $0x2dc] sm:$0xf]
  %v349 = vld [vmem:[%s1 + $0x2e0] sm:$0xf]
  %v350 = vld [vmem:[%s1 + $0x2e4] sm:$0xf]
  %v351 = vld [vmem:[%s1 + $0x2e8] sm:$0xf]
  %v352 = vld [vmem:[%s1 + $0x2ec] sm:$0xf]
  %v353 = vld [vmem:[%s1 + $0x2f0] sm:$0xf]
  %v354 = vld [vmem:[%s1 + $0x2f4] sm:$0xf]
  %v355 = vld [vmem:[%s1 + $0x2f8] sm:$0xf]
  %v356 = vld [vmem:[%s1 + $0x2fc] sm:$0xf]
  %v357 = vld [vmem:[%s1 + $0x300] sm:$0xf]
  %v358 = vld [vmem:[%s1 + $0x304] sm:$0xf]
  %v359 = vld [vmem:[%s1 + $0x308] sm:$0xf]
  %v360 = vld [vmem:[%s1 + $0x30c] sm:$0xf]
  %v361 = vld [vmem:[%s1 + $0x310] sm:$0xf]
  %v362 = vld [vmem:[%s1 + $0x314] sm:$0xf]
  %v363 = vld [vmem:[%s1 + $0x318] sm:$0xf]
  %v364 = vld [vmem:[%s1 + $0x31c] sm:$0xf]
  %v365 = vld [vmem:[%s1 + $0x320] sm:$0xf]
  %v366 = vld [vmem:[%s1 + $0x324] sm:$0xf]
  %v367 = vld [vmem:[%s1 + $0x328] sm:$0xf]
  %v368 = vld [vmem:[%s1 + $0x32c] sm:$0xf]
  %v369 = vld [vmem:[%s1 + $0x330] sm:$0xf]
  %v370 = vld [vmem:[%s1 + $0x334] sm:$0xf]
  %v371 = vld [vmem:[%s1 + $0x338] sm:$0xf]
  %v372 = vld [vmem:[%s1 + $0x33c] sm:$0xf]
  %v373 = vld [vmem:[%s1 + $0x340] sm:$0xf]
  %v374 = vld [vmem:[%s1 + $0x344] sm:$0xf]
  %v375 = vld [vmem:[%s1 + $0x348] sm:$0xf]
  %v376 = vld [vmem:[%s1 + $0x34c] sm:$0xf]
  %v377 = vld [vmem:[%s1 + $0x350] sm:$0xf]
  %v378 = vld [vmem:[%s1 + $0x354] sm:$0xf]
  %v379 = vld [vmem:[%s1 + $0x358] sm:$0xf]
  %v380 = vld [vmem:[%s1 + $0x35c] sm:$0xf]
  %v381 = vld [vmem:[%s1 + $0x360] sm:$0xf]
  %v382 = vld [vmem:[%s1 + $0x364] sm:$0xf]
  %v383 = vld [vmem:[%s1 + $0x368] sm:$0xf]
  %v384 = vld [vmem:[%s1 + $0x36c] sm:$0xf]
  %v385 = vld [vmem:[%s1 + $0x370] sm:$0xf]
  %v386 = vld [vmem:[%s1 + $0x374] sm:$0xf]
  %v387 = vld [vmem:[%s1 + $0x378] sm:$0xf]
  %v388 = vld [vmem:[%s1 + $0x37c] sm:$0xf]
  %v389 = vld [vmem:[%s1 + $0x380] sm:$0xf]
  %v390 = vld [vmem:[%s1 + $0x384] sm:$0xf]
  %v391 = vld [vmem:[%s1 + $0x388] sm:$0xf]
  %v392 = vld [vmem:[%s1 + $0x38c] sm:$0xf]
  %v393 = vld [vmem:[%s1 + $0x390] sm:$0xf]
  %v394 = vld [vmem:[%s1 + $0x394] sm:$0xf]
  %v395 = vld [vmem:[%s1 + $0x398] sm:$0xf]
  %v396 = vld [vmem:[%s1 + $0x39c] sm:$0xf]
  %v397 = vld [vmem:[%s1 + $0x3a0] sm:$0xf]
  %v398 = vld [vmem:[%s1 + $0x3a4] sm:$0xf]
  %v399 = vld [vmem:[%s1 + $0x3a8] sm:$0xf]
  %v400 = vld [vmem:[%s1 + $0x3ac] sm:$0xf]
  %v401 = vld [vmem:[%s1 + $0x3b0] sm:$0xf]
  %v402 = vld [vmem:[%s1 + $0x3b4] sm:$0xf]
  %v403 = vld [vmem:[%s1 + $0x3b8] sm:$0xf]
  %v404 = vld [vmem:[%s1 + $0x3bc] sm:$0xf]
  %v405 = vld [vmem:[%s1 + $0x3c0] sm:$0xf]
  %v406 = vld [vmem:[%s1 + $0x3c4] sm:$0xf]
  %v407 = vld [vmem:[%s1 + $0x3c8] sm:$0xf]
  %v408 = vld [vmem:[%s1 + $0x3cc] sm:$0xf]
  %v409 = vld [vmem:[%s1 + $0x3d0] sm:$0xf]
  %v410 = vld [vmem:[%s1 + $0x3d4] sm:$0xf]
  %v411 = vld [vmem:[%s1 + $0x3d8] sm:$0xf]
  %v412 = vld [vmem:[%s1 + $0x3dc] sm:$0xf]
  %v413 = vld [vmem:[%s1 + $0x3e0] sm:$0xf]
  %v414 = vld [vmem:[%s1 + $0x3e4] sm:$0xf]
  %v415 = vld [vmem:[%s1 + $0x3e8] sm:$0xf]
  %v416 = vld [vmem:[%s1 + $0x3ec] sm:$0xf]
  %v417 = vld [vmem:[%s1 + $0x3f0] sm:$0xf]
  %v418 = vld [vmem:[%s1 + $0x3f4] sm:$0xf]
  %v419 = vld [vmem:[%s1 + $0x3f8] sm:$0xf]
  %v420 = vld [vmem:[%s1 + $0x3fc] sm:$0xf]
  %v421 = vld [vmem:[%s1 + $0x400] sm:$0xf]
  %v422 = vld [vmem:[%s1 + $0x404] sm:$0xf]
  %v423 = vld [vmem:[%s1 + $0x408] sm:$0xf]
  %v424 = vld [vmem:[%s1 + $0x40c] sm:$0xf]
  %v425 = vld [vmem:[%s1 + $0x410] sm:$0xf]
  %v426 = vld [vmem:[%s1 + $0x414] sm:$0xf]
  %v427 = vld [vmem:[%s1 + $0x418] sm:$0xf]
  %v428 = vld [vmem:[%s1 + $0x41c] sm:$0xf]
  %v429 = vld [vmem:[%s1 + $0x420] sm:$0xf]
  %v430 = vld [vmem:[%s1 + $0x424] sm:$0xf]
  %v431 = vld [vmem:[%s1 + $0x428] sm:$0xf]
  %v432 = vld [vmem:[%s1 + $0x42c] sm:$0xf]
  %v433 = vld [vmem:[%s1 + $0x430] sm:$0xf]
  %v434 = vld [vmem:[%s1 + $0x434] sm:$0xf]
  %v435 = vld [vmem:[%s1 + $0x438] sm:$0xf]
  %v436 = vld [vmem:[%s1 + $0x43c] sm:$0xf]
  %v437 = vld [vmem:[%s1 + $0x440] sm:$0xf]
  %v438 = vld [vmem:[%s1 + $0x444] sm:$0xf]
  %v439 = vld [vmem:[%s1 + $0x448] sm:$0xf]
  %v440 = vld [vmem:[%s1 + $0x44c] sm:$0xf]
  %v441 = vld [vmem:[%s1 + $0x450] sm:$0xf]
  %v442 = vld [vmem:[%s1 + $0x454] sm:$0xf]
  %v443 = vld [vmem:[%s1 + $0x458] sm:$0xf]
  %v444 = vld [vmem:[%s1 + $0x45c] sm:$0xf]
  %v445 = vld [vmem:[%s1 + $0x460] sm:$0xf]
  %v446 = vld [vmem:[%s1 + $0x464] sm:$0xf]
  %v447 = vld [vmem:[%s1 + $0x468] sm:$0xf]
  %v448 = vld [vmem:[%s1 + $0x46c] sm:$0xf]
  %v449 = vld [vmem:[%s1 + $0x470] sm:$0xf]
  %v450 = vld [vmem:[%s1 + $0x474] sm:$0xf]
  %v451 = vld [vmem:[%s1 + $0x478] sm:$0xf]
  %v452 = vld [vmem:[%s1 + $0x47c] sm:$0xf]
  %v453 = vld [vmem:[%s1 + $0x480] sm:$0xf]
  %v454 = vld [vmem:[%s1 + $0x484] sm:$0xf]
  %v455 = vld [vmem:[%s1 + $0x488] sm:$0xf]
  %v456 = vld [vmem:[%s1 + $0x48c] sm:$0xf]
  %v457 = vld [vmem:[%s1 + $0x490] sm:$0xf]
  %v458 = vld [vmem:[%s1 + $0x494] sm:$0xf]
  %v459 = vld [vmem:[%s1 + $0x498] sm:$0xf]
  %v460 = vld [vmem:[%s1 + $0x49c] sm:$0xf]
  %v461 = vld [vmem:[%s1 + $0x4a0] sm:$0xf]
  %v462 = vld [vmem:[%s1 + $0x4a4] sm:$0xf]
  %v463 = vld [vmem:[%s1 + $0x4a8] sm:$0xf]
  %v464 = vld [vmem:[%s1 + $0x4ac] sm:$0xf]
  %v465 = vld [vmem:[%s1 + $0x4b0] sm:$0xf]
  %v466 = vld [vmem:[%s1 + $0x4b4] sm:$0xf]
  %v467 = vld [vmem:[%s1 + $0x4b8] sm:$0xf]
  %v468 = vld [vmem:[%s1 + $0x4bc] sm:$0xf]
  %v469 = vld [vmem:[%s1 + $0x4c0] sm:$0xf]
  %v470 = vld [vmem:[%s1 + $0x4c4] sm:$0xf]
  %v471 = vld [vmem:[%s1 + $0x4c8] sm:$0xf]
  %v472 = vld [vmem:[%s1 + $0x4cc] sm:$0xf]
  %v473 = vld [vmem:[%s1 + $0x4d0] sm:$0xf]
  %v474 = vld [vmem:[%s1 + $0x4d4] sm:$0xf]
  %v475 = vld [vmem:[%s1 + $0x4d8] sm:$0xf]
  %v476 = vld [vmem:[%s1 + $0x4dc] sm:$0xf]
  %v477 = vld [vmem:[%s1 + $0x4e0] sm:$0xf]
  %v478 = vld [vmem:[%s1 + $0x4e4] sm:$0xf]
  %v479 = vld [vmem:[%s1 + $0x4e8] sm:$0xf]
  %v480 = vld [vmem:[%s1 + $0x4ec] sm:$0xf]
  %v481 = vld [vmem:[%s1 + $0x4f0] sm:$0xf]
  %v482 = vld [vmem:[%s1 + $0x4f4] sm:$0xf]
  %v483 = vld [vmem:[%s1 + $0x4f8] sm:$0xf]
  %v484 = vld [vmem:[%s1 + $0x4fc] sm:$0xf]
  %v485 = vld [vmem:[%s1 + $0x500] sm:$0xf]
  %v486 = vld [vmem:[%s1 + $0x504] sm:$0xf]
  %v487 = vld [vmem:[%s1 + $0x508] sm:$0xf]
  %v488 = vld [vmem:[%s1 + $0x50c] sm:$0xf]
  %v489 = vld [vmem:[%s1 + $0x510] sm:$0xf]
  %v490 = vld [vmem:[%s1 + $0x514] sm:$0xf]
  %v491 = vld [vmem:[%s1 + $0x518] sm:$0xf]
  %v492 = vld [vmem:[%s1 + $0x51c] sm:$0xf]
  %v493 = vld [vmem:[%s1 + $0x520] sm:$0xf]
  %v494 = vld [vmem:[%s1 + $0x524] sm:$0xf]
  %v495 = vld [vmem:[%s1 + $0x528] sm:$0xf]
  %v496 = vld [vmem:[%s1 + $0x52c] sm:$0xf]
  %v497 = vld [vmem:[%s1 + $0x530] sm:$0xf]
  %v498 = vld [vmem:[%s1 + $0x534] sm:$0xf]
  %v499 = vld [vmem:[%s1 + $0x538] sm:$0xf]
  %v500 = vld [vmem:[%s1 + $0x53c] sm:$0xf]
  %v501 = vld [vmem:[%s1 + $0x540] sm:$0xf]
  %v502 = vld [vmem:[%s1 + $0x544] sm:$0xf]
  %v503 = vld [vmem:[%s1 + $0x548] sm:$0xf]
  %v504 = vld [vmem:[%s1 + $0x54c] sm:$0xf]
  %v505 = vld [vmem:[%s1 + $0x550] sm:$0xf]
  %v506 = vld [vmem:[%s1 + $0x554] sm:$0xf]
  %v507 = vld [vmem:[%s1 + $0x558] sm:$0xf]
  %v508 = vld [vmem:[%s1 + $0x55c] sm:$0xf]
  %v509 = vld [vmem:[%s1 + $0x560] sm:$0xf]
  %v510 = vld [vmem:[%s1 + $0x564] sm:$0xf]
  %v511 = vld [vmem:[%s1 + $0x568] sm:$0xf]
  %v512 = vld [vmem:[%s1 + $0x56c] sm:$0xf]
  %v513 = vld [vmem:[%s1 + $0x570] sm:$0xf]
  %v514 = vld [vmem:[%s1 + $0x574] sm:$0xf]
  %v515 = vld [vmem:[%s1 + $0x578] sm:$0xf]
  %v516 = vld [vmem:[%s1 + $0x57c] sm:$0xf]
  %v517 = vld [vmem:[%s1 + $0x580] sm:$0xf]
  %v518 = vld [vmem:[%s1 + $0x584] sm:$0xf]
  %v519 = vld [vmem:[%s1 + $0x588] sm:$0xf]
  %v520 = vld [vmem:[%s1 + $0x58c] sm:$0xf]
  %v521 = vld [vmem:[%s1 + $0x590] sm:$0xf]
  %v522 = vld [vmem:[%s1 + $0x594] sm:$0xf]
  %v523 = vld [vmem:[%s1 + $0x598] sm:$0xf]
  %v524 = vld [vmem:[%s1 + $0x59c] sm:$0xf]
  %v525 = vld [vmem:[%s1 + $0x5a0] sm:$0xf]
  %v526 = vld [vmem:[%s1 + $0x5a4] sm:$0xf]
  %v527 = vld [vmem:[%s1 + $0x5a8] sm:$0xf]
  %v528 = vld [vmem:[%s1 + $0x5ac] sm:$0xf]
  %v529 = vld [vmem:[%s1 + $0x5b0] sm:$0xf]
  %v530 = vld [vmem:[%s1 + $0x5b4] sm:$0xf]
  %v531 = vld [vmem:[%s1 + $0x5b8] sm:$0xf]
  %v532 = vld [vmem:[%s1 + $0x5bc] sm:$0xf]
  %v533 = vld [vmem:[%s1 + $0x5c0] sm:$0xf]
  %v534 = vld [vmem:[%s1 + $0x5c4] sm:$0xf]
  %v535 = vld [vmem:[%s1 + $0x5c8] sm:$0xf]
  %v536 = vld [vmem:[%s1 + $0x5cc] sm:$0xf]
  %v537 = vld [vmem:[%s1 + $0x5d0] sm:$0xf]
  %v538 = vld [vmem:[%s1 + $0x5d4] sm:$0xf]
  %v539 = vld [vmem:[%s1 + $0x5d8] sm:$0xf]
  %v540 = vld [vmem:[%s1 + $0x5dc] sm:$0xf]
  %v541 = vld [vmem:[%s1 + $0x5e0] sm:$0xf]
  %v542 = vld [vmem:[%s1 + $0x5e4] sm:$0xf]
  %v543 = vld [vmem:[%s1 + $0x5e8] sm:$0xf]
  %v544 = vld [vmem:[%s1 + $0x5ec] sm:$0xf]
  %v545 = vld [vmem:[%s1 + $0x5f0] sm:$0xf]
  %v546 = vld [vmem:[%s1 + $0x5f4] sm:$0xf]
  %v547 = vld [vmem:[%s1 + $0x5f8] sm:$0xf]
  %v548 = vld [vmem:[%s1 + $0x5fc] sm:$0xf]
  %v549 = vld [vmem:[%s1 + $0x600] sm:$0xf]
  %v550 = vld [vmem:[%s1 + $0x604] sm:$0xf]
  %v551 = vld [vmem:[%s1 + $0x608] sm:$0xf]
  %v552 = vld [vmem:[%s1 + $0x60c] sm:$0xf]
  %v553 = vld [vmem:[%s1 + $0x610] sm:$0xf]
  %v554 = vld [vmem:[%s1 + $0x614] sm:$0xf]
  %v555 = vld [vmem:[%s1 + $0x618] sm:$0xf]
  %v556 = vld [vmem:[%s1 + $0x61c] sm:$0xf]
  %v557 = vld [vmem:[%s1 + $0x620] sm:$0xf]
  %v558 = vld [vmem:[%s1 + $0x624] sm:$0xf]
  %v559 = vld [vmem:[%s1 + $0x628] sm:$0xf]
  %v560 = vld [vmem:[%s1 + $0x62c] sm:$0xf]
  %v561 = vld [vmem:[%s1 + $0x630] sm:$0xf]
  %v562 = vld [vmem:[%s1 + $0x634] sm:$0xf]
  %v563 = vld [vmem:[%s1 + $0x638] sm:$0xf]
  %v564 = vld [vmem:[%s1 + $0x63c] sm:$0xf]
  %v565 = vld [vmem:[%s1 + $0x640] sm:$0xf]
  %v566 = vld [vmem:[%s1 + $0x644] sm:$0xf]
  %v567 = vld [vmem:[%s1 + $0x648] sm:$0xf]
  %v568 = vld [vmem:[%s1 + $0x64c] sm:$0xf]
  %v569 = vld [vmem:[%s1 + $0x650] sm:$0xf]
  %v570 = vld [vmem:[%s1 + $0x654] sm:$0xf]
  %v571 = vld [vmem:[%s1 + $0x658] sm:$0xf]
  %v572 = vld [vmem:[%s1 + $0x65c] sm:$0xf]
  %v573 = vld [vmem:[%s1 + $0x660] sm:$0xf]
  %v574 = vld [vmem:[%s1 + $0x664] sm:$0xf]
  %v575 = vld [vmem:[%s1 + $0x668] sm:$0xf]
  %v576 = vld [vmem:[%s1 + $0x66c] sm:$0xf]
  %v577 = vld [vmem:[%s1 + $0x670] sm:$0xf]
  %v578 = vld [vmem:[%s1 + $0x674] sm:$0xf]
  %v579 = vld [vmem:[%s1 + $0x678] sm:$0xf]
  %v580 = vld [vmem:[%s1 + $0x67c] sm:$0xf]
  %v581 = vld [vmem:[%s1 + $0x680] sm:$0xf]
  %v582 = vld [vmem:[%s1 + $0x684] sm:$0xf]
  %v583 = vld [vmem:[%s1 + $0x688] sm:$0xf]
  %v584 = vld [vmem:[%s1 + $0x68c] sm:$0xf]
  %v585 = vld [vmem:[%s1 + $0x690] sm:$0xf]
  %v586 = vld [vmem:[%s1 + $0x694] sm:$0xf]
  %v587 = vld [vmem:[%s1 + $0x698] sm:$0xf]
  %v588 = vld [vmem:[%s1 + $0x69c] sm:$0xf]
  %v589 = vld [vmem:[%s1 + $0x6a0] sm:$0xf]
  %v590 = vld [vmem:[%s1 + $0x6a4] sm:$0xf]
  %v591 = vld [vmem:[%s1 + $0x6a8] sm:$0xf]
  %v592 = vld [vmem:[%s1 + $0x6ac] sm:$0xf]
  %v593 = vld [vmem:[%s1 + $0x6b0] sm:$0xf]
  %v594 = vld [vmem:[%s1 + $0x6b4] sm:$0xf]
  %v595 = vld [vmem:[%s1 + $0x6b8] sm:$0xf]
  %v596 = vld [vmem:[%s1 + $0x6bc] sm:$0xf]
  %v597 = vld [vmem:[%s1 + $0x6c0] sm:$0xf]
  %v598 = vld [vmem:[%s1 + $0x6c4] sm:$0xf]
  %v599 = vld [vmem:[%s1 + $0x6c8] sm:$0xf]
  %v600 = vld [vmem:[%s1 + $0x6cc] sm:$0xf]
  %v601 = vld [vmem:[%s1 + $0x6d0] sm:$0xf]
  %v602 = vld [vmem:[%s1 + $0x6d4] sm:$0xf]
  %v603 = vld [vmem:[%s1 + $0x6d8] sm:$0xf]
  %v604 = vld [vmem:[%s1 + $0x6dc] sm:$0xf]
  %v605 = vld [vmem:[%s1 + $0x6e0] sm:$0xf]
  %v606 = vld [vmem:[%s1 + $0x6e4] sm:$0xf]
  %v607 = vld [vmem:[%s1 + $0x6e8] sm:$0xf]
  %v608 = vld [vmem:[%s1 + $0x6ec] sm:$0xf]
  %v609 = vld [vmem:[%s1 + $0x6f0] sm:$0xf]
  %v610 = vld [vmem:[%s1 + $0x6f4] sm:$0xf]
  %v611 = vld [vmem:[%s1 + $0x6f8] sm:$0xf]
  %v612 = vld [vmem:[%s1 + $0x6fc] sm:$0xf]
  %v613 = vld [vmem:[%s1 + $0x700] sm:$0xf]
  %v614 = vld [vmem:[%s1 + $0x704] sm:$0xf]
  %v615 = vld [vmem:[%s1 + $0x708] sm:$0xf]
  %v616 = vld [vmem:[%s1 + $0x70c] sm:$0xf]
  %v617 = vld [vmem:[%s1 + $0x710] sm:$0xf]
  %v618 = vld [vmem:[%s1 + $0x714] sm:$0xf]
  %v619 = vld [vmem:[%s1 + $0x718] sm:$0xf]
  %v620 = vld [vmem:[%s1 + $0x71c] sm:$0xf]
  %v621 = vld [vmem:[%s1 + $0x720] sm:$0xf]
  %v622 = vld [vmem:[%s1 + $0x724] sm:$0xf]
  %v623 = vld [vmem:[%s1 + $0x728] sm:$0xf]
  %v624 = vld [vmem:[%s1 + $0x72c] sm:$0xf]
  %v625 = vld [vmem:[%s1 + $0x730] sm:$0xf]
  %v626 = vld [vmem:[%s1 + $0x734] sm:$0xf]
  %v627 = vld [vmem:[%s1 + $0x738] sm:$0xf]
  %v628 = vld [vmem:[%s1 + $0x73c] sm:$0xf]
  %v629 = vld [vmem:[%s1 + $0x740] sm:$0xf]
  %v630 = vld [vmem:[%s1 + $0x744] sm:$0xf]
  %v631 = vld [vmem:[%s1 + $0x748] sm:$0xf]
  %v632 = vld [vmem:[%s1 + $0x74c] sm:$0xf]
  %v633 = vld [vmem:[%s1 + $0x750] sm:$0xf]
  %v634 = vld [vmem:[%s1 + $0x754] sm:$0xf]
  %v635 = vld [vmem:[%s1 + $0x758] sm:$0xf]
  %v636 = vld [vmem:[%s1 + $0x75c] sm:$0xf]
  %v637 = vld [vmem:[%s1 + $0x760] sm:$0xf]
  %v638 = vld [vmem:[%s1 + $0x764] sm:$0xf]
  %v639 = vld [vmem:[%s1 + $0x768] sm:$0xf]
  %v640 = vld [vmem:[%s1 + $0x76c] sm:$0xf]
  %v641 = vld [vmem:[%s1 + $0x770] sm:$0xf]
  %v642 = vld [vmem:[%s1 + $0x774] sm:$0xf]
  %v643 = vld [vmem:[%s1 + $0x778] sm:$0xf]
  %v644 = vld [vmem:[%s1 + $0x77c] sm:$0xf]
  %v645 = vld [vmem:[%s1 + $0x780] sm:$0xf]
  %v646 = vld [vmem:[%s1 + $0x784] sm:$0xf]
  %v647 = vld [vmem:[%s1 + $0x788] sm:$0xf]
  %v648 = vld [vmem:[%s1 + $0x78c] sm:$0xf]
  %v649 = vld [vmem:[%s1 + $0x790] sm:$0xf]
  %v650 = vld [vmem:[%s1 + $0x794] sm:$0xf]
  %v651 = vld [vmem:[%s1 + $0x798] sm:$0xf]
  %v652 = vld [vmem:[%s1 + $0x79c] sm:$0xf]
  %v653 = vld [vmem:[%s1 + $0x7a0] sm:$0xf]
  %v654 = vld [vmem:[%s1 + $0x7a4] sm:$0xf]
  %v655 = vld [vmem:[%s1 + $0x7a8] sm:$0xf]
  %v656 = vld [vmem:[%s1 + $0x7ac] sm:$0xf]
  %v657 = vld [vmem:[%s1 + $0x7b0] sm:$0xf]
  %v658 = vld [vmem:[%s1 + $0x7b4] sm:$0xf]
  %v659 = vld [vmem:[%s1 + $0x7b8] sm:$0xf]
  %v660 = vld [vmem:[%s1 + $0x7bc] sm:$0xf]
  %v661 = vld [vmem:[%s1 + $0x7c0] sm:$0xf]
  %v662 = vld [vmem:[%s1 + $0x7c4] sm:$0xf]
  %v663 = vld [vmem:[%s1 + $0x7c8] sm:$0xf]
  %v664 = vld [vmem:[%s1 + $0x7cc] sm:$0xf]
  %v665 = vld [vmem:[%s1 + $0x7d0] sm:$0xf]
  %v666 = vld [vmem:[%s1 + $0x7d4] sm:$0xf]
  %v667 = vld [vmem:[%s1 + $0x7d8] sm:$0xf]
  %v668 = vld [vmem:[%s1 + $0x7dc] sm:$0xf]
  %v669 = vld [vmem:[%s1 + $0x7e0] sm:$0xf]
  %v670 = vld [vmem:[%s1 + $0x7e4] sm:$0xf]
  %v671 = vld [vmem:[%s1 + $0x7e8] sm:$0xf]
  %v672 = vld [vmem:[%s1 + $0x7ec] sm:$0xf]
  %v673 = vld [vmem:[%s1 + $0x7f0] sm:$0xf]
  %v674 = vld [vmem:[%s1 + $0x7f4] sm:$0xf]
  %v675 = vld [vmem:[%s1 + $0x7f8] sm:$0xf]
  %v676 = vld [vmem:[%s1 + $0x7fc] sm:$0xf]
  %v677 = vld [vmem:[%s2] sm:$0x1]
  %v679 = vlaneseq
  %v680 = vshrl.u32 %v679, 7
  %v681 = vsub.s32 0, %v680
  %v682 = vrot.slane %v677, %v681
  %v828 = vunpack.c.l.b16 %v21
  %v829 = vunpack.c.h.b16 %v21
  %v830 = vunpack.c.l.b16 %v22
  %v831 = vunpack.c.h.b16 %v22
  %v832 = vunpack.c.l.b16 %v23
  %v833 = vunpack.c.h.b16 %v23
  %v834 = vunpack.c.l.b16 %v24
  %v835 = vunpack.c.h.b16 %v24
  %v836 = vunpack.c.l.b16 %v25
  %v837 = vunpack.c.h.b16 %v25
  %v838 = vunpack.c.l.b16 %v26
  %v839 = vunpack.c.h.b16 %v26
  %v840 = vunpack.c.l.b16 %v27
  %v841 = vunpack.c.h.b16 %v27
  %v842 = vunpack.c.l.b16 %v28
  %v843 = vunpack.c.h.b16 %v28
  %v844 = vunpack.c.l.b16 %v29
  %v845 = vunpack.c.h.b16 %v29
  %v846 = vunpack.c.l.b16 %v30
  %v847 = vunpack.c.h.b16 %v30
  %v848 = vunpack.c.l.b16 %v31
  %v849 = vunpack.c.h.b16 %v31
  %v850 = vunpack.c.l.b16 %v32
  %v851 = vunpack.c.h.b16 %v32
  %v852 = vunpack.c.l.b16 %v33
  %v853 = vunpack.c.h.b16 %v33
  %v854 = vunpack.c.l.b16 %v34
  %v855 = vunpack.c.h.b16 %v34
  %v856 = vunpack.c.l.b16 %v35
  %v857 = vunpack.c.h.b16 %v35
  %v858 = vunpack.c.l.b16 %v36
  %v859 = vunpack.c.h.b16 %v36
  %v860 = vunpack.c.l.b16 %v37
  %v861 = vunpack.c.h.b16 %v37
  %v862 = vunpack.c.l.b16 %v38
  %v863 = vunpack.c.h.b16 %v38
  %v864 = vunpack.c.l.b16 %v39
  %v865 = vunpack.c.h.b16 %v39
  %v866 = vunpack.c.l.b16 %v40
  %v867 = vunpack.c.h.b16 %v40
  %v868 = vunpack.c.l.b16 %v41
  %v869 = vunpack.c.h.b16 %v41
  %v870 = vunpack.c.l.b16 %v42
  %v871 = vunpack.c.h.b16 %v42
  %v872 = vunpack.c.l.b16 %v43
  %v873 = vunpack.c.h.b16 %v43
  %v874 = vunpack.c.l.b16 %v44
  %v875 = vunpack.c.h.b16 %v44
  %v876 = vunpack.c.l.b16 %v45
  %v877 = vunpack.c.h.b16 %v45
  %v878 = vunpack.c.l.b16 %v46
  %v879 = vunpack.c.h.b16 %v46
  %v880 = vunpack.c.l.b16 %v47
  %v881 = vunpack.c.h.b16 %v47
  %v882 = vunpack.c.l.b16 %v48
  %v883 = vunpack.c.h.b16 %v48
  %v884 = vunpack.c.l.b16 %v49
  %v885 = vunpack.c.h.b16 %v49
  %v886 = vunpack.c.l.b16 %v50
  %v887 = vunpack.c.h.b16 %v50
  %v888 = vunpack.c.l.b16 %v51
  %v889 = vunpack.c.h.b16 %v51
  %v890 = vunpack.c.l.b16 %v52
  %v891 = vunpack.c.h.b16 %v52
  %v892 = vunpack.c.l.b16 %v53
  %v893 = vunpack.c.h.b16 %v53
  %v894 = vunpack.c.l.b16 %v54
  %v895 = vunpack.c.h.b16 %v54
  %v896 = vunpack.c.l.b16 %v55
  %v897 = vunpack.c.h.b16 %v55
  %v898 = vunpack.c.l.b16 %v56
  %v899 = vunpack.c.h.b16 %v56
  %v900 = vunpack.c.l.b16 %v57
  %v901 = vunpack.c.h.b16 %v57
  %v902 = vunpack.c.l.b16 %v58
  %v903 = vunpack.c.h.b16 %v58
  %v904 = vunpack.c.l.b16 %v59
  %v905 = vunpack.c.h.b16 %v59
  %v906 = vunpack.c.l.b16 %v60
  %v907 = vunpack.c.h.b16 %v60
  %v908 = vunpack.c.l.b16 %v61
  %v909 = vunpack.c.h.b16 %v61
  %v910 = vunpack.c.l.b16 %v62
  %v911 = vunpack.c.h.b16 %v62
  %v912 = vunpack.c.l.b16 %v63
  %v913 = vunpack.c.h.b16 %v63
  %v914 = vunpack.c.l.b16 %v64
  %v915 = vunpack.c.h.b16 %v64
  %v916 = vunpack.c.l.b16 %v65
  %v917 = vunpack.c.h.b16 %v65
  %v918 = vunpack.c.l.b16 %v66
  %v919 = vunpack.c.h.b16 %v66
  %v920 = vunpack.c.l.b16 %v67
  %v921 = vunpack.c.h.b16 %v67
  %v922 = vunpack.c.l.b16 %v68
  %v923 = vunpack.c.h.b16 %v68
  %v924 = vunpack.c.l.b16 %v69
  %v925 = vunpack.c.h.b16 %v69
  %v926 = vunpack.c.l.b16 %v70
  %v927 = vunpack.c.h.b16 %v70
  %v928 = vunpack.c.l.b16 %v71
  %v929 = vunpack.c.h.b16 %v71
  %v930 = vunpack.c.l.b16 %v72
  %v931 = vunpack.c.h.b16 %v72
  %v932 = vunpack.c.l.b16 %v73
  %v933 = vunpack.c.h.b16 %v73
  %v934 = vunpack.c.l.b16 %v74
  %v935 = vunpack.c.h.b16 %v74
  %v936 = vunpack.c.l.b16 %v75
  %v937 = vunpack.c.h.b16 %v75
  %v938 = vunpack.c.l.b16 %v76
  %v939 = vunpack.c.h.b16 %v76
  %v940 = vunpack.c.l.b16 %v77
  %v941 = vunpack.c.h.b16 %v77
  %v942 = vunpack.c.l.b16 %v78
  %v943 = vunpack.c.h.b16 %v78
  %v944 = vunpack.c.l.b16 %v79
  %v945 = vunpack.c.h.b16 %v79
  %v946 = vunpack.c.l.b16 %v80
  %v947 = vunpack.c.h.b16 %v80
  %v948 = vunpack.c.l.b16 %v81
  %v949 = vunpack.c.h.b16 %v81
  %v950 = vunpack.c.l.b16 %v82
  %v951 = vunpack.c.h.b16 %v82
  %v952 = vunpack.c.l.b16 %v83
  %v953 = vunpack.c.h.b16 %v83
  %v954 = vunpack.c.l.b16 %v84
  %v955 = vunpack.c.h.b16 %v84
  %v956 = vunpack.c.l.b16 %v85
  %v957 = vunpack.c.h.b16 %v85
  %v958 = vunpack.c.l.b16 %v86
  %v959 = vunpack.c.h.b16 %v86
  %v960 = vunpack.c.l.b16 %v87
  %v961 = vunpack.c.h.b16 %v87
  %v962 = vunpack.c.l.b16 %v88
  %v963 = vunpack.c.h.b16 %v88
  %v964 = vunpack.c.l.b16 %v89
  %v965 = vunpack.c.h.b16 %v89
  %v966 = vunpack.c.l.b16 %v90
  %v967 = vunpack.c.h.b16 %v90
  %v968 = vunpack.c.l.b16 %v91
  %v969 = vunpack.c.h.b16 %v91
  %v970 = vunpack.c.l.b16 %v92
  %v971 = vunpack.c.h.b16 %v92
  %v972 = vunpack.c.l.b16 %v93
  %v973 = vunpack.c.h.b16 %v93
  %v974 = vunpack.c.l.b16 %v94
  %v975 = vunpack.c.h.b16 %v94
  %v976 = vunpack.c.l.b16 %v95
  %v977 = vunpack.c.h.b16 %v95
  %v978 = vunpack.c.l.b16 %v96
  %v979 = vunpack.c.h.b16 %v96
  %v980 = vunpack.c.l.b16 %v97
  %v981 = vunpack.c.h.b16 %v97
  %v982 = vunpack.c.l.b16 %v98
  %v983 = vunpack.c.h.b16 %v98
  %v984 = vunpack.c.l.b16 %v99
  %v985 = vunpack.c.h.b16 %v99
  %v986 = vunpack.c.l.b16 %v100
  %v987 = vunpack.c.h.b16 %v100
  %v988 = vunpack.c.l.b16 %v101
  %v989 = vunpack.c.h.b16 %v101
  %v990 = vunpack.c.l.b16 %v102
  %v991 = vunpack.c.h.b16 %v102
  %v992 = vunpack.c.l.b16 %v103
  %v993 = vunpack.c.h.b16 %v103
  %v994 = vunpack.c.l.b16 %v104
  %v995 = vunpack.c.h.b16 %v104
  %v996 = vunpack.c.l.b16 %v105
  %v997 = vunpack.c.h.b16 %v105
  %v998 = vunpack.c.l.b16 %v106
  %v999 = vunpack.c.h.b16 %v106
  %v1000 = vunpack.c.l.b16 %v107
  %v1001 = vunpack.c.h.b16 %v107
  %v1002 = vunpack.c.l.b16 %v108
  %v1003 = vunpack.c.h.b16 %v108
  %v1004 = vunpack.c.l.b16 %v109
  %v1005 = vunpack.c.h.b16 %v109
  %v1006 = vunpack.c.l.b16 %v110
  %v1007 = vunpack.c.h.b16 %v110
  %v1008 = vunpack.c.l.b16 %v111
  %v1009 = vunpack.c.h.b16 %v111
  %v1010 = vunpack.c.l.b16 %v112
  %v1011 = vunpack.c.h.b16 %v112
  %v1012 = vunpack.c.l.b16 %v113
  %v1013 = vunpack.c.h.b16 %v113
  %v1014 = vunpack.c.l.b16 %v114
  %v1015 = vunpack.c.h.b16 %v114
  %v1016 = vunpack.c.l.b16 %v115
  %v1017 = vunpack.c.h.b16 %v115
  %v1018 = vunpack.c.l.b16 %v116
  %v1019 = vunpack.c.h.b16 %v116
  %v1020 = vunpack.c.l.b16 %v117
  %v1021 = vunpack.c.h.b16 %v117
  %v1022 = vunpack.c.l.b16 %v118
  %v1023 = vunpack.c.h.b16 %v118
  %v1024 = vunpack.c.l.b16 %v119
  %v1025 = vunpack.c.h.b16 %v119
  %v1026 = vunpack.c.l.b16 %v120
  %v1027 = vunpack.c.h.b16 %v120
  %v1028 = vunpack.c.l.b16 %v121
  %v1029 = vunpack.c.h.b16 %v121
  %v1030 = vunpack.c.l.b16 %v122
  %v1031 = vunpack.c.h.b16 %v122
  %v1032 = vunpack.c.l.b16 %v123
  %v1033 = vunpack.c.h.b16 %v123
  %v1034 = vunpack.c.l.b16 %v124
  %v1035 = vunpack.c.h.b16 %v124
  %v1036 = vunpack.c.l.b16 %v125
  %v1037 = vunpack.c.h.b16 %v125
  %v1038 = vunpack.c.l.b16 %v126
  %v1039 = vunpack.c.h.b16 %v126
  %v1040 = vunpack.c.l.b16 %v127
  %v1041 = vunpack.c.h.b16 %v127
  %v1042 = vunpack.c.l.b16 %v128
  %v1043 = vunpack.c.h.b16 %v128
  %v1044 = vunpack.c.l.b16 %v129
  %v1045 = vunpack.c.h.b16 %v129
  %v1046 = vunpack.c.l.b16 %v130
  %v1047 = vunpack.c.h.b16 %v130
  %v1048 = vunpack.c.l.b16 %v131
  %v1049 = vunpack.c.h.b16 %v131
  %v1050 = vunpack.c.l.b16 %v132
  %v1051 = vunpack.c.h.b16 %v132
  %v1052 = vunpack.c.l.b16 %v133
  %v1053 = vunpack.c.h.b16 %v133
  %v1054 = vunpack.c.l.b16 %v134
  %v1055 = vunpack.c.h.b16 %v134
  %v1056 = vunpack.c.l.b16 %v135
  %v1057 = vunpack.c.h.b16 %v135
  %v1058 = vunpack.c.l.b16 %v136
  %v1059 = vunpack.c.h.b16 %v136
  %v1060 = vunpack.c.l.b16 %v137
  %v1061 = vunpack.c.h.b16 %v137
  %v1062 = vunpack.c.l.b16 %v138
  %v1063 = vunpack.c.h.b16 %v138
  %v1064 = vunpack.c.l.b16 %v139
  %v1065 = vunpack.c.h.b16 %v139
  %v1066 = vunpack.c.l.b16 %v140
  %v1067 = vunpack.c.h.b16 %v140
  %v1068 = vunpack.c.l.b16 %v141
  %v1069 = vunpack.c.h.b16 %v141
  %v1070 = vunpack.c.l.b16 %v142
  %v1071 = vunpack.c.h.b16 %v142
  %v1072 = vunpack.c.l.b16 %v143
  %v1073 = vunpack.c.h.b16 %v143
  %v1074 = vunpack.c.l.b16 %v144
  %v1075 = vunpack.c.h.b16 %v144
  %v1076 = vunpack.c.l.b16 %v145
  %v1077 = vunpack.c.h.b16 %v145
  %v1078 = vunpack.c.l.b16 %v146
  %v1079 = vunpack.c.h.b16 %v146
  %v1080 = vunpack.c.l.b16 %v147
  %v1081 = vunpack.c.h.b16 %v147
  %v1082 = vunpack.c.l.b16 %v148
  %v1083 = vunpack.c.h.b16 %v148
  %v1084 = vunpack.c.l.b16 %v149
  %v1085 = vunpack.c.h.b16 %v149
  %v1086 = vunpack.c.l.b16 %v150
  %v1087 = vunpack.c.h.b16 %v150
  %v1088 = vunpack.c.l.b16 %v151
  %v1089 = vunpack.c.h.b16 %v151
  %v1090 = vunpack.c.l.b16 %v152
  %v1091 = vunpack.c.h.b16 %v152
  %v1092 = vunpack.c.l.b16 %v153
  %v1093 = vunpack.c.h.b16 %v153
  %v1094 = vunpack.c.l.b16 %v154
  %v1095 = vunpack.c.h.b16 %v154
  %v1096 = vunpack.c.l.b16 %v155
  %v1097 = vunpack.c.h.b16 %v155
  %v1098 = vunpack.c.l.b16 %v156
  %v1099 = vunpack.c.h.b16 %v156
  %v1100 = vunpack.c.l.b16 %v157
  %v1101 = vunpack.c.h.b16 %v157
  %v1102 = vunpack.c.l.b16 %v158
  %v1103 = vunpack.c.h.b16 %v158
  %v1104 = vunpack.c.l.b16 %v159
  %v1105 = vunpack.c.h.b16 %v159
  %v1106 = vunpack.c.l.b16 %v160
  %v1107 = vunpack.c.h.b16 %v160
  %v1108 = vunpack.c.l.b16 %v161
  %v1109 = vunpack.c.h.b16 %v161
  %v1110 = vunpack.c.l.b16 %v162
  %v1111 = vunpack.c.h.b16 %v162
  %v1112 = vunpack.c.l.b16 %v163
  %v1113 = vunpack.c.h.b16 %v163
  %v1114 = vunpack.c.l.b16 %v164
  %v1115 = vunpack.c.h.b16 %v164
  %v1116 = vpack.c.b16 %v860, %v828
  %v1117 = vpack.c.b16 %v861, %v829
  %v1118 = vpack.c.b16 %v862, %v830
  %v1119 = vpack.c.b16 %v863, %v831
  %v1120 = vpack.c.b16 %v864, %v832
  %v1121 = vpack.c.b16 %v865, %v833
  %v1122 = vpack.c.b16 %v866, %v834
  %v1123 = vpack.c.b16 %v867, %v835
  %v1124 = vpack.c.b16 %v868, %v836
  %v1125 = vpack.c.b16 %v869, %v837
  %v1126 = vpack.c.b16 %v870, %v838
  %v1127 = vpack.c.b16 %v871, %v839
  %v1128 = vpack.c.b16 %v872, %v840
  %v1129 = vpack.c.b16 %v873, %v841
  %v1130 = vpack.c.b16 %v874, %v842
  %v1131 = vpack.c.b16 %v875, %v843
  %v1132 = vpack.c.b16 %v876, %v844
  %v1133 = vpack.c.b16 %v877, %v845
  %v1134 = vpack.c.b16 %v878, %v846
  %v1135 = vpack.c.b16 %v879, %v847
  %v1136 = vpack.c.b16 %v880, %v848
  %v1137 = vpack.c.b16 %v881, %v849
  %v1138 = vpack.c.b16 %v882, %v850
  %v1139 = vpack.c.b16 %v883, %v851
  %v1140 = vpack.c.b16 %v884, %v852
  %v1141 = vpack.c.b16 %v885, %v853
  %v1142 = vpack.c.b16 %v886, %v854
  %v1143 = vpack.c.b16 %v887, %v855
  %v1144 = vpack.c.b16 %v888, %v856
  %v1145 = vpack.c.b16 %v889, %v857
  %v1146 = vpack.c.b16 %v890, %v858
  %v1147 = vpack.c.b16 %v891, %v859
  %v1148 = vpack.c.b16 %v924, %v892
  %v1149 = vpack.c.b16 %v925, %v893
  %v1150 = vpack.c.b16 %v926, %v894
  %v1151 = vpack.c.b16 %v927, %v895
  %v1152 = vpack.c.b16 %v928, %v896
  %v1153 = vpack.c.b16 %v929, %v897
  %v1154 = vpack.c.b16 %v930, %v898
  %v1155 = vpack.c.b16 %v931, %v899
  %v1156 = vpack.c.b16 %v932, %v900
  %v1157 = vpack.c.b16 %v933, %v901
  %v1158 = vpack.c.b16 %v934, %v902
  %v1159 = vpack.c.b16 %v935, %v903
  %v1160 = vpack.c.b16 %v936, %v904
  %v1161 = vpack.c.b16 %v937, %v905
  %v1162 = vpack.c.b16 %v938, %v906
  %v1163 = vpack.c.b16 %v939, %v907
  %v1164 = vpack.c.b16 %v940, %v908
  %v1165 = vpack.c.b16 %v941, %v909
  %v1166 = vpack.c.b16 %v942, %v910
  %v1167 = vpack.c.b16 %v943, %v911
  %v1168 = vpack.c.b16 %v944, %v912
  %v1169 = vpack.c.b16 %v945, %v913
  %v1170 = vpack.c.b16 %v946, %v914
  %v1171 = vpack.c.b16 %v947, %v915
  %v1172 = vpack.c.b16 %v948, %v916
  %v1173 = vpack.c.b16 %v949, %v917
  %v1174 = vpack.c.b16 %v950, %v918
  %v1175 = vpack.c.b16 %v951, %v919
  %v1176 = vpack.c.b16 %v952, %v920
  %v1177 = vpack.c.b16 %v953, %v921
  %v1178 = vpack.c.b16 %v954, %v922
  %v1179 = vpack.c.b16 %v955, %v923
  %v1180 = vpack.c.b16 %v988, %v956
  %v1181 = vpack.c.b16 %v989, %v957
  %v1182 = vpack.c.b16 %v990, %v958
  %v1183 = vpack.c.b16 %v991, %v959
  %v1184 = vpack.c.b16 %v992, %v960
  %v1185 = vpack.c.b16 %v993, %v961
  %v1186 = vpack.c.b16 %v994, %v962
  %v1187 = vpack.c.b16 %v995, %v963
  %v1188 = vpack.c.b16 %v996, %v964
  %v1189 = vpack.c.b16 %v997, %v965
  %v1190 = vpack.c.b16 %v998, %v966
  %v1191 = vpack.c.b16 %v999, %v967
  %v1192 = vpack.c.b16 %v1000, %v968
  %v1193 = vpack.c.b16 %v1001, %v969
  %v1194 = vpack.c.b16 %v1002, %v970
  %v1195 = vpack.c.b16 %v1003, %v971
  %v1196 = vpack.c.b16 %v1004, %v972
  %v1197 = vpack.c.b16 %v1005, %v973
  %v1198 = vpack.c.b16 %v1006, %v974
  %v1199 = vpack.c.b16 %v1007, %v975
  %v1200 = vpack.c.b16 %v1008, %v976
  %v1201 = vpack.c.b16 %v1009, %v977
  %v1202 = vpack.c.b16 %v1010, %v978
  %v1203 = vpack.c.b16 %v1011, %v979
  %v1204 = vpack.c.b16 %v1012, %v980
  %v1205 = vpack.c.b16 %v1013, %v981
  %v1206 = vpack.c.b16 %v1014, %v982
  %v1207 = vpack.c.b16 %v1015, %v983
  %v1208 = vpack.c.b16 %v1016, %v984
  %v1209 = vpack.c.b16 %v1017, %v985
  %v1210 = vpack.c.b16 %v1018, %v986
  %v1211 = vpack.c.b16 %v1019, %v987
  %v1212 = vpack.c.b16 %v1052, %v1020
  %v1213 = vpack.c.b16 %v1053, %v1021
  %v1214 = vpack.c.b16 %v1054, %v1022
  %v1215 = vpack.c.b16 %v1055, %v1023
  %v1216 = vpack.c.b16 %v1056, %v1024
  %v1217 = vpack.c.b16 %v1057, %v1025
  %v1218 = vpack.c.b16 %v1058, %v1026
  %v1219 = vpack.c.b16 %v1059, %v1027
  %v1220 = vpack.c.b16 %v1060, %v1028
  %v1221 = vpack.c.b16 %v1061, %v1029
  %v1222 = vpack.c.b16 %v1062, %v1030
  %v1223 = vpack.c.b16 %v1063, %v1031
  %v1224 = vpack.c.b16 %v1064, %v1032
  %v1225 = vpack.c.b16 %v1065, %v1033
  %v1226 = vpack.c.b16 %v1066, %v1034
  %v1227 = vpack.c.b16 %v1067, %v1035
  %v1228 = vpack.c.b16 %v1068, %v1036
  %v1229 = vpack.c.b16 %v1069, %v1037
  %v1230 = vpack.c.b16 %v1070, %v1038
  %v1231 = vpack.c.b16 %v1071, %v1039
  %v1232 = vpack.c.b16 %v1072, %v1040
  %v1233 = vpack.c.b16 %v1073, %v1041
  %v1234 = vpack.c.b16 %v1074, %v1042
  %v1235 = vpack.c.b16 %v1075, %v1043
  %v1236 = vpack.c.b16 %v1076, %v1044
  %v1237 = vpack.c.b16 %v1077, %v1045
  %v1238 = vpack.c.b16 %v1078, %v1046
  %v1239 = vpack.c.b16 %v1079, %v1047
  %v1240 = vpack.c.b16 %v1080, %v1048
  %v1241 = vpack.c.b16 %v1081, %v1049
  %v1242 = vpack.c.b16 %v1082, %v1050
  %v1243 = vpack.c.b16 %v1083, %v1051
  %v1244 = vpack.c.b16 %v1084, %v1084
  %v1245 = vpack.c.b16 %v1085, %v1085
  %v1246 = vpack.c.b16 %v1086, %v1086
  %v1247 = vpack.c.b16 %v1087, %v1087
  %v1248 = vpack.c.b16 %v1088, %v1088
  %v1249 = vpack.c.b16 %v1089, %v1089
  %v1250 = vpack.c.b16 %v1090, %v1090
  %v1251 = vpack.c.b16 %v1091, %v1091
  %v1252 = vpack.c.b16 %v1092, %v1092
  %v1253 = vpack.c.b16 %v1093, %v1093
  %v1254 = vpack.c.b16 %v1094, %v1094
  %v1255 = vpack.c.b16 %v1095, %v1095
  %v1256 = vpack.c.b16 %v1096, %v1096
  %v1257 = vpack.c.b16 %v1097, %v1097
  %v1258 = vpack.c.b16 %v1098, %v1098
  %v1259 = vpack.c.b16 %v1099, %v1099
  %v1260 = vpack.c.b16 %v1100, %v1100
  %v1261 = vpack.c.b16 %v1101, %v1101
  %v1262 = vpack.c.b16 %v1102, %v1102
  %v1263 = vpack.c.b16 %v1103, %v1103
  %v1264 = vpack.c.b16 %v1104, %v1104
  %v1265 = vpack.c.b16 %v1105, %v1105
  %v1266 = vpack.c.b16 %v1106, %v1106
  %v1267 = vpack.c.b16 %v1107, %v1107
  %v1268 = vpack.c.b16 %v1108, %v1108
  %v1269 = vpack.c.b16 %v1109, %v1109
  %v1270 = vpack.c.b16 %v1110, %v1110
  %v1271 = vpack.c.b16 %v1111, %v1111
  %v1272 = vpack.c.b16 %v1112, %v1112
  %v1273 = vpack.c.b16 %v1113, %v1113
  %v1274 = vpack.c.b16 %v1114, %v1114
  %v1275 = vpack.c.b16 %v1115, %v1115
  %v1948 = vunpack.c.l.b16 %v165
  %v1949 = vunpack.c.l.b16 %v166
  %v1950 = vunpack.c.l.b16 %v167
  %v1951 = vunpack.c.l.b16 %v168
  %v1952 = vunpack.c.l.b16 %v169
  %v1953 = vunpack.c.l.b16 %v170
  %v1954 = vunpack.c.l.b16 %v171
  %v1955 = vunpack.c.l.b16 %v172
  %v1956 = vunpack.c.l.b16 %v173
  %v1957 = vunpack.c.l.b16 %v174
  %v1958 = vunpack.c.l.b16 %v175
  %v1959 = vunpack.c.l.b16 %v176
  %v1960 = vunpack.c.l.b16 %v177
  %v1961 = vunpack.c.l.b16 %v178
  %v1962 = vunpack.c.l.b16 %v179
  %v1963 = vunpack.c.l.b16 %v180
  %v1964 = vunpack.c.l.b16 %v181
  %v1965 = vunpack.c.l.b16 %v182
  %v1966 = vunpack.c.l.b16 %v183
  %v1967 = vunpack.c.l.b16 %v184
  %v1968 = vunpack.c.l.b16 %v185
  %v1969 = vunpack.c.l.b16 %v186
  %v1970 = vunpack.c.l.b16 %v187
  %v1971 = vunpack.c.l.b16 %v188
  %v1972 = vunpack.c.l.b16 %v189
  %v1973 = vunpack.c.l.b16 %v190
  %v1974 = vunpack.c.l.b16 %v191
  %v1975 = vunpack.c.l.b16 %v192
  %v1976 = vunpack.c.l.b16 %v193
  %v1977 = vunpack.c.l.b16 %v194
  %v1978 = vunpack.c.l.b16 %v195
  %v1979 = vunpack.c.l.b16 %v196
  %v1980 = vunpack.c.l.b16 %v197
  %v1981 = vunpack.c.l.b16 %v198
  %v1982 = vunpack.c.l.b16 %v199
  %v1983 = vunpack.c.l.b16 %v200
  %v1984 = vunpack.c.l.b16 %v201
  %v1985 = vunpack.c.l.b16 %v202
  %v1986 = vunpack.c.l.b16 %v203
  %v1987 = vunpack.c.l.b16 %v204
  %v1988 = vunpack.c.l.b16 %v205
  %v1989 = vunpack.c.l.b16 %v206
  %v1990 = vunpack.c.l.b16 %v207
  %v1991 = vunpack.c.l.b16 %v208
  %v1992 = vunpack.c.l.b16 %v209
  %v1993 = vunpack.c.l.b16 %v210
  %v1994 = vunpack.c.l.b16 %v211
  %v1995 = vunpack.c.l.b16 %v212
  %v1996 = vunpack.c.l.b16 %v213
  %v1997 = vunpack.c.l.b16 %v214
  %v1998 = vunpack.c.l.b16 %v215
  %v1999 = vunpack.c.l.b16 %v216
  %v2000 = vunpack.c.l.b16 %v217
  %v2001 = vunpack.c.l.b16 %v218
  %v2002 = vunpack.c.l.b16 %v219
  %v2003 = vunpack.c.l.b16 %v220
  %v2004 = vunpack.c.l.b16 %v221
  %v2005 = vunpack.c.l.b16 %v222
  %v2006 = vunpack.c.l.b16 %v223
  %v2007 = vunpack.c.l.b16 %v224
  %v2008 = vunpack.c.l.b16 %v225
  %v2009 = vunpack.c.l.b16 %v226
  %v2010 = vunpack.c.l.b16 %v227
  %v2011 = vunpack.c.l.b16 %v228
  %v2012 = vunpack.c.l.b16 %v229
  %v2013 = vunpack.c.l.b16 %v230
  %v2014 = vunpack.c.l.b16 %v231
  %v2015 = vunpack.c.l.b16 %v232
  %v2016 = vunpack.c.l.b16 %v233
  %v2017 = vunpack.c.l.b16 %v234
  %v2018 = vunpack.c.l.b16 %v235
  %v2019 = vunpack.c.l.b16 %v236
  %v2020 = vunpack.c.l.b16 %v237
  %v2021 = vunpack.c.l.b16 %v238
  %v2022 = vunpack.c.l.b16 %v239
  %v2023 = vunpack.c.l.b16 %v240
  %v2024 = vunpack.c.l.b16 %v241
  %v2025 = vunpack.c.l.b16 %v242
  %v2026 = vunpack.c.l.b16 %v243
  %v2027 = vunpack.c.l.b16 %v244
  %v2028 = vunpack.c.l.b16 %v245
  %v2029 = vunpack.c.l.b16 %v246
  %v2030 = vunpack.c.l.b16 %v247
  %v2031 = vunpack.c.l.b16 %v248
  %v2032 = vunpack.c.l.b16 %v249
  %v2033 = vunpack.c.l.b16 %v250
  %v2034 = vunpack.c.l.b16 %v251
  %v2035 = vunpack.c.l.b16 %v252
  %v2036 = vunpack.c.l.b16 %v253
  %v2037 = vunpack.c.l.b16 %v254
  %v2038 = vunpack.c.l.b16 %v255
  %v2039 = vunpack.c.l.b16 %v256
  %v2040 = vunpack.c.l.b16 %v257
  %v2041 = vunpack.c.l.b16 %v258
  %v2042 = vunpack.c.l.b16 %v259
  %v2043 = vunpack.c.l.b16 %v260
  %v2044 = vunpack.c.l.b16 %v261
  %v2045 = vunpack.c.l.b16 %v262
  %v2046 = vunpack.c.l.b16 %v263
  %v2047 = vunpack.c.l.b16 %v264
  %v2048 = vunpack.c.l.b16 %v265
  %v2049 = vunpack.c.l.b16 %v266
  %v2050 = vunpack.c.l.b16 %v267
  %v2051 = vunpack.c.l.b16 %v268
  %v2052 = vunpack.c.l.b16 %v269
  %v2053 = vunpack.c.l.b16 %v270
  %v2054 = vunpack.c.l.b16 %v271
  %v2055 = vunpack.c.l.b16 %v272
  %v2056 = vunpack.c.l.b16 %v273
  %v2057 = vunpack.c.l.b16 %v274
  %v2058 = vunpack.c.l.b16 %v275
  %v2059 = vunpack.c.l.b16 %v276
  %v2060 = vunpack.c.l.b16 %v277
  %v2061 = vunpack.c.l.b16 %v278
  %v2062 = vunpack.c.l.b16 %v279
  %v2063 = vunpack.c.l.b16 %v280
  %v2064 = vunpack.c.l.b16 %v281
  %v2065 = vunpack.c.l.b16 %v282
  %v2066 = vunpack.c.l.b16 %v283
  %v2067 = vunpack.c.l.b16 %v284
  %v2068 = vunpack.c.l.b16 %v285
  %v2069 = vunpack.c.l.b16 %v286
  %v2070 = vunpack.c.l.b16 %v287
  %v2071 = vunpack.c.l.b16 %v288
  %v2072 = vunpack.c.l.b16 %v289
  %v2073 = vunpack.c.l.b16 %v290
  %v2074 = vunpack.c.l.b16 %v291
  %v2075 = vunpack.c.l.b16 %v292
  %v2076 = vunpack.c.l.b16 %v293
  %v2077 = vunpack.c.l.b16 %v294
  %v2078 = vunpack.c.l.b16 %v295
  %v2079 = vunpack.c.l.b16 %v296
  %v2080 = vunpack.c.l.b16 %v297
  %v2081 = vunpack.c.l.b16 %v298
  %v2082 = vunpack.c.l.b16 %v299
  %v2083 = vunpack.c.l.b16 %v300
  %v2084 = vunpack.c.l.b16 %v301
  %v2085 = vunpack.c.l.b16 %v302
  %v2086 = vunpack.c.l.b16 %v303
  %v2087 = vunpack.c.l.b16 %v304
  %v2088 = vunpack.c.l.b16 %v305
  %v2089 = vunpack.c.l.b16 %v306
  %v2090 = vunpack.c.l.b16 %v307
  %v2091 = vunpack.c.l.b16 %v308
  %v2092 = vunpack.c.l.b16 %v309
  %v2093 = vunpack.c.l.b16 %v310
  %v2094 = vunpack.c.l.b16 %v311
  %v2095 = vunpack.c.l.b16 %v312
  %v2096 = vunpack.c.l.b16 %v313
  %v2097 = vunpack.c.l.b16 %v314
  %v2098 = vunpack.c.l.b16 %v315
  %v2099 = vunpack.c.l.b16 %v316
  %v2100 = vunpack.c.l.b16 %v317
  %v2101 = vunpack.c.l.b16 %v318
  %v2102 = vunpack.c.l.b16 %v319
  %v2103 = vunpack.c.l.b16 %v320
  %v2104 = vunpack.c.l.b16 %v321
  %v2105 = vunpack.c.l.b16 %v322
  %v2106 = vunpack.c.l.b16 %v323
  %v2107 = vunpack.c.l.b16 %v324
  %v2108 = vunpack.c.l.b16 %v325
  %v2109 = vunpack.c.l.b16 %v326
  %v2110 = vunpack.c.l.b16 %v327
  %v2111 = vunpack.c.l.b16 %v328
  %v2112 = vunpack.c.l.b16 %v329
  %v2113 = vunpack.c.l.b16 %v330
  %v2114 = vunpack.c.l.b16 %v331
  %v2115 = vunpack.c.l.b16 %v332
  %v2116 = vunpack.c.l.b16 %v333
  %v2117 = vunpack.c.l.b16 %v334
  %v2118 = vunpack.c.l.b16 %v335
  %v2119 = vunpack.c.l.b16 %v336
  %v2120 = vunpack.c.l.b16 %v337
  %v2121 = vunpack.c.l.b16 %v338
  %v2122 = vunpack.c.l.b16 %v339
  %v2123 = vunpack.c.l.b16 %v340
  %v2124 = vunpack.c.l.b16 %v341
  %v2125 = vunpack.c.l.b16 %v342
  %v2126 = vunpack.c.l.b16 %v343
  %v2127 = vunpack.c.l.b16 %v344
  %v2128 = vunpack.c.l.b16 %v345
  %v2129 = vunpack.c.l.b16 %v346
  %v2130 = vunpack.c.l.b16 %v347
  %v2131 = vunpack.c.l.b16 %v348
  %v2132 = vunpack.c.l.b16 %v349
  %v2133 = vunpack.c.l.b16 %v350
  %v2134 = vunpack.c.l.b16 %v351
  %v2135 = vunpack.c.l.b16 %v352
  %v2136 = vunpack.c.l.b16 %v353
  %v2137 = vunpack.c.l.b16 %v354
  %v2138 = vunpack.c.l.b16 %v355
  %v2139 = vunpack.c.l.b16 %v356
  %v2140 = vunpack.c.l.b16 %v357
  %v2141 = vunpack.c.l.b16 %v358
  %v2142 = vunpack.c.l.b16 %v359
  %v2143 = vunpack.c.l.b16 %v360
  %v2144 = vunpack.c.l.b16 %v361
  %v2145 = vunpack.c.l.b16 %v362
  %v2146 = vunpack.c.l.b16 %v363
  %v2147 = vunpack.c.l.b16 %v364
  %v2148 = vunpack.c.l.b16 %v365
  %v2149 = vunpack.c.l.b16 %v366
  %v2150 = vunpack.c.l.b16 %v367
  %v2151 = vunpack.c.l.b16 %v368
  %v2152 = vunpack.c.l.b16 %v369
  %v2153 = vunpack.c.l.b16 %v370
  %v2154 = vunpack.c.l.b16 %v371
  %v2155 = vunpack.c.l.b16 %v372
  %v2156 = vunpack.c.l.b16 %v373
  %v2157 = vunpack.c.l.b16 %v374
  %v2158 = vunpack.c.l.b16 %v375
  %v2159 = vunpack.c.l.b16 %v376
  %v2160 = vunpack.c.l.b16 %v377
  %v2161 = vunpack.c.l.b16 %v378
  %v2162 = vunpack.c.l.b16 %v379
  %v2163 = vunpack.c.l.b16 %v380
  %v2164 = vunpack.c.l.b16 %v381
  %v2165 = vunpack.c.l.b16 %v382
  %v2166 = vunpack.c.l.b16 %v383
  %v2167 = vunpack.c.l.b16 %v384
  %v2168 = vunpack.c.l.b16 %v385
  %v2169 = vunpack.c.l.b16 %v386
  %v2170 = vunpack.c.l.b16 %v387
  %v2171 = vunpack.c.l.b16 %v388
  %v2172 = vunpack.c.l.b16 %v389
  %v2173 = vunpack.c.l.b16 %v390
  %v2174 = vunpack.c.l.b16 %v391
  %v2175 = vunpack.c.l.b16 %v392
  %v2176 = vunpack.c.l.b16 %v393
  %v2177 = vunpack.c.l.b16 %v394
  %v2178 = vunpack.c.l.b16 %v395
  %v2179 = vunpack.c.l.b16 %v396
  %v2180 = vunpack.c.l.b16 %v397
  %v2181 = vunpack.c.l.b16 %v398
  %v2182 = vunpack.c.l.b16 %v399
  %v2183 = vunpack.c.l.b16 %v400
  %v2184 = vunpack.c.l.b16 %v401
  %v2185 = vunpack.c.l.b16 %v402
  %v2186 = vunpack.c.l.b16 %v403
  %v2187 = vunpack.c.l.b16 %v404
  %v2188 = vunpack.c.l.b16 %v405
  %v2189 = vunpack.c.l.b16 %v406
  %v2190 = vunpack.c.l.b16 %v407
  %v2191 = vunpack.c.l.b16 %v408
  %v2192 = vunpack.c.l.b16 %v409
  %v2193 = vunpack.c.l.b16 %v410
  %v2194 = vunpack.c.l.b16 %v411
  %v2195 = vunpack.c.l.b16 %v412
  %v2196 = vunpack.c.l.b16 %v413
  %v2197 = vunpack.c.l.b16 %v414
  %v2198 = vunpack.c.l.b16 %v415
  %v2199 = vunpack.c.l.b16 %v416
  %v2200 = vunpack.c.l.b16 %v417
  %v2201 = vunpack.c.l.b16 %v418
  %v2202 = vunpack.c.l.b16 %v419
  %v2203 = vunpack.c.l.b16 %v420
  %v2204 = vunpack.c.l.b16 %v421
  %v2205 = vunpack.c.l.b16 %v422
  %v2206 = vunpack.c.l.b16 %v423
  %v2207 = vunpack.c.l.b16 %v424
  %v2208 = vunpack.c.l.b16 %v425
  %v2209 = vunpack.c.l.b16 %v426
  %v2210 = vunpack.c.l.b16 %v427
  %v2211 = vunpack.c.l.b16 %v428
  %v2212 = vunpack.c.l.b16 %v429
  %v2213 = vunpack.c.l.b16 %v430
  %v2214 = vunpack.c.l.b16 %v431
  %v2215 = vunpack.c.l.b16 %v432
  %v2216 = vunpack.c.l.b16 %v433
  %v2217 = vunpack.c.l.b16 %v434
  %v2218 = vunpack.c.l.b16 %v435
  %v2219 = vunpack.c.l.b16 %v436
  %v2220 = vunpack.c.l.b16 %v437
  %v2221 = vunpack.c.l.b16 %v438
  %v2222 = vunpack.c.l.b16 %v439
  %v2223 = vunpack.c.l.b16 %v440
  %v2224 = vunpack.c.l.b16 %v441
  %v2225 = vunpack.c.l.b16 %v442
  %v2226 = vunpack.c.l.b16 %v443
  %v2227 = vunpack.c.l.b16 %v444
  %v2228 = vunpack.c.l.b16 %v445
  %v2229 = vunpack.c.l.b16 %v446
  %v2230 = vunpack.c.l.b16 %v447
  %v2231 = vunpack.c.l.b16 %v448
  %v2232 = vunpack.c.l.b16 %v449
  %v2233 = vunpack.c.l.b16 %v450
  %v2234 = vunpack.c.l.b16 %v451
  %v2235 = vunpack.c.l.b16 %v452
  %v2236 = vunpack.c.l.b16 %v453
  %v2237 = vunpack.c.l.b16 %v454
  %v2238 = vunpack.c.l.b16 %v455
  %v2239 = vunpack.c.l.b16 %v456
  %v2240 = vunpack.c.l.b16 %v457
  %v2241 = vunpack.c.l.b16 %v458
  %v2242 = vunpack.c.l.b16 %v459
  %v2243 = vunpack.c.l.b16 %v460
  %v2244 = vunpack.c.l.b16 %v461
  %v2245 = vunpack.c.l.b16 %v462
  %v2246 = vunpack.c.l.b16 %v463
  %v2247 = vunpack.c.l.b16 %v464
  %v2248 = vunpack.c.l.b16 %v465
  %v2249 = vunpack.c.l.b16 %v466
  %v2250 = vunpack.c.l.b16 %v467
  %v2251 = vunpack.c.l.b16 %v468
  %v2252 = vunpack.c.l.b16 %v469
  %v2253 = vunpack.c.l.b16 %v470
  %v2254 = vunpack.c.l.b16 %v471
  %v2255 = vunpack.c.l.b16 %v472
  %v2256 = vunpack.c.l.b16 %v473
  %v2257 = vunpack.c.l.b16 %v474
  %v2258 = vunpack.c.l.b16 %v475
  %v2259 = vunpack.c.l.b16 %v476
  %v2260 = vunpack.c.l.b16 %v477
  %v2261 = vunpack.c.l.b16 %v478
  %v2262 = vunpack.c.l.b16 %v479
  %v2263 = vunpack.c.l.b16 %v480
  %v2264 = vunpack.c.l.b16 %v481
  %v2265 = vunpack.c.l.b16 %v482
  %v2266 = vunpack.c.l.b16 %v483
  %v2267 = vunpack.c.l.b16 %v484
  %v2268 = vunpack.c.l.b16 %v485
  %v2269 = vunpack.c.l.b16 %v486
  %v2270 = vunpack.c.l.b16 %v487
  %v2271 = vunpack.c.l.b16 %v488
  %v2272 = vunpack.c.l.b16 %v489
  %v2273 = vunpack.c.l.b16 %v490
  %v2274 = vunpack.c.l.b16 %v491
  %v2275 = vunpack.c.l.b16 %v492
  %v2276 = vunpack.c.l.b16 %v493
  %v2277 = vunpack.c.l.b16 %v494
  %v2278 = vunpack.c.l.b16 %v495
  %v2279 = vunpack.c.l.b16 %v496
  %v2280 = vunpack.c.l.b16 %v497
  %v2281 = vunpack.c.l.b16 %v498
  %v2282 = vunpack.c.l.b16 %v499
  %v2283 = vunpack.c.l.b16 %v500
  %v2284 = vunpack.c.l.b16 %v501
  %v2285 = vunpack.c.l.b16 %v502
  %v2286 = vunpack.c.l.b16 %v503
  %v2287 = vunpack.c.l.b16 %v504
  %v2288 = vunpack.c.l.b16 %v505
  %v2289 = vunpack.c.l.b16 %v506
  %v2290 = vunpack.c.l.b16 %v507
  %v2291 = vunpack.c.l.b16 %v508
  %v2292 = vunpack.c.l.b16 %v509
  %v2293 = vunpack.c.l.b16 %v510
  %v2294 = vunpack.c.l.b16 %v511
  %v2295 = vunpack.c.l.b16 %v512
  %v2296 = vunpack.c.l.b16 %v513
  %v2297 = vunpack.c.l.b16 %v514
  %v2298 = vunpack.c.l.b16 %v515
  %v2299 = vunpack.c.l.b16 %v516
  %v2300 = vunpack.c.l.b16 %v517
  %v2301 = vunpack.c.l.b16 %v518
  %v2302 = vunpack.c.l.b16 %v519
  %v2303 = vunpack.c.l.b16 %v520
  %v2304 = vunpack.c.l.b16 %v521
  %v2305 = vunpack.c.l.b16 %v522
  %v2306 = vunpack.c.l.b16 %v523
  %v2307 = vunpack.c.l.b16 %v524
  %v2308 = vunpack.c.l.b16 %v525
  %v2309 = vunpack.c.l.b16 %v526
  %v2310 = vunpack.c.l.b16 %v527
  %v2311 = vunpack.c.l.b16 %v528
  %v2312 = vunpack.c.l.b16 %v529
  %v2313 = vunpack.c.l.b16 %v530
  %v2314 = vunpack.c.l.b16 %v531
  %v2315 = vunpack.c.l.b16 %v532
  %v2316 = vunpack.c.l.b16 %v533
  %v2317 = vunpack.c.l.b16 %v534
  %v2318 = vunpack.c.l.b16 %v535
  %v2319 = vunpack.c.l.b16 %v536
  %v2320 = vunpack.c.l.b16 %v537
  %v2321 = vunpack.c.l.b16 %v538
  %v2322 = vunpack.c.l.b16 %v539
  %v2323 = vunpack.c.l.b16 %v540
  %v2324 = vunpack.c.l.b16 %v541
  %v2325 = vunpack.c.l.b16 %v542
  %v2326 = vunpack.c.l.b16 %v543
  %v2327 = vunpack.c.l.b16 %v544
  %v2328 = vunpack.c.l.b16 %v545
  %v2329 = vunpack.c.l.b16 %v546
  %v2330 = vunpack.c.l.b16 %v547
  %v2331 = vunpack.c.l.b16 %v548
  %v2332 = vunpack.c.l.b16 %v549
  %v2333 = vunpack.c.l.b16 %v550
  %v2334 = vunpack.c.l.b16 %v551
  %v2335 = vunpack.c.l.b16 %v552
  %v2336 = vunpack.c.l.b16 %v553
  %v2337 = vunpack.c.l.b16 %v554
  %v2338 = vunpack.c.l.b16 %v555
  %v2339 = vunpack.c.l.b16 %v556
  %v2340 = vunpack.c.l.b16 %v557
  %v2341 = vunpack.c.l.b16 %v558
  %v2342 = vunpack.c.l.b16 %v559
  %v2343 = vunpack.c.l.b16 %v560
  %v2344 = vunpack.c.l.b16 %v561
  %v2345 = vunpack.c.l.b16 %v562
  %v2346 = vunpack.c.l.b16 %v563
  %v2347 = vunpack.c.l.b16 %v564
  %v2348 = vunpack.c.l.b16 %v565
  %v2349 = vunpack.c.l.b16 %v566
  %v2350 = vunpack.c.l.b16 %v567
  %v2351 = vunpack.c.l.b16 %v568
  %v2352 = vunpack.c.l.b16 %v569
  %v2353 = vunpack.c.l.b16 %v570
  %v2354 = vunpack.c.l.b16 %v571
  %v2355 = vunpack.c.l.b16 %v572
  %v2356 = vunpack.c.l.b16 %v573
  %v2357 = vunpack.c.l.b16 %v574
  %v2358 = vunpack.c.l.b16 %v575
  %v2359 = vunpack.c.l.b16 %v576
  %v2360 = vunpack.c.l.b16 %v577
  %v2361 = vunpack.c.l.b16 %v578
  %v2362 = vunpack.c.l.b16 %v579
  %v2363 = vunpack.c.l.b16 %v580
  %v2364 = vunpack.c.l.b16 %v581
  %v2365 = vunpack.c.l.b16 %v582
  %v2366 = vunpack.c.l.b16 %v583
  %v2367 = vunpack.c.l.b16 %v584
  %v2368 = vunpack.c.l.b16 %v585
  %v2369 = vunpack.c.l.b16 %v586
  %v2370 = vunpack.c.l.b16 %v587
  %v2371 = vunpack.c.l.b16 %v588
  %v2372 = vunpack.c.l.b16 %v589
  %v2373 = vunpack.c.l.b16 %v590
  %v2374 = vunpack.c.l.b16 %v591
  %v2375 = vunpack.c.l.b16 %v592
  %v2376 = vunpack.c.l.b16 %v593
  %v2377 = vunpack.c.l.b16 %v594
  %v2378 = vunpack.c.l.b16 %v595
  %v2379 = vunpack.c.l.b16 %v596
  %v2380 = vunpack.c.l.b16 %v597
  %v2381 = vunpack.c.l.b16 %v598
  %v2382 = vunpack.c.l.b16 %v599
  %v2383 = vunpack.c.l.b16 %v600
  %v2384 = vunpack.c.l.b16 %v601
  %v2385 = vunpack.c.l.b16 %v602
  %v2386 = vunpack.c.l.b16 %v603
  %v2387 = vunpack.c.l.b16 %v604
  %v2388 = vunpack.c.l.b16 %v605
  %v2389 = vunpack.c.l.b16 %v606
  %v2390 = vunpack.c.l.b16 %v607
  %v2391 = vunpack.c.l.b16 %v608
  %v2392 = vunpack.c.l.b16 %v609
  %v2393 = vunpack.c.l.b16 %v610
  %v2394 = vunpack.c.l.b16 %v611
  %v2395 = vunpack.c.l.b16 %v612
  %v2396 = vunpack.c.l.b16 %v613
  %v2397 = vunpack.c.l.b16 %v614
  %v2398 = vunpack.c.l.b16 %v615
  %v2399 = vunpack.c.l.b16 %v616
  %v2400 = vunpack.c.l.b16 %v617
  %v2401 = vunpack.c.l.b16 %v618
  %v2402 = vunpack.c.l.b16 %v619
  %v2403 = vunpack.c.l.b16 %v620
  %v2404 = vunpack.c.l.b16 %v621
  %v2405 = vunpack.c.l.b16 %v622
  %v2406 = vunpack.c.l.b16 %v623
  %v2407 = vunpack.c.l.b16 %v624
  %v2408 = vunpack.c.l.b16 %v625
  %v2409 = vunpack.c.l.b16 %v626
  %v2410 = vunpack.c.l.b16 %v627
  %v2411 = vunpack.c.l.b16 %v628
  %v2412 = vunpack.c.l.b16 %v629
  %v2413 = vunpack.c.l.b16 %v630
  %v2414 = vunpack.c.l.b16 %v631
  %v2415 = vunpack.c.l.b16 %v632
  %v2416 = vunpack.c.l.b16 %v633
  %v2417 = vunpack.c.l.b16 %v634
  %v2418 = vunpack.c.l.b16 %v635
  %v2419 = vunpack.c.l.b16 %v636
  %v2420 = vunpack.c.l.b16 %v637
  %v2421 = vunpack.c.l.b16 %v638
  %v2422 = vunpack.c.l.b16 %v639
  %v2423 = vunpack.c.l.b16 %v640
  %v2424 = vunpack.c.l.b16 %v641
  %v2425 = vunpack.c.l.b16 %v642
  %v2426 = vunpack.c.l.b16 %v643
  %v2427 = vunpack.c.l.b16 %v644
  %v2428 = vunpack.c.l.b16 %v645
  %v2429 = vunpack.c.l.b16 %v646
  %v2430 = vunpack.c.l.b16 %v647
  %v2431 = vunpack.c.l.b16 %v648
  %v2432 = vunpack.c.l.b16 %v649
  %v2433 = vunpack.c.l.b16 %v650
  %v2434 = vunpack.c.l.b16 %v651
  %v2435 = vunpack.c.l.b16 %v652
  %v2436 = vunpack.c.l.b16 %v653
  %v2437 = vunpack.c.l.b16 %v654
  %v2438 = vunpack.c.l.b16 %v655
  %v2439 = vunpack.c.l.b16 %v656
  %v2440 = vunpack.c.l.b16 %v657
  %v2441 = vunpack.c.l.b16 %v658
  %v2442 = vunpack.c.l.b16 %v659
  %v2443 = vunpack.c.l.b16 %v660
  %v2444 = vunpack.c.l.b16 %v661
  %v2445 = vunpack.c.l.b16 %v662
  %v2446 = vunpack.c.l.b16 %v663
  %v2447 = vunpack.c.l.b16 %v664
  %v2448 = vunpack.c.l.b16 %v665
  %v2449 = vunpack.c.l.b16 %v666
  %v2450 = vunpack.c.l.b16 %v667
  %v2451 = vunpack.c.l.b16 %v668
  %v2452 = vunpack.c.l.b16 %v669
  %v2453 = vunpack.c.l.b16 %v670
  %v2454 = vunpack.c.l.b16 %v671
  %v2455 = vunpack.c.l.b16 %v672
  %v2456 = vunpack.c.l.b16 %v673
  %v2457 = vunpack.c.l.b16 %v674
  %v2458 = vunpack.c.l.b16 %v675
  %v2459 = vunpack.c.l.b16 %v676
  %v2460 = vpack.c.b16 %v1949, %v1948
  %v2461 = vpack.c.b16 %v1951, %v1950
  %v2462 = vpack.c.b16 %v1953, %v1952
  %v2463 = vpack.c.b16 %v1955, %v1954
  %v2464 = vpack.c.b16 %v1957, %v1956
  %v2465 = vpack.c.b16 %v1959, %v1958
  %v2466 = vpack.c.b16 %v1961, %v1960
  %v2467 = vpack.c.b16 %v1963, %v1962
  %v2468 = vpack.c.b16 %v1965, %v1964
  %v2469 = vpack.c.b16 %v1967, %v1966
  %v2470 = vpack.c.b16 %v1969, %v1968
  %v2471 = vpack.c.b16 %v1971, %v1970
  %v2472 = vpack.c.b16 %v1973, %v1972
  %v2473 = vpack.c.b16 %v1975, %v1974
  %v2474 = vpack.c.b16 %v1977, %v1976
  %v2475 = vpack.c.b16 %v1979, %v1978
  %v2476 = vpack.c.b16 %v1981, %v1980
  %v2477 = vpack.c.b16 %v1983, %v1982
  %v2478 = vpack.c.b16 %v1985, %v1984
  %v2479 = vpack.c.b16 %v1987, %v1986
  %v2480 = vpack.c.b16 %v1989, %v1988
  %v2481 = vpack.c.b16 %v1991, %v1990
  %v2482 = vpack.c.b16 %v1993, %v1992
  %v2483 = vpack.c.b16 %v1995, %v1994
  %v2484 = vpack.c.b16 %v1997, %v1996
  %v2485 = vpack.c.b16 %v1999, %v1998
  %v2486 = vpack.c.b16 %v2001, %v2000
  %v2487 = vpack.c.b16 %v2003, %v2002
  %v2488 = vpack.c.b16 %v2005, %v2004
  %v2489 = vpack.c.b16 %v2007, %v2006
  %v2490 = vpack.c.b16 %v2009, %v2008
  %v2491 = vpack.c.b16 %v2011, %v2010
  %v2492 = vpack.c.b16 %v2013, %v2012
  %v2493 = vpack.c.b16 %v2015, %v2014
  %v2494 = vpack.c.b16 %v2017, %v2016
  %v2495 = vpack.c.b16 %v2019, %v2018
  %v2496 = vpack.c.b16 %v2021, %v2020
  %v2497 = vpack.c.b16 %v2023, %v2022
  %v2498 = vpack.c.b16 %v2025, %v2024
  %v2499 = vpack.c.b16 %v2027, %v2026
  %v2500 = vpack.c.b16 %v2029, %v2028
  %v2501 = vpack.c.b16 %v2031, %v2030
  %v2502 = vpack.c.b16 %v2033, %v2032
  %v2503 = vpack.c.b16 %v2035, %v2034
  %v2504 = vpack.c.b16 %v2037, %v2036
  %v2505 = vpack.c.b16 %v2039, %v2038
  %v2506 = vpack.c.b16 %v2041, %v2040
  %v2507 = vpack.c.b16 %v2043, %v2042
  %v2508 = vpack.c.b16 %v2045, %v2044
  %v2509 = vpack.c.b16 %v2047, %v2046
  %v2510 = vpack.c.b16 %v2049, %v2048
  %v2511 = vpack.c.b16 %v2051, %v2050
  %v2512 = vpack.c.b16 %v2053, %v2052
  %v2513 = vpack.c.b16 %v2055, %v2054
  %v2514 = vpack.c.b16 %v2057, %v2056
  %v2515 = vpack.c.b16 %v2059, %v2058
  %v2516 = vpack.c.b16 %v2061, %v2060
  %v2517 = vpack.c.b16 %v2063, %v2062
  %v2518 = vpack.c.b16 %v2065, %v2064
  %v2519 = vpack.c.b16 %v2067, %v2066
  %v2520 = vpack.c.b16 %v2069, %v2068
  %v2521 = vpack.c.b16 %v2071, %v2070
  %v2522 = vpack.c.b16 %v2073, %v2072
  %v2523 = vpack.c.b16 %v2075, %v2074
  %v2524 = vpack.c.b16 %v2077, %v2076
  %v2525 = vpack.c.b16 %v2079, %v2078
  %v2526 = vpack.c.b16 %v2081, %v2080
  %v2527 = vpack.c.b16 %v2083, %v2082
  %v2528 = vpack.c.b16 %v2085, %v2084
  %v2529 = vpack.c.b16 %v2087, %v2086
  %v2530 = vpack.c.b16 %v2089, %v2088
  %v2531 = vpack.c.b16 %v2091, %v2090
  %v2532 = vpack.c.b16 %v2093, %v2092
  %v2533 = vpack.c.b16 %v2095, %v2094
  %v2534 = vpack.c.b16 %v2097, %v2096
  %v2535 = vpack.c.b16 %v2099, %v2098
  %v2536 = vpack.c.b16 %v2101, %v2100
  %v2537 = vpack.c.b16 %v2103, %v2102
  %v2538 = vpack.c.b16 %v2105, %v2104
  %v2539 = vpack.c.b16 %v2107, %v2106
  %v2540 = vpack.c.b16 %v2109, %v2108
  %v2541 = vpack.c.b16 %v2111, %v2110
  %v2542 = vpack.c.b16 %v2113, %v2112
  %v2543 = vpack.c.b16 %v2115, %v2114
  %v2544 = vpack.c.b16 %v2117, %v2116
  %v2545 = vpack.c.b16 %v2119, %v2118
  %v2546 = vpack.c.b16 %v2121, %v2120
  %v2547 = vpack.c.b16 %v2123, %v2122
  %v2548 = vpack.c.b16 %v2125, %v2124
  %v2549 = vpack.c.b16 %v2127, %v2126
  %v2550 = vpack.c.b16 %v2129, %v2128
  %v2551 = vpack.c.b16 %v2131, %v2130
  %v2552 = vpack.c.b16 %v2133, %v2132
  %v2553 = vpack.c.b16 %v2135, %v2134
  %v2554 = vpack.c.b16 %v2137, %v2136
  %v2555 = vpack.c.b16 %v2139, %v2138
  %v2556 = vpack.c.b16 %v2141, %v2140
  %v2557 = vpack.c.b16 %v2143, %v2142
  %v2558 = vpack.c.b16 %v2145, %v2144
  %v2559 = vpack.c.b16 %v2147, %v2146
  %v2560 = vpack.c.b16 %v2149, %v2148
  %v2561 = vpack.c.b16 %v2151, %v2150
  %v2562 = vpack.c.b16 %v2153, %v2152
  %v2563 = vpack.c.b16 %v2155, %v2154
  %v2564 = vpack.c.b16 %v2157, %v2156
  %v2565 = vpack.c.b16 %v2159, %v2158
  %v2566 = vpack.c.b16 %v2161, %v2160
  %v2567 = vpack.c.b16 %v2163, %v2162
  %v2568 = vpack.c.b16 %v2165, %v2164
  %v2569 = vpack.c.b16 %v2167, %v2166
  %v2570 = vpack.c.b16 %v2169, %v2168
  %v2571 = vpack.c.b16 %v2171, %v2170
  %v2572 = vpack.c.b16 %v2173, %v2172
  %v2573 = vpack.c.b16 %v2175, %v2174
  %v2574 = vpack.c.b16 %v2177, %v2176
  %v2575 = vpack.c.b16 %v2179, %v2178
  %v2576 = vpack.c.b16 %v2181, %v2180
  %v2577 = vpack.c.b16 %v2183, %v2182
  %v2578 = vpack.c.b16 %v2185, %v2184
  %v2579 = vpack.c.b16 %v2187, %v2186
  %v2580 = vpack.c.b16 %v2189, %v2188
  %v2581 = vpack.c.b16 %v2191, %v2190
  %v2582 = vpack.c.b16 %v2193, %v2192
  %v2583 = vpack.c.b16 %v2195, %v2194
  %v2584 = vpack.c.b16 %v2197, %v2196
  %v2585 = vpack.c.b16 %v2199, %v2198
  %v2586 = vpack.c.b16 %v2201, %v2200
  %v2587 = vpack.c.b16 %v2203, %v2202
  %v2588 = vpack.c.b16 %v2205, %v2204
  %v2589 = vpack.c.b16 %v2207, %v2206
  %v2590 = vpack.c.b16 %v2209, %v2208
  %v2591 = vpack.c.b16 %v2211, %v2210
  %v2592 = vpack.c.b16 %v2213, %v2212
  %v2593 = vpack.c.b16 %v2215, %v2214
  %v2594 = vpack.c.b16 %v2217, %v2216
  %v2595 = vpack.c.b16 %v2219, %v2218
  %v2596 = vpack.c.b16 %v2221, %v2220
  %v2597 = vpack.c.b16 %v2223, %v2222
  %v2598 = vpack.c.b16 %v2225, %v2224
  %v2599 = vpack.c.b16 %v2227, %v2226
  %v2600 = vpack.c.b16 %v2229, %v2228
  %v2601 = vpack.c.b16 %v2231, %v2230
  %v2602 = vpack.c.b16 %v2233, %v2232
  %v2603 = vpack.c.b16 %v2235, %v2234
  %v2604 = vpack.c.b16 %v2237, %v2236
  %v2605 = vpack.c.b16 %v2239, %v2238
  %v2606 = vpack.c.b16 %v2241, %v2240
  %v2607 = vpack.c.b16 %v2243, %v2242
  %v2608 = vpack.c.b16 %v2245, %v2244
  %v2609 = vpack.c.b16 %v2247, %v2246
  %v2610 = vpack.c.b16 %v2249, %v2248
  %v2611 = vpack.c.b16 %v2251, %v2250
  %v2612 = vpack.c.b16 %v2253, %v2252
  %v2613 = vpack.c.b16 %v2255, %v2254
  %v2614 = vpack.c.b16 %v2257, %v2256
  %v2615 = vpack.c.b16 %v2259, %v2258
  %v2616 = vpack.c.b16 %v2261, %v2260
  %v2617 = vpack.c.b16 %v2263, %v2262
  %v2618 = vpack.c.b16 %v2265, %v2264
  %v2619 = vpack.c.b16 %v2267, %v2266
  %v2620 = vpack.c.b16 %v2269, %v2268
  %v2621 = vpack.c.b16 %v2271, %v2270
  %v2622 = vpack.c.b16 %v2273, %v2272
  %v2623 = vpack.c.b16 %v2275, %v2274
  %v2624 = vpack.c.b16 %v2277, %v2276
  %v2625 = vpack.c.b16 %v2279, %v2278
  %v2626 = vpack.c.b16 %v2281, %v2280
  %v2627 = vpack.c.b16 %v2283, %v2282
  %v2628 = vpack.c.b16 %v2285, %v2284
  %v2629 = vpack.c.b16 %v2287, %v2286
  %v2630 = vpack.c.b16 %v2289, %v2288
  %v2631 = vpack.c.b16 %v2291, %v2290
  %v2632 = vpack.c.b16 %v2293, %v2292
  %v2633 = vpack.c.b16 %v2295, %v2294
  %v2634 = vpack.c.b16 %v2297, %v2296
  %v2635 = vpack.c.b16 %v2299, %v2298
  %v2636 = vpack.c.b16 %v2301, %v2300
  %v2637 = vpack.c.b16 %v2303, %v2302
  %v2638 = vpack.c.b16 %v2305, %v2304
  %v2639 = vpack.c.b16 %v2307, %v2306
  %v2640 = vpack.c.b16 %v2309, %v2308
  %v2641 = vpack.c.b16 %v2311, %v2310
  %v2642 = vpack.c.b16 %v2313, %v2312
  %v2643 = vpack.c.b16 %v2315, %v2314
  %v2644 = vpack.c.b16 %v2317, %v2316
  %v2645 = vpack.c.b16 %v2319, %v2318
  %v2646 = vpack.c.b16 %v2321, %v2320
  %v2647 = vpack.c.b16 %v2323, %v2322
  %v2648 = vpack.c.b16 %v2325, %v2324
  %v2649 = vpack.c.b16 %v2327, %v2326
  %v2650 = vpack.c.b16 %v2329, %v2328
  %v2651 = vpack.c.b16 %v2331, %v2330
  %v2652 = vpack.c.b16 %v2333, %v2332
  %v2653 = vpack.c.b16 %v2335, %v2334
  %v2654 = vpack.c.b16 %v2337, %v2336
  %v2655 = vpack.c.b16 %v2339, %v2338
  %v2656 = vpack.c.b16 %v2341, %v2340
  %v2657 = vpack.c.b16 %v2343, %v2342
  %v2658 = vpack.c.b16 %v2345, %v2344
  %v2659 = vpack.c.b16 %v2347, %v2346
  %v2660 = vpack.c.b16 %v2349, %v2348
  %v2661 = vpack.c.b16 %v2351, %v2350
  %v2662 = vpack.c.b16 %v2353, %v2352
  %v2663 = vpack.c.b16 %v2355, %v2354
  %v2664 = vpack.c.b16 %v2357, %v2356
  %v2665 = vpack.c.b16 %v2359, %v2358
  %v2666 = vpack.c.b16 %v2361, %v2360
  %v2667 = vpack.c.b16 %v2363, %v2362
  %v2668 = vpack.c.b16 %v2365, %v2364
  %v2669 = vpack.c.b16 %v2367, %v2366
  %v2670 = vpack.c.b16 %v2369, %v2368
  %v2671 = vpack.c.b16 %v2371, %v2370
  %v2672 = vpack.c.b16 %v2373, %v2372
  %v2673 = vpack.c.b16 %v2375, %v2374
  %v2674 = vpack.c.b16 %v2377, %v2376
  %v2675 = vpack.c.b16 %v2379, %v2378
  %v2676 = vpack.c.b16 %v2381, %v2380
  %v2677 = vpack.c.b16 %v2383, %v2382
  %v2678 = vpack.c.b16 %v2385, %v2384
  %v2679 = vpack.c.b16 %v2387, %v2386
  %v2680 = vpack.c.b16 %v2389, %v2388
  %v2681 = vpack.c.b16 %v2391, %v2390
  %v2682 = vpack.c.b16 %v2393, %v2392
  %v2683 = vpack.c.b16 %v2395, %v2394
  %v2684 = vpack.c.b16 %v2397, %v2396
  %v2685 = vpack.c.b16 %v2399, %v2398
  %v2686 = vpack.c.b16 %v2401, %v2400
  %v2687 = vpack.c.b16 %v2403, %v2402
  %v2688 = vpack.c.b16 %v2405, %v2404
  %v2689 = vpack.c.b16 %v2407, %v2406
  %v2690 = vpack.c.b16 %v2409, %v2408
  %v2691 = vpack.c.b16 %v2411, %v2410
  %v2692 = vpack.c.b16 %v2413, %v2412
  %v2693 = vpack.c.b16 %v2415, %v2414
  %v2694 = vpack.c.b16 %v2417, %v2416
  %v2695 = vpack.c.b16 %v2419, %v2418
  %v2696 = vpack.c.b16 %v2421, %v2420
  %v2697 = vpack.c.b16 %v2423, %v2422
  %v2698 = vpack.c.b16 %v2425, %v2424
  %v2699 = vpack.c.b16 %v2427, %v2426
  %v2700 = vpack.c.b16 %v2429, %v2428
  %v2701 = vpack.c.b16 %v2431, %v2430
  %v2702 = vpack.c.b16 %v2433, %v2432
  %v2703 = vpack.c.b16 %v2435, %v2434
  %v2704 = vpack.c.b16 %v2437, %v2436
  %v2705 = vpack.c.b16 %v2439, %v2438
  %v2706 = vpack.c.b16 %v2441, %v2440
  %v2707 = vpack.c.b16 %v2443, %v2442
  %v2708 = vpack.c.b16 %v2445, %v2444
  %v2709 = vpack.c.b16 %v2447, %v2446
  %v2710 = vpack.c.b16 %v2449, %v2448
  %v2711 = vpack.c.b16 %v2451, %v2450
  %v2712 = vpack.c.b16 %v2453, %v2452
  %v2713 = vpack.c.b16 %v2455, %v2454
  %v2714 = vpack.c.b16 %v2457, %v2456
  %v2715 = vpack.c.b16 %v2459, %v2458
  %2972 = vmatprep.subr.bf16.mxu0 0
  %2973 = vmatpush1.bf16.msra.mxu0 %v2467
  %2974 = vmatprep.subr.bf16.mxu0 0
  %2975 = vmatpush1.bf16.msra.mxu0 %v2466
  %2976 = vmatprep.subr.bf16.mxu0 0
  %2977 = vmatpush1.bf16.msra.mxu0 %v2465
  %2978 = vmatprep.subr.bf16.mxu0 0
  %2979 = vmatpush1.bf16.msra.mxu0 %v2464
  %2980 = vmatprep.subr.bf16.mxu0 0
  %2981 = vmatpush1.bf16.msra.mxu0 %v2463
  %2982 = vmatprep.subr.bf16.mxu0 0
  %2983 = vmatpush1.bf16.msra.mxu0 %v2462
  %2984 = vmatprep.subr.bf16.mxu0 0
  %2985 = vmatpush1.bf16.msra.mxu0 %v2461
  %2986 = vmatprep.subr.bf16.mxu0 0
  %2987 = vmatpush1.bf16.msra.mxu0 %v2460
  %2988 = vmatprep.subr.bf16.mxu0 0
  %2989 = vmatpush2.bf16.msra.mxu0 %v2475
  %2990 = vmatprep.subr.bf16.mxu0 0
  %2991 = vmatpush2.bf16.msra.mxu0 %v2474
  %2992 = vmatprep.subr.bf16.mxu0 0
  %2993 = vmatpush2.bf16.msra.mxu0 %v2473
  %2994 = vmatprep.subr.bf16.mxu0 0
  %2995 = vmatpush2.bf16.msra.mxu0 %v2472
  %2996 = vmatprep.subr.bf16.mxu0 0
  %2997 = vmatpush2.bf16.msra.mxu0 %v2471
  %2998 = vmatprep.subr.bf16.mxu0 0
  %2999 = vmatpush2.bf16.msra.mxu0 %v2470
  %3000 = vmatprep.subr.bf16.mxu0 0
  %3001 = vmatpush2.bf16.msra.mxu0 %v2469
  %3002 = vmatprep.subr.bf16.mxu0 0
  %3003 = vmatpush2.bf16.msra.mxu0 %v2468
  %3004 = vmatprep.mubr.bf16.mxu0 %v1117
  %3005 = vmatmul.mubr.bf16.gmra.mxu0 %v1116
  %v3006 = vpop.f32.mrf.mxu0
  %v3007 = vadd.f32 %v682, %v3006
  %v3008 = vpop.f32.mrf.mxu0
  %v3009 = vpop.f32.mrf.mxu0
  %v3010 = vadd.f32 %v682, %v3009
  %v3011 = vpop.f32.mrf.mxu0
  %3012 = vmatprep.mubr.bf16.mxu0 %v1149
  %3013 = vmatmul.mubr.bf16.gmra.mxu0 %v1148
  %v3014 = vpop.f32.mrf.mxu0
  %v3015 = vadd.f32 %v682, %v3014
  %v3016 = vpop.f32.mrf.mxu0
  %v3017 = vpop.f32.mrf.mxu0
  %v3018 = vadd.f32 %v682, %v3017
  %v3019 = vpop.f32.mrf.mxu0
  %3020 = vmatprep.mubr.bf16.mxu0 %v1181
  %3021 = vmatmul.mubr.bf16.gmra.mxu0 %v1180
  %v3022 = vpop.f32.mrf.mxu0
  %v3023 = vadd.f32 %v682, %v3022
  %v3024 = vpop.f32.mrf.mxu0
  %v3025 = vpop.f32.mrf.mxu0
  %v3026 = vadd.f32 %v682, %v3025
  %v3027 = vpop.f32.mrf.mxu0
  %3028 = vmatprep.mubr.bf16.mxu0 %v1213
  %3029 = vmatmul.mubr.bf16.gmra.mxu0 %v1212
  %v3030 = vpop.f32.mrf.mxu0
  %v3031 = vadd.f32 %v682, %v3030
  %v3032 = vpop.f32.mrf.mxu0
  %v3033 = vpop.f32.mrf.mxu0
  %v3034 = vadd.f32 %v682, %v3033
  %v3035 = vpop.f32.mrf.mxu0
  %3036 = vmatprep.mubr.bf16.mxu0 %v1245
  %3037 = vmatmul.mubr.bf16.gmra.mxu0 %v1244
  %v3038 = vpop.f32.mrf.mxu0
  %v3039 = vadd.f32 %v682, %v3038
  %v3040 = vpop.f32.mrf.mxu0
  %v3041 = vpop.f32.mrf.mxu0
  %v3042 = vpop.f32.mrf.mxu0
  %3043 = vdwg.mxu0
  %3044 = vmatprep.subr.bf16.mxu0 0
  %3045 = vmatpush1.bf16.msra.mxu0 %v2483
  %3046 = vmatprep.subr.bf16.mxu0 0
  %3047 = vmatpush1.bf16.msra.mxu0 %v2482
  %3048 = vmatprep.subr.bf16.mxu0 0
  %3049 = vmatpush1.bf16.msra.mxu0 %v2481
  %3050 = vmatprep.subr.bf16.mxu0 0
  %3051 = vmatpush1.bf16.msra.mxu0 %v2480
  %3052 = vmatprep.subr.bf16.mxu0 0
  %3053 = vmatpush1.bf16.msra.mxu0 %v2479
  %3054 = vmatprep.subr.bf16.mxu0 0
  %3055 = vmatpush1.bf16.msra.mxu0 %v2478
  %3056 = vmatprep.subr.bf16.mxu0 0
  %3057 = vmatpush1.bf16.msra.mxu0 %v2477
  %3058 = vmatprep.subr.bf16.mxu0 0
  %3059 = vmatpush1.bf16.msra.mxu0 %v2476
  %3060 = vmatprep.subr.bf16.mxu0 0
  %3061 = vmatpush2.bf16.msra.mxu0 %v2491
  %3062 = vmatprep.subr.bf16.mxu0 0
  %3063 = vmatpush2.bf16.msra.mxu0 %v2490
  %3064 = vmatprep.subr.bf16.mxu0 0
  %3065 = vmatpush2.bf16.msra.mxu0 %v2489
  %3066 = vmatprep.subr.bf16.mxu0 0
  %3067 = vmatpush2.bf16.msra.mxu0 %v2488
  %3068 = vmatprep.subr.bf16.mxu0 0
  %3069 = vmatpush2.bf16.msra.mxu0 %v2487
  %3070 = vmatprep.subr.bf16.mxu0 0
  %3071 = vmatpush2.bf16.msra.mxu0 %v2486
  %3072 = vmatprep.subr.bf16.mxu0 0
  %3073 = vmatpush2.bf16.msra.mxu0 %v2485
  %3074 = vmatprep.subr.bf16.mxu0 0
  %3075 = vmatpush2.bf16.msra.mxu0 %v2484
  %3076 = vmatprep.mubr.bf16.mxu0 %v1119
  %3077 = vmatmul.mubr.bf16.gmra.mxu0 %v1118
  %v3078 = vpop.f32.mrf.mxu0
  %v3079 = vadd.f32 %v3007, %v3078
  %v3080 = vpop.f32.mrf.mxu0
  %v3081 = vpop.f32.mrf.mxu0
  %v3082 = vadd.f32 %v3010, %v3081
  %v3083 = vpop.f32.mrf.mxu0
  %3084 = vmatprep.mubr.bf16.mxu0 %v1151
  %3085 = vmatmul.mubr.bf16.gmra.mxu0 %v1150
  %v3086 = vpop.f32.mrf.mxu0
  %v3087 = vadd.f32 %v3015, %v3086
  %v3088 = vpop.f32.mrf.mxu0
  %v3089 = vpop.f32.mrf.mxu0
  %v3090 = vadd.f32 %v3018, %v3089
  %v3091 = vpop.f32.mrf.mxu0
  %3092 = vmatprep.mubr.bf16.mxu0 %v1183
  %3093 = vmatmul.mubr.bf16.gmra.mxu0 %v1182
  %v3094 = vpop.f32.mrf.mxu0
  %v3095 = vadd.f32 %v3023, %v3094
  %v3096 = vpop.f32.mrf.mxu0
  %v3097 = vpop.f32.mrf.mxu0
  %v3098 = vadd.f32 %v3026, %v3097
  %v3099 = vpop.f32.mrf.mxu0
  %3100 = vmatprep.mubr.bf16.mxu0 %v1215
  %3101 = vmatmul.mubr.bf16.gmra.mxu0 %v1214
  %v3102 = vpop.f32.mrf.mxu0
  %v3103 = vadd.f32 %v3031, %v3102
  %v3104 = vpop.f32.mrf.mxu0
  %v3105 = vpop.f32.mrf.mxu0
  %v3106 = vadd.f32 %v3034, %v3105
  %v3107 = vpop.f32.mrf.mxu0
  %3108 = vmatprep.mubr.bf16.mxu0 %v1247
  %3109 = vmatmul.mubr.bf16.gmra.mxu0 %v1246
  %v3110 = vpop.f32.mrf.mxu0
  %v3111 = vadd.f32 %v3039, %v3110
  %v3112 = vpop.f32.mrf.mxu0
  %v3113 = vpop.f32.mrf.mxu0
  %v3114 = vpop.f32.mrf.mxu0
  %3115 = vdwg.mxu0
  %3116 = vmatprep.subr.bf16.mxu0 0
  %3117 = vmatpush1.bf16.msra.mxu0 %v2499
  %3118 = vmatprep.subr.bf16.mxu0 0
  %3119 = vmatpush1.bf16.msra.mxu0 %v2498
  %3120 = vmatprep.subr.bf16.mxu0 0
  %3121 = vmatpush1.bf16.msra.mxu0 %v2497
  %3122 = vmatprep.subr.bf16.mxu0 0
  %3123 = vmatpush1.bf16.msra.mxu0 %v2496
  %3124 = vmatprep.subr.bf16.mxu0 0
  %3125 = vmatpush1.bf16.msra.mxu0 %v2495
  %3126 = vmatprep.subr.bf16.mxu0 0
  %3127 = vmatpush1.bf16.msra.mxu0 %v2494
  %3128 = vmatprep.subr.bf16.mxu0 0
  %3129 = vmatpush1.bf16.msra.mxu0 %v2493
  %3130 = vmatprep.subr.bf16.mxu0 0
  %3131 = vmatpush1.bf16.msra.mxu0 %v2492
  %3132 = vmatprep.subr.bf16.mxu0 0
  %3133 = vmatpush2.bf16.msra.mxu0 %v2507
  %3134 = vmatprep.subr.bf16.mxu0 0
  %3135 = vmatpush2.bf16.msra.mxu0 %v2506
  %3136 = vmatprep.subr.bf16.mxu0 0
  %3137 = vmatpush2.bf16.msra.mxu0 %v2505
  %3138 = vmatprep.subr.bf16.mxu0 0
  %3139 = vmatpush2.bf16.msra.mxu0 %v2504
  %3140 = vmatprep.subr.bf16.mxu0 0
  %3141 = vmatpush2.bf16.msra.mxu0 %v2503
  %3142 = vmatprep.subr.bf16.mxu0 0
  %3143 = vmatpush2.bf16.msra.mxu0 %v2502
  %3144 = vmatprep.subr.bf16.mxu0 0
  %3145 = vmatpush2.bf16.msra.mxu0 %v2501
  %3146 = vmatprep.subr.bf16.mxu0 0
  %3147 = vmatpush2.bf16.msra.mxu0 %v2500
  %3148 = vmatprep.mubr.bf16.mxu0 %v1121
  %3149 = vmatmul.mubr.bf16.gmra.mxu0 %v1120
  %v3150 = vpop.f32.mrf.mxu0
  %v3151 = vadd.f32 %v3079, %v3150
  %v3152 = vpop.f32.mrf.mxu0
  %v3153 = vpop.f32.mrf.mxu0
  %v3154 = vadd.f32 %v3082, %v3153
  %v3155 = vpop.f32.mrf.mxu0
  %3156 = vmatprep.mubr.bf16.mxu0 %v1153
  %3157 = vmatmul.mubr.bf16.gmra.mxu0 %v1152
  %v3158 = vpop.f32.mrf.mxu0
  %v3159 = vadd.f32 %v3087, %v3158
  %v3160 = vpop.f32.mrf.mxu0
  %v3161 = vpop.f32.mrf.mxu0
  %v3162 = vadd.f32 %v3090, %v3161
  %v3163 = vpop.f32.mrf.mxu0
  %3164 = vmatprep.mubr.bf16.mxu0 %v1185
  %3165 = vmatmul.mubr.bf16.gmra.mxu0 %v1184
  %v3166 = vpop.f32.mrf.mxu0
  %v3167 = vadd.f32 %v3095, %v3166
  %v3168 = vpop.f32.mrf.mxu0
  %v3169 = vpop.f32.mrf.mxu0
  %v3170 = vadd.f32 %v3098, %v3169
  %v3171 = vpop.f32.mrf.mxu0
  %3172 = vmatprep.mubr.bf16.mxu0 %v1217
  %3173 = vmatmul.mubr.bf16.gmra.mxu0 %v1216
  %v3174 = vpop.f32.mrf.mxu0
  %v3175 = vadd.f32 %v3103, %v3174
  %v3176 = vpop.f32.mrf.mxu0
  %v3177 = vpop.f32.mrf.mxu0
  %v3178 = vadd.f32 %v3106, %v3177
  %v3179 = vpop.f32.mrf.mxu0
  %3180 = vmatprep.mubr.bf16.mxu0 %v1249
  %3181 = vmatmul.mubr.bf16.gmra.mxu0 %v1248
  %v3182 = vpop.f32.mrf.mxu0
  %v3183 = vadd.f32 %v3111, %v3182
  %v3184 = vpop.f32.mrf.mxu0
  %v3185 = vpop.f32.mrf.mxu0
  %v3186 = vpop.f32.mrf.mxu0
  %3187 = vdwg.mxu0
  %3188 = vmatprep.subr.bf16.mxu0 0
  %3189 = vmatpush1.bf16.msra.mxu0 %v2515
  %3190 = vmatprep.subr.bf16.mxu0 0
  %3191 = vmatpush1.bf16.msra.mxu0 %v2514
  %3192 = vmatprep.subr.bf16.mxu0 0
  %3193 = vmatpush1.bf16.msra.mxu0 %v2513
  %3194 = vmatprep.subr.bf16.mxu0 0
  %3195 = vmatpush1.bf16.msra.mxu0 %v2512
  %3196 = vmatprep.subr.bf16.mxu0 0
  %3197 = vmatpush1.bf16.msra.mxu0 %v2511
  %3198 = vmatprep.subr.bf16.mxu0 0
  %3199 = vmatpush1.bf16.msra.mxu0 %v2510
  %3200 = vmatprep.subr.bf16.mxu0 0
  %3201 = vmatpush1.bf16.msra.mxu0 %v2509
  %3202 = vmatprep.subr.bf16.mxu0 0
  %3203 = vmatpush1.bf16.msra.mxu0 %v2508
  %3204 = vmatprep.subr.bf16.mxu0 0
  %3205 = vmatpush2.bf16.msra.mxu0 %v2523
  %3206 = vmatprep.subr.bf16.mxu0 0
  %3207 = vmatpush2.bf16.msra.mxu0 %v2522
  %3208 = vmatprep.subr.bf16.mxu0 0
  %3209 = vmatpush2.bf16.msra.mxu0 %v2521
  %3210 = vmatprep.subr.bf16.mxu0 0
  %3211 = vmatpush2.bf16.msra.mxu0 %v2520
  %3212 = vmatprep.subr.bf16.mxu0 0
  %3213 = vmatpush2.bf16.msra.mxu0 %v2519
  %3214 = vmatprep.subr.bf16.mxu0 0
  %3215 = vmatpush2.bf16.msra.mxu0 %v2518
  %3216 = vmatprep.subr.bf16.mxu0 0
  %3217 = vmatpush2.bf16.msra.mxu0 %v2517
  %3218 = vmatprep.subr.bf16.mxu0 0
  %3219 = vmatpush2.bf16.msra.mxu0 %v2516
  %3220 = vmatprep.mubr.bf16.mxu0 %v1123
  %3221 = vmatmul.mubr.bf16.gmra.mxu0 %v1122
  %v3222 = vpop.f32.mrf.mxu0
  %v3223 = vadd.f32 %v3151, %v3222
  %v3224 = vpop.f32.mrf.mxu0
  %v3225 = vpop.f32.mrf.mxu0
  %v3226 = vadd.f32 %v3154, %v3225
  %v3227 = vpop.f32.mrf.mxu0
  %3228 = vmatprep.mubr.bf16.mxu0 %v1155
  %3229 = vmatmul.mubr.bf16.gmra.mxu0 %v1154
  %v3230 = vpop.f32.mrf.mxu0
  %v3231 = vadd.f32 %v3159, %v3230
  %v3232 = vpop.f32.mrf.mxu0
  %v3233 = vpop.f32.mrf.mxu0
  %v3234 = vadd.f32 %v3162, %v3233
  %v3235 = vpop.f32.mrf.mxu0
  %3236 = vmatprep.mubr.bf16.mxu0 %v1187
  %3237 = vmatmul.mubr.bf16.gmra.mxu0 %v1186
  %v3238 = vpop.f32.mrf.mxu0
  %v3239 = vadd.f32 %v3167, %v3238
  %v3240 = vpop.f32.mrf.mxu0
  %v3241 = vpop.f32.mrf.mxu0
  %v3242 = vadd.f32 %v3170, %v3241
  %v3243 = vpop.f32.mrf.mxu0
  %3244 = vmatprep.mubr.bf16.mxu0 %v1219
  %3245 = vmatmul.mubr.bf16.gmra.mxu0 %v1218
  %v3246 = vpop.f32.mrf.mxu0
  %v3247 = vadd.f32 %v3175, %v3246
  %v3248 = vpop.f32.mrf.mxu0
  %v3249 = vpop.f32.mrf.mxu0
  %v3250 = vadd.f32 %v3178, %v3249
  %v3251 = vpop.f32.mrf.mxu0
  %3252 = vmatprep.mubr.bf16.mxu0 %v1251
  %3253 = vmatmul.mubr.bf16.gmra.mxu0 %v1250
  %v3254 = vpop.f32.mrf.mxu0
  %v3255 = vadd.f32 %v3183, %v3254
  %v3256 = vpop.f32.mrf.mxu0
  %v3257 = vpop.f32.mrf.mxu0
  %v3258 = vpop.f32.mrf.mxu0
  %3259 = vdwg.mxu0
  %3260 = vmatprep.subr.bf16.mxu0 0
  %3261 = vmatpush1.bf16.msra.mxu0 %v2531
  %3262 = vmatprep.subr.bf16.mxu0 0
  %3263 = vmatpush1.bf16.msra.mxu0 %v2530
  %3264 = vmatprep.subr.bf16.mxu0 0
  %3265 = vmatpush1.bf16.msra.mxu0 %v2529
  %3266 = vmatprep.subr.bf16.mxu0 0
  %3267 = vmatpush1.bf16.msra.mxu0 %v2528
  %3268 = vmatprep.subr.bf16.mxu0 0
  %3269 = vmatpush1.bf16.msra.mxu0 %v2527
  %3270 = vmatprep.subr.bf16.mxu0 0
  %3271 = vmatpush1.bf16.msra.mxu0 %v2526
  %3272 = vmatprep.subr.bf16.mxu0 0
  %3273 = vmatpush1.bf16.msra.mxu0 %v2525
  %3274 = vmatprep.subr.bf16.mxu0 0
  %3275 = vmatpush1.bf16.msra.mxu0 %v2524
  %3276 = vmatprep.subr.bf16.mxu0 0
  %3277 = vmatpush2.bf16.msra.mxu0 %v2539
  %3278 = vmatprep.subr.bf16.mxu0 0
  %3279 = vmatpush2.bf16.msra.mxu0 %v2538
  %3280 = vmatprep.subr.bf16.mxu0 0
  %3281 = vmatpush2.bf16.msra.mxu0 %v2537
  %3282 = vmatprep.subr.bf16.mxu0 0
  %3283 = vmatpush2.bf16.msra.mxu0 %v2536
  %3284 = vmatprep.subr.bf16.mxu0 0
  %3285 = vmatpush2.bf16.msra.mxu0 %v2535
  %3286 = vmatprep.subr.bf16.mxu0 0
  %3287 = vmatpush2.bf16.msra.mxu0 %v2534
  %3288 = vmatprep.subr.bf16.mxu0 0
  %3289 = vmatpush2.bf16.msra.mxu0 %v2533
  %3290 = vmatprep.subr.bf16.mxu0 0
  %3291 = vmatpush2.bf16.msra.mxu0 %v2532
  %3292 = vmatprep.mubr.bf16.mxu0 %v1125
  %3293 = vmatmul.mubr.bf16.gmra.mxu0 %v1124
  %v3294 = vpop.f32.mrf.mxu0
  %v3295 = vadd.f32 %v3223, %v3294
  %v3296 = vpop.f32.mrf.mxu0
  %v3297 = vpop.f32.mrf.mxu0
  %v3298 = vadd.f32 %v3226, %v3297
  %v3299 = vpop.f32.mrf.mxu0
  %3300 = vmatprep.mubr.bf16.mxu0 %v1157
  %3301 = vmatmul.mubr.bf16.gmra.mxu0 %v1156
  %v3302 = vpop.f32.mrf.mxu0
  %v3303 = vadd.f32 %v3231, %v3302
  %v3304 = vpop.f32.mrf.mxu0
  %v3305 = vpop.f32.mrf.mxu0
  %v3306 = vadd.f32 %v3234, %v3305
  %v3307 = vpop.f32.mrf.mxu0
  %3308 = vmatprep.mubr.bf16.mxu0 %v1189
  %3309 = vmatmul.mubr.bf16.gmra.mxu0 %v1188
  %v3310 = vpop.f32.mrf.mxu0
  %v3311 = vadd.f32 %v3239, %v3310
  %v3312 = vpop.f32.mrf.mxu0
  %v3313 = vpop.f32.mrf.mxu0
  %v3314 = vadd.f32 %v3242, %v3313
  %v3315 = vpop.f32.mrf.mxu0
  %3316 = vmatprep.mubr.bf16.mxu0 %v1221
  %3317 = vmatmul.mubr.bf16.gmra.mxu0 %v1220
  %v3318 = vpop.f32.mrf.mxu0
  %v3319 = vadd.f32 %v3247, %v3318
  %v3320 = vpop.f32.mrf.mxu0
  %v3321 = vpop.f32.mrf.mxu0
  %v3322 = vadd.f32 %v3250, %v3321
  %v3323 = vpop.f32.mrf.mxu0
  %3324 = vmatprep.mubr.bf16.mxu0 %v1253
  %3325 = vmatmul.mubr.bf16.gmra.mxu0 %v1252
  %v3326 = vpop.f32.mrf.mxu0
  %v3327 = vadd.f32 %v3255, %v3326
  %v3328 = vpop.f32.mrf.mxu0
  %v3329 = vpop.f32.mrf.mxu0
  %v3330 = vpop.f32.mrf.mxu0
  %3331 = vdwg.mxu0
  %3332 = vmatprep.subr.bf16.mxu0 0
  %3333 = vmatpush1.bf16.msra.mxu0 %v2547
  %3334 = vmatprep.subr.bf16.mxu0 0
  %3335 = vmatpush1.bf16.msra.mxu0 %v2546
  %3336 = vmatprep.subr.bf16.mxu0 0
  %3337 = vmatpush1.bf16.msra.mxu0 %v2545
  %3338 = vmatprep.subr.bf16.mxu0 0
  %3339 = vmatpush1.bf16.msra.mxu0 %v2544
  %3340 = vmatprep.subr.bf16.mxu0 0
  %3341 = vmatpush1.bf16.msra.mxu0 %v2543
  %3342 = vmatprep.subr.bf16.mxu0 0
  %3343 = vmatpush1.bf16.msra.mxu0 %v2542
  %3344 = vmatprep.subr.bf16.mxu0 0
  %3345 = vmatpush1.bf16.msra.mxu0 %v2541
  %3346 = vmatprep.subr.bf16.mxu0 0
  %3347 = vmatpush1.bf16.msra.mxu0 %v2540
  %3348 = vmatprep.subr.bf16.mxu0 0
  %3349 = vmatpush2.bf16.msra.mxu0 %v2555
  %3350 = vmatprep.subr.bf16.mxu0 0
  %3351 = vmatpush2.bf16.msra.mxu0 %v2554
  %3352 = vmatprep.subr.bf16.mxu0 0
  %3353 = vmatpush2.bf16.msra.mxu0 %v2553
  %3354 = vmatprep.subr.bf16.mxu0 0
  %3355 = vmatpush2.bf16.msra.mxu0 %v2552
  %3356 = vmatprep.subr.bf16.mxu0 0
  %3357 = vmatpush2.bf16.msra.mxu0 %v2551
  %3358 = vmatprep.subr.bf16.mxu0 0
  %3359 = vmatpush2.bf16.msra.mxu0 %v2550
  %3360 = vmatprep.subr.bf16.mxu0 0
  %3361 = vmatpush2.bf16.msra.mxu0 %v2549
  %3362 = vmatprep.subr.bf16.mxu0 0
  %3363 = vmatpush2.bf16.msra.mxu0 %v2548
  %3364 = vmatprep.mubr.bf16.mxu0 %v1127
  %3365 = vmatmul.mubr.bf16.gmra.mxu0 %v1126
  %v3366 = vpop.f32.mrf.mxu0
  %v3367 = vadd.f32 %v3295, %v3366
  %v3368 = vpop.f32.mrf.mxu0
  %v3369 = vpop.f32.mrf.mxu0
  %v3370 = vadd.f32 %v3298, %v3369
  %v3371 = vpop.f32.mrf.mxu0
  %3372 = vmatprep.mubr.bf16.mxu0 %v1159
  %3373 = vmatmul.mubr.bf16.gmra.mxu0 %v1158
  %v3374 = vpop.f32.mrf.mxu0
  %v3375 = vadd.f32 %v3303, %v3374
  %v3376 = vpop.f32.mrf.mxu0
  %v3377 = vpop.f32.mrf.mxu0
  %v3378 = vadd.f32 %v3306, %v3377
  %v3379 = vpop.f32.mrf.mxu0
  %3380 = vmatprep.mubr.bf16.mxu0 %v1191
  %3381 = vmatmul.mubr.bf16.gmra.mxu0 %v1190
  %v3382 = vpop.f32.mrf.mxu0
  %v3383 = vadd.f32 %v3311, %v3382
  %v3384 = vpop.f32.mrf.mxu0
  %v3385 = vpop.f32.mrf.mxu0
  %v3386 = vadd.f32 %v3314, %v3385
  %v3387 = vpop.f32.mrf.mxu0
  %3388 = vmatprep.mubr.bf16.mxu0 %v1223
  %3389 = vmatmul.mubr.bf16.gmra.mxu0 %v1222
  %v3390 = vpop.f32.mrf.mxu0
  %v3391 = vadd.f32 %v3319, %v3390
  %v3392 = vpop.f32.mrf.mxu0
  %v3393 = vpop.f32.mrf.mxu0
  %v3394 = vadd.f32 %v3322, %v3393
  %v3395 = vpop.f32.mrf.mxu0
  %3396 = vmatprep.mubr.bf16.mxu0 %v1255
  %3397 = vmatmul.mubr.bf16.gmra.mxu0 %v1254
  %v3398 = vpop.f32.mrf.mxu0
  %v3399 = vadd.f32 %v3327, %v3398
  %v3400 = vpop.f32.mrf.mxu0
  %v3401 = vpop.f32.mrf.mxu0
  %v3402 = vpop.f32.mrf.mxu0
  %3403 = vdwg.mxu0
  %3404 = vmatprep.subr.bf16.mxu0 0
  %3405 = vmatpush1.bf16.msra.mxu0 %v2563
  %3406 = vmatprep.subr.bf16.mxu0 0
  %3407 = vmatpush1.bf16.msra.mxu0 %v2562
  %3408 = vmatprep.subr.bf16.mxu0 0
  %3409 = vmatpush1.bf16.msra.mxu0 %v2561
  %3410 = vmatprep.subr.bf16.mxu0 0
  %3411 = vmatpush1.bf16.msra.mxu0 %v2560
  %3412 = vmatprep.subr.bf16.mxu0 0
  %3413 = vmatpush1.bf16.msra.mxu0 %v2559
  %3414 = vmatprep.subr.bf16.mxu0 0
  %3415 = vmatpush1.bf16.msra.mxu0 %v2558
  %3416 = vmatprep.subr.bf16.mxu0 0
  %3417 = vmatpush1.bf16.msra.mxu0 %v2557
  %3418 = vmatprep.subr.bf16.mxu0 0
  %3419 = vmatpush1.bf16.msra.mxu0 %v2556
  %3420 = vmatprep.subr.bf16.mxu0 0
  %3421 = vmatpush2.bf16.msra.mxu0 %v2571
  %3422 = vmatprep.subr.bf16.mxu0 0
  %3423 = vmatpush2.bf16.msra.mxu0 %v2570
  %3424 = vmatprep.subr.bf16.mxu0 0
  %3425 = vmatpush2.bf16.msra.mxu0 %v2569
  %3426 = vmatprep.subr.bf16.mxu0 0
  %3427 = vmatpush2.bf16.msra.mxu0 %v2568
  %3428 = vmatprep.subr.bf16.mxu0 0
  %3429 = vmatpush2.bf16.msra.mxu0 %v2567
  %3430 = vmatprep.subr.bf16.mxu0 0
  %3431 = vmatpush2.bf16.msra.mxu0 %v2566
  %3432 = vmatprep.subr.bf16.mxu0 0
  %3433 = vmatpush2.bf16.msra.mxu0 %v2565
  %3434 = vmatprep.subr.bf16.mxu0 0
  %3435 = vmatpush2.bf16.msra.mxu0 %v2564
  %3436 = vmatprep.mubr.bf16.mxu0 %v1129
  %3437 = vmatmul.mubr.bf16.gmra.mxu0 %v1128
  %v3438 = vpop.f32.mrf.mxu0
  %v3439 = vadd.f32 %v3367, %v3438
  %v3440 = vpop.f32.mrf.mxu0
  %v3441 = vpop.f32.mrf.mxu0
  %v3442 = vadd.f32 %v3370, %v3441
  %v3443 = vpop.f32.mrf.mxu0
  %3444 = vmatprep.mubr.bf16.mxu0 %v1161
  %3445 = vmatmul.mubr.bf16.gmra.mxu0 %v1160
  %v3446 = vpop.f32.mrf.mxu0
  %v3447 = vadd.f32 %v3375, %v3446
  %v3448 = vpop.f32.mrf.mxu0
  %v3449 = vpop.f32.mrf.mxu0
  %v3450 = vadd.f32 %v3378, %v3449
  %v3451 = vpop.f32.mrf.mxu0
  %3452 = vmatprep.mubr.bf16.mxu0 %v1193
  %3453 = vmatmul.mubr.bf16.gmra.mxu0 %v1192
  %v3454 = vpop.f32.mrf.mxu0
  %v3455 = vadd.f32 %v3383, %v3454
  %v3456 = vpop.f32.mrf.mxu0
  %v3457 = vpop.f32.mrf.mxu0
  %v3458 = vadd.f32 %v3386, %v3457
  %v3459 = vpop.f32.mrf.mxu0
  %3460 = vmatprep.mubr.bf16.mxu0 %v1225
  %3461 = vmatmul.mubr.bf16.gmra.mxu0 %v1224
  %v3462 = vpop.f32.mrf.mxu0
  %v3463 = vadd.f32 %v3391, %v3462
  %v3464 = vpop.f32.mrf.mxu0
  %v3465 = vpop.f32.mrf.mxu0
  %v3466 = vadd.f32 %v3394, %v3465
  %v3467 = vpop.f32.mrf.mxu0
  %3468 = vmatprep.mubr.bf16.mxu0 %v1257
  %3469 = vmatmul.mubr.bf16.gmra.mxu0 %v1256
  %v3470 = vpop.f32.mrf.mxu0
  %v3471 = vadd.f32 %v3399, %v3470
  %v3472 = vpop.f32.mrf.mxu0
  %v3473 = vpop.f32.mrf.mxu0
  %v3474 = vpop.f32.mrf.mxu0
  %3475 = vdwg.mxu0
  %3476 = vmatprep.subr.bf16.mxu0 0
  %3477 = vmatpush1.bf16.msra.mxu0 %v2579
  %3478 = vmatprep.subr.bf16.mxu0 0
  %3479 = vmatpush1.bf16.msra.mxu0 %v2578
  %3480 = vmatprep.subr.bf16.mxu0 0
  %3481 = vmatpush1.bf16.msra.mxu0 %v2577
  %3482 = vmatprep.subr.bf16.mxu0 0
  %3483 = vmatpush1.bf16.msra.mxu0 %v2576
  %3484 = vmatprep.subr.bf16.mxu0 0
  %3485 = vmatpush1.bf16.msra.mxu0 %v2575
  %3486 = vmatprep.subr.bf16.mxu0 0
  %3487 = vmatpush1.bf16.msra.mxu0 %v2574
  %3488 = vmatprep.subr.bf16.mxu0 0
  %3489 = vmatpush1.bf16.msra.mxu0 %v2573
  %3490 = vmatprep.subr.bf16.mxu0 0
  %3491 = vmatpush1.bf16.msra.mxu0 %v2572
  %3492 = vmatprep.subr.bf16.mxu0 0
  %3493 = vmatpush2.bf16.msra.mxu0 %v2587
  %3494 = vmatprep.subr.bf16.mxu0 0
  %3495 = vmatpush2.bf16.msra.mxu0 %v2586
  %3496 = vmatprep.subr.bf16.mxu0 0
  %3497 = vmatpush2.bf16.msra.mxu0 %v2585
  %3498 = vmatprep.subr.bf16.mxu0 0
  %3499 = vmatpush2.bf16.msra.mxu0 %v2584
  %3500 = vmatprep.subr.bf16.mxu0 0
  %3501 = vmatpush2.bf16.msra.mxu0 %v2583
  %3502 = vmatprep.subr.bf16.mxu0 0
  %3503 = vmatpush2.bf16.msra.mxu0 %v2582
  %3504 = vmatprep.subr.bf16.mxu0 0
  %3505 = vmatpush2.bf16.msra.mxu0 %v2581
  %3506 = vmatprep.subr.bf16.mxu0 0
  %3507 = vmatpush2.bf16.msra.mxu0 %v2580
  %3508 = vmatprep.mubr.bf16.mxu0 %v1131
  %3509 = vmatmul.mubr.bf16.gmra.mxu0 %v1130
  %v3510 = vpop.f32.mrf.mxu0
  %v3511 = vadd.f32 %v3439, %v3510
  %v3512 = vpop.f32.mrf.mxu0
  %v3513 = vpop.f32.mrf.mxu0
  %v3514 = vadd.f32 %v3442, %v3513
  %v3515 = vpop.f32.mrf.mxu0
  %3516 = vmatprep.mubr.bf16.mxu0 %v1163
  %3517 = vmatmul.mubr.bf16.gmra.mxu0 %v1162
  %v3518 = vpop.f32.mrf.mxu0
  %v3519 = vadd.f32 %v3447, %v3518
  %v3520 = vpop.f32.mrf.mxu0
  %v3521 = vpop.f32.mrf.mxu0
  %v3522 = vadd.f32 %v3450, %v3521
  %v3523 = vpop.f32.mrf.mxu0
  %3524 = vmatprep.mubr.bf16.mxu0 %v1195
  %3525 = vmatmul.mubr.bf16.gmra.mxu0 %v1194
  %v3526 = vpop.f32.mrf.mxu0
  %v3527 = vadd.f32 %v3455, %v3526
  %v3528 = vpop.f32.mrf.mxu0
  %v3529 = vpop.f32.mrf.mxu0
  %v3530 = vadd.f32 %v3458, %v3529
  %v3531 = vpop.f32.mrf.mxu0
  %3532 = vmatprep.mubr.bf16.mxu0 %v1227
  %3533 = vmatmul.mubr.bf16.gmra.mxu0 %v1226
  %v3534 = vpop.f32.mrf.mxu0
  %v3535 = vadd.f32 %v3463, %v3534
  %v3536 = vpop.f32.mrf.mxu0
  %v3537 = vpop.f32.mrf.mxu0
  %v3538 = vadd.f32 %v3466, %v3537
  %v3539 = vpop.f32.mrf.mxu0
  %3540 = vmatprep.mubr.bf16.mxu0 %v1259
  %3541 = vmatmul.mubr.bf16.gmra.mxu0 %v1258
  %v3542 = vpop.f32.mrf.mxu0
  %v3543 = vadd.f32 %v3471, %v3542
  %v3544 = vpop.f32.mrf.mxu0
  %v3545 = vpop.f32.mrf.mxu0
  %v3546 = vpop.f32.mrf.mxu0
  %3547 = vdwg.mxu0
  %3548 = vmatprep.subr.bf16.mxu0 0
  %3549 = vmatpush1.bf16.msra.mxu0 %v2595
  %3550 = vmatprep.subr.bf16.mxu0 0
  %3551 = vmatpush1.bf16.msra.mxu0 %v2594
  %3552 = vmatprep.subr.bf16.mxu0 0
  %3553 = vmatpush1.bf16.msra.mxu0 %v2593
  %3554 = vmatprep.subr.bf16.mxu0 0
  %3555 = vmatpush1.bf16.msra.mxu0 %v2592
  %3556 = vmatprep.subr.bf16.mxu0 0
  %3557 = vmatpush1.bf16.msra.mxu0 %v2591
  %3558 = vmatprep.subr.bf16.mxu0 0
  %3559 = vmatpush1.bf16.msra.mxu0 %v2590
  %3560 = vmatprep.subr.bf16.mxu0 0
  %3561 = vmatpush1.bf16.msra.mxu0 %v2589
  %3562 = vmatprep.subr.bf16.mxu0 0
  %3563 = vmatpush1.bf16.msra.mxu0 %v2588
  %3564 = vmatprep.subr.bf16.mxu0 0
  %3565 = vmatpush2.bf16.msra.mxu0 %v2603
  %3566 = vmatprep.subr.bf16.mxu0 0
  %3567 = vmatpush2.bf16.msra.mxu0 %v2602
  %3568 = vmatprep.subr.bf16.mxu0 0
  %3569 = vmatpush2.bf16.msra.mxu0 %v2601
  %3570 = vmatprep.subr.bf16.mxu0 0
  %3571 = vmatpush2.bf16.msra.mxu0 %v2600
  %3572 = vmatprep.subr.bf16.mxu0 0
  %3573 = vmatpush2.bf16.msra.mxu0 %v2599
  %3574 = vmatprep.subr.bf16.mxu0 0
  %3575 = vmatpush2.bf16.msra.mxu0 %v2598
  %3576 = vmatprep.subr.bf16.mxu0 0
  %3577 = vmatpush2.bf16.msra.mxu0 %v2597
  %3578 = vmatprep.subr.bf16.mxu0 0
  %3579 = vmatpush2.bf16.msra.mxu0 %v2596
  %3580 = vmatprep.mubr.bf16.mxu0 %v1133
  %3581 = vmatmul.mubr.bf16.gmra.mxu0 %v1132
  %v3582 = vpop.f32.mrf.mxu0
  %v3583 = vadd.f32 %v3511, %v3582
  %v3584 = vpop.f32.mrf.mxu0
  %v3585 = vpop.f32.mrf.mxu0
  %v3586 = vadd.f32 %v3514, %v3585
  %v3587 = vpop.f32.mrf.mxu0
  %3588 = vmatprep.mubr.bf16.mxu0 %v1165
  %3589 = vmatmul.mubr.bf16.gmra.mxu0 %v1164
  %v3590 = vpop.f32.mrf.mxu0
  %v3591 = vadd.f32 %v3519, %v3590
  %v3592 = vpop.f32.mrf.mxu0
  %v3593 = vpop.f32.mrf.mxu0
  %v3594 = vadd.f32 %v3522, %v3593
  %v3595 = vpop.f32.mrf.mxu0
  %3596 = vmatprep.mubr.bf16.mxu0 %v1197
  %3597 = vmatmul.mubr.bf16.gmra.mxu0 %v1196
  %v3598 = vpop.f32.mrf.mxu0
  %v3599 = vadd.f32 %v3527, %v3598
  %v3600 = vpop.f32.mrf.mxu0
  %v3601 = vpop.f32.mrf.mxu0
  %v3602 = vadd.f32 %v3530, %v3601
  %v3603 = vpop.f32.mrf.mxu0
  %3604 = vmatprep.mubr.bf16.mxu0 %v1229
  %3605 = vmatmul.mubr.bf16.gmra.mxu0 %v1228
  %v3606 = vpop.f32.mrf.mxu0
  %v3607 = vadd.f32 %v3535, %v3606
  %v3608 = vpop.f32.mrf.mxu0
  %v3609 = vpop.f32.mrf.mxu0
  %v3610 = vadd.f32 %v3538, %v3609
  %v3611 = vpop.f32.mrf.mxu0
  %3612 = vmatprep.mubr.bf16.mxu0 %v1261
  %3613 = vmatmul.mubr.bf16.gmra.mxu0 %v1260
  %v3614 = vpop.f32.mrf.mxu0
  %v3615 = vadd.f32 %v3543, %v3614
  %v3616 = vpop.f32.mrf.mxu0
  %v3617 = vpop.f32.mrf.mxu0
  %v3618 = vpop.f32.mrf.mxu0
  %3619 = vdwg.mxu0
  %3620 = vmatprep.subr.bf16.mxu0 0
  %3621 = vmatpush1.bf16.msra.mxu0 %v2611
  %3622 = vmatprep.subr.bf16.mxu0 0
  %3623 = vmatpush1.bf16.msra.mxu0 %v2610
  %3624 = vmatprep.subr.bf16.mxu0 0
  %3625 = vmatpush1.bf16.msra.mxu0 %v2609
  %3626 = vmatprep.subr.bf16.mxu0 0
  %3627 = vmatpush1.bf16.msra.mxu0 %v2608
  %3628 = vmatprep.subr.bf16.mxu0 0
  %3629 = vmatpush1.bf16.msra.mxu0 %v2607
  %3630 = vmatprep.subr.bf16.mxu0 0
  %3631 = vmatpush1.bf16.msra.mxu0 %v2606
  %3632 = vmatprep.subr.bf16.mxu0 0
  %3633 = vmatpush1.bf16.msra.mxu0 %v2605
  %3634 = vmatprep.subr.bf16.mxu0 0
  %3635 = vmatpush1.bf16.msra.mxu0 %v2604
  %3636 = vmatprep.subr.bf16.mxu0 0
  %3637 = vmatpush2.bf16.msra.mxu0 %v2619
  %3638 = vmatprep.subr.bf16.mxu0 0
  %3639 = vmatpush2.bf16.msra.mxu0 %v2618
  %3640 = vmatprep.subr.bf16.mxu0 0
  %3641 = vmatpush2.bf16.msra.mxu0 %v2617
  %3642 = vmatprep.subr.bf16.mxu0 0
  %3643 = vmatpush2.bf16.msra.mxu0 %v2616
  %3644 = vmatprep.subr.bf16.mxu0 0
  %3645 = vmatpush2.bf16.msra.mxu0 %v2615
  %3646 = vmatprep.subr.bf16.mxu0 0
  %3647 = vmatpush2.bf16.msra.mxu0 %v2614
  %3648 = vmatprep.subr.bf16.mxu0 0
  %3649 = vmatpush2.bf16.msra.mxu0 %v2613
  %3650 = vmatprep.subr.bf16.mxu0 0
  %3651 = vmatpush2.bf16.msra.mxu0 %v2612
  %3652 = vmatprep.mubr.bf16.mxu0 %v1135
  %3653 = vmatmul.mubr.bf16.gmra.mxu0 %v1134
  %v3654 = vpop.f32.mrf.mxu0
  %v3655 = vadd.f32 %v3583, %v3654
  %v3656 = vpop.f32.mrf.mxu0
  %v3657 = vpop.f32.mrf.mxu0
  %v3658 = vadd.f32 %v3586, %v3657
  %v3659 = vpop.f32.mrf.mxu0
  %3660 = vmatprep.mubr.bf16.mxu0 %v1167
  %3661 = vmatmul.mubr.bf16.gmra.mxu0 %v1166
  %v3662 = vpop.f32.mrf.mxu0
  %v3663 = vadd.f32 %v3591, %v3662
  %v3664 = vpop.f32.mrf.mxu0
  %v3665 = vpop.f32.mrf.mxu0
  %v3666 = vadd.f32 %v3594, %v3665
  %v3667 = vpop.f32.mrf.mxu0
  %3668 = vmatprep.mubr.bf16.mxu0 %v1199
  %3669 = vmatmul.mubr.bf16.gmra.mxu0 %v1198
  %v3670 = vpop.f32.mrf.mxu0
  %v3671 = vadd.f32 %v3599, %v3670
  %v3672 = vpop.f32.mrf.mxu0
  %v3673 = vpop.f32.mrf.mxu0
  %v3674 = vadd.f32 %v3602, %v3673
  %v3675 = vpop.f32.mrf.mxu0
  %3676 = vmatprep.mubr.bf16.mxu0 %v1231
  %3677 = vmatmul.mubr.bf16.gmra.mxu0 %v1230
  %v3678 = vpop.f32.mrf.mxu0
  %v3679 = vadd.f32 %v3607, %v3678
  %v3680 = vpop.f32.mrf.mxu0
  %v3681 = vpop.f32.mrf.mxu0
  %v3682 = vadd.f32 %v3610, %v3681
  %v3683 = vpop.f32.mrf.mxu0
  %3684 = vmatprep.mubr.bf16.mxu0 %v1263
  %3685 = vmatmul.mubr.bf16.gmra.mxu0 %v1262
  %v3686 = vpop.f32.mrf.mxu0
  %v3687 = vadd.f32 %v3615, %v3686
  %v3688 = vpop.f32.mrf.mxu0
  %v3689 = vpop.f32.mrf.mxu0
  %v3690 = vpop.f32.mrf.mxu0
  %3691 = vdwg.mxu0
  %3692 = vmatprep.subr.bf16.mxu0 0
  %3693 = vmatpush1.bf16.msra.mxu0 %v2627
  %3694 = vmatprep.subr.bf16.mxu0 0
  %3695 = vmatpush1.bf16.msra.mxu0 %v2626
  %3696 = vmatprep.subr.bf16.mxu0 0
  %3697 = vmatpush1.bf16.msra.mxu0 %v2625
  %3698 = vmatprep.subr.bf16.mxu0 0
  %3699 = vmatpush1.bf16.msra.mxu0 %v2624
  %3700 = vmatprep.subr.bf16.mxu0 0
  %3701 = vmatpush1.bf16.msra.mxu0 %v2623
  %3702 = vmatprep.subr.bf16.mxu0 0
  %3703 = vmatpush1.bf16.msra.mxu0 %v2622
  %3704 = vmatprep.subr.bf16.mxu0 0
  %3705 = vmatpush1.bf16.msra.mxu0 %v2621
  %3706 = vmatprep.subr.bf16.mxu0 0
  %3707 = vmatpush1.bf16.msra.mxu0 %v2620
  %3708 = vmatprep.subr.bf16.mxu0 0
  %3709 = vmatpush2.bf16.msra.mxu0 %v2635
  %3710 = vmatprep.subr.bf16.mxu0 0
  %3711 = vmatpush2.bf16.msra.mxu0 %v2634
  %3712 = vmatprep.subr.bf16.mxu0 0
  %3713 = vmatpush2.bf16.msra.mxu0 %v2633
  %3714 = vmatprep.subr.bf16.mxu0 0
  %3715 = vmatpush2.bf16.msra.mxu0 %v2632
  %3716 = vmatprep.subr.bf16.mxu0 0
  %3717 = vmatpush2.bf16.msra.mxu0 %v2631
  %3718 = vmatprep.subr.bf16.mxu0 0
  %3719 = vmatpush2.bf16.msra.mxu0 %v2630
  %3720 = vmatprep.subr.bf16.mxu0 0
  %3721 = vmatpush2.bf16.msra.mxu0 %v2629
  %3722 = vmatprep.subr.bf16.mxu0 0
  %3723 = vmatpush2.bf16.msra.mxu0 %v2628
  %3724 = vmatprep.mubr.bf16.mxu0 %v1137
  %3725 = vmatmul.mubr.bf16.gmra.mxu0 %v1136
  %v3726 = vpop.f32.mrf.mxu0
  %v3727 = vadd.f32 %v3655, %v3726
  %v3728 = vpop.f32.mrf.mxu0
  %v3729 = vpop.f32.mrf.mxu0
  %v3730 = vadd.f32 %v3658, %v3729
  %v3731 = vpop.f32.mrf.mxu0
  %3732 = vmatprep.mubr.bf16.mxu0 %v1169
  %3733 = vmatmul.mubr.bf16.gmra.mxu0 %v1168
  %v3734 = vpop.f32.mrf.mxu0
  %v3735 = vadd.f32 %v3663, %v3734
  %v3736 = vpop.f32.mrf.mxu0
  %v3737 = vpop.f32.mrf.mxu0
  %v3738 = vadd.f32 %v3666, %v3737
  %v3739 = vpop.f32.mrf.mxu0
  %3740 = vmatprep.mubr.bf16.mxu0 %v1201
  %3741 = vmatmul.mubr.bf16.gmra.mxu0 %v1200
  %v3742 = vpop.f32.mrf.mxu0
  %v3743 = vadd.f32 %v3671, %v3742
  %v3744 = vpop.f32.mrf.mxu0
  %v3745 = vpop.f32.mrf.mxu0
  %v3746 = vadd.f32 %v3674, %v3745
  %v3747 = vpop.f32.mrf.mxu0
  %3748 = vmatprep.mubr.bf16.mxu0 %v1233
  %3749 = vmatmul.mubr.bf16.gmra.mxu0 %v1232
  %v3750 = vpop.f32.mrf.mxu0
  %v3751 = vadd.f32 %v3679, %v3750
  %v3752 = vpop.f32.mrf.mxu0
  %v3753 = vpop.f32.mrf.mxu0
  %v3754 = vadd.f32 %v3682, %v3753
  %v3755 = vpop.f32.mrf.mxu0
  %3756 = vmatprep.mubr.bf16.mxu0 %v1265
  %3757 = vmatmul.mubr.bf16.gmra.mxu0 %v1264
  %v3758 = vpop.f32.mrf.mxu0
  %v3759 = vadd.f32 %v3687, %v3758
  %v3760 = vpop.f32.mrf.mxu0
  %v3761 = vpop.f32.mrf.mxu0
  %v3762 = vpop.f32.mrf.mxu0
  %3763 = vdwg.mxu0
  %3764 = vmatprep.subr.bf16.mxu0 0
  %3765 = vmatpush1.bf16.msra.mxu0 %v2643
  %3766 = vmatprep.subr.bf16.mxu0 0
  %3767 = vmatpush1.bf16.msra.mxu0 %v2642
  %3768 = vmatprep.subr.bf16.mxu0 0
  %3769 = vmatpush1.bf16.msra.mxu0 %v2641
  %3770 = vmatprep.subr.bf16.mxu0 0
  %3771 = vmatpush1.bf16.msra.mxu0 %v2640
  %3772 = vmatprep.subr.bf16.mxu0 0
  %3773 = vmatpush1.bf16.msra.mxu0 %v2639
  %3774 = vmatprep.subr.bf16.mxu0 0
  %3775 = vmatpush1.bf16.msra.mxu0 %v2638
  %3776 = vmatprep.subr.bf16.mxu0 0
  %3777 = vmatpush1.bf16.msra.mxu0 %v2637
  %3778 = vmatprep.subr.bf16.mxu0 0
  %3779 = vmatpush1.bf16.msra.mxu0 %v2636
  %3780 = vmatprep.subr.bf16.mxu0 0
  %3781 = vmatpush2.bf16.msra.mxu0 %v2651
  %3782 = vmatprep.subr.bf16.mxu0 0
  %3783 = vmatpush2.bf16.msra.mxu0 %v2650
  %3784 = vmatprep.subr.bf16.mxu0 0
  %3785 = vmatpush2.bf16.msra.mxu0 %v2649
  %3786 = vmatprep.subr.bf16.mxu0 0
  %3787 = vmatpush2.bf16.msra.mxu0 %v2648
  %3788 = vmatprep.subr.bf16.mxu0 0
  %3789 = vmatpush2.bf16.msra.mxu0 %v2647
  %3790 = vmatprep.subr.bf16.mxu0 0
  %3791 = vmatpush2.bf16.msra.mxu0 %v2646
  %3792 = vmatprep.subr.bf16.mxu0 0
  %3793 = vmatpush2.bf16.msra.mxu0 %v2645
  %3794 = vmatprep.subr.bf16.mxu0 0
  %3795 = vmatpush2.bf16.msra.mxu0 %v2644
  %3796 = vmatprep.mubr.bf16.mxu0 %v1139
  %3797 = vmatmul.mubr.bf16.gmra.mxu0 %v1138
  %v3798 = vpop.f32.mrf.mxu0
  %v3799 = vadd.f32 %v3727, %v3798
  %v3800 = vpop.f32.mrf.mxu0
  %v3801 = vpop.f32.mrf.mxu0
  %v3802 = vadd.f32 %v3730, %v3801
  %v3803 = vpop.f32.mrf.mxu0
  %3804 = vmatprep.mubr.bf16.mxu0 %v1171
  %3805 = vmatmul.mubr.bf16.gmra.mxu0 %v1170
  %v3806 = vpop.f32.mrf.mxu0
  %v3807 = vadd.f32 %v3735, %v3806
  %v3808 = vpop.f32.mrf.mxu0
  %v3809 = vpop.f32.mrf.mxu0
  %v3810 = vadd.f32 %v3738, %v3809
  %v3811 = vpop.f32.mrf.mxu0
  %3812 = vmatprep.mubr.bf16.mxu0 %v1203
  %3813 = vmatmul.mubr.bf16.gmra.mxu0 %v1202
  %v3814 = vpop.f32.mrf.mxu0
  %v3815 = vadd.f32 %v3743, %v3814
  %v3816 = vpop.f32.mrf.mxu0
  %v3817 = vpop.f32.mrf.mxu0
  %v3818 = vadd.f32 %v3746, %v3817
  %v3819 = vpop.f32.mrf.mxu0
  %3820 = vmatprep.mubr.bf16.mxu0 %v1235
  %3821 = vmatmul.mubr.bf16.gmra.mxu0 %v1234
  %v3822 = vpop.f32.mrf.mxu0
  %v3823 = vadd.f32 %v3751, %v3822
  %v3824 = vpop.f32.mrf.mxu0
  %v3825 = vpop.f32.mrf.mxu0
  %v3826 = vadd.f32 %v3754, %v3825
  %v3827 = vpop.f32.mrf.mxu0
  %3828 = vmatprep.mubr.bf16.mxu0 %v1267
  %3829 = vmatmul.mubr.bf16.gmra.mxu0 %v1266
  %v3830 = vpop.f32.mrf.mxu0
  %v3831 = vadd.f32 %v3759, %v3830
  %v3832 = vpop.f32.mrf.mxu0
  %v3833 = vpop.f32.mrf.mxu0
  %v3834 = vpop.f32.mrf.mxu0
  %3835 = vdwg.mxu0
  %3836 = vmatprep.subr.bf16.mxu0 0
  %3837 = vmatpush1.bf16.msra.mxu0 %v2659
  %3838 = vmatprep.subr.bf16.mxu0 0
  %3839 = vmatpush1.bf16.msra.mxu0 %v2658
  %3840 = vmatprep.subr.bf16.mxu0 0
  %3841 = vmatpush1.bf16.msra.mxu0 %v2657
  %3842 = vmatprep.subr.bf16.mxu0 0
  %3843 = vmatpush1.bf16.msra.mxu0 %v2656
  %3844 = vmatprep.subr.bf16.mxu0 0
  %3845 = vmatpush1.bf16.msra.mxu0 %v2655
  %3846 = vmatprep.subr.bf16.mxu0 0
  %3847 = vmatpush1.bf16.msra.mxu0 %v2654
  %3848 = vmatprep.subr.bf16.mxu0 0
  %3849 = vmatpush1.bf16.msra.mxu0 %v2653
  %3850 = vmatprep.subr.bf16.mxu0 0
  %3851 = vmatpush1.bf16.msra.mxu0 %v2652
  %3852 = vmatprep.subr.bf16.mxu0 0
  %3853 = vmatpush2.bf16.msra.mxu0 %v2667
  %3854 = vmatprep.subr.bf16.mxu0 0
  %3855 = vmatpush2.bf16.msra.mxu0 %v2666
  %3856 = vmatprep.subr.bf16.mxu0 0
  %3857 = vmatpush2.bf16.msra.mxu0 %v2665
  %3858 = vmatprep.subr.bf16.mxu0 0
  %3859 = vmatpush2.bf16.msra.mxu0 %v2664
  %3860 = vmatprep.subr.bf16.mxu0 0
  %3861 = vmatpush2.bf16.msra.mxu0 %v2663
  %3862 = vmatprep.subr.bf16.mxu0 0
  %3863 = vmatpush2.bf16.msra.mxu0 %v2662
  %3864 = vmatprep.subr.bf16.mxu0 0
  %3865 = vmatpush2.bf16.msra.mxu0 %v2661
  %3866 = vmatprep.subr.bf16.mxu0 0
  %3867 = vmatpush2.bf16.msra.mxu0 %v2660
  %3868 = vmatprep.mubr.bf16.mxu0 %v1141
  %3869 = vmatmul.mubr.bf16.gmra.mxu0 %v1140
  %v3870 = vpop.f32.mrf.mxu0
  %v3871 = vadd.f32 %v3799, %v3870
  %v3872 = vpop.f32.mrf.mxu0
  %v3873 = vpop.f32.mrf.mxu0
  %v3874 = vadd.f32 %v3802, %v3873
  %v3875 = vpop.f32.mrf.mxu0
  %3876 = vmatprep.mubr.bf16.mxu0 %v1173
  %3877 = vmatmul.mubr.bf16.gmra.mxu0 %v1172
  %v3878 = vpop.f32.mrf.mxu0
  %v3879 = vadd.f32 %v3807, %v3878
  %v3880 = vpop.f32.mrf.mxu0
  %v3881 = vpop.f32.mrf.mxu0
  %v3882 = vadd.f32 %v3810, %v3881
  %v3883 = vpop.f32.mrf.mxu0
  %3884 = vmatprep.mubr.bf16.mxu0 %v1205
  %3885 = vmatmul.mubr.bf16.gmra.mxu0 %v1204
  %v3886 = vpop.f32.mrf.mxu0
  %v3887 = vadd.f32 %v3815, %v3886
  %v3888 = vpop.f32.mrf.mxu0
  %v3889 = vpop.f32.mrf.mxu0
  %v3890 = vadd.f32 %v3818, %v3889
  %v3891 = vpop.f32.mrf.mxu0
  %3892 = vmatprep.mubr.bf16.mxu0 %v1237
  %3893 = vmatmul.mubr.bf16.gmra.mxu0 %v1236
  %v3894 = vpop.f32.mrf.mxu0
  %v3895 = vadd.f32 %v3823, %v3894
  %v3896 = vpop.f32.mrf.mxu0
  %v3897 = vpop.f32.mrf.mxu0
  %v3898 = vadd.f32 %v3826, %v3897
  %v3899 = vpop.f32.mrf.mxu0
  %3900 = vmatprep.mubr.bf16.mxu0 %v1269
  %3901 = vmatmul.mubr.bf16.gmra.mxu0 %v1268
  %v3902 = vpop.f32.mrf.mxu0
  %v3903 = vadd.f32 %v3831, %v3902
  %v3904 = vpop.f32.mrf.mxu0
  %v3905 = vpop.f32.mrf.mxu0
  %v3906 = vpop.f32.mrf.mxu0
  %3907 = vdwg.mxu0
  %3908 = vmatprep.subr.bf16.mxu0 0
  %3909 = vmatpush1.bf16.msra.mxu0 %v2675
  %3910 = vmatprep.subr.bf16.mxu0 0
  %3911 = vmatpush1.bf16.msra.mxu0 %v2674
  %3912 = vmatprep.subr.bf16.mxu0 0
  %3913 = vmatpush1.bf16.msra.mxu0 %v2673
  %3914 = vmatprep.subr.bf16.mxu0 0
  %3915 = vmatpush1.bf16.msra.mxu0 %v2672
  %3916 = vmatprep.subr.bf16.mxu0 0
  %3917 = vmatpush1.bf16.msra.mxu0 %v2671
  %3918 = vmatprep.subr.bf16.mxu0 0
  %3919 = vmatpush1.bf16.msra.mxu0 %v2670
  %3920 = vmatprep.subr.bf16.mxu0 0
  %3921 = vmatpush1.bf16.msra.mxu0 %v2669
  %3922 = vmatprep.subr.bf16.mxu0 0
  %3923 = vmatpush1.bf16.msra.mxu0 %v2668
  %3924 = vmatprep.subr.bf16.mxu0 0
  %3925 = vmatpush2.bf16.msra.mxu0 %v2683
  %3926 = vmatprep.subr.bf16.mxu0 0
  %3927 = vmatpush2.bf16.msra.mxu0 %v2682
  %3928 = vmatprep.subr.bf16.mxu0 0
  %3929 = vmatpush2.bf16.msra.mxu0 %v2681
  %3930 = vmatprep.subr.bf16.mxu0 0
  %3931 = vmatpush2.bf16.msra.mxu0 %v2680
  %3932 = vmatprep.subr.bf16.mxu0 0
  %3933 = vmatpush2.bf16.msra.mxu0 %v2679
  %3934 = vmatprep.subr.bf16.mxu0 0
  %3935 = vmatpush2.bf16.msra.mxu0 %v2678
  %3936 = vmatprep.subr.bf16.mxu0 0
  %3937 = vmatpush2.bf16.msra.mxu0 %v2677
  %3938 = vmatprep.subr.bf16.mxu0 0
  %3939 = vmatpush2.bf16.msra.mxu0 %v2676
  %3940 = vmatprep.mubr.bf16.mxu0 %v1143
  %3941 = vmatmul.mubr.bf16.gmra.mxu0 %v1142
  %v3942 = vpop.f32.mrf.mxu0
  %v3943 = vadd.f32 %v3871, %v3942
  %v3944 = vpop.f32.mrf.mxu0
  %v3945 = vpop.f32.mrf.mxu0
  %v3946 = vadd.f32 %v3874, %v3945
  %v3947 = vpop.f32.mrf.mxu0
  %3948 = vmatprep.mubr.bf16.mxu0 %v1175
  %3949 = vmatmul.mubr.bf16.gmra.mxu0 %v1174
  %v3950 = vpop.f32.mrf.mxu0
  %v3951 = vadd.f32 %v3879, %v3950
  %v3952 = vpop.f32.mrf.mxu0
  %v3953 = vpop.f32.mrf.mxu0
  %v3954 = vadd.f32 %v3882, %v3953
  %v3955 = vpop.f32.mrf.mxu0
  %3956 = vmatprep.mubr.bf16.mxu0 %v1207
  %3957 = vmatmul.mubr.bf16.gmra.mxu0 %v1206
  %v3958 = vpop.f32.mrf.mxu0
  %v3959 = vadd.f32 %v3887, %v3958
  %v3960 = vpop.f32.mrf.mxu0
  %v3961 = vpop.f32.mrf.mxu0
  %v3962 = vadd.f32 %v3890, %v3961
  %v3963 = vpop.f32.mrf.mxu0
  %3964 = vmatprep.mubr.bf16.mxu0 %v1239
  %3965 = vmatmul.mubr.bf16.gmra.mxu0 %v1238
  %v3966 = vpop.f32.mrf.mxu0
  %v3967 = vadd.f32 %v3895, %v3966
  %v3968 = vpop.f32.mrf.mxu0
  %v3969 = vpop.f32.mrf.mxu0
  %v3970 = vadd.f32 %v3898, %v3969
  %v3971 = vpop.f32.mrf.mxu0
  %3972 = vmatprep.mubr.bf16.mxu0 %v1271
  %3973 = vmatmul.mubr.bf16.gmra.mxu0 %v1270
  %v3974 = vpop.f32.mrf.mxu0
  %v3975 = vadd.f32 %v3903, %v3974
  %v3976 = vpop.f32.mrf.mxu0
  %v3977 = vpop.f32.mrf.mxu0
  %v3978 = vpop.f32.mrf.mxu0
  %3979 = vdwg.mxu0
  %3980 = vmatprep.subr.bf16.mxu0 0
  %3981 = vmatpush1.bf16.msra.mxu0 %v2691
  %3982 = vmatprep.subr.bf16.mxu0 0
  %3983 = vmatpush1.bf16.msra.mxu0 %v2690
  %3984 = vmatprep.subr.bf16.mxu0 0
  %3985 = vmatpush1.bf16.msra.mxu0 %v2689
  %3986 = vmatprep.subr.bf16.mxu0 0
  %3987 = vmatpush1.bf16.msra.mxu0 %v2688
  %3988 = vmatprep.subr.bf16.mxu0 0
  %3989 = vmatpush1.bf16.msra.mxu0 %v2687
  %3990 = vmatprep.subr.bf16.mxu0 0
  %3991 = vmatpush1.bf16.msra.mxu0 %v2686
  %3992 = vmatprep.subr.bf16.mxu0 0
  %3993 = vmatpush1.bf16.msra.mxu0 %v2685
  %3994 = vmatprep.subr.bf16.mxu0 0
  %3995 = vmatpush1.bf16.msra.mxu0 %v2684
  %3996 = vmatprep.subr.bf16.mxu0 0
  %3997 = vmatpush2.bf16.msra.mxu0 %v2699
  %3998 = vmatprep.subr.bf16.mxu0 0
  %3999 = vmatpush2.bf16.msra.mxu0 %v2698
  %4000 = vmatprep.subr.bf16.mxu0 0
  %4001 = vmatpush2.bf16.msra.mxu0 %v2697
  %4002 = vmatprep.subr.bf16.mxu0 0
  %4003 = vmatpush2.bf16.msra.mxu0 %v2696
  %4004 = vmatprep.subr.bf16.mxu0 0
  %4005 = vmatpush2.bf16.msra.mxu0 %v2695
  %4006 = vmatprep.subr.bf16.mxu0 0
  %4007 = vmatpush2.bf16.msra.mxu0 %v2694
  %4008 = vmatprep.subr.bf16.mxu0 0
  %4009 = vmatpush2.bf16.msra.mxu0 %v2693
  %4010 = vmatprep.subr.bf16.mxu0 0
  %4011 = vmatpush2.bf16.msra.mxu0 %v2692
  %4012 = vmatprep.mubr.bf16.mxu0 %v1145
  %4013 = vmatmul.mubr.bf16.gmra.mxu0 %v1144
  %v4014 = vpop.f32.mrf.mxu0
  %v4015 = vadd.f32 %v3943, %v4014
  %v4016 = vpop.f32.mrf.mxu0
  %v4017 = vpop.f32.mrf.mxu0
  %v4018 = vadd.f32 %v3946, %v4017
  %v4019 = vpop.f32.mrf.mxu0
  %4020 = vmatprep.mubr.bf16.mxu0 %v1177
  %4021 = vmatmul.mubr.bf16.gmra.mxu0 %v1176
  %v4022 = vpop.f32.mrf.mxu0
  %v4023 = vadd.f32 %v3951, %v4022
  %v4024 = vpop.f32.mrf.mxu0
  %v4025 = vpop.f32.mrf.mxu0
  %v4026 = vadd.f32 %v3954, %v4025
  %v4027 = vpop.f32.mrf.mxu0
  %4028 = vmatprep.mubr.bf16.mxu0 %v1209
  %4029 = vmatmul.mubr.bf16.gmra.mxu0 %v1208
  %v4030 = vpop.f32.mrf.mxu0
  %v4031 = vadd.f32 %v3959, %v4030
  %v4032 = vpop.f32.mrf.mxu0
  %v4033 = vpop.f32.mrf.mxu0
  %v4034 = vadd.f32 %v3962, %v4033
  %v4035 = vpop.f32.mrf.mxu0
  %4036 = vmatprep.mubr.bf16.mxu0 %v1241
  %4037 = vmatmul.mubr.bf16.gmra.mxu0 %v1240
  %v4038 = vpop.f32.mrf.mxu0
  %v4039 = vadd.f32 %v3967, %v4038
  %v4040 = vpop.f32.mrf.mxu0
  %v4041 = vpop.f32.mrf.mxu0
  %v4042 = vadd.f32 %v3970, %v4041
  %v4043 = vpop.f32.mrf.mxu0
  %4044 = vmatprep.mubr.bf16.mxu0 %v1273
  %4045 = vmatmul.mubr.bf16.gmra.mxu0 %v1272
  %v4046 = vpop.f32.mrf.mxu0
  %v4047 = vadd.f32 %v3975, %v4046
  %v4048 = vpop.f32.mrf.mxu0
  %v4049 = vpop.f32.mrf.mxu0
  %v4050 = vpop.f32.mrf.mxu0
  %4051 = vdwg.mxu0
  %4052 = vmatprep.subr.bf16.mxu0 0
  %4053 = vmatpush1.bf16.msra.mxu0 %v2707
  %4054 = vmatprep.subr.bf16.mxu0 0
  %4055 = vmatpush1.bf16.msra.mxu0 %v2706
  %4056 = vmatprep.subr.bf16.mxu0 0
  %4057 = vmatpush1.bf16.msra.mxu0 %v2705
  %4058 = vmatprep.subr.bf16.mxu0 0
  %4059 = vmatpush1.bf16.msra.mxu0 %v2704
  %4060 = vmatprep.subr.bf16.mxu0 0
  %4061 = vmatpush1.bf16.msra.mxu0 %v2703
  %4062 = vmatprep.subr.bf16.mxu0 0
  %4063 = vmatpush1.bf16.msra.mxu0 %v2702
  %4064 = vmatprep.subr.bf16.mxu0 0
  %4065 = vmatpush1.bf16.msra.mxu0 %v2701
  %4066 = vmatprep.subr.bf16.mxu0 0
  %4067 = vmatpush1.bf16.msra.mxu0 %v2700
  %4068 = vmatprep.subr.bf16.mxu0 0
  %4069 = vmatpush2.bf16.msra.mxu0 %v2715
  %4070 = vmatprep.subr.bf16.mxu0 0
  %4071 = vmatpush2.bf16.msra.mxu0 %v2714
  %4072 = vmatprep.subr.bf16.mxu0 0
  %4073 = vmatpush2.bf16.msra.mxu0 %v2713
  %4074 = vmatprep.subr.bf16.mxu0 0
  %4075 = vmatpush2.bf16.msra.mxu0 %v2712
  %4076 = vmatprep.subr.bf16.mxu0 0
  %4077 = vmatpush2.bf16.msra.mxu0 %v2711
  %4078 = vmatprep.subr.bf16.mxu0 0
  %4079 = vmatpush2.bf16.msra.mxu0 %v2710
  %4080 = vmatprep.subr.bf16.mxu0 0
  %4081 = vmatpush2.bf16.msra.mxu0 %v2709
  %4082 = vmatprep.subr.bf16.mxu0 0
  %4083 = vmatpush2.bf16.msra.mxu0 %v2708
  %4084 = vmatprep.mubr.bf16.mxu0 %v1147
  %4085 = vmatmul.mubr.bf16.gmra.mxu0 %v1146
  %v4086 = vpop.f32.mrf.mxu0
  %v4087 = vadd.f32 %v4015, %v4086
  %v4088 = vpop.f32.mrf.mxu0
  %v4089 = vpop.f32.mrf.mxu0
  %v4090 = vadd.f32 %v4018, %v4089
  %v4091 = vpop.f32.mrf.mxu0
  %4092 = vmatprep.mubr.bf16.mxu0 %v1179
  %4093 = vmatmul.mubr.bf16.gmra.mxu0 %v1178
  %v4094 = vpop.f32.mrf.mxu0
  %v4095 = vadd.f32 %v4023, %v4094
  %v4096 = vpop.f32.mrf.mxu0
  %v4097 = vpop.f32.mrf.mxu0
  %v4098 = vadd.f32 %v4026, %v4097
  %v4099 = vpop.f32.mrf.mxu0
  %4100 = vmatprep.mubr.bf16.mxu0 %v1211
  %4101 = vmatmul.mubr.bf16.gmra.mxu0 %v1210
  %v4102 = vpop.f32.mrf.mxu0
  %v4103 = vadd.f32 %v4031, %v4102
  %v4104 = vpop.f32.mrf.mxu0
  %v4105 = vpop.f32.mrf.mxu0
  %v4106 = vadd.f32 %v4034, %v4105
  %v4107 = vpop.f32.mrf.mxu0
  %4108 = vmatprep.mubr.bf16.mxu0 %v1243
  %4109 = vmatmul.mubr.bf16.gmra.mxu0 %v1242
  %v4110 = vpop.f32.mrf.mxu0
  %v4111 = vadd.f32 %v4039, %v4110
  %v4112 = vpop.f32.mrf.mxu0
  %v4113 = vpop.f32.mrf.mxu0
  %v4114 = vadd.f32 %v4042, %v4113
  %v4115 = vpop.f32.mrf.mxu0
  %4116 = vmatprep.mubr.bf16.mxu0 %v1275
  %4117 = vmatmul.mubr.bf16.gmra.mxu0 %v1274
  %v4118 = vpop.f32.mrf.mxu0
  %v4119 = vadd.f32 %v4047, %v4118
  %v4120 = vpop.f32.mrf.mxu0
  %v4121 = vpop.f32.mrf.mxu0
  %v4122 = vpop.f32.mrf.mxu0
  %4123 = vdwg.mxu0
  %v4124 = vadd.f32 %v4087, %v4090
  %v4125 = vadd.f32 %v4124, %v4095
  %v4126 = vadd.f32 %v4125, %v4098
  %v4127 = vadd.f32 %v4126, %v4103
  %v4128 = vadd.f32 %v4127, %v4106
  %v4129 = vadd.f32 %v4128, %v4111
  %v4130 = vadd.f32 %v4129, %v4114
  %v4131 = vadd.f32 %v4130, %v4119
  %v4132 = vrot.slane %v4131, 4
  %v4133 = vadd.f32 %v4131, %v4132
  %v4134 = vrot.slane %v4133, 2
  %v4135 = vadd.f32 %v4133, %v4134
  %v4136 = vrot.slane %v4135, 1
  %v4137 = vadd.f32 %v4135, %v4136
  %v4138 = vmul.f32 %v4087, %v4087
  %v4139 = vmul.f32 %v4090, %v4090
  %v4140 = vmul.f32 %v4095, %v4095
  %v4141 = vmul.f32 %v4098, %v4098
  %v4142 = vmul.f32 %v4103, %v4103
  %v4143 = vmul.f32 %v4106, %v4106
  %v4144 = vmul.f32 %v4111, %v4111
  %v4145 = vmul.f32 %v4114, %v4114
  %v4146 = vmul.f32 %v4119, %v4119
  %v4147 = vadd.f32 %v4138, %v4139
  %v4148 = vadd.f32 %v4147, %v4140
  %v4149 = vadd.f32 %v4148, %v4141
  %v4150 = vadd.f32 %v4149, %v4142
  %v4151 = vadd.f32 %v4150, %v4143
  %v4152 = vadd.f32 %v4151, %v4144
  %v4153 = vadd.f32 %v4152, %v4145
  %v4154 = vadd.f32 %v4153, %v4146
  %v4155 = vrot.slane %v4154, 4
  %v4156 = vadd.f32 %v4154, %v4155
  %v4157 = vrot.slane %v4156, 2
  %v4158 = vadd.f32 %v4156, %v4157
  %v4159 = vrot.slane %v4158, 1
  %v4160 = vadd.f32 %v4158, %v4159
  %v4161 = vmul.f32 %v4137, 0.013888889
  %v4162 = vmul.f32 %v4160, 0.013888889
  %v4163 = vmul.f32 %v4161, %v4161
  %v4164 = vsub.f32 %v4162, %v4163
  %v4165 = vmax.f32 %v4164, 0.0
  %v4166 = vsub.f32 %v4087, %v4161
  %v4167 = vsub.f32 %v4090, %v4161
  %v4168 = vsub.f32 %v4095, %v4161
  %v4169 = vsub.f32 %v4098, %v4161
  %v4170 = vsub.f32 %v4103, %v4161
  %v4171 = vsub.f32 %v4106, %v4161
  %v4172 = vsub.f32 %v4111, %v4161
  %v4173 = vsub.f32 %v4114, %v4161
  %v4174 = vsub.f32 %v4119, %v4161
  %v4175 = vadd.f32 %v4165, 1e-05
  %v4176 = vrsqrt.pop %v4175
  %v4177 = vmul.f32 %v4166, %v4176
  %v4178 = vmul.f32 %v4167, %v4176
  %v4179 = vmul.f32 %v4168, %v4176
  %v4180 = vmul.f32 %v4169, %v4176
  %v4181 = vmul.f32 %v4170, %v4176
  %v4182 = vmul.f32 %v4171, %v4176
  %v4183 = vmul.f32 %v4172, %v4176
  %v4184 = vmul.f32 %v4173, %v4176
  %v4185 = vmul.f32 %v4174, %v4176
  %v4186 = vld [vmem:[%s3] sm:$0x1]
  %v4188 = vlaneseq
  %v4189 = vshrl.u32 %v4188, 7
  %v4190 = vsub.s32 0, %v4189
  %v4191 = vrot.slane %v4186, %v4190
  %v4193 = vmul.f32 %v4177, %v4191
  %v4194 = vmul.f32 %v4178, %v4191
  %v4195 = vmul.f32 %v4179, %v4191
  %v4196 = vmul.f32 %v4180, %v4191
  %v4197 = vmul.f32 %v4181, %v4191
  %v4198 = vmul.f32 %v4182, %v4191
  %v4199 = vmul.f32 %v4183, %v4191
  %v4200 = vmul.f32 %v4184, %v4191
  %v4201 = vmul.f32 %v4185, %v4191
  %v4202 = vld [vmem:[%s4] sm:$0x1]
  %v4204 = vlaneseq
  %v4205 = vshrl.u32 %v4204, 7
  %v4206 = vsub.s32 0, %v4205
  %v4207 = vrot.slane %v4202, %v4206
  %v4209 = vadd.f32 %v4193, %v4207
  %v4210 = vadd.f32 %v4194, %v4207
  %v4211 = vadd.f32 %v4195, %v4207
  %v4212 = vadd.f32 %v4196, %v4207
  %v4213 = vadd.f32 %v4197, %v4207
  %v4214 = vadd.f32 %v4198, %v4207
  %v4215 = vadd.f32 %v4199, %v4207
  %v4216 = vadd.f32 %v4200, %v4207
  %v4217 = vadd.f32 %v4201, %v4207
  %v4218 = vmax.f32 %v4209, 0.0
  %v4219 = vmax.f32 %v4210, 0.0
  %v4220 = vmax.f32 %v4211, 0.0
  %v4221 = vmax.f32 %v4212, 0.0
  %v4222 = vmax.f32 %v4213, 0.0
  %v4223 = vmax.f32 %v4214, 0.0
  %v4224 = vmax.f32 %v4215, 0.0
  %v4225 = vmax.f32 %v4216, 0.0
  %v4226 = vmax.f32 %v4217, 0.0
  %v4227 = vpack.c.bf16 %v4219, %v4218
  %v4228 = vpack.c.bf16 %v4221, %v4220
  %v4229 = vpack.c.bf16 %v4223, %v4222
  %v4230 = vpack.c.bf16 %v4225, %v4224
  %v4231 = vpack.c.bf16 %v4226, %v4226
  %v4237 = vunpack.c.l.b16 %v4227
  %v4238 = vunpack.c.h.b16 %v4227
  %v4239 = vunpack.c.l.b16 %v4228
  %v4240 = vunpack.c.h.b16 %v4228
  %v4241 = vunpack.c.l.b16 %v4229
  %v4242 = vunpack.c.h.b16 %v4229
  %v4243 = vunpack.c.l.b16 %v4230
  %v4244 = vunpack.c.h.b16 %v4230
  %v4245 = vunpack.c.l.b16 %v4231
  %v4246 = vpack.c.b16 %v4237, %v4237
  %v4247 = vpack.c.b16 %v4238, %v4238
  %v4248 = vpack.c.b16 %v4239, %v4239
  %v4249 = vpack.c.b16 %v4240, %v4240
  %v4250 = vpack.c.b16 %v4241, %v4241
  %v4251 = vpack.c.b16 %v4242, %v4242
  %v4252 = vpack.c.b16 %v4243, %v4243
  %v4253 = vpack.c.b16 %v4244, %v4244
  %v4254 = vpack.c.b16 %v4245, %v4245
  %4264 = vst [vmem:[%s5] sm:$0xf] %v4246
  %4265 = vst [vmem:[%s5 + $0x4] sm:$0xf] %v4247
  %4266 = vst [vmem:[%s5 + $0x8] sm:$0xf] %v4248
  %4267 = vst [vmem:[%s5 + $0xc] sm:$0xf] %v4249
  %4268 = vst [vmem:[%s5 + $0x10] sm:$0xf] %v4250
  %4269 = vst [vmem:[%s5 + $0x14] sm:$0xf] %v4251
  %4270 = vst [vmem:[%s5 + $0x18] sm:$0xf] %v4252
  %4271 = vst [vmem:[%s5 + $0x1c] sm:$0xf] %v4253
  %4272 = vst [vmem:[%s5 + $0x20] sm:$0xf] %v4254
  // Predicated region
  $region22: #{generator_forward.5} parent=0 // pred_check
    _
  $region23: #{generator_forward.5} parent=0 // pred_check_branch
    %4274 = sbr.rel (0) target = $region25
  $region24: #{generator_forward.5} parent=0 // pred_region
    _
  $region25: #{generator_forward.5} parent=0 // pred_fallthru
    _
  // Predicated region
  $region26: #{generator_forward.5} parent=0 // pred_check
    _
  $region27: #{generator_forward.5} parent=0 // pred_check_branch
    %4276 = sbr.rel (0) target = $region29
  $region28: #{generator_forward.5} parent=0 // pred_region
    _
  $region29: #{generator_forward.5} parent=0 // pred_fallthru
    _

// kernel: generator_forward.6
$region0: #{generator_forward.6}
  #allocation0 [shape = 'u32[]', space=smem, size = 0x4, offset = 0x4, fixed_abs, tag = 'smem constant byte address 0x4 - core index']
  #allocation1 [shape = 'u32[144,128]{1,0:T(1,128)}', space=vmem, size = 0x12000, scoped, tag = 'internal scratch']
  %s0 = inlined_call_operand.vmem [shape: bf16[338,1152], index: 0, kind: input, shape index: {}]
  %s1 = inlined_call_operand.vmem [shape: bf16[1152,128], index: 1, kind: input, shape index: {}]
  %s2 = inlined_call_operand.vmem [shape: f32[1,128], index: 2, kind: input, shape index: {}]
  %s3 = inlined_call_operand.vmem [shape: f32[1,128], index: 3, kind: input, shape index: {}]
  %s4 = inlined_call_operand.vmem [shape: f32[1,128], index: 4, kind: input, shape index: {}]
  %s5 = inlined_call_operand.vmem [shape: bf16[338,128], index: 5, kind: output, shape index: {}]
  %s6 = sld [smem:[#allocation0]]
  $region30: #{generator_forward.6} parent=0
    _
  %s8 = ssub.s32 1, %s6
  %s9 = scalar_select 0, %s8, %s6
  // Predicated region
  $region2: #{generator_forward.6} parent=0 // pred_check
    _
  $region3: #{generator_forward.6} parent=0 // pred_check_branch
    %11 = sbr.rel (0) target = $region5
  $region4: #{generator_forward.6} parent=0 // pred_region
    _
  $region5: #{generator_forward.6} parent=0 // pred_fallthru
    _
  // Predicated region
  $region6: #{generator_forward.6} parent=0 // pred_check
    _
  $region7: #{generator_forward.6} parent=0 // pred_check_branch
    %13 = sbr.rel (0) target = $region9
  $region8: #{generator_forward.6} parent=0 // pred_region
    _
  $region9: #{generator_forward.6} parent=0 // pred_fallthru
    _
  // Predicated region
  $region10: #{generator_forward.6} parent=0 // pred_check
    _
  $region11: #{generator_forward.6} parent=0 // pred_check_branch
    %15 = sbr.rel (0) target = $region13
  $region12: #{generator_forward.6} parent=0 // pred_region
    _
  $region13: #{generator_forward.6} parent=0 // pred_fallthru
    _
  // Predicated region
  $region14: #{generator_forward.6} parent=0 // pred_check
    _
  $region15: #{generator_forward.6} parent=0 // pred_check_branch
    %17 = sbr.rel (0) target = $region17
  $region16: #{generator_forward.6} parent=0 // pred_region
    _
  $region17: #{generator_forward.6} parent=0 // pred_fallthru
    _
  // Predicated region
  $region18: #{generator_forward.6} parent=0 // pred_check
    _
  $region19: #{generator_forward.6} parent=0 // pred_check_branch
    %19 = sbr.rel (0) target = $region21
  $region20: #{generator_forward.6} parent=0 // pred_region
    _
  $region21: #{generator_forward.6} parent=0 // pred_fallthru
    _
  %v21 = vld [vmem:[%s0] sm:$0xff]
  %v22 = vld [vmem:[%s0 + $0x8] sm:$0xff]
  %v23 = vld [vmem:[%s0 + $0x10] sm:$0xff]
  %v24 = vld [vmem:[%s0 + $0x18] sm:$0xff]
  %v25 = vld [vmem:[%s0 + $0x20] sm:$0xf]
  %v26 = vld [vmem:[%s0 + $0x24] sm:$0xff]
  %v27 = vld [vmem:[%s0 + $0x2c] sm:$0xff]
  %v28 = vld [vmem:[%s0 + $0x34] sm:$0xff]
  %v29 = vld [vmem:[%s0 + $0x3c] sm:$0xff]
  %v30 = vld [vmem:[%s0 + $0x44] sm:$0xf]
  %v31 = vld [vmem:[%s0 + $0x48] sm:$0xff]
  %v32 = vld [vmem:[%s0 + $0x50] sm:$0xff]
  %v33 = vld [vmem:[%s0 + $0x58] sm:$0xff]
  %v34 = vld [vmem:[%s0 + $0x60] sm:$0xff]
  %v35 = vld [vmem:[%s0 + $0x68] sm:$0xf]
  %v36 = vld [vmem:[%s0 + $0x6c] sm:$0xff]
  %v37 = vld [vmem:[%s0 + $0x74] sm:$0xff]
  %v38 = vld [vmem:[%s0 + $0x7c] sm:$0xff]
  %v39 = vld [vmem:[%s0 + $0x84] sm:$0xff]
  %v40 = vld [vmem:[%s0 + $0x8c] sm:$0xf]
  %v41 = vld [vmem:[%s0 + $0x90] sm:$0xff]
  %v42 = vld [vmem:[%s0 + $0x98] sm:$0xff]
  %v43 = vld [vmem:[%s0 + $0xa0] sm:$0xff]
  %v44 = vld [vmem:[%s0 + $0xa8] sm:$0xff]
  %v45 = vld [vmem:[%s0 + $0xb0] sm:$0xf]
  %v46 = vld [vmem:[%s0 + $0xb4] sm:$0xff]
  %v47 = vld [vmem:[%s0 + $0xbc] sm:$0xff]
  %v48 = vld [vmem:[%s0 + $0xc4] sm:$0xff]
  %v49 = vld [vmem:[%s0 + $0xcc] sm:$0xff]
  %v50 = vld [vmem:[%s0 + $0xd4] sm:$0xf]
  %v51 = vld [vmem:[%s0 + $0xd8] sm:$0xff]
  %v52 = vld [vmem:[%s0 + $0xe0] sm:$0xff]
  %v53 = vld [vmem:[%s0 + $0xe8] sm:$0xff]
  %v54 = vld [vmem:[%s0 + $0xf0] sm:$0xff]
  %v55 = vld [vmem:[%s0 + $0xf8] sm:$0xf]
  %v56 = vld [vmem:[%s0 + $0xfc] sm:$0xff]
  %v57 = vld [vmem:[%s0 + $0x104] sm:$0xff]
  %v58 = vld [vmem:[%s0 + $0x10c] sm:$0xff]
  %v59 = vld [vmem:[%s0 + $0x114] sm:$0xff]
  %v60 = vld [vmem:[%s0 + $0x11c] sm:$0xf]
  %v61 = vld [vmem:[%s0 + $0x120] sm:$0xff]
  %v62 = vld [vmem:[%s0 + $0x128] sm:$0xff]
  %v63 = vld [vmem:[%s0 + $0x130] sm:$0xff]
  %v64 = vld [vmem:[%s0 + $0x138] sm:$0xff]
  %v65 = vld [vmem:[%s0 + $0x140] sm:$0xf]
  %v66 = vld [vmem:[%s0 + $0x144] sm:$0xff]
  %v67 = vld [vmem:[%s0 + $0x14c] sm:$0xff]
  %v68 = vld [vmem:[%s0 + $0x154] sm:$0xff]
  %v69 = vld [vmem:[%s0 + $0x15c] sm:$0xff]
  %v70 = vld [vmem:[%s0 + $0x164] sm:$0xf]
  %v71 = vld [vmem:[%s0 + $0x168] sm:$0xff]
  %v72 = vld [vmem:[%s0 + $0x170] sm:$0xff]
  %v73 = vld [vmem:[%s0 + $0x178] sm:$0xff]
  %v74 = vld [vmem:[%s0 + $0x180] sm:$0xff]
  %v75 = vld [vmem:[%s0 + $0x188] sm:$0xf]
  %v76 = vld [vmem:[%s0 + $0x18c] sm:$0xff]
  %v77 = vld [vmem:[%s0 + $0x194] sm:$0xff]
  %v78 = vld [vmem:[%s0 + $0x19c] sm:$0xff]
  %v79 = vld [vmem:[%s0 + $0x1a4] sm:$0xff]
  %v80 = vld [vmem:[%s0 + $0x1ac] sm:$0xf]
  %v81 = vld [vmem:[%s0 + $0x1b0] sm:$0xff]
  %v82 = vld [vmem:[%s0 + $0x1b8] sm:$0xff]
  %v83 = vld [vmem:[%s0 + $0x1c0] sm:$0xff]
  %v84 = vld [vmem:[%s0 + $0x1c8] sm:$0xff]
  %v85 = vld [vmem:[%s0 + $0x1d0] sm:$0xf]
  %v86 = vld [vmem:[%s0 + $0x1d4] sm:$0xff]
  %v87 = vld [vmem:[%s0 + $0x1dc] sm:$0xff]
  %v88 = vld [vmem:[%s0 + $0x1e4] sm:$0xff]
  %v89 = vld [vmem:[%s0 + $0x1ec] sm:$0xff]
  %v90 = vld [vmem:[%s0 + $0x1f4] sm:$0xf]
  %v91 = vld [vmem:[%s0 + $0x1f8] sm:$0xff]
  %v92 = vld [vmem:[%s0 + $0x200] sm:$0xff]
  %v93 = vld [vmem:[%s0 + $0x208] sm:$0xff]
  %v94 = vld [vmem:[%s0 + $0x210] sm:$0xff]
  %v95 = vld [vmem:[%s0 + $0x218] sm:$0xf]
  %v96 = vld [vmem:[%s0 + $0x21c] sm:$0xff]
  %v97 = vld [vmem:[%s0 + $0x224] sm:$0xff]
  %v98 = vld [vmem:[%s0 + $0x22c] sm:$0xff]
  %v99 = vld [vmem:[%s0 + $0x234] sm:$0xff]
  %v100 = vld [vmem:[%s0 + $0x23c] sm:$0xf]
  %v101 = vld [vmem:[%s0 + $0x240] sm:$0xff]
  %v102 = vld [vmem:[%s0 + $0x248] sm:$0xff]
  %v103 = vld [vmem:[%s0 + $0x250] sm:$0xff]
  %v104 = vld [vmem:[%s0 + $0x258] sm:$0xff]
  %v105 = vld [vmem:[%s0 + $0x260] sm:$0xf]
  %v106 = vld [vmem:[%s0 + $0x264] sm:$0xff]
  %v107 = vld [vmem:[%s0 + $0x26c] sm:$0xff]
  %v108 = vld [vmem:[%s0 + $0x274] sm:$0xff]
  %v109 = vld [vmem:[%s0 + $0x27c] sm:$0xff]
  %v110 = vld [vmem:[%s0 + $0x284] sm:$0xf]
  %v111 = vld [vmem:[%s0 + $0x288] sm:$0xff]
  %v112 = vld [vmem:[%s0 + $0x290] sm:$0xff]
  %v113 = vld [vmem:[%s0 + $0x298] sm:$0xff]
  %v114 = vld [vmem:[%s0 + $0x2a0] sm:$0xff]
  %v115 = vld [vmem:[%s0 + $0x2a8] sm:$0xf]
  %v116 = vld [vmem:[%s0 + $0x2ac] sm:$0xff]
  %v117 = vld [vmem:[%s0 + $0x2b4] sm:$0xff]
  %v118 = vld [vmem:[%s0 + $0x2bc] sm:$0xff]
  %v119 = vld [vmem:[%s0 + $0x2c4] sm:$0xff]
  %v120 = vld [vmem:[%s0 + $0x2cc] sm:$0xf]
  %v121 = vld [vmem:[%s0 + $0x2d0] sm:$0xff]
  %v122 = vld [vmem:[%s0 + $0x2d8] sm:$0xff]
  %v123 = vld [vmem:[%s0 + $0x2e0] sm:$0xff]
  %v124 = vld [vmem:[%s0 + $0x2e8] sm:$0xff]
  %v125 = vld [vmem:[%s0 + $0x2f0] sm:$0xf]
  %v126 = vld [vmem:[%s0 + $0x2f4] sm:$0xff]
  %v127 = vld [vmem:[%s0 + $0x2fc] sm:$0xff]
  %v128 = vld [vmem:[%s0 + $0x304] sm:$0xff]
  %v129 = vld [vmem:[%s0 + $0x30c] sm:$0xff]
  %v130 = vld [vmem:[%s0 + $0x314] sm:$0xf]
  %v131 = vld [vmem:[%s0 + $0x318] sm:$0xff]
  %v132 = vld [vmem:[%s0 + $0x320] sm:$0xff]
  %v133 = vld [vmem:[%s0 + $0x328] sm:$0xff]
  %v134 = vld [vmem:[%s0 + $0x330] sm:$0xff]
  %v135 = vld [vmem:[%s0 + $0x338] sm:$0xf]
  %v136 = vld [vmem:[%s0 + $0x33c] sm:$0xff]
  %v137 = vld [vmem:[%s0 + $0x344] sm:$0xff]
  %v138 = vld [vmem:[%s0 + $0x34c] sm:$0xff]
  %v139 = vld [vmem:[%s0 + $0x354] sm:$0xff]
  %v140 = vld [vmem:[%s0 + $0x35c] sm:$0xf]
  %v141 = vld [vmem:[%s0 + $0x360] sm:$0xff]
  %v142 = vld [vmem:[%s0 + $0x368] sm:$0xff]
  %v143 = vld [vmem:[%s0 + $0x370] sm:$0xff]
  %v144 = vld [vmem:[%s0 + $0x378] sm:$0xff]
  %v145 = vld [vmem:[%s0 + $0x380] sm:$0xf]
  %v146 = vld [vmem:[%s0 + $0x384] sm:$0xff]
  %v147 = vld [vmem:[%s0 + $0x38c] sm:$0xff]
  %v148 = vld [vmem:[%s0 + $0x394] sm:$0xff]
  %v149 = vld [vmem:[%s0 + $0x39c] sm:$0xff]
  %v150 = vld [vmem:[%s0 + $0x3a4] sm:$0xf]
  %v151 = vld [vmem:[%s0 + $0x3a8] sm:$0xff]
  %v152 = vld [vmem:[%s0 + $0x3b0] sm:$0xff]
  %v153 = vld [vmem:[%s0 + $0x3b8] sm:$0xff]
  %v154 = vld [vmem:[%s0 + $0x3c0] sm:$0xff]
  %v155 = vld [vmem:[%s0 + $0x3c8] sm:$0xf]
  %v156 = vld [vmem:[%s0 + $0x3cc] sm:$0xff]
  %v157 = vld [vmem:[%s0 + $0x3d4] sm:$0xff]
  %v158 = vld [vmem:[%s0 + $0x3dc] sm:$0xff]
  %v159 = vld [vmem:[%s0 + $0x3e4] sm:$0xff]
  %v160 = vld [vmem:[%s0 + $0x3ec] sm:$0xf]
  %v161 = vld [vmem:[%s0 + $0x3f0] sm:$0xff]
  %v162 = vld [vmem:[%s0 + $0x3f8] sm:$0xff]
  %v163 = vld [vmem:[%s0 + $0x400] sm:$0xff]
  %v164 = vld [vmem:[%s0 + $0x408] sm:$0xff]
  %v165 = vld [vmem:[%s0 + $0x410] sm:$0xf]
  %v166 = vld [vmem:[%s0 + $0x414] sm:$0xff]
  %v167 = vld [vmem:[%s0 + $0x41c] sm:$0xff]
  %v168 = vld [vmem:[%s0 + $0x424] sm:$0xff]
  %v169 = vld [vmem:[%s0 + $0x42c] sm:$0xff]
  %v170 = vld [vmem:[%s0 + $0x434] sm:$0xf]
  %v171 = vld [vmem:[%s0 + $0x438] sm:$0xff]
  %v172 = vld [vmem:[%s0 + $0x440] sm:$0xff]
  %v173 = vld [vmem:[%s0 + $0x448] sm:$0xff]
  %v174 = vld [vmem:[%s0 + $0x450] sm:$0xff]
  %v175 = vld [vmem:[%s0 + $0x458] sm:$0xf]
  %v176 = vld [vmem:[%s0 + $0x45c] sm:$0xff]
  %v177 = vld [vmem:[%s0 + $0x464] sm:$0xff]
  %v178 = vld [vmem:[%s0 + $0x46c] sm:$0xff]
  %v179 = vld [vmem:[%s0 + $0x474] sm:$0xff]
  %v180 = vld [vmem:[%s0 + $0x47c] sm:$0xf]
  %v181 = vld [vmem:[%s0 + $0x480] sm:$0xff]
  %v182 = vld [vmem:[%s0 + $0x488] sm:$0xff]
  %v183 = vld [vmem:[%s0 + $0x490] sm:$0xff]
  %v184 = vld [vmem:[%s0 + $0x498] sm:$0xff]
  %v185 = vld [vmem:[%s0 + $0x4a0] sm:$0xf]
  %v186 = vld [vmem:[%s0 + $0x4a4] sm:$0xff]
  %v187 = vld [vmem:[%s0 + $0x4ac] sm:$0xff]
  %v188 = vld [vmem:[%s0 + $0x4b4] sm:$0xff]
  %v189 = vld [vmem:[%s0 + $0x4bc] sm:$0xff]
  %v190 = vld [vmem:[%s0 + $0x4c4] sm:$0xf]
  %v191 = vld [vmem:[%s0 + $0x4c8] sm:$0xff]
  %v192 = vld [vmem:[%s0 + $0x4d0] sm:$0xff]
  %v193 = vld [vmem:[%s0 + $0x4d8] sm:$0xff]
  %v194 = vld [vmem:[%s0 + $0x4e0] sm:$0xff]
  %v195 = vld [vmem:[%s0 + $0x4e8] sm:$0xf]
  %v196 = vld [vmem:[%s0 + $0x4ec] sm:$0xff]
  %v197 = vld [vmem:[%s0 + $0x4f4] sm:$0xff]
  %v198 = vld [vmem:[%s0 + $0x4fc] sm:$0xff]
  %v199 = vld [vmem:[%s0 + $0x504] sm:$0xff]
  %v200 = vld [vmem:[%s0 + $0x50c] sm:$0xf]
  %v201 = vld [vmem:[%s0 + $0x510] sm:$0xff]
  %v202 = vld [vmem:[%s0 + $0x518] sm:$0xff]
  %v203 = vld [vmem:[%s0 + $0x520] sm:$0xff]
  %v204 = vld [vmem:[%s0 + $0x528] sm:$0xff]
  %v205 = vld [vmem:[%s0 + $0x530] sm:$0xf]
  %v206 = vld [vmem:[%s0 + $0x534] sm:$0xff]
  %v207 = vld [vmem:[%s0 + $0x53c] sm:$0xff]
  %v208 = vld [vmem:[%s0 + $0x544] sm:$0xff]
  %v209 = vld [vmem:[%s0 + $0x54c] sm:$0xff]
  %v210 = vld [vmem:[%s0 + $0x554] sm:$0xf]
  %v211 = vld [vmem:[%s0 + $0x558] sm:$0xff]
  %v212 = vld [vmem:[%s0 + $0x560] sm:$0xff]
  %v213 = vld [vmem:[%s0 + $0x568] sm:$0xff]
  %v214 = vld [vmem:[%s0 + $0x570] sm:$0xff]
  %v215 = vld [vmem:[%s0 + $0x578] sm:$0xf]
  %v216 = vld [vmem:[%s0 + $0x57c] sm:$0xff]
  %v217 = vld [vmem:[%s0 + $0x584] sm:$0xff]
  %v218 = vld [vmem:[%s0 + $0x58c] sm:$0xff]
  %v219 = vld [vmem:[%s0 + $0x594] sm:$0xff]
  %v220 = vld [vmem:[%s0 + $0x59c] sm:$0xf]
  %v221 = vld [vmem:[%s0 + $0x5a0] sm:$0xff]
  %v222 = vld [vmem:[%s0 + $0x5a8] sm:$0xff]
  %v223 = vld [vmem:[%s0 + $0x5b0] sm:$0xff]
  %v224 = vld [vmem:[%s0 + $0x5b8] sm:$0xff]
  %v225 = vld [vmem:[%s0 + $0x5c0] sm:$0xf]
  %v226 = vld [vmem:[%s0 + $0x5c4] sm:$0xff]
  %v227 = vld [vmem:[%s0 + $0x5cc] sm:$0xff]
  %v228 = vld [vmem:[%s0 + $0x5d4] sm:$0xff]
  %v229 = vld [vmem:[%s0 + $0x5dc] sm:$0xff]
  %v230 = vld [vmem:[%s0 + $0x5e4] sm:$0xf]
  %v231 = vld [vmem:[%s0 + $0x5e8] sm:$0x11]
  %v232 = vld [vmem:[%s0 + $0x5f0] sm:$0x11]
  %v233 = vld [vmem:[%s0 + $0x5f8] sm:$0x11]
  %v234 = vld [vmem:[%s0 + $0x600] sm:$0x11]
  %v235 = vld [vmem:[%s0 + $0x608] sm:$0x1]
  %v236 = vld [vmem:[%s1] sm:$0xf]
  %v237 = vld [vmem:[%s1 + $0x4] sm:$0xf]
  %v238 = vld [vmem:[%s1 + $0x8] sm:$0xf]
  %v239 = vld [vmem:[%s1 + $0xc] sm:$0xf]
  %v240 = vld [vmem:[%s1 + $0x10] sm:$0xf]
  %v241 = vld [vmem:[%s1 + $0x14] sm:$0xf]
  %v242 = vld [vmem:[%s1 + $0x18] sm:$0xf]
  %v243 = vld [vmem:[%s1 + $0x1c] sm:$0xf]
  %v244 = vld [vmem:[%s1 + $0x20] sm:$0xf]
  %v245 = vld [vmem:[%s1 + $0x24] sm:$0xf]
  %v246 = vld [vmem:[%s1 + $0x28] sm:$0xf]
  %v247 = vld [vmem:[%s1 + $0x2c] sm:$0xf]
  %v248 = vld [vmem:[%s1 + $0x30] sm:$0xf]
  %v249 = vld [vmem:[%s1 + $0x34] sm:$0xf]
  %v250 = vld [vmem:[%s1 + $0x38] sm:$0xf]
  %v251 = vld [vmem:[%s1 + $0x3c] sm:$0xf]
  %v252 = vld [vmem:[%s1 + $0x40] sm:$0xf]
  %v253 = vld [vmem:[%s1 + $0x44] sm:$0xf]
  %v254 = vld [vmem:[%s1 + $0x48] sm:$0xf]
  %v255 = vld [vmem:[%s1 + $0x4c] sm:$0xf]
  %v256 = vld [vmem:[%s1 + $0x50] sm:$0xf]
  %v257 = vld [vmem:[%s1 + $0x54] sm:$0xf]
  %v258 = vld [vmem:[%s1 + $0x58] sm:$0xf]
  %v259 = vld [vmem:[%s1 + $0x5c] sm:$0xf]
  %v260 = vld [vmem:[%s1 + $0x60] sm:$0xf]
  %v261 = vld [vmem:[%s1 + $0x64] sm:$0xf]
  %v262 = vld [vmem:[%s1 + $0x68] sm:$0xf]
  %v263 = vld [vmem:[%s1 + $0x6c] sm:$0xf]
  %v264 = vld [vmem:[%s1 + $0x70] sm:$0xf]
  %v265 = vld [vmem:[%s1 + $0x74] sm:$0xf]
  %v266 = vld [vmem:[%s1 + $0x78] sm:$0xf]
  %v267 = vld [vmem:[%s1 + $0x7c] sm:$0xf]
  %v268 = vld [vmem:[%s1 + $0x80] sm:$0xf]
  %v269 = vld [vmem:[%s1 + $0x84] sm:$0xf]
  %v270 = vld [vmem:[%s1 + $0x88] sm:$0xf]
  %v271 = vld [vmem:[%s1 + $0x8c] sm:$0xf]
  %v272 = vld [vmem:[%s1 + $0x90] sm:$0xf]
  %v273 = vld [vmem:[%s1 + $0x94] sm:$0xf]
  %v274 = vld [vmem:[%s1 + $0x98] sm:$0xf]
  %v275 = vld [vmem:[%s1 + $0x9c] sm:$0xf]
  %v276 = vld [vmem:[%s1 + $0xa0] sm:$0xf]
  %v277 = vld [vmem:[%s1 + $0xa4] sm:$0xf]
  %v278 = vld [vmem:[%s1 + $0xa8] sm:$0xf]
  %v279 = vld [vmem:[%s1 + $0xac] sm:$0xf]
  %v280 = vld [vmem:[%s1 + $0xb0] sm:$0xf]
  %v281 = vld [vmem:[%s1 + $0xb4] sm:$0xf]
  %v282 = vld [vmem:[%s1 + $0xb8] sm:$0xf]
  %v283 = vld [vmem:[%s1 + $0xbc] sm:$0xf]
  %v284 = vld [vmem:[%s1 + $0xc0] sm:$0xf]
  %v285 = vld [vmem:[%s1 + $0xc4] sm:$0xf]
  %v286 = vld [vmem:[%s1 + $0xc8] sm:$0xf]
  %v287 = vld [vmem:[%s1 + $0xcc] sm:$0xf]
  %v288 = vld [vmem:[%s1 + $0xd0] sm:$0xf]
  %v289 = vld [vmem:[%s1 + $0xd4] sm:$0xf]
  %v290 = vld [vmem:[%s1 + $0xd8] sm:$0xf]
  %v291 = vld [vmem:[%s1 + $0xdc] sm:$0xf]
  %v292 = vld [vmem:[%s1 + $0xe0] sm:$0xf]
  %v293 = vld [vmem:[%s1 + $0xe4] sm:$0xf]
  %v294 = vld [vmem:[%s1 + $0xe8] sm:$0xf]
  %v295 = vld [vmem:[%s1 + $0xec] sm:$0xf]
  %v296 = vld [vmem:[%s1 + $0xf0] sm:$0xf]
  %v297 = vld [vmem:[%s1 + $0xf4] sm:$0xf]
  %v298 = vld [vmem:[%s1 + $0xf8] sm:$0xf]
  %v299 = vld [vmem:[%s1 + $0xfc] sm:$0xf]
  %v300 = vld [vmem:[%s1 + $0x100] sm:$0xf]
  %v301 = vld [vmem:[%s1 + $0x104] sm:$0xf]
  %v302 = vld [vmem:[%s1 + $0x108] sm:$0xf]
  %v303 = vld [vmem:[%s1 + $0x10c] sm:$0xf]
  %v304 = vld [vmem:[%s1 + $0x110] sm:$0xf]
  %v305 = vld [vmem:[%s1 + $0x114] sm:$0xf]
  %v306 = vld [vmem:[%s1 + $0x118] sm:$0xf]
  %v307 = vld [vmem:[%s1 + $0x11c] sm:$0xf]
  %v308 = vld [vmem:[%s1 + $0x120] sm:$0xf]
  %v309 = vld [vmem:[%s1 + $0x124] sm:$0xf]
  %v310 = vld [vmem:[%s1 + $0x128] sm:$0xf]
  %v311 = vld [vmem:[%s1 + $0x12c] sm:$0xf]
  %v312 = vld [vmem:[%s1 + $0x130] sm:$0xf]
  %v313 = vld [vmem:[%s1 + $0x134] sm:$0xf]
  %v314 = vld [vmem:[%s1 + $0x138] sm:$0xf]
  %v315 = vld [vmem:[%s1 + $0x13c] sm:$0xf]
  %v316 = vld [vmem:[%s1 + $0x140] sm:$0xf]
  %v317 = vld [vmem:[%s1 + $0x144] sm:$0xf]
  %v318 = vld [vmem:[%s1 + $0x148] sm:$0xf]
  %v319 = vld [vmem:[%s1 + $0x14c] sm:$0xf]
  %v320 = vld [vmem:[%s1 + $0x150] sm:$0xf]
  %v321 = vld [vmem:[%s1 + $0x154] sm:$0xf]
  %v322 = vld [vmem:[%s1 + $0x158] sm:$0xf]
  %v323 = vld [vmem:[%s1 + $0x15c] sm:$0xf]
  %v324 = vld [vmem:[%s1 + $0x160] sm:$0xf]
  %v325 = vld [vmem:[%s1 + $0x164] sm:$0xf]
  %v326 = vld [vmem:[%s1 + $0x168] sm:$0xf]
  %v327 = vld [vmem:[%s1 + $0x16c] sm:$0xf]
  %v328 = vld [vmem:[%s1 + $0x170] sm:$0xf]
  %v329 = vld [vmem:[%s1 + $0x174] sm:$0xf]
  %v330 = vld [vmem:[%s1 + $0x178] sm:$0xf]
  %v331 = vld [vmem:[%s1 + $0x17c] sm:$0xf]
  %v332 = vld [vmem:[%s1 + $0x180] sm:$0xf]
  %v333 = vld [vmem:[%s1 + $0x184] sm:$0xf]
  %v334 = vld [vmem:[%s1 + $0x188] sm:$0xf]
  %v335 = vld [vmem:[%s1 + $0x18c] sm:$0xf]
  %v336 = vld [vmem:[%s1 + $0x190] sm:$0xf]
  %v337 = vld [vmem:[%s1 + $0x194] sm:$0xf]
  %v338 = vld [vmem:[%s1 + $0x198] sm:$0xf]
  %v339 = vld [vmem:[%s1 + $0x19c] sm:$0xf]
  %v340 = vld [vmem:[%s1 + $0x1a0] sm:$0xf]
  %v341 = vld [vmem:[%s1 + $0x1a4] sm:$0xf]
  %v342 = vld [vmem:[%s1 + $0x1a8] sm:$0xf]
  %v343 = vld [vmem:[%s1 + $0x1ac] sm:$0xf]
  %v344 = vld [vmem:[%s1 + $0x1b0] sm:$0xf]
  %v345 = vld [vmem:[%s1 + $0x1b4] sm:$0xf]
  %v346 = vld [vmem:[%s1 + $0x1b8] sm:$0xf]
  %v347 = vld [vmem:[%s1 + $0x1bc] sm:$0xf]
  %v348 = vld [vmem:[%s1 + $0x1c0] sm:$0xf]
  %v349 = vld [vmem:[%s1 + $0x1c4] sm:$0xf]
  %v350 = vld [vmem:[%s1 + $0x1c8] sm:$0xf]
  %v351 = vld [vmem:[%s1 + $0x1cc] sm:$0xf]
  %v352 = vld [vmem:[%s1 + $0x1d0] sm:$0xf]
  %v353 = vld [vmem:[%s1 + $0x1d4] sm:$0xf]
  %v354 = vld [vmem:[%s1 + $0x1d8] sm:$0xf]
  %v355 = vld [vmem:[%s1 + $0x1dc] sm:$0xf]
  %v356 = vld [vmem:[%s1 + $0x1e0] sm:$0xf]
  %v357 = vld [vmem:[%s1 + $0x1e4] sm:$0xf]
  %v358 = vld [vmem:[%s1 + $0x1e8] sm:$0xf]
  %v359 = vld [vmem:[%s1 + $0x1ec] sm:$0xf]
  %v360 = vld [vmem:[%s1 + $0x1f0] sm:$0xf]
  %v361 = vld [vmem:[%s1 + $0x1f4] sm:$0xf]
  %v362 = vld [vmem:[%s1 + $0x1f8] sm:$0xf]
  %v363 = vld [vmem:[%s1 + $0x1fc] sm:$0xf]
  %v364 = vld [vmem:[%s1 + $0x200] sm:$0xf]
  %v365 = vld [vmem:[%s1 + $0x204] sm:$0xf]
  %v366 = vld [vmem:[%s1 + $0x208] sm:$0xf]
  %v367 = vld [vmem:[%s1 + $0x20c] sm:$0xf]
  %v368 = vld [vmem:[%s1 + $0x210] sm:$0xf]
  %v369 = vld [vmem:[%s1 + $0x214] sm:$0xf]
  %v370 = vld [vmem:[%s1 + $0x218] sm:$0xf]
  %v371 = vld [vmem:[%s1 + $0x21c] sm:$0xf]
  %v372 = vld [vmem:[%s1 + $0x220] sm:$0xf]
  %v373 = vld [vmem:[%s1 + $0x224] sm:$0xf]
  %v374 = vld [vmem:[%s1 + $0x228] sm:$0xf]
  %v375 = vld [vmem:[%s1 + $0x22c] sm:$0xf]
  %v376 = vld [vmem:[%s1 + $0x230] sm:$0xf]
  %v377 = vld [vmem:[%s1 + $0x234] sm:$0xf]
  %v378 = vld [vmem:[%s1 + $0x238] sm:$0xf]
  %v379 = vld [vmem:[%s1 + $0x23c] sm:$0xf]
  %v380 = vld [vmem:[%s2] sm:$0x1]
  %v382 = vlaneseq
  %v383 = vshrl.u32 %v382, 7
  %v384 = vsub.s32 0, %v383
  %v385 = vrot.slane %v380, %v384
  %v602 = vunpack.c.l.b16 %v21
  %v603 = vunpack.c.h.b16 %v21
  %v604 = vunpack.c.l.b16 %v22
  %v605 = vunpack.c.h.b16 %v22
  %v606 = vunpack.c.l.b16 %v23
  %v607 = vunpack.c.h.b16 %v23
  %v608 = vunpack.c.l.b16 %v24
  %v609 = vunpack.c.h.b16 %v24
  %v610 = vunpack.c.l.b16 %v25
  %v611 = vunpack.c.l.b16 %v26
  %v612 = vunpack.c.h.b16 %v26
  %v613 = vunpack.c.l.b16 %v27
  %v614 = vunpack.c.h.b16 %v27
  %v615 = vunpack.c.l.b16 %v28
  %v616 = vunpack.c.h.b16 %v28
  %v617 = vunpack.c.l.b16 %v29
  %v618 = vunpack.c.h.b16 %v29
  %v619 = vunpack.c.l.b16 %v30
  %v620 = vunpack.c.l.b16 %v31
  %v621 = vunpack.c.h.b16 %v31
  %v622 = vunpack.c.l.b16 %v32
  %v623 = vunpack.c.h.b16 %v32
  %v624 = vunpack.c.l.b16 %v33
  %v625 = vunpack.c.h.b16 %v33
  %v626 = vunpack.c.l.b16 %v34
  %v627 = vunpack.c.h.b16 %v34
  %v628 = vunpack.c.l.b16 %v35
  %v629 = vunpack.c.l.b16 %v36
  %v630 = vunpack.c.h.b16 %v36
  %v631 = vunpack.c.l.b16 %v37
  %v632 = vunpack.c.h.b16 %v37
  %v633 = vunpack.c.l.b16 %v38
  %v634 = vunpack.c.h.b16 %v38
  %v635 = vunpack.c.l.b16 %v39
  %v636 = vunpack.c.h.b16 %v39
  %v637 = vunpack.c.l.b16 %v40
  %v638 = vunpack.c.l.b16 %v41
  %v639 = vunpack.c.h.b16 %v41
  %v640 = vunpack.c.l.b16 %v42
  %v641 = vunpack.c.h.b16 %v42
  %v642 = vunpack.c.l.b16 %v43
  %v643 = vunpack.c.h.b16 %v43
  %v644 = vunpack.c.l.b16 %v44
  %v645 = vunpack.c.h.b16 %v44
  %v646 = vunpack.c.l.b16 %v45
  %v647 = vunpack.c.l.b16 %v46
  %v648 = vunpack.c.h.b16 %v46
  %v649 = vunpack.c.l.b16 %v47
  %v650 = vunpack.c.h.b16 %v47
  %v651 = vunpack.c.l.b16 %v48
  %v652 = vunpack.c.h.b16 %v48
  %v653 = vunpack.c.l.b16 %v49
  %v654 = vunpack.c.h.b16 %v49
  %v655 = vunpack.c.l.b16 %v50
  %v656 = vunpack.c.l.b16 %v51
  %v657 = vunpack.c.h.b16 %v51
  %v658 = vunpack.c.l.b16 %v52
  %v659 = vunpack.c.h.b16 %v52
  %v660 = vunpack.c.l.b16 %v53
  %v661 = vunpack.c.h.b16 %v53
  %v662 = vunpack.c.l.b16 %v54
  %v663 = vunpack.c.h.b16 %v54
  %v664 = vunpack.c.l.b16 %v55
  %v665 = vunpack.c.l.b16 %v56
  %v666 = vunpack.c.h.b16 %v56
  %v667 = vunpack.c.l.b16 %v57
  %v668 = vunpack.c.h.b16 %v57
  %v669 = vunpack.c.l.b16 %v58
  %v670 = vunpack.c.h.b16 %v58
  %v671 = vunpack.c.l.b16 %v59
  %v672 = vunpack.c.h.b16 %v59
  %v673 = vunpack.c.l.b16 %v60
  %v674 = vunpack.c.l.b16 %v61
  %v675 = vunpack.c.h.b16 %v61
  %v676 = vunpack.c.l.b16 %v62
  %v677 = vunpack.c.h.b16 %v62
  %v678 = vunpack.c.l.b16 %v63
  %v679 = vunpack.c.h.b16 %v63
  %v680 = vunpack.c.l.b16 %v64
  %v681 = vunpack.c.h.b16 %v64
  %v682 = vunpack.c.l.b16 %v65
  %v683 = vunpack.c.l.b16 %v66
  %v684 = vunpack.c.h.b16 %v66
  %v685 = vunpack.c.l.b16 %v67
  %v686 = vunpack.c.h.b16 %v67
  %v687 = vunpack.c.l.b16 %v68
  %v688 = vunpack.c.h.b16 %v68
  %v689 = vunpack.c.l.b16 %v69
  %v690 = vunpack.c.h.b16 %v69
  %v691 = vunpack.c.l.b16 %v70
  %v692 = vunpack.c.l.b16 %v71
  %v693 = vunpack.c.h.b16 %v71
  %v694 = vunpack.c.l.b16 %v72
  %v695 = vunpack.c.h.b16 %v72
  %v696 = vunpack.c.l.b16 %v73
  %v697 = vunpack.c.h.b16 %v73
  %v698 = vunpack.c.l.b16 %v74
  %v699 = vunpack.c.h.b16 %v74
  %v700 = vunpack.c.l.b16 %v75
  %v701 = vunpack.c.l.b16 %v76
  %v702 = vunpack.c.h.b16 %v76
  %v703 = vunpack.c.l.b16 %v77
  %v704 = vunpack.c.h.b16 %v77
  %v705 = vunpack.c.l.b16 %v78
  %v706 = vunpack.c.h.b16 %v78
  %v707 = vunpack.c.l.b16 %v79
  %v708 = vunpack.c.h.b16 %v79
  %v709 = vunpack.c.l.b16 %v80
  %v710 = vunpack.c.l.b16 %v81
  %v711 = vunpack.c.h.b16 %v81
  %v712 = vunpack.c.l.b16 %v82
  %v713 = vunpack.c.h.b16 %v82
  %v714 = vunpack.c.l.b16 %v83
  %v715 = vunpack.c.h.b16 %v83
  %v716 = vunpack.c.l.b16 %v84
  %v717 = vunpack.c.h.b16 %v84
  %v718 = vunpack.c.l.b16 %v85
  %v719 = vunpack.c.l.b16 %v86
  %v720 = vunpack.c.h.b16 %v86
  %v721 = vunpack.c.l.b16 %v87
  %v722 = vunpack.c.h.b16 %v87
  %v723 = vunpack.c.l.b16 %v88
  %v724 = vunpack.c.h.b16 %v88
  %v725 = vunpack.c.l.b16 %v89
  %v726 = vunpack.c.h.b16 %v89
  %v727 = vunpack.c.l.b16 %v90
  %v728 = vunpack.c.l.b16 %v91
  %v729 = vunpack.c.h.b16 %v91
  %v730 = vunpack.c.l.b16 %v92
  %v731 = vunpack.c.h.b16 %v92
  %v732 = vunpack.c.l.b16 %v93
  %v733 = vunpack.c.h.b16 %v93
  %v734 = vunpack.c.l.b16 %v94
  %v735 = vunpack.c.h.b16 %v94
  %v736 = vunpack.c.l.b16 %v95
  %v737 = vunpack.c.l.b16 %v96
  %v738 = vunpack.c.h.b16 %v96
  %v739 = vunpack.c.l.b16 %v97
  %v740 = vunpack.c.h.b16 %v97
  %v741 = vunpack.c.l.b16 %v98
  %v742 = vunpack.c.h.b16 %v98
  %v743 = vunpack.c.l.b16 %v99
  %v744 = vunpack.c.h.b16 %v99
  %v745 = vunpack.c.l.b16 %v100
  %v746 = vunpack.c.l.b16 %v101
  %v747 = vunpack.c.h.b16 %v101
  %v748 = vunpack.c.l.b16 %v102
  %v749 = vunpack.c.h.b16 %v102
  %v750 = vunpack.c.l.b16 %v103
  %v751 = vunpack.c.h.b16 %v103
  %v752 = vunpack.c.l.b16 %v104
  %v753 = vunpack.c.h.b16 %v104
  %v754 = vunpack.c.l.b16 %v105
  %v755 = vunpack.c.l.b16 %v106
  %v756 = vunpack.c.h.b16 %v106
  %v757 = vunpack.c.l.b16 %v107
  %v758 = vunpack.c.h.b16 %v107
  %v759 = vunpack.c.l.b16 %v108
  %v760 = vunpack.c.h.b16 %v108
  %v761 = vunpack.c.l.b16 %v109
  %v762 = vunpack.c.h.b16 %v109
  %v763 = vunpack.c.l.b16 %v110
  %v764 = vunpack.c.l.b16 %v111
  %v765 = vunpack.c.h.b16 %v111
  %v766 = vunpack.c.l.b16 %v112
  %v767 = vunpack.c.h.b16 %v112
  %v768 = vunpack.c.l.b16 %v113
  %v769 = vunpack.c.h.b16 %v113
  %v770 = vunpack.c.l.b16 %v114
  %v771 = vunpack.c.h.b16 %v114
  %v772 = vunpack.c.l.b16 %v115
  %v773 = vunpack.c.l.b16 %v116
  %v774 = vunpack.c.h.b16 %v116
  %v775 = vunpack.c.l.b16 %v117
  %v776 = vunpack.c.h.b16 %v117
  %v777 = vunpack.c.l.b16 %v118
  %v778 = vunpack.c.h.b16 %v118
  %v779 = vunpack.c.l.b16 %v119
  %v780 = vunpack.c.h.b16 %v119
  %v781 = vunpack.c.l.b16 %v120
  %v782 = vunpack.c.l.b16 %v121
  %v783 = vunpack.c.h.b16 %v121
  %v784 = vunpack.c.l.b16 %v122
  %v785 = vunpack.c.h.b16 %v122
  %v786 = vunpack.c.l.b16 %v123
  %v787 = vunpack.c.h.b16 %v123
  %v788 = vunpack.c.l.b16 %v124
  %v789 = vunpack.c.h.b16 %v124
  %v790 = vunpack.c.l.b16 %v125
  %v791 = vunpack.c.l.b16 %v126
  %v792 = vunpack.c.h.b16 %v126
  %v793 = vunpack.c.l.b16 %v127
  %v794 = vunpack.c.h.b16 %v127
  %v795 = vunpack.c.l.b16 %v128
  %v796 = vunpack.c.h.b16 %v128
  %v797 = vunpack.c.l.b16 %v129
  %v798 = vunpack.c.h.b16 %v129
  %v799 = vunpack.c.l.b16 %v130
  %v800 = vunpack.c.l.b16 %v131
  %v801 = vunpack.c.h.b16 %v131
  %v802 = vunpack.c.l.b16 %v132
  %v803 = vunpack.c.h.b16 %v132
  %v804 = vunpack.c.l.b16 %v133
  %v805 = vunpack.c.h.b16 %v133
  %v806 = vunpack.c.l.b16 %v134
  %v807 = vunpack.c.h.b16 %v134
  %v808 = vunpack.c.l.b16 %v135
  %v809 = vunpack.c.l.b16 %v136
  %v810 = vunpack.c.h.b16 %v136
  %v811 = vunpack.c.l.b16 %v137
  %v812 = vunpack.c.h.b16 %v137
  %v813 = vunpack.c.l.b16 %v138
  %v814 = vunpack.c.h.b16 %v138
  %v815 = vunpack.c.l.b16 %v139
  %v816 = vunpack.c.h.b16 %v139
  %v817 = vunpack.c.l.b16 %v140
  %v818 = vunpack.c.l.b16 %v141
  %v819 = vunpack.c.h.b16 %v141
  %v820 = vunpack.c.l.b16 %v142
  %v821 = vunpack.c.h.b16 %v142
  %v822 = vunpack.c.l.b16 %v143
  %v823 = vunpack.c.h.b16 %v143
  %v824 = vunpack.c.l.b16 %v144
  %v825 = vunpack.c.h.b16 %v144
  %v826 = vunpack.c.l.b16 %v145
  %v827 = vunpack.c.l.b16 %v146
  %v828 = vunpack.c.h.b16 %v146
  %v829 = vunpack.c.l.b16 %v147
  %v830 = vunpack.c.h.b16 %v147
  %v831 = vunpack.c.l.b16 %v148
  %v832 = vunpack.c.h.b16 %v148
  %v833 = vunpack.c.l.b16 %v149
  %v834 = vunpack.c.h.b16 %v149
  %v835 = vunpack.c.l.b16 %v150
  %v836 = vunpack.c.l.b16 %v151
  %v837 = vunpack.c.h.b16 %v151
  %v838 = vunpack.c.l.b16 %v152
  %v839 = vunpack.c.h.b16 %v152
  %v840 = vunpack.c.l.b16 %v153
  %v841 = vunpack.c.h.b16 %v153
  %v842 = vunpack.c.l.b16 %v154
  %v843 = vunpack.c.h.b16 %v154
  %v844 = vunpack.c.l.b16 %v155
  %v845 = vunpack.c.l.b16 %v156
  %v846 = vunpack.c.h.b16 %v156
  %v847 = vunpack.c.l.b16 %v157
  %v848 = vunpack.c.h.b16 %v157
  %v849 = vunpack.c.l.b16 %v158
  %v850 = vunpack.c.h.b16 %v158
  %v851 = vunpack.c.l.b16 %v159
  %v852 = vunpack.c.h.b16 %v159
  %v853 = vunpack.c.l.b16 %v160
  %v854 = vunpack.c.l.b16 %v161
  %v855 = vunpack.c.h.b16 %v161
  %v856 = vunpack.c.l.b16 %v162
  %v857 = vunpack.c.h.b16 %v162
  %v858 = vunpack.c.l.b16 %v163
  %v859 = vunpack.c.h.b16 %v163
  %v860 = vunpack.c.l.b16 %v164
  %v861 = vunpack.c.h.b16 %v164
  %v862 = vunpack.c.l.b16 %v165
  %v863 = vunpack.c.l.b16 %v166
  %v864 = vunpack.c.h.b16 %v166
  %v865 = vunpack.c.l.b16 %v167
  %v866 = vunpack.c.h.b16 %v167
  %v867 = vunpack.c.l.b16 %v168
  %v868 = vunpack.c.h.b16 %v168
  %v869 = vunpack.c.l.b16 %v169
  %v870 = vunpack.c.h.b16 %v169
  %v871 = vunpack.c.l.b16 %v170
  %v872 = vunpack.c.l.b16 %v171
  %v873 = vunpack.c.h.b16 %v171
  %v874 = vunpack.c.l.b16 %v172
  %v875 = vunpack.c.h.b16 %v172
  %v876 = vunpack.c.l.b16 %v173
  %v877 = vunpack.c.h.b16 %v173
  %v878 = vunpack.c.l.b16 %v174
  %v879 = vunpack.c.h.b16 %v174
  %v880 = vunpack.c.l.b16 %v175
  %v881 = vunpack.c.l.b16 %v176
  %v882 = vunpack.c.h.b16 %v176
  %v883 = vunpack.c.l.b16 %v177
  %v884 = vunpack.c.h.b16 %v177
  %v885 = vunpack.c.l.b16 %v178
  %v886 = vunpack.c.h.b16 %v178
  %v887 = vunpack.c.l.b16 %v179
  %v888 = vunpack.c.h.b16 %v179
  %v889 = vunpack.c.l.b16 %v180
  %v890 = vunpack.c.l.b16 %v181
  %v891 = vunpack.c.h.b16 %v181
  %v892 = vunpack.c.l.b16 %v182
  %v893 = vunpack.c.h.b16 %v182
  %v894 = vunpack.c.l.b16 %v183
  %v895 = vunpack.c.h.b16 %v183
  %v896 = vunpack.c.l.b16 %v184
  %v897 = vunpack.c.h.b16 %v184
  %v898 = vunpack.c.l.b16 %v185
  %v899 = vunpack.c.l.b16 %v186
  %v900 = vunpack.c.h.b16 %v186
  %v901 = vunpack.c.l.b16 %v187
  %v902 = vunpack.c.h.b16 %v187
  %v903 = vunpack.c.l.b16 %v188
  %v904 = vunpack.c.h.b16 %v188
  %v905 = vunpack.c.l.b16 %v189
  %v906 = vunpack.c.h.b16 %v189
  %v907 = vunpack.c.l.b16 %v190
  %v908 = vunpack.c.l.b16 %v191
  %v909 = vunpack.c.h.b16 %v191
  %v910 = vunpack.c.l.b16 %v192
  %v911 = vunpack.c.h.b16 %v192
  %v912 = vunpack.c.l.b16 %v193
  %v913 = vunpack.c.h.b16 %v193
  %v914 = vunpack.c.l.b16 %v194
  %v915 = vunpack.c.h.b16 %v194
  %v916 = vunpack.c.l.b16 %v195
  %v917 = vunpack.c.l.b16 %v196
  %v918 = vunpack.c.h.b16 %v196
  %v919 = vunpack.c.l.b16 %v197
  %v920 = vunpack.c.h.b16 %v197
  %v921 = vunpack.c.l.b16 %v198
  %v922 = vunpack.c.h.b16 %v198
  %v923 = vunpack.c.l.b16 %v199
  %v924 = vunpack.c.h.b16 %v199
  %v925 = vunpack.c.l.b16 %v200
  %v926 = vunpack.c.l.b16 %v201
  %v927 = vunpack.c.h.b16 %v201
  %v928 = vunpack.c.l.b16 %v202
  %v929 = vunpack.c.h.b16 %v202
  %v930 = vunpack.c.l.b16 %v203
  %v931 = vunpack.c.h.b16 %v203
  %v932 = vunpack.c.l.b16 %v204
  %v933 = vunpack.c.h.b16 %v204
  %v934 = vunpack.c.l.b16 %v205
  %v935 = vunpack.c.l.b16 %v206
  %v936 = vunpack.c.h.b16 %v206
  %v937 = vunpack.c.l.b16 %v207
  %v938 = vunpack.c.h.b16 %v207
  %v939 = vunpack.c.l.b16 %v208
  %v940 = vunpack.c.h.b16 %v208
  %v941 = vunpack.c.l.b16 %v209
  %v942 = vunpack.c.h.b16 %v209
  %v943 = vunpack.c.l.b16 %v210
  %v944 = vunpack.c.l.b16 %v211
  %v945 = vunpack.c.h.b16 %v211
  %v946 = vunpack.c.l.b16 %v212
  %v947 = vunpack.c.h.b16 %v212
  %v948 = vunpack.c.l.b16 %v213
  %v949 = vunpack.c.h.b16 %v213
  %v950 = vunpack.c.l.b16 %v214
  %v951 = vunpack.c.h.b16 %v214
  %v952 = vunpack.c.l.b16 %v215
  %v953 = vunpack.c.l.b16 %v216
  %v954 = vunpack.c.h.b16 %v216
  %v955 = vunpack.c.l.b16 %v217
  %v956 = vunpack.c.h.b16 %v217
  %v957 = vunpack.c.l.b16 %v218
  %v958 = vunpack.c.h.b16 %v218
  %v959 = vunpack.c.l.b16 %v219
  %v960 = vunpack.c.h.b16 %v219
  %v961 = vunpack.c.l.b16 %v220
  %v962 = vunpack.c.l.b16 %v221
  %v963 = vunpack.c.h.b16 %v221
  %v964 = vunpack.c.l.b16 %v222
  %v965 = vunpack.c.h.b16 %v222
  %v966 = vunpack.c.l.b16 %v223
  %v967 = vunpack.c.h.b16 %v223
  %v968 = vunpack.c.l.b16 %v224
  %v969 = vunpack.c.h.b16 %v224
  %v970 = vunpack.c.l.b16 %v225
  %v971 = vunpack.c.l.b16 %v226
  %v972 = vunpack.c.h.b16 %v226
  %v973 = vunpack.c.l.b16 %v227
  %v974 = vunpack.c.h.b16 %v227
  %v975 = vunpack.c.l.b16 %v228
  %v976 = vunpack.c.h.b16 %v228
  %v977 = vunpack.c.l.b16 %v229
  %v978 = vunpack.c.h.b16 %v229
  %v979 = vunpack.c.l.b16 %v230
  %v980 = vunpack.c.l.b16 %v231
  %v981 = vunpack.c.h.b16 %v231
  %v982 = vunpack.c.l.b16 %v232
  %v983 = vunpack.c.h.b16 %v232
  %v984 = vunpack.c.l.b16 %v233
  %v985 = vunpack.c.h.b16 %v233
  %v986 = vunpack.c.l.b16 %v234
  %v987 = vunpack.c.h.b16 %v234
  %v988 = vunpack.c.l.b16 %v235
  %v989 = vpack.c.b16 %v611, %v602
  %v990 = vpack.c.b16 %v612, %v603
  %v991 = vpack.c.b16 %v613, %v604
  %v992 = vpack.c.b16 %v614, %v605
  %v993 = vpack.c.b16 %v615, %v606
  %v994 = vpack.c.b16 %v616, %v607
  %v995 = vpack.c.b16 %v617, %v608
  %v996 = vpack.c.b16 %v618, %v609
  %v997 = vpack.c.b16 %v619, %v610
  %v998 = vpack.c.b16 %v629, %v620
  %v999 = vpack.c.b16 %v630, %v621
  %v1000 = vpack.c.b16 %v631, %v622
  %v1001 = vpack.c.b16 %v632, %v623
  %v1002 = vpack.c.b16 %v633, %v624
  %v1003 = vpack.c.b16 %v634, %v625
  %v1004 = vpack.c.b16 %v635, %v626
  %v1005 = vpack.c.b16 %v636, %v627
  %v1006 = vpack.c.b16 %v637, %v628
  %v1007 = vpack.c.b16 %v647, %v638
  %v1008 = vpack.c.b16 %v648, %v639
  %v1009 = vpack.c.b16 %v649, %v640
  %v1010 = vpack.c.b16 %v650, %v641
  %v1011 = vpack.c.b16 %v651, %v642
  %v1012 = vpack.c.b16 %v652, %v643
  %v1013 = vpack.c.b16 %v653, %v644
  %v1014 = vpack.c.b16 %v654, %v645
  %v1015 = vpack.c.b16 %v655, %v646
  %v1016 = vpack.c.b16 %v665, %v656
  %v1017 = vpack.c.b16 %v666, %v657
  %v1018 = vpack.c.b16 %v667, %v658
  %v1019 = vpack.c.b16 %v668, %v659
  %v1020 = vpack.c.b16 %v669, %v660
  %v1021 = vpack.c.b16 %v670, %v661
  %v1022 = vpack.c.b16 %v671, %v662
  %v1023 = vpack.c.b16 %v672, %v663
  %v1024 = vpack.c.b16 %v673, %v664
  %v1025 = vpack.c.b16 %v683, %v674
  %v1026 = vpack.c.b16 %v684, %v675
  %v1027 = vpack.c.b16 %v685, %v676
  %v1028 = vpack.c.b16 %v686, %v677
  %v1029 = vpack.c.b16 %v687, %v678
  %v1030 = vpack.c.b16 %v688, %v679
  %v1031 = vpack.c.b16 %v689, %v680
  %v1032 = vpack.c.b16 %v690, %v681
  %v1033 = vpack.c.b16 %v691, %v682
  %v1034 = vpack.c.b16 %v701, %v692
  %v1035 = vpack.c.b16 %v702, %v693
  %v1036 = vpack.c.b16 %v703, %v694
  %v1037 = vpack.c.b16 %v704, %v695
  %v1038 = vpack.c.b16 %v705, %v696
  %v1039 = vpack.c.b16 %v706, %v697
  %v1040 = vpack.c.b16 %v707, %v698
  %v1041 = vpack.c.b16 %v708, %v699
  %v1042 = vpack.c.b16 %v709, %v700
  %v1043 = vpack.c.b16 %v719, %v710
  %v1044 = vpack.c.b16 %v720, %v711
  %v1045 = vpack.c.b16 %v721, %v712
  %v1046 = vpack.c.b16 %v722, %v713
  %v1047 = vpack.c.b16 %v723, %v714
  %v1048 = vpack.c.b16 %v724, %v715
  %v1049 = vpack.c.b16 %v725, %v716
  %v1050 = vpack.c.b16 %v726, %v717
  %v1051 = vpack.c.b16 %v727, %v718
  %v1052 = vpack.c.b16 %v737, %v728
  %v1053 = vpack.c.b16 %v738, %v729
  %v1054 = vpack.c.b16 %v739, %v730
  %v1055 = vpack.c.b16 %v740, %v731
  %v1056 = vpack.c.b16 %v741, %v732
  %v1057 = vpack.c.b16 %v742, %v733
  %v1058 = vpack.c.b16 %v743, %v734
  %v1059 = vpack.c.b16 %v744, %v735
  %v1060 = vpack.c.b16 %v745, %v736
  %v1061 = vpack.c.b16 %v755, %v746
  %v1062 = vpack.c.b16 %v756, %v747
  %v1063 = vpack.c.b16 %v757, %v748
  %v1064 = vpack.c.b16 %v758, %v749
  %v1065 = vpack.c.b16 %v759, %v750
  %v1066 = vpack.c.b16 %v760, %v751
  %v1067 = vpack.c.b16 %v761, %v752
  %v1068 = vpack.c.b16 %v762, %v753
  %v1069 = vpack.c.b16 %v763, %v754
  %v1070 = vpack.c.b16 %v773, %v764
  %v1071 = vpack.c.b16 %v774, %v765
  %v1072 = vpack.c.b16 %v775, %v766
  %v1073 = vpack.c.b16 %v776, %v767
  %v1074 = vpack.c.b16 %v777, %v768
  %v1075 = vpack.c.b16 %v778, %v769
  %v1076 = vpack.c.b16 %v779, %v770
  %v1077 = vpack.c.b16 %v780, %v771
  %v1078 = vpack.c.b16 %v781, %v772
  %v1079 = vpack.c.b16 %v791, %v782
  %v1080 = vpack.c.b16 %v792, %v783
  %v1081 = vpack.c.b16 %v793, %v784
  %v1082 = vpack.c.b16 %v794, %v785
  %v1083 = vpack.c.b16 %v795, %v786
  %v1084 = vpack.c.b16 %v796, %v787
  %v1085 = vpack.c.b16 %v797, %v788
  %v1086 = vpack.c.b16 %v798, %v789
  %v1087 = vpack.c.b16 %v799, %v790
  %v1088 = vpack.c.b16 %v809, %v800
  %v1089 = vpack.c.b16 %v810, %v801
  %v1090 = vpack.c.b16 %v811, %v802
  %v1091 = vpack.c.b16 %v812, %v803
  %v1092 = vpack.c.b16 %v813, %v804
  %v1093 = vpack.c.b16 %v814, %v805
  %v1094 = vpack.c.b16 %v815, %v806
  %v1095 = vpack.c.b16 %v816, %v807
  %v1096 = vpack.c.b16 %v817, %v808
  %v1097 = vpack.c.b16 %v827, %v818
  %v1098 = vpack.c.b16 %v828, %v819
  %v1099 = vpack.c.b16 %v829, %v820
  %v1100 = vpack.c.b16 %v830, %v821
  %v1101 = vpack.c.b16 %v831, %v822
  %v1102 = vpack.c.b16 %v832, %v823
  %v1103 = vpack.c.b16 %v833, %v824
  %v1104 = vpack.c.b16 %v834, %v825
  %v1105 = vpack.c.b16 %v835, %v826
  %v1106 = vpack.c.b16 %v845, %v836
  %v1107 = vpack.c.b16 %v846, %v837
  %v1108 = vpack.c.b16 %v847, %v838
  %v1109 = vpack.c.b16 %v848, %v839
  %v1110 = vpack.c.b16 %v849, %v840
  %v1111 = vpack.c.b16 %v850, %v841
  %v1112 = vpack.c.b16 %v851, %v842
  %v1113 = vpack.c.b16 %v852, %v843
  %v1114 = vpack.c.b16 %v853, %v844
  %v1115 = vpack.c.b16 %v863, %v854
  %v1116 = vpack.c.b16 %v864, %v855
  %v1117 = vpack.c.b16 %v865, %v856
  %v1118 = vpack.c.b16 %v866, %v857
  %v1119 = vpack.c.b16 %v867, %v858
  %v1120 = vpack.c.b16 %v868, %v859
  %v1121 = vpack.c.b16 %v869, %v860
  %v1122 = vpack.c.b16 %v870, %v861
  %v1123 = vpack.c.b16 %v871, %v862
  %v1124 = vpack.c.b16 %v881, %v872
  %v1125 = vpack.c.b16 %v882, %v873
  %v1126 = vpack.c.b16 %v883, %v874
  %v1127 = vpack.c.b16 %v884, %v875
  %v1128 = vpack.c.b16 %v885, %v876
  %v1129 = vpack.c.b16 %v886, %v877
  %v1130 = vpack.c.b16 %v887, %v878
  %v1131 = vpack.c.b16 %v888, %v879
  %v1132 = vpack.c.b16 %v889, %v880
  %v1133 = vpack.c.b16 %v899, %v890
  %v1134 = vpack.c.b16 %v900, %v891
  %v1135 = vpack.c.b16 %v901, %v892
  %v1136 = vpack.c.b16 %v902, %v893
  %v1137 = vpack.c.b16 %v903, %v894
  %v1138 = vpack.c.b16 %v904, %v895
  %v1139 = vpack.c.b16 %v905, %v896
  %v1140 = vpack.c.b16 %v906, %v897
  %v1141 = vpack.c.b16 %v907, %v898
  %v1142 = vpack.c.b16 %v917, %v908
  %v1143 = vpack.c.b16 %v918, %v909
  %v1144 = vpack.c.b16 %v919, %v910
  %v1145 = vpack.c.b16 %v920, %v911
  %v1146 = vpack.c.b16 %v921, %v912
  %v1147 = vpack.c.b16 %v922, %v913
  %v1148 = vpack.c.b16 %v923, %v914
  %v1149 = vpack.c.b16 %v924, %v915
  %v1150 = vpack.c.b16 %v925, %v916
  %v1151 = vpack.c.b16 %v935, %v926
  %v1152 = vpack.c.b16 %v936, %v927
  %v1153 = vpack.c.b16 %v937, %v928
  %v1154 = vpack.c.b16 %v938, %v929
  %v1155 = vpack.c.b16 %v939, %v930
  %v1156 = vpack.c.b16 %v940, %v931
  %v1157 = vpack.c.b16 %v941, %v932
  %v1158 = vpack.c.b16 %v942, %v933
  %v1159 = vpack.c.b16 %v943, %v934
  %v1160 = vpack.c.b16 %v953, %v944
  %v1161 = vpack.c.b16 %v954, %v945
  %v1162 = vpack.c.b16 %v955, %v946
  %v1163 = vpack.c.b16 %v956, %v947
  %v1164 = vpack.c.b16 %v957, %v948
  %v1165 = vpack.c.b16 %v958, %v949
  %v1166 = vpack.c.b16 %v959, %v950
  %v1167 = vpack.c.b16 %v960, %v951
  %v1168 = vpack.c.b16 %v961, %v952
  %v1169 = vpack.c.b16 %v971, %v962
  %v1170 = vpack.c.b16 %v972, %v963
  %v1171 = vpack.c.b16 %v973, %v964
  %v1172 = vpack.c.b16 %v974, %v965
  %v1173 = vpack.c.b16 %v975, %v966
  %v1174 = vpack.c.b16 %v976, %v967
  %v1175 = vpack.c.b16 %v977, %v968
  %v1176 = vpack.c.b16 %v978, %v969
  %v1177 = vpack.c.b16 %v979, %v970
  %v1178 = vpack.c.b16 %v980, %v980
  %v1179 = vpack.c.b16 %v981, %v981
  %v1180 = vpack.c.b16 %v982, %v982
  %v1181 = vpack.c.b16 %v983, %v983
  %v1182 = vpack.c.b16 %v984, %v984
  %v1183 = vpack.c.b16 %v985, %v985
  %v1184 = vpack.c.b16 %v986, %v986
  %v1185 = vpack.c.b16 %v987, %v987
  %v1186 = vpack.c.b16 %v988, %v988
  %v1529 = vunpack.c.l.b16 %v236
  %v1530 = vunpack.c.l.b16 %v237
  %v1531 = vunpack.c.l.b16 %v238
  %v1532 = vunpack.c.l.b16 %v239
  %v1533 = vunpack.c.l.b16 %v240
  %v1534 = vunpack.c.l.b16 %v241
  %v1535 = vunpack.c.l.b16 %v242
  %v1536 = vunpack.c.l.b16 %v243
  %v1537 = vunpack.c.l.b16 %v244
  %v1538 = vunpack.c.l.b16 %v245
  %v1539 = vunpack.c.l.b16 %v246
  %v1540 = vunpack.c.l.b16 %v247
  %v1541 = vunpack.c.l.b16 %v248
  %v1542 = vunpack.c.l.b16 %v249
  %v1543 = vunpack.c.l.b16 %v250
  %v1544 = vunpack.c.l.b16 %v251
  %v1545 = vunpack.c.l.b16 %v252
  %v1546 = vunpack.c.l.b16 %v253
  %v1547 = vunpack.c.l.b16 %v254
  %v1548 = vunpack.c.l.b16 %v255
  %v1549 = vunpack.c.l.b16 %v256
  %v1550 = vunpack.c.l.b16 %v257
  %v1551 = vunpack.c.l.b16 %v258
  %v1552 = vunpack.c.l.b16 %v259
  %v1553 = vunpack.c.l.b16 %v260
  %v1554 = vunpack.c.l.b16 %v261
  %v1555 = vunpack.c.l.b16 %v262
  %v1556 = vunpack.c.l.b16 %v263
  %v1557 = vunpack.c.l.b16 %v264
  %v1558 = vunpack.c.l.b16 %v265
  %v1559 = vunpack.c.l.b16 %v266
  %v1560 = vunpack.c.l.b16 %v267
  %v1561 = vunpack.c.l.b16 %v268
  %v1562 = vunpack.c.l.b16 %v269
  %v1563 = vunpack.c.l.b16 %v270
  %v1564 = vunpack.c.l.b16 %v271
  %v1565 = vunpack.c.l.b16 %v272
  %v1566 = vunpack.c.l.b16 %v273
  %v1567 = vunpack.c.l.b16 %v274
  %v1568 = vunpack.c.l.b16 %v275
  %v1569 = vunpack.c.l.b16 %v276
  %v1570 = vunpack.c.l.b16 %v277
  %v1571 = vunpack.c.l.b16 %v278
  %v1572 = vunpack.c.l.b16 %v279
  %v1573 = vunpack.c.l.b16 %v280
  %v1574 = vunpack.c.l.b16 %v281
  %v1575 = vunpack.c.l.b16 %v282
  %v1576 = vunpack.c.l.b16 %v283
  %v1577 = vunpack.c.l.b16 %v284
  %v1578 = vunpack.c.l.b16 %v285
  %v1579 = vunpack.c.l.b16 %v286
  %v1580 = vunpack.c.l.b16 %v287
  %v1581 = vunpack.c.l.b16 %v288
  %v1582 = vunpack.c.l.b16 %v289
  %v1583 = vunpack.c.l.b16 %v290
  %v1584 = vunpack.c.l.b16 %v291
  %v1585 = vunpack.c.l.b16 %v292
  %v1586 = vunpack.c.l.b16 %v293
  %v1587 = vunpack.c.l.b16 %v294
  %v1588 = vunpack.c.l.b16 %v295
  %v1589 = vunpack.c.l.b16 %v296
  %v1590 = vunpack.c.l.b16 %v297
  %v1591 = vunpack.c.l.b16 %v298
  %v1592 = vunpack.c.l.b16 %v299
  %v1593 = vunpack.c.l.b16 %v300
  %v1594 = vunpack.c.l.b16 %v301
  %v1595 = vunpack.c.l.b16 %v302
  %v1596 = vunpack.c.l.b16 %v303
  %v1597 = vunpack.c.l.b16 %v304
  %v1598 = vunpack.c.l.b16 %v305
  %v1599 = vunpack.c.l.b16 %v306
  %v1600 = vunpack.c.l.b16 %v307
  %v1601 = vunpack.c.l.b16 %v308
  %v1602 = vunpack.c.l.b16 %v309
  %v1603 = vunpack.c.l.b16 %v310
  %v1604 = vunpack.c.l.b16 %v311
  %v1605 = vunpack.c.l.b16 %v312
  %v1606 = vunpack.c.l.b16 %v313
  %v1607 = vunpack.c.l.b16 %v314
  %v1608 = vunpack.c.l.b16 %v315
  %v1609 = vunpack.c.l.b16 %v316
  %v1610 = vunpack.c.l.b16 %v317
  %v1611 = vunpack.c.l.b16 %v318
  %v1612 = vunpack.c.l.b16 %v319
  %v1613 = vunpack.c.l.b16 %v320
  %v1614 = vunpack.c.l.b16 %v321
  %v1615 = vunpack.c.l.b16 %v322
  %v1616 = vunpack.c.l.b16 %v323
  %v1617 = vunpack.c.l.b16 %v324
  %v1618 = vunpack.c.l.b16 %v325
  %v1619 = vunpack.c.l.b16 %v326
  %v1620 = vunpack.c.l.b16 %v327
  %v1621 = vunpack.c.l.b16 %v328
  %v1622 = vunpack.c.l.b16 %v329
  %v1623 = vunpack.c.l.b16 %v330
  %v1624 = vunpack.c.l.b16 %v331
  %v1625 = vunpack.c.l.b16 %v332
  %v1626 = vunpack.c.l.b16 %v333
  %v1627 = vunpack.c.l.b16 %v334
  %v1628 = vunpack.c.l.b16 %v335
  %v1629 = vunpack.c.l.b16 %v336
  %v1630 = vunpack.c.l.b16 %v337
  %v1631 = vunpack.c.l.b16 %v338
  %v1632 = vunpack.c.l.b16 %v339
  %v1633 = vunpack.c.l.b16 %v340
  %v1634 = vunpack.c.l.b16 %v341
  %v1635 = vunpack.c.l.b16 %v342
  %v1636 = vunpack.c.l.b16 %v343
  %v1637 = vunpack.c.l.b16 %v344
  %v1638 = vunpack.c.l.b16 %v345
  %v1639 = vunpack.c.l.b16 %v346
  %v1640 = vunpack.c.l.b16 %v347
  %v1641 = vunpack.c.l.b16 %v348
  %v1642 = vunpack.c.l.b16 %v349
  %v1643 = vunpack.c.l.b16 %v350
  %v1644 = vunpack.c.l.b16 %v351
  %v1645 = vunpack.c.l.b16 %v352
  %v1646 = vunpack.c.l.b16 %v353
  %v1647 = vunpack.c.l.b16 %v354
  %v1648 = vunpack.c.l.b16 %v355
  %v1649 = vunpack.c.l.b16 %v356
  %v1650 = vunpack.c.l.b16 %v357
  %v1651 = vunpack.c.l.b16 %v358
  %v1652 = vunpack.c.l.b16 %v359
  %v1653 = vunpack.c.l.b16 %v360
  %v1654 = vunpack.c.l.b16 %v361
  %v1655 = vunpack.c.l.b16 %v362
  %v1656 = vunpack.c.l.b16 %v363
  %v1657 = vunpack.c.l.b16 %v364
  %v1658 = vunpack.c.l.b16 %v365
  %v1659 = vunpack.c.l.b16 %v366
  %v1660 = vunpack.c.l.b16 %v367
  %v1661 = vunpack.c.l.b16 %v368
  %v1662 = vunpack.c.l.b16 %v369
  %v1663 = vunpack.c.l.b16 %v370
  %v1664 = vunpack.c.l.b16 %v371
  %v1665 = vunpack.c.l.b16 %v372
  %v1666 = vunpack.c.l.b16 %v373
  %v1667 = vunpack.c.l.b16 %v374
  %v1668 = vunpack.c.l.b16 %v375
  %v1669 = vunpack.c.l.b16 %v376
  %v1670 = vunpack.c.l.b16 %v377
  %v1671 = vunpack.c.l.b16 %v378
  %v1672 = vunpack.c.l.b16 %v379
  %v1673 = vpack.c.b16 %v1530, %v1529
  %v1674 = vpack.c.b16 %v1532, %v1531
  %v1675 = vpack.c.b16 %v1534, %v1533
  %v1676 = vpack.c.b16 %v1536, %v1535
  %v1677 = vpack.c.b16 %v1538, %v1537
  %v1678 = vpack.c.b16 %v1540, %v1539
  %v1679 = vpack.c.b16 %v1542, %v1541
  %v1680 = vpack.c.b16 %v1544, %v1543
  %v1681 = vpack.c.b16 %v1546, %v1545
  %v1682 = vpack.c.b16 %v1548, %v1547
  %v1683 = vpack.c.b16 %v1550, %v1549
  %v1684 = vpack.c.b16 %v1552, %v1551
  %v1685 = vpack.c.b16 %v1554, %v1553
  %v1686 = vpack.c.b16 %v1556, %v1555
  %v1687 = vpack.c.b16 %v1558, %v1557
  %v1688 = vpack.c.b16 %v1560, %v1559
  %v1689 = vpack.c.b16 %v1562, %v1561
  %v1690 = vpack.c.b16 %v1564, %v1563
  %v1691 = vpack.c.b16 %v1566, %v1565
  %v1692 = vpack.c.b16 %v1568, %v1567
  %v1693 = vpack.c.b16 %v1570, %v1569
  %v1694 = vpack.c.b16 %v1572, %v1571
  %v1695 = vpack.c.b16 %v1574, %v1573
  %v1696 = vpack.c.b16 %v1576, %v1575
  %v1697 = vpack.c.b16 %v1578, %v1577
  %v1698 = vpack.c.b16 %v1580, %v1579
  %v1699 = vpack.c.b16 %v1582, %v1581
  %v1700 = vpack.c.b16 %v1584, %v1583
  %v1701 = vpack.c.b16 %v1586, %v1585
  %v1702 = vpack.c.b16 %v1588, %v1587
  %v1703 = vpack.c.b16 %v1590, %v1589
  %v1704 = vpack.c.b16 %v1592, %v1591
  %v1705 = vpack.c.b16 %v1594, %v1593
  %v1706 = vpack.c.b16 %v1596, %v1595
  %v1707 = vpack.c.b16 %v1598, %v1597
  %v1708 = vpack.c.b16 %v1600, %v1599
  %v1709 = vpack.c.b16 %v1602, %v1601
  %v1710 = vpack.c.b16 %v1604, %v1603
  %v1711 = vpack.c.b16 %v1606, %v1605
  %v1712 = vpack.c.b16 %v1608, %v1607
  %v1713 = vpack.c.b16 %v1610, %v1609
  %v1714 = vpack.c.b16 %v1612, %v1611
  %v1715 = vpack.c.b16 %v1614, %v1613
  %v1716 = vpack.c.b16 %v1616, %v1615
  %v1717 = vpack.c.b16 %v1618, %v1617
  %v1718 = vpack.c.b16 %v1620, %v1619
  %v1719 = vpack.c.b16 %v1622, %v1621
  %v1720 = vpack.c.b16 %v1624, %v1623
  %v1721 = vpack.c.b16 %v1626, %v1625
  %v1722 = vpack.c.b16 %v1628, %v1627
  %v1723 = vpack.c.b16 %v1630, %v1629
  %v1724 = vpack.c.b16 %v1632, %v1631
  %v1725 = vpack.c.b16 %v1634, %v1633
  %v1726 = vpack.c.b16 %v1636, %v1635
  %v1727 = vpack.c.b16 %v1638, %v1637
  %v1728 = vpack.c.b16 %v1640, %v1639
  %v1729 = vpack.c.b16 %v1642, %v1641
  %v1730 = vpack.c.b16 %v1644, %v1643
  %v1731 = vpack.c.b16 %v1646, %v1645
  %v1732 = vpack.c.b16 %v1648, %v1647
  %v1733 = vpack.c.b16 %v1650, %v1649
  %v1734 = vpack.c.b16 %v1652, %v1651
  %v1735 = vpack.c.b16 %v1654, %v1653
  %v1736 = vpack.c.b16 %v1656, %v1655
  %v1737 = vpack.c.b16 %v1658, %v1657
  %v1738 = vpack.c.b16 %v1660, %v1659
  %v1739 = vpack.c.b16 %v1662, %v1661
  %v1740 = vpack.c.b16 %v1664, %v1663
  %v1741 = vpack.c.b16 %v1666, %v1665
  %v1742 = vpack.c.b16 %v1668, %v1667
  %v1743 = vpack.c.b16 %v1670, %v1669
  %v1744 = vpack.c.b16 %v1672, %v1671
  %1817 = vmatprep.subr.bf16.mxu0 0
  %1818 = vmatpush1.bf16.msra.mxu0 %v1680
  %1819 = vmatprep.subr.bf16.mxu0 0
  %1820 = vmatpush1.bf16.msra.mxu0 %v1679
  %1821 = vmatprep.subr.bf16.mxu0 0
  %1822 = vmatpush1.bf16.msra.mxu0 %v1678
  %1823 = vmatprep.subr.bf16.mxu0 0
  %1824 = vmatpush1.bf16.msra.mxu0 %v1677
  %1825 = vmatprep.subr.bf16.mxu0 0
  %1826 = vmatpush1.bf16.msra.mxu0 %v1676
  %1827 = vmatprep.subr.bf16.mxu0 0
  %1828 = vmatpush1.bf16.msra.mxu0 %v1675
  %1829 = vmatprep.subr.bf16.mxu0 0
  %1830 = vmatpush1.bf16.msra.mxu0 %v1674
  %1831 = vmatprep.subr.bf16.mxu0 0
  %1832 = vmatpush1.bf16.msra.mxu0 %v1673
  %1833 = vmatprep.subr.bf16.mxu0 0
  %1834 = vmatpush2.bf16.msra.mxu0 %v1688
  %1835 = vmatprep.subr.bf16.mxu0 0
  %1836 = vmatpush2.bf16.msra.mxu0 %v1687
  %1837 = vmatprep.subr.bf16.mxu0 0
  %1838 = vmatpush2.bf16.msra.mxu0 %v1686
  %1839 = vmatprep.subr.bf16.mxu0 0
  %1840 = vmatpush2.bf16.msra.mxu0 %v1685
  %1841 = vmatprep.subr.bf16.mxu0 0
  %1842 = vmatpush2.bf16.msra.mxu0 %v1684
  %1843 = vmatprep.subr.bf16.mxu0 0
  %1844 = vmatpush2.bf16.msra.mxu0 %v1683
  %1845 = vmatprep.subr.bf16.mxu0 0
  %1846 = vmatpush2.bf16.msra.mxu0 %v1682
  %1847 = vmatprep.subr.bf16.mxu0 0
  %1848 = vmatpush2.bf16.msra.mxu0 %v1681
  %1849 = vmatprep.mubr.bf16.mxu0 %v990
  %1850 = vmatmul.mubr.bf16.gmra.mxu0 %v989
  %v1851 = vpop.f32.mrf.mxu0
  %v1852 = vadd.f32 %v385, %v1851
  %v1853 = vpop.f32.mrf.mxu0
  %v1854 = vpop.f32.mrf.mxu0
  %v1855 = vadd.f32 %v385, %v1854
  %v1856 = vpop.f32.mrf.mxu0
  %1857 = vmatprep.mubr.bf16.mxu0 %v999
  %1858 = vmatmul.mubr.bf16.gmra.mxu0 %v998
  %v1859 = vpop.f32.mrf.mxu0
  %v1860 = vadd.f32 %v385, %v1859
  %v1861 = vpop.f32.mrf.mxu0
  %v1862 = vpop.f32.mrf.mxu0
  %v1863 = vadd.f32 %v385, %v1862
  %v1864 = vpop.f32.mrf.mxu0
  %1865 = vmatprep.mubr.bf16.mxu0 %v1008
  %1866 = vmatmul.mubr.bf16.gmra.mxu0 %v1007
  %v1867 = vpop.f32.mrf.mxu0
  %v1868 = vadd.f32 %v385, %v1867
  %v1869 = vpop.f32.mrf.mxu0
  %v1870 = vpop.f32.mrf.mxu0
  %v1871 = vadd.f32 %v385, %v1870
  %v1872 = vpop.f32.mrf.mxu0
  %1873 = vmatprep.mubr.bf16.mxu0 %v1017
  %1874 = vmatmul.mubr.bf16.gmra.mxu0 %v1016
  %v1875 = vpop.f32.mrf.mxu0
  %v1876 = vadd.f32 %v385, %v1875
  %v1877 = vpop.f32.mrf.mxu0
  %v1878 = vpop.f32.mrf.mxu0
  %v1879 = vadd.f32 %v385, %v1878
  %v1880 = vpop.f32.mrf.mxu0
  %1881 = vmatprep.mubr.bf16.mxu0 %v1026
  %1882 = vmatmul.mubr.bf16.gmra.mxu0 %v1025
  %v1883 = vpop.f32.mrf.mxu0
  %v1884 = vadd.f32 %v385, %v1883
  %v1885 = vpop.f32.mrf.mxu0
  %v1886 = vpop.f32.mrf.mxu0
  %v1887 = vadd.f32 %v385, %v1886
  %v1888 = vpop.f32.mrf.mxu0
  %1889 = vmatprep.mubr.bf16.mxu0 %v1035
  %1890 = vmatmul.mubr.bf16.gmra.mxu0 %v1034
  %v1891 = vpop.f32.mrf.mxu0
  %v1892 = vadd.f32 %v385, %v1891
  %v1893 = vpop.f32.mrf.mxu0
  %v1894 = vpop.f32.mrf.mxu0
  %v1895 = vadd.f32 %v385, %v1894
  %v1896 = vpop.f32.mrf.mxu0
  %1897 = vmatprep.mubr.bf16.mxu0 %v1044
  %1898 = vmatmul.mubr.bf16.gmra.mxu0 %v1043
  %v1899 = vpop.f32.mrf.mxu0
  %v1900 = vadd.f32 %v385, %v1899
  %v1901 = vpop.f32.mrf.mxu0
  %v1902 = vpop.f32.mrf.mxu0
  %v1903 = vadd.f32 %v385, %v1902
  %v1904 = vpop.f32.mrf.mxu0
  %1905 = vmatprep.mubr.bf16.mxu0 %v1053
  %1906 = vmatmul.mubr.bf16.gmra.mxu0 %v1052
  %v1907 = vpop.f32.mrf.mxu0
  %v1908 = vadd.f32 %v385, %v1907
  %v1909 = vpop.f32.mrf.mxu0
  %v1910 = vpop.f32.mrf.mxu0
  %v1911 = vadd.f32 %v385, %v1910
  %v1912 = vpop.f32.mrf.mxu0
  %1913 = vmatprep.mubr.bf16.mxu0 %v1062
  %1914 = vmatmul.mubr.bf16.gmra.mxu0 %v1061
  %v1915 = vpop.f32.mrf.mxu0
  %v1916 = vadd.f32 %v385, %v1915
  %v1917 = vpop.f32.mrf.mxu0
  %v1918 = vpop.f32.mrf.mxu0
  %v1919 = vadd.f32 %v385, %v1918
  %v1920 = vpop.f32.mrf.mxu0
  %1921 = vmatprep.mubr.bf16.mxu0 %v1071
  %1922 = vmatmul.mubr.bf16.gmra.mxu0 %v1070
  %v1923 = vpop.f32.mrf.mxu0
  %v1924 = vadd.f32 %v385, %v1923
  %v1925 = vpop.f32.mrf.mxu0
  %v1926 = vpop.f32.mrf.mxu0
  %v1927 = vadd.f32 %v385, %v1926
  %v1928 = vpop.f32.mrf.mxu0
  %1929 = vmatprep.mubr.bf16.mxu0 %v1080
  %1930 = vmatmul.mubr.bf16.gmra.mxu0 %v1079
  %v1931 = vpop.f32.mrf.mxu0
  %v1932 = vadd.f32 %v385, %v1931
  %v1933 = vpop.f32.mrf.mxu0
  %v1934 = vpop.f32.mrf.mxu0
  %v1935 = vadd.f32 %v385, %v1934
  %v1936 = vpop.f32.mrf.mxu0
  %1937 = vmatprep.mubr.bf16.mxu0 %v1089
  %1938 = vmatmul.mubr.bf16.gmra.mxu0 %v1088
  %v1939 = vpop.f32.mrf.mxu0
  %v1940 = vadd.f32 %v385, %v1939
  %v1941 = vpop.f32.mrf.mxu0
  %v1942 = vpop.f32.mrf.mxu0
  %v1943 = vadd.f32 %v385, %v1942
  %v1944 = vpop.f32.mrf.mxu0
  %1945 = vmatprep.mubr.bf16.mxu0 %v1098
  %1946 = vmatmul.mubr.bf16.gmra.mxu0 %v1097
  %v1947 = vpop.f32.mrf.mxu0
  %v1948 = vadd.f32 %v385, %v1947
  %v1949 = vpop.f32.mrf.mxu0
  %v1950 = vpop.f32.mrf.mxu0
  %v1951 = vadd.f32 %v385, %v1950
  %v1952 = vpop.f32.mrf.mxu0
  %1953 = vmatprep.mubr.bf16.mxu0 %v1107
  %1954 = vmatmul.mubr.bf16.gmra.mxu0 %v1106
  %v1955 = vpop.f32.mrf.mxu0
  %v1956 = vadd.f32 %v385, %v1955
  %v1957 = vpop.f32.mrf.mxu0
  %v1958 = vpop.f32.mrf.mxu0
  %v1959 = vadd.f32 %v385, %v1958
  %v1960 = vpop.f32.mrf.mxu0
  %1961 = vmatprep.mubr.bf16.mxu0 %v1116
  %1962 = vmatmul.mubr.bf16.gmra.mxu0 %v1115
  %v1963 = vpop.f32.mrf.mxu0
  %v1964 = vadd.f32 %v385, %v1963
  %v1965 = vpop.f32.mrf.mxu0
  %v1966 = vpop.f32.mrf.mxu0
  %v1967 = vadd.f32 %v385, %v1966
  %v1968 = vpop.f32.mrf.mxu0
  %1969 = vmatprep.mubr.bf16.mxu0 %v1125
  %1970 = vmatmul.mubr.bf16.gmra.mxu0 %v1124
  %v1971 = vpop.f32.mrf.mxu0
  %v1972 = vadd.f32 %v385, %v1971
  %v1973 = vpop.f32.mrf.mxu0
  %v1974 = vpop.f32.mrf.mxu0
  %v1975 = vadd.f32 %v385, %v1974
  %v1976 = vpop.f32.mrf.mxu0
  %1977 = vmatprep.mubr.bf16.mxu0 %v1134
  %1978 = vmatmul.mubr.bf16.gmra.mxu0 %v1133
  %v1979 = vpop.f32.mrf.mxu0
  %v1980 = vadd.f32 %v385, %v1979
  %v1981 = vpop.f32.mrf.mxu0
  %v1982 = vpop.f32.mrf.mxu0
  %v1983 = vadd.f32 %v385, %v1982
  %v1984 = vpop.f32.mrf.mxu0
  %1985 = vmatprep.mubr.bf16.mxu0 %v1143
  %1986 = vmatmul.mubr.bf16.gmra.mxu0 %v1142
  %v1987 = vpop.f32.mrf.mxu0
  %v1988 = vadd.f32 %v385, %v1987
  %v1989 = vpop.f32.mrf.mxu0
  %v1990 = vpop.f32.mrf.mxu0
  %v1991 = vadd.f32 %v385, %v1990
  %v1992 = vpop.f32.mrf.mxu0
  %1993 = vmatprep.mubr.bf16.mxu0 %v1152
  %1994 = vmatmul.mubr.bf16.gmra.mxu0 %v1151
  %v1995 = vpop.f32.mrf.mxu0
  %v1996 = vadd.f32 %v385, %v1995
  %v1997 = vpop.f32.mrf.mxu0
  %v1998 = vpop.f32.mrf.mxu0
  %v1999 = vadd.f32 %v385, %v1998
  %v2000 = vpop.f32.mrf.mxu0
  %2001 = vmatprep.mubr.bf16.mxu0 %v1161
  %2002 = vmatmul.mubr.bf16.gmra.mxu0 %v1160
  %v2003 = vpop.f32.mrf.mxu0
  %v2004 = vadd.f32 %v385, %v2003
  %v2005 = vpop.f32.mrf.mxu0
  %v2006 = vpop.f32.mrf.mxu0
  %v2007 = vadd.f32 %v385, %v2006
  %v2008 = vpop.f32.mrf.mxu0
  %2009 = vmatprep.mubr.bf16.mxu0 %v1170
  %2010 = vmatmul.mubr.bf16.gmra.mxu0 %v1169
  %v2011 = vpop.f32.mrf.mxu0
  %v2012 = vadd.f32 %v385, %v2011
  %v2013 = vpop.f32.mrf.mxu0
  %v2014 = vpop.f32.mrf.mxu0
  %v2015 = vadd.f32 %v385, %v2014
  %v2016 = vpop.f32.mrf.mxu0
  %2017 = vmatprep.mubr.bf16.mxu0 %v1179
  %2018 = vmatmul.mubr.bf16.gmra.mxu0 %v1178
  %v2019 = vpop.f32.mrf.mxu0
  %v2020 = vadd.f32 %v385, %v2019
  %v2021 = vpop.f32.mrf.mxu0
  %v2022 = vpop.f32.mrf.mxu0
  %v2023 = vpop.f32.mrf.mxu0
  %2024 = vdwg.mxu0
  %2025 = vmatprep.subr.bf16.mxu0 0
  %2026 = vmatpush1.bf16.msra.mxu0 %v1696
  %2027 = vmatprep.subr.bf16.mxu0 0
  %2028 = vmatpush1.bf16.msra.mxu0 %v1695
  %2029 = vmatprep.subr.bf16.mxu0 0
  %2030 = vmatpush1.bf16.msra.mxu0 %v1694
  %2031 = vmatprep.subr.bf16.mxu0 0
  %2032 = vmatpush1.bf16.msra.mxu0 %v1693
  %2033 = vmatprep.subr.bf16.mxu0 0
  %2034 = vmatpush1.bf16.msra.mxu0 %v1692
  %2035 = vmatprep.subr.bf16.mxu0 0
  %2036 = vmatpush1.bf16.msra.mxu0 %v1691
  %2037 = vmatprep.subr.bf16.mxu0 0
  %2038 = vmatpush1.bf16.msra.mxu0 %v1690
  %2039 = vmatprep.subr.bf16.mxu0 0
  %2040 = vmatpush1.bf16.msra.mxu0 %v1689
  %2041 = vmatprep.subr.bf16.mxu0 0
  %2042 = vmatpush2.bf16.msra.mxu0 %v1704
  %2043 = vmatprep.subr.bf16.mxu0 0
  %2044 = vmatpush2.bf16.msra.mxu0 %v1703
  %2045 = vmatprep.subr.bf16.mxu0 0
  %2046 = vmatpush2.bf16.msra.mxu0 %v1702
  %2047 = vmatprep.subr.bf16.mxu0 0
  %2048 = vmatpush2.bf16.msra.mxu0 %v1701
  %2049 = vmatprep.subr.bf16.mxu0 0
  %2050 = vmatpush2.bf16.msra.mxu0 %v1700
  %2051 = vmatprep.subr.bf16.mxu0 0
  %2052 = vmatpush2.bf16.msra.mxu0 %v1699
  %2053 = vmatprep.subr.bf16.mxu0 0
  %2054 = vmatpush2.bf16.msra.mxu0 %v1698
  %2055 = vmatprep.subr.bf16.mxu0 0
  %2056 = vmatpush2.bf16.msra.mxu0 %v1697
  %2057 = vmatprep.mubr.bf16.mxu0 %v992
  %2058 = vmatmul.mubr.bf16.gmra.mxu0 %v991
  %v2059 = vpop.f32.mrf.mxu0
  %v2060 = vadd.f32 %v1852, %v2059
  %v2061 = vpop.f32.mrf.mxu0
  %v2062 = vpop.f32.mrf.mxu0
  %v2063 = vadd.f32 %v1855, %v2062
  %v2064 = vpop.f32.mrf.mxu0
  %2065 = vmatprep.mubr.bf16.mxu0 %v1001
  %2066 = vmatmul.mubr.bf16.gmra.mxu0 %v1000
  %v2067 = vpop.f32.mrf.mxu0
  %v2068 = vadd.f32 %v1860, %v2067
  %v2069 = vpop.f32.mrf.mxu0
  %v2070 = vpop.f32.mrf.mxu0
  %v2071 = vadd.f32 %v1863, %v2070
  %v2072 = vpop.f32.mrf.mxu0
  %2073 = vmatprep.mubr.bf16.mxu0 %v1010
  %2074 = vmatmul.mubr.bf16.gmra.mxu0 %v1009
  %v2075 = vpop.f32.mrf.mxu0
  %v2076 = vadd.f32 %v1868, %v2075
  %v2077 = vpop.f32.mrf.mxu0
  %v2078 = vpop.f32.mrf.mxu0
  %v2079 = vadd.f32 %v1871, %v2078
  %v2080 = vpop.f32.mrf.mxu0
  %2081 = vmatprep.mubr.bf16.mxu0 %v1019
  %2082 = vmatmul.mubr.bf16.gmra.mxu0 %v1018
  %v2083 = vpop.f32.mrf.mxu0
  %v2084 = vadd.f32 %v1876, %v2083
  %v2085 = vpop.f32.mrf.mxu0
  %v2086 = vpop.f32.mrf.mxu0
  %v2087 = vadd.f32 %v1879, %v2086
  %v2088 = vpop.f32.mrf.mxu0
  %2089 = vmatprep.mubr.bf16.mxu0 %v1028
  %2090 = vmatmul.mubr.bf16.gmra.mxu0 %v1027
  %v2091 = vpop.f32.mrf.mxu0
  %v2092 = vadd.f32 %v1884, %v2091
  %v2093 = vpop.f32.mrf.mxu0
  %v2094 = vpop.f32.mrf.mxu0
  %v2095 = vadd.f32 %v1887, %v2094
  %v2096 = vpop.f32.mrf.mxu0
  %2097 = vmatprep.mubr.bf16.mxu0 %v1037
  %2098 = vmatmul.mubr.bf16.gmra.mxu0 %v1036
  %v2099 = vpop.f32.mrf.mxu0
  %v2100 = vadd.f32 %v1892, %v2099
  %v2101 = vpop.f32.mrf.mxu0
  %v2102 = vpop.f32.mrf.mxu0
  %v2103 = vadd.f32 %v1895, %v2102
  %v2104 = vpop.f32.mrf.mxu0
  %2105 = vmatprep.mubr.bf16.mxu0 %v1046
  %2106 = vmatmul.mubr.bf16.gmra.mxu0 %v1045
  %v2107 = vpop.f32.mrf.mxu0
  %v2108 = vadd.f32 %v1900, %v2107
  %v2109 = vpop.f32.mrf.mxu0
  %v2110 = vpop.f32.mrf.mxu0
  %v2111 = vadd.f32 %v1903, %v2110
  %v2112 = vpop.f32.mrf.mxu0
  %2113 = vmatprep.mubr.bf16.mxu0 %v1055
  %2114 = vmatmul.mubr.bf16.gmra.mxu0 %v1054
  %v2115 = vpop.f32.mrf.mxu0
  %v2116 = vadd.f32 %v1908, %v2115
  %v2117 = vpop.f32.mrf.mxu0
  %v2118 = vpop.f32.mrf.mxu0
  %v2119 = vadd.f32 %v1911, %v2118
  %v2120 = vpop.f32.mrf.mxu0
  %2121 = vmatprep.mubr.bf16.mxu0 %v1064
  %2122 = vmatmul.mubr.bf16.gmra.mxu0 %v1063
  %v2123 = vpop.f32.mrf.mxu0
  %v2124 = vadd.f32 %v1916, %v2123
  %v2125 = vpop.f32.mrf.mxu0
  %v2126 = vpop.f32.mrf.mxu0
  %v2127 = vadd.f32 %v1919, %v2126
  %v2128 = vpop.f32.mrf.mxu0
  %2129 = vmatprep.mubr.bf16.mxu0 %v1073
  %2130 = vmatmul.mubr.bf16.gmra.mxu0 %v1072
  %v2131 = vpop.f32.mrf.mxu0
  %v2132 = vadd.f32 %v1924, %v2131
  %v2133 = vpop.f32.mrf.mxu0
  %v2134 = vpop.f32.mrf.mxu0
  %v2135 = vadd.f32 %v1927, %v2134
  %v2136 = vpop.f32.mrf.mxu0
  %2137 = vmatprep.mubr.bf16.mxu0 %v1082
  %2138 = vmatmul.mubr.bf16.gmra.mxu0 %v1081
  %v2139 = vpop.f32.mrf.mxu0
  %v2140 = vadd.f32 %v1932, %v2139
  %v2141 = vpop.f32.mrf.mxu0
  %v2142 = vpop.f32.mrf.mxu0
  %v2143 = vadd.f32 %v1935, %v2142
  %v2144 = vpop.f32.mrf.mxu0
  %2145 = vmatprep.mubr.bf16.mxu0 %v1091
  %2146 = vmatmul.mubr.bf16.gmra.mxu0 %v1090
  %v2147 = vpop.f32.mrf.mxu0
  %v2148 = vadd.f32 %v1940, %v2147
  %v2149 = vpop.f32.mrf.mxu0
  %v2150 = vpop.f32.mrf.mxu0
  %v2151 = vadd.f32 %v1943, %v2150
  %v2152 = vpop.f32.mrf.mxu0
  %2153 = vmatprep.mubr.bf16.mxu0 %v1100
  %2154 = vmatmul.mubr.bf16.gmra.mxu0 %v1099
  %v2155 = vpop.f32.mrf.mxu0
  %v2156 = vadd.f32 %v1948, %v2155
  %v2157 = vpop.f32.mrf.mxu0
  %v2158 = vpop.f32.mrf.mxu0
  %v2159 = vadd.f32 %v1951, %v2158
  %v2160 = vpop.f32.mrf.mxu0
  %2161 = vmatprep.mubr.bf16.mxu0 %v1109
  %2162 = vmatmul.mubr.bf16.gmra.mxu0 %v1108
  %v2163 = vpop.f32.mrf.mxu0
  %v2164 = vadd.f32 %v1956, %v2163
  %v2165 = vpop.f32.mrf.mxu0
  %v2166 = vpop.f32.mrf.mxu0
  %v2167 = vadd.f32 %v1959, %v2166
  %v2168 = vpop.f32.mrf.mxu0
  %2169 = vmatprep.mubr.bf16.mxu0 %v1118
  %2170 = vmatmul.mubr.bf16.gmra.mxu0 %v1117
  %v2171 = vpop.f32.mrf.mxu0
  %v2172 = vadd.f32 %v1964, %v2171
  %v2173 = vpop.f32.mrf.mxu0
  %v2174 = vpop.f32.mrf.mxu0
  %v2175 = vadd.f32 %v1967, %v2174
  %v2176 = vpop.f32.mrf.mxu0
  %2177 = vmatprep.mubr.bf16.mxu0 %v1127
  %2178 = vmatmul.mubr.bf16.gmra.mxu0 %v1126
  %v2179 = vpop.f32.mrf.mxu0
  %v2180 = vadd.f32 %v1972, %v2179
  %v2181 = vpop.f32.mrf.mxu0
  %v2182 = vpop.f32.mrf.mxu0
  %v2183 = vadd.f32 %v1975, %v2182
  %v2184 = vpop.f32.mrf.mxu0
  %2185 = vmatprep.mubr.bf16.mxu0 %v1136
  %2186 = vmatmul.mubr.bf16.gmra.mxu0 %v1135
  %v2187 = vpop.f32.mrf.mxu0
  %v2188 = vadd.f32 %v1980, %v2187
  %v2189 = vpop.f32.mrf.mxu0
  %v2190 = vpop.f32.mrf.mxu0
  %v2191 = vadd.f32 %v1983, %v2190
  %v2192 = vpop.f32.mrf.mxu0
  %2193 = vmatprep.mubr.bf16.mxu0 %v1145
  %2194 = vmatmul.mubr.bf16.gmra.mxu0 %v1144
  %v2195 = vpop.f32.mrf.mxu0
  %v2196 = vadd.f32 %v1988, %v2195
  %v2197 = vpop.f32.mrf.mxu0
  %v2198 = vpop.f32.mrf.mxu0
  %v2199 = vadd.f32 %v1991, %v2198
  %v2200 = vpop.f32.mrf.mxu0
  %2201 = vmatprep.mubr.bf16.mxu0 %v1154
  %2202 = vmatmul.mubr.bf16.gmra.mxu0 %v1153
  %v2203 = vpop.f32.mrf.mxu0
  %v2204 = vadd.f32 %v1996, %v2203
  %v2205 = vpop.f32.mrf.mxu0
  %v2206 = vpop.f32.mrf.mxu0
  %v2207 = vadd.f32 %v1999, %v2206
  %v2208 = vpop.f32.mrf.mxu0
  %2209 = vmatprep.mubr.bf16.mxu0 %v1163
  %2210 = vmatmul.mubr.bf16.gmra.mxu0 %v1162
  %v2211 = vpop.f32.mrf.mxu0
  %v2212 = vadd.f32 %v2004, %v2211
  %v2213 = vpop.f32.mrf.mxu0
  %v2214 = vpop.f32.mrf.mxu0
  %v2215 = vadd.f32 %v2007, %v2214
  %v2216 = vpop.f32.mrf.mxu0
  %2217 = vmatprep.mubr.bf16.mxu0 %v1172
  %2218 = vmatmul.mubr.bf16.gmra.mxu0 %v1171
  %v2219 = vpop.f32.mrf.mxu0
  %v2220 = vadd.f32 %v2012, %v2219
  %v2221 = vpop.f32.mrf.mxu0
  %v2222 = vpop.f32.mrf.mxu0
  %v2223 = vadd.f32 %v2015, %v2222
  %v2224 = vpop.f32.mrf.mxu0
  %2225 = vmatprep.mubr.bf16.mxu0 %v1181
  %2226 = vmatmul.mubr.bf16.gmra.mxu0 %v1180
  %v2227 = vpop.f32.mrf.mxu0
  %v2228 = vadd.f32 %v2020, %v2227
  %v2229 = vpop.f32.mrf.mxu0
  %v2230 = vpop.f32.mrf.mxu0
  %v2231 = vpop.f32.mrf.mxu0
  %2232 = vdwg.mxu0
  %2233 = vmatprep.subr.bf16.mxu0 0
  %2234 = vmatpush1.bf16.msra.mxu0 %v1712
  %2235 = vmatprep.subr.bf16.mxu0 0
  %2236 = vmatpush1.bf16.msra.mxu0 %v1711
  %2237 = vmatprep.subr.bf16.mxu0 0
  %2238 = vmatpush1.bf16.msra.mxu0 %v1710
  %2239 = vmatprep.subr.bf16.mxu0 0
  %2240 = vmatpush1.bf16.msra.mxu0 %v1709
  %2241 = vmatprep.subr.bf16.mxu0 0
  %2242 = vmatpush1.bf16.msra.mxu0 %v1708
  %2243 = vmatprep.subr.bf16.mxu0 0
  %2244 = vmatpush1.bf16.msra.mxu0 %v1707
  %2245 = vmatprep.subr.bf16.mxu0 0
  %2246 = vmatpush1.bf16.msra.mxu0 %v1706
  %2247 = vmatprep.subr.bf16.mxu0 0
  %2248 = vmatpush1.bf16.msra.mxu0 %v1705
  %2249 = vmatprep.subr.bf16.mxu0 0
  %2250 = vmatpush2.bf16.msra.mxu0 %v1720
  %2251 = vmatprep.subr.bf16.mxu0 0
  %2252 = vmatpush2.bf16.msra.mxu0 %v1719
  %2253 = vmatprep.subr.bf16.mxu0 0
  %2254 = vmatpush2.bf16.msra.mxu0 %v1718
  %2255 = vmatprep.subr.bf16.mxu0 0
  %2256 = vmatpush2.bf16.msra.mxu0 %v1717
  %2257 = vmatprep.subr.bf16.mxu0 0
  %2258 = vmatpush2.bf16.msra.mxu0 %v1716
  %2259 = vmatprep.subr.bf16.mxu0 0
  %2260 = vmatpush2.bf16.msra.mxu0 %v1715
  %2261 = vmatprep.subr.bf16.mxu0 0
  %2262 = vmatpush2.bf16.msra.mxu0 %v1714
  %2263 = vmatprep.subr.bf16.mxu0 0
  %2264 = vmatpush2.bf16.msra.mxu0 %v1713
  %2265 = vmatprep.mubr.bf16.mxu0 %v994
  %2266 = vmatmul.mubr.bf16.gmra.mxu0 %v993
  %v2267 = vpop.f32.mrf.mxu0
  %v2268 = vadd.f32 %v2060, %v2267
  %v2269 = vpop.f32.mrf.mxu0
  %v2270 = vpop.f32.mrf.mxu0
  %v2271 = vadd.f32 %v2063, %v2270
  %v2272 = vpop.f32.mrf.mxu0
  %2273 = vmatprep.mubr.bf16.mxu0 %v1003
  %2274 = vmatmul.mubr.bf16.gmra.mxu0 %v1002
  %v2275 = vpop.f32.mrf.mxu0
  %v2276 = vadd.f32 %v2068, %v2275
  %v2277 = vpop.f32.mrf.mxu0
  %v2278 = vpop.f32.mrf.mxu0
  %v2279 = vadd.f32 %v2071, %v2278
  %v2280 = vpop.f32.mrf.mxu0
  %2281 = vmatprep.mubr.bf16.mxu0 %v1012
  %2282 = vmatmul.mubr.bf16.gmra.mxu0 %v1011
  %v2283 = vpop.f32.mrf.mxu0
  %v2284 = vadd.f32 %v2076, %v2283
  %v2285 = vpop.f32.mrf.mxu0
  %v2286 = vpop.f32.mrf.mxu0
  %v2287 = vadd.f32 %v2079, %v2286
  %v2288 = vpop.f32.mrf.mxu0
  %2289 = vmatprep.mubr.bf16.mxu0 %v1021
  %2290 = vmatmul.mubr.bf16.gmra.mxu0 %v1020
  %v2291 = vpop.f32.mrf.mxu0
  %v2292 = vadd.f32 %v2084, %v2291
  %v2293 = vpop.f32.mrf.mxu0
  %v2294 = vpop.f32.mrf.mxu0
  %v2295 = vadd.f32 %v2087, %v2294
  %v2296 = vpop.f32.mrf.mxu0
  %2297 = vmatprep.mubr.bf16.mxu0 %v1030
  %2298 = vmatmul.mubr.bf16.gmra.mxu0 %v1029
  %v2299 = vpop.f32.mrf.mxu0
  %v2300 = vadd.f32 %v2092, %v2299
  %v2301 = vpop.f32.mrf.mxu0
  %v2302 = vpop.f32.mrf.mxu0
  %v2303 = vadd.f32 %v2095, %v2302
  %v2304 = vpop.f32.mrf.mxu0
  %2305 = vmatprep.mubr.bf16.mxu0 %v1039
  %2306 = vmatmul.mubr.bf16.gmra.mxu0 %v1038
  %v2307 = vpop.f32.mrf.mxu0
  %v2308 = vadd.f32 %v2100, %v2307
  %v2309 = vpop.f32.mrf.mxu0
  %v2310 = vpop.f32.mrf.mxu0
  %v2311 = vadd.f32 %v2103, %v2310
  %v2312 = vpop.f32.mrf.mxu0
  %2313 = vmatprep.mubr.bf16.mxu0 %v1048
  %2314 = vmatmul.mubr.bf16.gmra.mxu0 %v1047
  %v2315 = vpop.f32.mrf.mxu0
  %v2316 = vadd.f32 %v2108, %v2315
  %v2317 = vpop.f32.mrf.mxu0
  %v2318 = vpop.f32.mrf.mxu0
  %v2319 = vadd.f32 %v2111, %v2318
  %v2320 = vpop.f32.mrf.mxu0
  %2321 = vmatprep.mubr.bf16.mxu0 %v1057
  %2322 = vmatmul.mubr.bf16.gmra.mxu0 %v1056
  %v2323 = vpop.f32.mrf.mxu0
  %v2324 = vadd.f32 %v2116, %v2323
  %v2325 = vpop.f32.mrf.mxu0
  %v2326 = vpop.f32.mrf.mxu0
  %v2327 = vadd.f32 %v2119, %v2326
  %v2328 = vpop.f32.mrf.mxu0
  %2329 = vmatprep.mubr.bf16.mxu0 %v1066
  %2330 = vmatmul.mubr.bf16.gmra.mxu0 %v1065
  %v2331 = vpop.f32.mrf.mxu0
  %v2332 = vadd.f32 %v2124, %v2331
  %v2333 = vpop.f32.mrf.mxu0
  %v2334 = vpop.f32.mrf.mxu0
  %v2335 = vadd.f32 %v2127, %v2334
  %v2336 = vpop.f32.mrf.mxu0
  %2337 = vmatprep.mubr.bf16.mxu0 %v1075
  %2338 = vmatmul.mubr.bf16.gmra.mxu0 %v1074
  %v2339 = vpop.f32.mrf.mxu0
  %v2340 = vadd.f32 %v2132, %v2339
  %v2341 = vpop.f32.mrf.mxu0
  %v2342 = vpop.f32.mrf.mxu0
  %v2343 = vadd.f32 %v2135, %v2342
  %v2344 = vpop.f32.mrf.mxu0
  %2345 = vmatprep.mubr.bf16.mxu0 %v1084
  %2346 = vmatmul.mubr.bf16.gmra.mxu0 %v1083
  %v2347 = vpop.f32.mrf.mxu0
  %v2348 = vadd.f32 %v2140, %v2347
  %v2349 = vpop.f32.mrf.mxu0
  %v2350 = vpop.f32.mrf.mxu0
  %v2351 = vadd.f32 %v2143, %v2350
  %v2352 = vpop.f32.mrf.mxu0
  %2353 = vmatprep.mubr.bf16.mxu0 %v1093
  %2354 = vmatmul.mubr.bf16.gmra.mxu0 %v1092
  %v2355 = vpop.f32.mrf.mxu0
  %v2356 = vadd.f32 %v2148, %v2355
  %v2357 = vpop.f32.mrf.mxu0
  %v2358 = vpop.f32.mrf.mxu0
  %v2359 = vadd.f32 %v2151, %v2358
  %v2360 = vpop.f32.mrf.mxu0
  %2361 = vmatprep.mubr.bf16.mxu0 %v1102
  %2362 = vmatmul.mubr.bf16.gmra.mxu0 %v1101
  %v2363 = vpop.f32.mrf.mxu0
  %v2364 = vadd.f32 %v2156, %v2363
  %v2365 = vpop.f32.mrf.mxu0
  %v2366 = vpop.f32.mrf.mxu0
  %v2367 = vadd.f32 %v2159, %v2366
  %v2368 = vpop.f32.mrf.mxu0
  %2369 = vmatprep.mubr.bf16.mxu0 %v1111
  %2370 = vmatmul.mubr.bf16.gmra.mxu0 %v1110
  %v2371 = vpop.f32.mrf.mxu0
  %v2372 = vadd.f32 %v2164, %v2371
  %v2373 = vpop.f32.mrf.mxu0
  %v2374 = vpop.f32.mrf.mxu0
  %v2375 = vadd.f32 %v2167, %v2374
  %v2376 = vpop.f32.mrf.mxu0
  %2377 = vmatprep.mubr.bf16.mxu0 %v1120
  %2378 = vmatmul.mubr.bf16.gmra.mxu0 %v1119
  %v2379 = vpop.f32.mrf.mxu0
  %v2380 = vadd.f32 %v2172, %v2379
  %v2381 = vpop.f32.mrf.mxu0
  %v2382 = vpop.f32.mrf.mxu0
  %v2383 = vadd.f32 %v2175, %v2382
  %v2384 = vpop.f32.mrf.mxu0
  %2385 = vmatprep.mubr.bf16.mxu0 %v1129
  %2386 = vmatmul.mubr.bf16.gmra.mxu0 %v1128
  %v2387 = vpop.f32.mrf.mxu0
  %v2388 = vadd.f32 %v2180, %v2387
  %v2389 = vpop.f32.mrf.mxu0
  %v2390 = vpop.f32.mrf.mxu0
  %v2391 = vadd.f32 %v2183, %v2390
  %v2392 = vpop.f32.mrf.mxu0
  %2393 = vmatprep.mubr.bf16.mxu0 %v1138
  %2394 = vmatmul.mubr.bf16.gmra.mxu0 %v1137
  %v2395 = vpop.f32.mrf.mxu0
  %v2396 = vadd.f32 %v2188, %v2395
  %v2397 = vpop.f32.mrf.mxu0
  %v2398 = vpop.f32.mrf.mxu0
  %v2399 = vadd.f32 %v2191, %v2398
  %v2400 = vpop.f32.mrf.mxu0
  %2401 = vmatprep.mubr.bf16.mxu0 %v1147
  %2402 = vmatmul.mubr.bf16.gmra.mxu0 %v1146
  %v2403 = vpop.f32.mrf.mxu0
  %v2404 = vadd.f32 %v2196, %v2403
  %v2405 = vpop.f32.mrf.mxu0
  %v2406 = vpop.f32.mrf.mxu0
  %v2407 = vadd.f32 %v2199, %v2406
  %v2408 = vpop.f32.mrf.mxu0
  %2409 = vmatprep.mubr.bf16.mxu0 %v1156
  %2410 = vmatmul.mubr.bf16.gmra.mxu0 %v1155
  %v2411 = vpop.f32.mrf.mxu0
  %v2412 = vadd.f32 %v2204, %v2411
  %v2413 = vpop.f32.mrf.mxu0
  %v2414 = vpop.f32.mrf.mxu0
  %v2415 = vadd.f32 %v2207, %v2414
  %v2416 = vpop.f32.mrf.mxu0
  %2417 = vmatprep.mubr.bf16.mxu0 %v1165
  %2418 = vmatmul.mubr.bf16.gmra.mxu0 %v1164
  %v2419 = vpop.f32.mrf.mxu0
  %v2420 = vadd.f32 %v2212, %v2419
  %v2421 = vpop.f32.mrf.mxu0
  %v2422 = vpop.f32.mrf.mxu0
  %v2423 = vadd.f32 %v2215, %v2422
  %v2424 = vpop.f32.mrf.mxu0
  %2425 = vmatprep.mubr.bf16.mxu0 %v1174
  %2426 = vmatmul.mubr.bf16.gmra.mxu0 %v1173
  %v2427 = vpop.f32.mrf.mxu0
  %v2428 = vadd.f32 %v2220, %v2427
  %v2429 = vpop.f32.mrf.mxu0
  %v2430 = vpop.f32.mrf.mxu0
  %v2431 = vadd.f32 %v2223, %v2430
  %v2432 = vpop.f32.mrf.mxu0
  %2433 = vmatprep.mubr.bf16.mxu0 %v1183
  %2434 = vmatmul.mubr.bf16.gmra.mxu0 %v1182
  %v2435 = vpop.f32.mrf.mxu0
  %v2436 = vadd.f32 %v2228, %v2435
  %v2437 = vpop.f32.mrf.mxu0
  %v2438 = vpop.f32.mrf.mxu0
  %v2439 = vpop.f32.mrf.mxu0
  %2440 = vdwg.mxu0
  %2441 = vmatprep.subr.bf16.mxu0 0
  %2442 = vmatpush1.bf16.msra.mxu0 %v1728
  %2443 = vmatprep.subr.bf16.mxu0 0
  %2444 = vmatpush1.bf16.msra.mxu0 %v1727
  %2445 = vmatprep.subr.bf16.mxu0 0
  %2446 = vmatpush1.bf16.msra.mxu0 %v1726
  %2447 = vmatprep.subr.bf16.mxu0 0
  %2448 = vmatpush1.bf16.msra.mxu0 %v1725
  %2449 = vmatprep.subr.bf16.mxu0 0
  %2450 = vmatpush1.bf16.msra.mxu0 %v1724
  %2451 = vmatprep.subr.bf16.mxu0 0
  %2452 = vmatpush1.bf16.msra.mxu0 %v1723
  %2453 = vmatprep.subr.bf16.mxu0 0
  %2454 = vmatpush1.bf16.msra.mxu0 %v1722
  %2455 = vmatprep.subr.bf16.mxu0 0
  %2456 = vmatpush1.bf16.msra.mxu0 %v1721
  %2457 = vmatprep.subr.bf16.mxu0 0
  %2458 = vmatpush2.bf16.msra.mxu0 %v1736
  %2459 = vmatprep.subr.bf16.mxu0 0
  %2460 = vmatpush2.bf16.msra.mxu0 %v1735
  %2461 = vmatprep.subr.bf16.mxu0 0
  %2462 = vmatpush2.bf16.msra.mxu0 %v1734
  %2463 = vmatprep.subr.bf16.mxu0 0
  %2464 = vmatpush2.bf16.msra.mxu0 %v1733
  %2465 = vmatprep.subr.bf16.mxu0 0
  %2466 = vmatpush2.bf16.msra.mxu0 %v1732
  %2467 = vmatprep.subr.bf16.mxu0 0
  %2468 = vmatpush2.bf16.msra.mxu0 %v1731
  %2469 = vmatprep.subr.bf16.mxu0 0
  %2470 = vmatpush2.bf16.msra.mxu0 %v1730
  %2471 = vmatprep.subr.bf16.mxu0 0
  %2472 = vmatpush2.bf16.msra.mxu0 %v1729
  %2473 = vmatprep.mubr.bf16.mxu0 %v996
  %2474 = vmatmul.mubr.bf16.gmra.mxu0 %v995
  %v2475 = vpop.f32.mrf.mxu0
  %v2476 = vadd.f32 %v2268, %v2475
  %v2477 = vpop.f32.mrf.mxu0
  %v2478 = vpop.f32.mrf.mxu0
  %v2479 = vadd.f32 %v2271, %v2478
  %v2480 = vpop.f32.mrf.mxu0
  %2481 = vmatprep.mubr.bf16.mxu0 %v1005
  %2482 = vmatmul.mubr.bf16.gmra.mxu0 %v1004
  %v2483 = vpop.f32.mrf.mxu0
  %v2484 = vadd.f32 %v2276, %v2483
  %v2485 = vpop.f32.mrf.mxu0
  %v2486 = vpop.f32.mrf.mxu0
  %v2487 = vadd.f32 %v2279, %v2486
  %v2488 = vpop.f32.mrf.mxu0
  %2489 = vmatprep.mubr.bf16.mxu0 %v1014
  %2490 = vmatmul.mubr.bf16.gmra.mxu0 %v1013
  %v2491 = vpop.f32.mrf.mxu0
  %v2492 = vadd.f32 %v2284, %v2491
  %v2493 = vpop.f32.mrf.mxu0
  %v2494 = vpop.f32.mrf.mxu0
  %v2495 = vadd.f32 %v2287, %v2494
  %v2496 = vpop.f32.mrf.mxu0
  %2497 = vmatprep.mubr.bf16.mxu0 %v1023
  %2498 = vmatmul.mubr.bf16.gmra.mxu0 %v1022
  %v2499 = vpop.f32.mrf.mxu0
  %v2500 = vadd.f32 %v2292, %v2499
  %v2501 = vpop.f32.mrf.mxu0
  %v2502 = vpop.f32.mrf.mxu0
  %v2503 = vadd.f32 %v2295, %v2502
  %v2504 = vpop.f32.mrf.mxu0
  %2505 = vmatprep.mubr.bf16.mxu0 %v1032
  %2506 = vmatmul.mubr.bf16.gmra.mxu0 %v1031
  %v2507 = vpop.f32.mrf.mxu0
  %v2508 = vadd.f32 %v2300, %v2507
  %v2509 = vpop.f32.mrf.mxu0
  %v2510 = vpop.f32.mrf.mxu0
  %v2511 = vadd.f32 %v2303, %v2510
  %v2512 = vpop.f32.mrf.mxu0
  %2513 = vmatprep.mubr.bf16.mxu0 %v1041
  %2514 = vmatmul.mubr.bf16.gmra.mxu0 %v1040
  %v2515 = vpop.f32.mrf.mxu0
  %v2516 = vadd.f32 %v2308, %v2515
  %v2517 = vpop.f32.mrf.mxu0
  %v2518 = vpop.f32.mrf.mxu0
  %v2519 = vadd.f32 %v2311, %v2518
  %v2520 = vpop.f32.mrf.mxu0
  %2521 = vmatprep.mubr.bf16.mxu0 %v1050
  %2522 = vmatmul.mubr.bf16.gmra.mxu0 %v1049
  %v2523 = vpop.f32.mrf.mxu0
  %v2524 = vadd.f32 %v2316, %v2523
  %v2525 = vpop.f32.mrf.mxu0
  %v2526 = vpop.f32.mrf.mxu0
  %v2527 = vadd.f32 %v2319, %v2526
  %v2528 = vpop.f32.mrf.mxu0
  %2529 = vmatprep.mubr.bf16.mxu0 %v1059
  %2530 = vmatmul.mubr.bf16.gmra.mxu0 %v1058
  %v2531 = vpop.f32.mrf.mxu0
  %v2532 = vadd.f32 %v2324, %v2531
  %v2533 = vpop.f32.mrf.mxu0
  %v2534 = vpop.f32.mrf.mxu0
  %v2535 = vadd.f32 %v2327, %v2534
  %v2536 = vpop.f32.mrf.mxu0
  %2537 = vmatprep.mubr.bf16.mxu0 %v1068
  %2538 = vmatmul.mubr.bf16.gmra.mxu0 %v1067
  %v2539 = vpop.f32.mrf.mxu0
  %v2540 = vadd.f32 %v2332, %v2539
  %v2541 = vpop.f32.mrf.mxu0
  %v2542 = vpop.f32.mrf.mxu0
  %v2543 = vadd.f32 %v2335, %v2542
  %v2544 = vpop.f32.mrf.mxu0
  %2545 = vmatprep.mubr.bf16.mxu0 %v1077
  %2546 = vmatmul.mubr.bf16.gmra.mxu0 %v1076
  %v2547 = vpop.f32.mrf.mxu0
  %v2548 = vadd.f32 %v2340, %v2547
  %v2549 = vpop.f32.mrf.mxu0
  %v2550 = vpop.f32.mrf.mxu0
  %v2551 = vadd.f32 %v2343, %v2550
  %v2552 = vpop.f32.mrf.mxu0
  %2553 = vmatprep.mubr.bf16.mxu0 %v1086
  %2554 = vmatmul.mubr.bf16.gmra.mxu0 %v1085
  %v2555 = vpop.f32.mrf.mxu0
  %v2556 = vadd.f32 %v2348, %v2555
  %v2557 = vpop.f32.mrf.mxu0
  %v2558 = vpop.f32.mrf.mxu0
  %v2559 = vadd.f32 %v2351, %v2558
  %v2560 = vpop.f32.mrf.mxu0
  %2561 = vmatprep.mubr.bf16.mxu0 %v1095
  %2562 = vmatmul.mubr.bf16.gmra.mxu0 %v1094
  %v2563 = vpop.f32.mrf.mxu0
  %v2564 = vadd.f32 %v2356, %v2563
  %v2565 = vpop.f32.mrf.mxu0
  %v2566 = vpop.f32.mrf.mxu0
  %v2567 = vadd.f32 %v2359, %v2566
  %v2568 = vpop.f32.mrf.mxu0
  %2569 = vmatprep.mubr.bf16.mxu0 %v1104
  %2570 = vmatmul.mubr.bf16.gmra.mxu0 %v1103
  %v2571 = vpop.f32.mrf.mxu0
  %v2572 = vadd.f32 %v2364, %v2571
  %v2573 = vpop.f32.mrf.mxu0
  %v2574 = vpop.f32.mrf.mxu0
  %v2575 = vadd.f32 %v2367, %v2574
  %v2576 = vpop.f32.mrf.mxu0
  %2577 = vmatprep.mubr.bf16.mxu0 %v1113
  %2578 = vmatmul.mubr.bf16.gmra.mxu0 %v1112
  %v2579 = vpop.f32.mrf.mxu0
  %v2580 = vadd.f32 %v2372, %v2579
  %v2581 = vpop.f32.mrf.mxu0
  %v2582 = vpop.f32.mrf.mxu0
  %v2583 = vadd.f32 %v2375, %v2582
  %v2584 = vpop.f32.mrf.mxu0
  %2585 = vmatprep.mubr.bf16.mxu0 %v1122
  %2586 = vmatmul.mubr.bf16.gmra.mxu0 %v1121
  %v2587 = vpop.f32.mrf.mxu0
  %v2588 = vadd.f32 %v2380, %v2587
  %v2589 = vpop.f32.mrf.mxu0
  %v2590 = vpop.f32.mrf.mxu0
  %v2591 = vadd.f32 %v2383, %v2590
  %v2592 = vpop.f32.mrf.mxu0
  %2593 = vmatprep.mubr.bf16.mxu0 %v1131
  %2594 = vmatmul.mubr.bf16.gmra.mxu0 %v1130
  %v2595 = vpop.f32.mrf.mxu0
  %v2596 = vadd.f32 %v2388, %v2595
  %v2597 = vpop.f32.mrf.mxu0
  %v2598 = vpop.f32.mrf.mxu0
  %v2599 = vadd.f32 %v2391, %v2598
  %v2600 = vpop.f32.mrf.mxu0
  %2601 = vmatprep.mubr.bf16.mxu0 %v1140
  %2602 = vmatmul.mubr.bf16.gmra.mxu0 %v1139
  %v2603 = vpop.f32.mrf.mxu0
  %v2604 = vadd.f32 %v2396, %v2603
  %v2605 = vpop.f32.mrf.mxu0
  %v2606 = vpop.f32.mrf.mxu0
  %v2607 = vadd.f32 %v2399, %v2606
  %v2608 = vpop.f32.mrf.mxu0
  %2609 = vmatprep.mubr.bf16.mxu0 %v1149
  %2610 = vmatmul.mubr.bf16.gmra.mxu0 %v1148
  %v2611 = vpop.f32.mrf.mxu0
  %v2612 = vadd.f32 %v2404, %v2611
  %v2613 = vpop.f32.mrf.mxu0
  %v2614 = vpop.f32.mrf.mxu0
  %v2615 = vadd.f32 %v2407, %v2614
  %v2616 = vpop.f32.mrf.mxu0
  %2617 = vmatprep.mubr.bf16.mxu0 %v1158
  %2618 = vmatmul.mubr.bf16.gmra.mxu0 %v1157
  %v2619 = vpop.f32.mrf.mxu0
  %v2620 = vadd.f32 %v2412, %v2619
  %v2621 = vpop.f32.mrf.mxu0
  %v2622 = vpop.f32.mrf.mxu0
  %v2623 = vadd.f32 %v2415, %v2622
  %v2624 = vpop.f32.mrf.mxu0
  %2625 = vmatprep.mubr.bf16.mxu0 %v1167
  %2626 = vmatmul.mubr.bf16.gmra.mxu0 %v1166
  %v2627 = vpop.f32.mrf.mxu0
  %v2628 = vadd.f32 %v2420, %v2627
  %v2629 = vpop.f32.mrf.mxu0
  %v2630 = vpop.f32.mrf.mxu0
  %v2631 = vadd.f32 %v2423, %v2630
  %v2632 = vpop.f32.mrf.mxu0
  %2633 = vmatprep.mubr.bf16.mxu0 %v1176
  %2634 = vmatmul.mubr.bf16.gmra.mxu0 %v1175
  %v2635 = vpop.f32.mrf.mxu0
  %v2636 = vadd.f32 %v2428, %v2635
  %v2637 = vpop.f32.mrf.mxu0
  %v2638 = vpop.f32.mrf.mxu0
  %v2639 = vadd.f32 %v2431, %v2638
  %v2640 = vpop.f32.mrf.mxu0
  %2641 = vmatprep.mubr.bf16.mxu0 %v1185
  %2642 = vmatmul.mubr.bf16.gmra.mxu0 %v1184
  %v2643 = vpop.f32.mrf.mxu0
  %v2644 = vadd.f32 %v2436, %v2643
  %v2645 = vpop.f32.mrf.mxu0
  %v2646 = vpop.f32.mrf.mxu0
  %v2647 = vpop.f32.mrf.mxu0
  %2648 = vdwg.mxu0
  %2649 = vmatprep.subr.bf16.mxu0 0
  %2650 = vmatpush1.bf16.msra.mxu0 %v1744
  %2651 = vmatprep.subr.bf16.mxu0 0
  %2652 = vmatpush1.bf16.msra.mxu0 %v1743
  %2653 = vmatprep.subr.bf16.mxu0 0
  %2654 = vmatpush1.bf16.msra.mxu0 %v1742
  %2655 = vmatprep.subr.bf16.mxu0 0
  %2656 = vmatpush1.bf16.msra.mxu0 %v1741
  %2657 = vmatprep.subr.bf16.mxu0 0
  %2658 = vmatpush1.bf16.msra.mxu0 %v1740
  %2659 = vmatprep.subr.bf16.mxu0 0
  %2660 = vmatpush1.bf16.msra.mxu0 %v1739
  %2661 = vmatprep.subr.bf16.mxu0 0
  %2662 = vmatpush1.bf16.msra.mxu0 %v1738
  %2663 = vmatprep.subr.bf16.mxu0 0
  %2664 = vmatpush1.bf16.msra.mxu0 %v1737
  %2665 = vmatprep.subr.bf16.mxu0 0
  %2666 = vmatpush2.bf16.msra.mxu0 0
  %2667 = vmatprep.subr.bf16.mxu0 0
  %2668 = vmatpush2.bf16.msra.mxu0 0
  %2669 = vmatprep.subr.bf16.mxu0 0
  %2670 = vmatpush2.bf16.msra.mxu0 0
  %2671 = vmatprep.subr.bf16.mxu0 0
  %2672 = vmatpush2.bf16.msra.mxu0 0
  %2673 = vmatprep.subr.bf16.mxu0 0
  %2674 = vmatpush2.bf16.msra.mxu0 0
  %2675 = vmatprep.subr.bf16.mxu0 0
  %2676 = vmatpush2.bf16.msra.mxu0 0
  %2677 = vmatprep.subr.bf16.mxu0 0
  %2678 = vmatpush2.bf16.msra.mxu0 0
  %2679 = vmatprep.subr.bf16.mxu0 0
  %2680 = vmatpush2.bf16.msra.mxu0 0
  %2681 = vmatprep.mubr.bf16.mxu0 0
  %2682 = vmatmul.mubr.bf16.gmra.mxu0 %v997
  %v2683 = vpop.f32.mrf.mxu0
  %v2684 = vadd.f32 %v2476, %v2683
  %v2685 = vpop.f32.mrf.mxu0
  %v2686 = vpop.f32.mrf.mxu0
  %v2687 = vadd.f32 %v2479, %v2686
  %v2688 = vpop.f32.mrf.mxu0
  %2689 = vmatprep.mubr.bf16.mxu0 0
  %2690 = vmatmul.mubr.bf16.gmra.mxu0 %v1006
  %v2691 = vpop.f32.mrf.mxu0
  %v2692 = vadd.f32 %v2484, %v2691
  %v2693 = vpop.f32.mrf.mxu0
  %v2694 = vpop.f32.mrf.mxu0
  %v2695 = vadd.f32 %v2487, %v2694
  %v2696 = vpop.f32.mrf.mxu0
  %2697 = vmatprep.mubr.bf16.mxu0 0
  %2698 = vmatmul.mubr.bf16.gmra.mxu0 %v1015
  %v2699 = vpop.f32.mrf.mxu0
  %v2700 = vadd.f32 %v2492, %v2699
  %v2701 = vpop.f32.mrf.mxu0
  %v2702 = vpop.f32.mrf.mxu0
  %v2703 = vadd.f32 %v2495, %v2702
  %v2704 = vpop.f32.mrf.mxu0
  %2705 = vmatprep.mubr.bf16.mxu0 0
  %2706 = vmatmul.mubr.bf16.gmra.mxu0 %v1024
  %v2707 = vpop.f32.mrf.mxu0
  %v2708 = vadd.f32 %v2500, %v2707
  %v2709 = vpop.f32.mrf.mxu0
  %v2710 = vpop.f32.mrf.mxu0
  %v2711 = vadd.f32 %v2503, %v2710
  %v2712 = vpop.f32.mrf.mxu0
  %2713 = vmatprep.mubr.bf16.mxu0 0
  %2714 = vmatmul.mubr.bf16.gmra.mxu0 %v1033
  %v2715 = vpop.f32.mrf.mxu0
  %v2716 = vadd.f32 %v2508, %v2715
  %v2717 = vpop.f32.mrf.mxu0
  %v2718 = vpop.f32.mrf.mxu0
  %v2719 = vadd.f32 %v2511, %v2718
  %v2720 = vpop.f32.mrf.mxu0
  %2721 = vmatprep.mubr.bf16.mxu0 0
  %2722 = vmatmul.mubr.bf16.gmra.mxu0 %v1042
  %v2723 = vpop.f32.mrf.mxu0
  %v2724 = vadd.f32 %v2516, %v2723
  %v2725 = vpop.f32.mrf.mxu0
  %v2726 = vpop.f32.mrf.mxu0
  %v2727 = vadd.f32 %v2519, %v2726
  %v2728 = vpop.f32.mrf.mxu0
  %2729 = vmatprep.mubr.bf16.mxu0 0
  %2730 = vmatmul.mubr.bf16.gmra.mxu0 %v1051
  %v2731 = vpop.f32.mrf.mxu0
  %v2732 = vadd.f32 %v2524, %v2731
  %v2733 = vpop.f32.mrf.mxu0
  %v2734 = vpop.f32.mrf.mxu0
  %v2735 = vadd.f32 %v2527, %v2734
  %v2736 = vpop.f32.mrf.mxu0
  %2737 = vmatprep.mubr.bf16.mxu0 0
  %2738 = vmatmul.mubr.bf16.gmra.mxu0 %v1060
  %v2739 = vpop.f32.mrf.mxu0
  %v2740 = vadd.f32 %v2532, %v2739
  %v2741 = vpop.f32.mrf.mxu0
  %v2742 = vpop.f32.mrf.mxu0
  %v2743 = vadd.f32 %v2535, %v2742
  %v2744 = vpop.f32.mrf.mxu0
  %2745 = vmatprep.mubr.bf16.mxu0 0
  %2746 = vmatmul.mubr.bf16.gmra.mxu0 %v1069
  %v2747 = vpop.f32.mrf.mxu0
  %v2748 = vadd.f32 %v2540, %v2747
  %v2749 = vpop.f32.mrf.mxu0
  %v2750 = vpop.f32.mrf.mxu0
  %v2751 = vadd.f32 %v2543, %v2750
  %v2752 = vpop.f32.mrf.mxu0
  %2753 = vmatprep.mubr.bf16.mxu0 0
  %2754 = vmatmul.mubr.bf16.gmra.mxu0 %v1078
  %v2755 = vpop.f32.mrf.mxu0
  %v2756 = vadd.f32 %v2548, %v2755
  %v2757 = vpop.f32.mrf.mxu0
  %v2758 = vpop.f32.mrf.mxu0
  %v2759 = vadd.f32 %v2551, %v2758
  %v2760 = vpop.f32.mrf.mxu0
  %2761 = vmatprep.mubr.bf16.mxu0 0
  %2762 = vmatmul.mubr.bf16.gmra.mxu0 %v1087
  %v2763 = vpop.f32.mrf.mxu0
  %v2764 = vadd.f32 %v2556, %v2763
  %v2765 = vpop.f32.mrf.mxu0
  %v2766 = vpop.f32.mrf.mxu0
  %v2767 = vadd.f32 %v2559, %v2766
  %v2768 = vpop.f32.mrf.mxu0
  %2769 = vmatprep.mubr.bf16.mxu0 0
  %2770 = vmatmul.mubr.bf16.gmra.mxu0 %v1096
  %v2771 = vpop.f32.mrf.mxu0
  %v2772 = vadd.f32 %v2564, %v2771
  %v2773 = vpop.f32.mrf.mxu0
  %v2774 = vpop.f32.mrf.mxu0
  %v2775 = vadd.f32 %v2567, %v2774
  %v2776 = vpop.f32.mrf.mxu0
  %2777 = vmatprep.mubr.bf16.mxu0 0
  %2778 = vmatmul.mubr.bf16.gmra.mxu0 %v1105
  %v2779 = vpop.f32.mrf.mxu0
  %v2780 = vadd.f32 %v2572, %v2779
  %v2781 = vpop.f32.mrf.mxu0
  %v2782 = vpop.f32.mrf.mxu0
  %v2783 = vadd.f32 %v2575, %v2782
  %v2784 = vpop.f32.mrf.mxu0
  %2785 = vmatprep.mubr.bf16.mxu0 0
  %2786 = vmatmul.mubr.bf16.gmra.mxu0 %v1114
  %v2787 = vpop.f32.mrf.mxu0
  %v2788 = vadd.f32 %v2580, %v2787
  %v2789 = vpop.f32.mrf.mxu0
  %v2790 = vpop.f32.mrf.mxu0
  %v2791 = vadd.f32 %v2583, %v2790
  %v2792 = vpop.f32.mrf.mxu0
  %2793 = vmatprep.mubr.bf16.mxu0 0
  %2794 = vmatmul.mubr.bf16.gmra.mxu0 %v1123
  %v2795 = vpop.f32.mrf.mxu0
  %v2796 = vadd.f32 %v2588, %v2795
  %v2797 = vpop.f32.mrf.mxu0
  %v2798 = vpop.f32.mrf.mxu0
  %v2799 = vadd.f32 %v2591, %v2798
  %v2800 = vpop.f32.mrf.mxu0
  %2801 = vmatprep.mubr.bf16.mxu0 0
  %2802 = vmatmul.mubr.bf16.gmra.mxu0 %v1132
  %v2803 = vpop.f32.mrf.mxu0
  %v2804 = vadd.f32 %v2596, %v2803
  %v2805 = vpop.f32.mrf.mxu0
  %v2806 = vpop.f32.mrf.mxu0
  %v2807 = vadd.f32 %v2599, %v2806
  %v2808 = vpop.f32.mrf.mxu0
  %2809 = vmatprep.mubr.bf16.mxu0 0
  %2810 = vmatmul.mubr.bf16.gmra.mxu0 %v1141
  %v2811 = vpop.f32.mrf.mxu0
  %v2812 = vadd.f32 %v2604, %v2811
  %v2813 = vpop.f32.mrf.mxu0
  %v2814 = vpop.f32.mrf.mxu0
  %v2815 = vadd.f32 %v2607, %v2814
  %v2816 = vpop.f32.mrf.mxu0
  %2817 = vmatprep.mubr.bf16.mxu0 0
  %2818 = vmatmul.mubr.bf16.gmra.mxu0 %v1150
  %v2819 = vpop.f32.mrf.mxu0
  %v2820 = vadd.f32 %v2612, %v2819
  %v2821 = vpop.f32.mrf.mxu0
  %v2822 = vpop.f32.mrf.mxu0
  %v2823 = vadd.f32 %v2615, %v2822
  %v2824 = vpop.f32.mrf.mxu0
  %2825 = vmatprep.mubr.bf16.mxu0 0
  %2826 = vmatmul.mubr.bf16.gmra.mxu0 %v1159
  %v2827 = vpop.f32.mrf.mxu0
  %v2828 = vadd.f32 %v2620, %v2827
  %v2829 = vpop.f32.mrf.mxu0
  %v2830 = vpop.f32.mrf.mxu0
  %v2831 = vadd.f32 %v2623, %v2830
  %v2832 = vpop.f32.mrf.mxu0
  %2833 = vmatprep.mubr.bf16.mxu0 0
  %2834 = vmatmul.mubr.bf16.gmra.mxu0 %v1168
  %v2835 = vpop.f32.mrf.mxu0
  %v2836 = vadd.f32 %v2628, %v2835
  %v2837 = vpop.f32.mrf.mxu0
  %v2838 = vpop.f32.mrf.mxu0
  %v2839 = vadd.f32 %v2631, %v2838
  %v2840 = vpop.f32.mrf.mxu0
  %2841 = vmatprep.mubr.bf16.mxu0 0
  %2842 = vmatmul.mubr.bf16.gmra.mxu0 %v1177
  %v2843 = vpop.f32.mrf.mxu0
  %v2844 = vadd.f32 %v2636, %v2843
  %v2845 = vpop.f32.mrf.mxu0
  %v2846 = vpop.f32.mrf.mxu0
  %v2847 = vadd.f32 %v2639, %v2846
  %v2848 = vpop.f32.mrf.mxu0
  %2849 = vmatprep.mubr.bf16.mxu0 0
  %2850 = vmatmul.mubr.bf16.gmra.mxu0 %v1186
  %v2851 = vpop.f32.mrf.mxu0
  %v2852 = vadd.f32 %v2644, %v2851
  %v2853 = vpop.f32.mrf.mxu0
  %v2854 = vpop.f32.mrf.mxu0
  %v2855 = vpop.f32.mrf.mxu0
  %2856 = vdwg.mxu0
  %v2857 = vadd.f32 %v2684, %v2687
  %v2858 = vadd.f32 %v2857, %v2692
  %v2859 = vadd.f32 %v2858, %v2695
  %v2860 = vadd.f32 %v2859, %v2700
  %v2861 = vadd.f32 %v2860, %v2703
  %v2862 = vadd.f32 %v2861, %v2708
  %v2863 = vadd.f32 %v2862, %v2711
  %v2864 = vadd.f32 %v2863, %v2716
  %v2865 = vadd.f32 %v2864, %v2719
  %v2866 = vadd.f32 %v2865, %v2724
  %v2867 = vadd.f32 %v2866, %v2727
  %v2868 = vadd.f32 %v2867, %v2732
  %v2869 = vadd.f32 %v2868, %v2735
  %v2870 = vadd.f32 %v2869, %v2740
  %v2871 = vadd.f32 %v2870, %v2743
  %v2872 = vadd.f32 %v2871, %v2748
  %v2873 = vadd.f32 %v2872, %v2751
  %v2874 = vadd.f32 %v2873, %v2756
  %v2875 = vadd.f32 %v2874, %v2759
  %v2876 = vadd.f32 %v2875, %v2764
  %v2877 = vadd.f32 %v2876, %v2767
  %v2878 = vadd.f32 %v2877, %v2772
  %v2879 = vadd.f32 %v2878, %v2775
  %v2880 = vadd.f32 %v2879, %v2780
  %v2881 = vadd.f32 %v2880, %v2783
  %v2882 = vadd.f32 %v2881, %v2788
  %v2883 = vadd.f32 %v2882, %v2791
  %v2884 = vadd.f32 %v2883, %v2796
  %v2885 = vadd.f32 %v2884, %v2799
  %v2886 = vadd.f32 %v2885, %v2804
  %v2887 = vadd.f32 %v2886, %v2807
  %v2888 = vadd.f32 %v2887, %v2812
  %v2889 = vadd.f32 %v2888, %v2815
  %v2890 = vadd.f32 %v2889, %v2820
  %v2891 = vadd.f32 %v2890, %v2823
  %v2892 = vadd.f32 %v2891, %v2828
  %v2893 = vadd.f32 %v2892, %v2831
  %v2894 = vadd.f32 %v2893, %v2836
  %v2895 = vadd.f32 %v2894, %v2839
  %v2896 = vadd.f32 %v2895, %v2844
  %v2897 = vadd.f32 %v2896, %v2847
  %vm2898 = vcmask 1041408
  %v2899 = vsel %vm2898, %v2852, 0.0
  %v2900 = vadd.f32 %v2897, %v2899
  %v2901 = vrot.slane %v2900, 4
  %v2902 = vadd.f32 %v2900, %v2901
  %v2903 = vrot.slane %v2902, 2
  %v2904 = vadd.f32 %v2902, %v2903
  %v2905 = vrot.slane %v2904, 1
  %v2906 = vadd.f32 %v2904, %v2905
  %v2907 = vmul.f32 %v2684, %v2684
  %v2908 = vmul.f32 %v2687, %v2687
  %v2909 = vmul.f32 %v2692, %v2692
  %v2910 = vmul.f32 %v2695, %v2695
  %v2911 = vmul.f32 %v2700, %v2700
  %v2912 = vmul.f32 %v2703, %v2703
  %v2913 = vmul.f32 %v2708, %v2708
  %v2914 = vmul.f32 %v2711, %v2711
  %v2915 = vmul.f32 %v2716, %v2716
  %v2916 = vmul.f32 %v2719, %v2719
  %v2917 = vmul.f32 %v2724, %v2724
  %v2918 = vmul.f32 %v2727, %v2727
  %v2919 = vmul.f32 %v2732, %v2732
  %v2920 = vmul.f32 %v2735, %v2735
  %v2921 = vmul.f32 %v2740, %v2740
  %v2922 = vmul.f32 %v2743, %v2743
  %v2923 = vmul.f32 %v2748, %v2748
  %v2924 = vmul.f32 %v2751, %v2751
  %v2925 = vmul.f32 %v2756, %v2756
  %v2926 = vmul.f32 %v2759, %v2759
  %v2927 = vmul.f32 %v2764, %v2764
  %v2928 = vmul.f32 %v2767, %v2767
  %v2929 = vmul.f32 %v2772, %v2772
  %v2930 = vmul.f32 %v2775, %v2775
  %v2931 = vmul.f32 %v2780, %v2780
  %v2932 = vmul.f32 %v2783, %v2783
  %v2933 = vmul.f32 %v2788, %v2788
  %v2934 = vmul.f32 %v2791, %v2791
  %v2935 = vmul.f32 %v2796, %v2796
  %v2936 = vmul.f32 %v2799, %v2799
  %v2937 = vmul.f32 %v2804, %v2804
  %v2938 = vmul.f32 %v2807, %v2807
  %v2939 = vmul.f32 %v2812, %v2812
  %v2940 = vmul.f32 %v2815, %v2815
  %v2941 = vmul.f32 %v2820, %v2820
  %v2942 = vmul.f32 %v2823, %v2823
  %v2943 = vmul.f32 %v2828, %v2828
  %v2944 = vmul.f32 %v2831, %v2831
  %v2945 = vmul.f32 %v2836, %v2836
  %v2946 = vmul.f32 %v2839, %v2839
  %v2947 = vmul.f32 %v2844, %v2844
  %v2948 = vmul.f32 %v2847, %v2847
  %v2949 = vmul.f32 %v2852, %v2852
  %v2950 = vadd.f32 %v2907, %v2908
  %v2951 = vadd.f32 %v2950, %v2909
  %v2952 = vadd.f32 %v2951, %v2910
  %v2953 = vadd.f32 %v2952, %v2911
  %v2954 = vadd.f32 %v2953, %v2912
  %v2955 = vadd.f32 %v2954, %v2913
  %v2956 = vadd.f32 %v2955, %v2914
  %v2957 = vadd.f32 %v2956, %v2915
  %v2958 = vadd.f32 %v2957, %v2916
  %v2959 = vadd.f32 %v2958, %v2917
  %v2960 = vadd.f32 %v2959, %v2918
  %v2961 = vadd.f32 %v2960, %v2919
  %v2962 = vadd.f32 %v2961, %v2920
  %v2963 = vadd.f32 %v2962, %v2921
  %v2964 = vadd.f32 %v2963, %v2922
  %v2965 = vadd.f32 %v2964, %v2923
  %v2966 = vadd.f32 %v2965, %v2924
  %v2967 = vadd.f32 %v2966, %v2925
  %v2968 = vadd.f32 %v2967, %v2926
  %v2969 = vadd.f32 %v2968, %v2927
  %v2970 = vadd.f32 %v2969, %v2928
  %v2971 = vadd.f32 %v2970, %v2929
  %v2972 = vadd.f32 %v2971, %v2930
  %v2973 = vadd.f32 %v2972, %v2931
  %v2974 = vadd.f32 %v2973, %v2932
  %v2975 = vadd.f32 %v2974, %v2933
  %v2976 = vadd.f32 %v2975, %v2934
  %v2977 = vadd.f32 %v2976, %v2935
  %v2978 = vadd.f32 %v2977, %v2936
  %v2979 = vadd.f32 %v2978, %v2937
  %v2980 = vadd.f32 %v2979, %v2938
  %v2981 = vadd.f32 %v2980, %v2939
  %v2982 = vadd.f32 %v2981, %v2940
  %v2983 = vadd.f32 %v2982, %v2941
  %v2984 = vadd.f32 %v2983, %v2942
  %v2985 = vadd.f32 %v2984, %v2943
  %v2986 = vadd.f32 %v2985, %v2944
  %v2987 = vadd.f32 %v2986, %v2945
  %v2988 = vadd.f32 %v2987, %v2946
  %v2989 = vadd.f32 %v2988, %v2947
  %v2990 = vadd.f32 %v2989, %v2948
  %v2991 = vsel %vm2898, %v2949, 0.0
  %v2992 = vadd.f32 %v2990, %v2991
  %v2993 = vrot.slane %v2992, 4
  %v2994 = vadd.f32 %v2992, %v2993
  %v2995 = vrot.slane %v2994, 2
  %v2996 = vadd.f32 %v2994, %v2995
  %v2997 = vrot.slane %v2996, 1
  %v2998 = vadd.f32 %v2996, %v2997
  %v2999 = vmul.f32 %v2906, 0.00295858
  %v3000 = vmul.f32 %v2998, 0.00295858
  %v3001 = vmul.f32 %v2999, %v2999
  %v3002 = vsub.f32 %v3000, %v3001
  %v3003 = vmax.f32 %v3002, 0.0
  %v3004 = vsub.f32 %v2684, %v2999
  %v3005 = vsub.f32 %v2687, %v2999
  %v3006 = vsub.f32 %v2692, %v2999
  %v3007 = vsub.f32 %v2695, %v2999
  %v3008 = vsub.f32 %v2700, %v2999
  %v3009 = vsub.f32 %v2703, %v2999
  %v3010 = vsub.f32 %v2708, %v2999
  %v3011 = vsub.f32 %v2711, %v2999
  %v3012 = vsub.f32 %v2716, %v2999
  %v3013 = vsub.f32 %v2719, %v2999
  %v3014 = vsub.f32 %v2724, %v2999
  %v3015 = vsub.f32 %v2727, %v2999
  %v3016 = vsub.f32 %v2732, %v2999
  %v3017 = vsub.f32 %v2735, %v2999
  %v3018 = vsub.f32 %v2740, %v2999
  %v3019 = vsub.f32 %v2743, %v2999
  %v3020 = vsub.f32 %v2748, %v2999
  %v3021 = vsub.f32 %v2751, %v2999
  %v3022 = vsub.f32 %v2756, %v2999
  %v3023 = vsub.f32 %v2759, %v2999
  %v3024 = vsub.f32 %v2764, %v2999
  %v3025 = vsub.f32 %v2767, %v2999
  %v3026 = vsub.f32 %v2772, %v2999
  %v3027 = vsub.f32 %v2775, %v2999
  %v3028 = vsub.f32 %v2780, %v2999
  %v3029 = vsub.f32 %v2783, %v2999
  %v3030 = vsub.f32 %v2788, %v2999
  %v3031 = vsub.f32 %v2791, %v2999
  %v3032 = vsub.f32 %v2796, %v2999
  %v3033 = vsub.f32 %v2799, %v2999
  %v3034 = vsub.f32 %v2804, %v2999
  %v3035 = vsub.f32 %v2807, %v2999
  %v3036 = vsub.f32 %v2812, %v2999
  %v3037 = vsub.f32 %v2815, %v2999
  %v3038 = vsub.f32 %v2820, %v2999
  %v3039 = vsub.f32 %v2823, %v2999
  %v3040 = vsub.f32 %v2828, %v2999
  %v3041 = vsub.f32 %v2831, %v2999
  %v3042 = vsub.f32 %v2836, %v2999
  %v3043 = vsub.f32 %v2839, %v2999
  %v3044 = vsub.f32 %v2844, %v2999
  %v3045 = vsub.f32 %v2847, %v2999
  %v3046 = vsub.f32 %v2852, %v2999
  %v3047 = vadd.f32 %v3003, 1e-05
  %v3048 = vrsqrt.pop %v3047
  %v3049 = vmul.f32 %v3004, %v3048
  %v3050 = vmul.f32 %v3005, %v3048
  %v3051 = vmul.f32 %v3006, %v3048
  %v3052 = vmul.f32 %v3007, %v3048
  %v3053 = vmul.f32 %v3008, %v3048
  %v3054 = vmul.f32 %v3009, %v3048
  %v3055 = vmul.f32 %v3010, %v3048
  %v3056 = vmul.f32 %v3011, %v3048
  %v3057 = vmul.f32 %v3012, %v3048
  %v3058 = vmul.f32 %v3013, %v3048
  %v3059 = vmul.f32 %v3014, %v3048
  %v3060 = vmul.f32 %v3015, %v3048
  %v3061 = vmul.f32 %v3016, %v3048
  %v3062 = vmul.f32 %v3017, %v3048
  %v3063 = vmul.f32 %v3018, %v3048
  %v3064 = vmul.f32 %v3019, %v3048
  %v3065 = vmul.f32 %v3020, %v3048
  %v3066 = vmul.f32 %v3021, %v3048
  %v3067 = vmul.f32 %v3022, %v3048
  %v3068 = vmul.f32 %v3023, %v3048
  %v3069 = vmul.f32 %v3024, %v3048
  %v3070 = vmul.f32 %v3025, %v3048
  %v3071 = vmul.f32 %v3026, %v3048
  %v3072 = vmul.f32 %v3027, %v3048
  %v3073 = vmul.f32 %v3028, %v3048
  %v3074 = vmul.f32 %v3029, %v3048
  %v3075 = vmul.f32 %v3030, %v3048
  %v3076 = vmul.f32 %v3031, %v3048
  %v3077 = vmul.f32 %v3032, %v3048
  %v3078 = vmul.f32 %v3033, %v3048
  %v3079 = vmul.f32 %v3034, %v3048
  %v3080 = vmul.f32 %v3035, %v3048
  %v3081 = vmul.f32 %v3036, %v3048
  %v3082 = vmul.f32 %v3037, %v3048
  %v3083 = vmul.f32 %v3038, %v3048
  %v3084 = vmul.f32 %v3039, %v3048
  %v3085 = vmul.f32 %v3040, %v3048
  %v3086 = vmul.f32 %v3041, %v3048
  %v3087 = vmul.f32 %v3042, %v3048
  %v3088 = vmul.f32 %v3043, %v3048
  %v3089 = vmul.f32 %v3044, %v3048
  %v3090 = vmul.f32 %v3045, %v3048
  %v3091 = vmul.f32 %v3046, %v3048
  %v3092 = vld [vmem:[%s3] sm:$0x1]
  %v3094 = vlaneseq
  %v3095 = vshrl.u32 %v3094, 7
  %v3096 = vsub.s32 0, %v3095
  %v3097 = vrot.slane %v3092, %v3096
  %v3099 = vmul.f32 %v3049, %v3097
  %v3100 = vmul.f32 %v3050, %v3097
  %v3101 = vmul.f32 %v3051, %v3097
  %v3102 = vmul.f32 %v3052, %v3097
  %v3103 = vmul.f32 %v3053, %v3097
  %v3104 = vmul.f32 %v3054, %v3097
  %v3105 = vmul.f32 %v3055, %v3097
  %v3106 = vmul.f32 %v3056, %v3097
  %v3107 = vmul.f32 %v3057, %v3097
  %v3108 = vmul.f32 %v3058, %v3097
  %v3109 = vmul.f32 %v3059, %v3097
  %v3110 = vmul.f32 %v3060, %v3097
  %v3111 = vmul.f32 %v3061, %v3097
  %v3112 = vmul.f32 %v3062, %v3097
  %v3113 = vmul.f32 %v3063, %v3097
  %v3114 = vmul.f32 %v3064, %v3097
  %v3115 = vmul.f32 %v3065, %v3097
  %v3116 = vmul.f32 %v3066, %v3097
  %v3117 = vmul.f32 %v3067, %v3097
  %v3118 = vmul.f32 %v3068, %v3097
  %v3119 = vmul.f32 %v3069, %v3097
  %v3120 = vmul.f32 %v3070, %v3097
  %v3121 = vmul.f32 %v3071, %v3097
  %v3122 = vmul.f32 %v3072, %v3097
  %v3123 = vmul.f32 %v3073, %v3097
  %v3124 = vmul.f32 %v3074, %v3097
  %v3125 = vmul.f32 %v3075, %v3097
  %v3126 = vmul.f32 %v3076, %v3097
  %v3127 = vmul.f32 %v3077, %v3097
  %v3128 = vmul.f32 %v3078, %v3097
  %v3129 = vmul.f32 %v3079, %v3097
  %v3130 = vmul.f32 %v3080, %v3097
  %v3131 = vmul.f32 %v3081, %v3097
  %v3132 = vmul.f32 %v3082, %v3097
  %v3133 = vmul.f32 %v3083, %v3097
  %v3134 = vmul.f32 %v3084, %v3097
  %v3135 = vmul.f32 %v3085, %v3097
  %v3136 = vmul.f32 %v3086, %v3097
  %v3137 = vmul.f32 %v3087, %v3097
  %v3138 = vmul.f32 %v3088, %v3097
  %v3139 = vmul.f32 %v3089, %v3097
  %v3140 = vmul.f32 %v3090, %v3097
  %v3141 = vmul.f32 %v3091, %v3097
  %v3142 = vld [vmem:[%s4] sm:$0x1]
  %v3144 = vlaneseq
  %v3145 = vshrl.u32 %v3144, 7
  %v3146 = vsub.s32 0, %v3145
  %v3147 = vrot.slane %v3142, %v3146
  %v3149 = vadd.f32 %v3099, %v3147
  %v3150 = vadd.f32 %v3100, %v3147
  %v3151 = vadd.f32 %v3101, %v3147
  %v3152 = vadd.f32 %v3102, %v3147
  %v3153 = vadd.f32 %v3103, %v3147
  %v3154 = vadd.f32 %v3104, %v3147
  %v3155 = vadd.f32 %v3105, %v3147
  %v3156 = vadd.f32 %v3106, %v3147
  %v3157 = vadd.f32 %v3107, %v3147
  %v3158 = vadd.f32 %v3108, %v3147
  %v3159 = vadd.f32 %v3109, %v3147
  %v3160 = vadd.f32 %v3110, %v3147
  %v3161 = vadd.f32 %v3111, %v3147
  %v3162 = vadd.f32 %v3112, %v3147
  %v3163 = vadd.f32 %v3113, %v3147
  %v3164 = vadd.f32 %v3114, %v3147
  %v3165 = vadd.f32 %v3115, %v3147
  %v3166 = vadd.f32 %v3116, %v3147
  %v3167 = vadd.f32 %v3117, %v3147
  %v3168 = vadd.f32 %v3118, %v3147
  %v3169 = vadd.f32 %v3119, %v3147
  %v3170 = vadd.f32 %v3120, %v3147
  %v3171 = vadd.f32 %v3121, %v3147
  %v3172 = vadd.f32 %v3122, %v3147
  %v3173 = vadd.f32 %v3123, %v3147
  %v3174 = vadd.f32 %v3124, %v3147
  %v3175 = vadd.f32 %v3125, %v3147
  %v3176 = vadd.f32 %v3126, %v3147
  %v3177 = vadd.f32 %v3127, %v3147
  %v3178 = vadd.f32 %v3128, %v3147
  %v3179 = vadd.f32 %v3129, %v3147
  %v3180 = vadd.f32 %v3130, %v3147
  %v3181 = vadd.f32 %v3131, %v3147
  %v3182 = vadd.f32 %v3132, %v3147
  %v3183 = vadd.f32 %v3133, %v3147
  %v3184 = vadd.f32 %v3134, %v3147
  %v3185 = vadd.f32 %v3135, %v3147
  %v3186 = vadd.f32 %v3136, %v3147
  %v3187 = vadd.f32 %v3137, %v3147
  %v3188 = vadd.f32 %v3138, %v3147
  %v3189 = vadd.f32 %v3139, %v3147
  %v3190 = vadd.f32 %v3140, %v3147
  %v3191 = vadd.f32 %v3141, %v3147
  %v3192 = vmax.f32 %v3149, 0.0
  %v3193 = vmax.f32 %v3150, 0.0
  %v3194 = vmax.f32 %v3151, 0.0
  %v3195 = vmax.f32 %v3152, 0.0
  %v3196 = vmax.f32 %v3153, 0.0
  %v3197 = vmax.f32 %v3154, 0.0
  %v3198 = vmax.f32 %v3155, 0.0
  %v3199 = vmax.f32 %v3156, 0.0
  %v3200 = vmax.f32 %v3157, 0.0
  %v3201 = vmax.f32 %v3158, 0.0
  %v3202 = vmax.f32 %v3159, 0.0
  %v3203 = vmax.f32 %v3160, 0.0
  %v3204 = vmax.f32 %v3161, 0.0
  %v3205 = vmax.f32 %v3162, 0.0
  %v3206 = vmax.f32 %v3163, 0.0
  %v3207 = vmax.f32 %v3164, 0.0
  %v3208 = vmax.f32 %v3165, 0.0
  %v3209 = vmax.f32 %v3166, 0.0
  %v3210 = vmax.f32 %v3167, 0.0
  %v3211 = vmax.f32 %v3168, 0.0
  %v3212 = vmax.f32 %v3169, 0.0
  %v3213 = vmax.f32 %v3170, 0.0
  %v3214 = vmax.f32 %v3171, 0.0
  %v3215 = vmax.f32 %v3172, 0.0
  %v3216 = vmax.f32 %v3173, 0.0
  %v3217 = vmax.f32 %v3174, 0.0
  %v3218 = vmax.f32 %v3175, 0.0
  %v3219 = vmax.f32 %v3176, 0.0
  %v3220 = vmax.f32 %v3177, 0.0
  %v3221 = vmax.f32 %v3178, 0.0
  %v3222 = vmax.f32 %v3179, 0.0
  %v3223 = vmax.f32 %v3180, 0.0
  %v3224 = vmax.f32 %v3181, 0.0
  %v3225 = vmax.f32 %v3182, 0.0
  %v3226 = vmax.f32 %v3183, 0.0
  %v3227 = vmax.f32 %v3184, 0.0
  %v3228 = vmax.f32 %v3185, 0.0
  %v3229 = vmax.f32 %v3186, 0.0
  %v3230 = vmax.f32 %v3187, 0.0
  %v3231 = vmax.f32 %v3188, 0.0
  %v3232 = vmax.f32 %v3189, 0.0
  %v3233 = vmax.f32 %v3190, 0.0
  %v3234 = vmax.f32 %v3191, 0.0
  %v3235 = vpack.c.bf16 %v3193, %v3192
  %v3236 = vpack.c.bf16 %v3195, %v3194
  %v3237 = vpack.c.bf16 %v3197, %v3196
  %v3238 = vpack.c.bf16 %v3199, %v3198
  %v3239 = vpack.c.bf16 %v3201, %v3200
  %v3240 = vpack.c.bf16 %v3203, %v3202
  %v3241 = vpack.c.bf16 %v3205, %v3204
  %v3242 = vpack.c.bf16 %v3207, %v3206
  %v3243 = vpack.c.bf16 %v3209, %v3208
  %v3244 = vpack.c.bf16 %v3211, %v3210
  %v3245 = vpack.c.bf16 %v3213, %v3212
  %v3246 = vpack.c.bf16 %v3215, %v3214
  %v3247 = vpack.c.bf16 %v3217, %v3216
  %v3248 = vpack.c.bf16 %v3219, %v3218
  %v3249 = vpack.c.bf16 %v3221, %v3220
  %v3250 = vpack.c.bf16 %v3223, %v3222
  %v3251 = vpack.c.bf16 %v3225, %v3224
  %v3252 = vpack.c.bf16 %v3227, %v3226
  %v3253 = vpack.c.bf16 %v3229, %v3228
  %v3254 = vpack.c.bf16 %v3231, %v3230
  %v3255 = vpack.c.bf16 %v3233, %v3232
  %v3256 = vpack.c.bf16 %v3234, %v3234
  %v3279 = vunpack.c.l.b16 %v3235
  %v3280 = vunpack.c.h.b16 %v3235
  %v3281 = vunpack.c.l.b16 %v3236
  %v3282 = vunpack.c.h.b16 %v3236
  %v3283 = vunpack.c.l.b16 %v3237
  %v3284 = vunpack.c.h.b16 %v3237
  %v3285 = vunpack.c.l.b16 %v3238
  %v3286 = vunpack.c.h.b16 %v3238
  %v3287 = vunpack.c.l.b16 %v3239
  %v3288 = vunpack.c.h.b16 %v3239
  %v3289 = vunpack.c.l.b16 %v3240
  %v3290 = vunpack.c.h.b16 %v3240
  %v3291 = vunpack.c.l.b16 %v3241
  %v3292 = vunpack.c.h.b16 %v3241
  %v3293 = vunpack.c.l.b16 %v3242
  %v3294 = vunpack.c.h.b16 %v3242
  %v3295 = vunpack.c.l.b16 %v3243
  %v3296 = vunpack.c.h.b16 %v3243
  %v3297 = vunpack.c.l.b16 %v3244
  %v3298 = vunpack.c.h.b16 %v3244
  %v3299 = vunpack.c.l.b16 %v3245
  %v3300 = vunpack.c.h.b16 %v3245
  %v3301 = vunpack.c.l.b16 %v3246
  %v3302 = vunpack.c.h.b16 %v3246
  %v3303 = vunpack.c.l.b16 %v3247
  %v3304 = vunpack.c.h.b16 %v3247
  %v3305 = vunpack.c.l.b16 %v3248
  %v3306 = vunpack.c.h.b16 %v3248
  %v3307 = vunpack.c.l.b16 %v3249
  %v3308 = vunpack.c.h.b16 %v3249
  %v3309 = vunpack.c.l.b16 %v3250
  %v3310 = vunpack.c.h.b16 %v3250
  %v3311 = vunpack.c.l.b16 %v3251
  %v3312 = vunpack.c.h.b16 %v3251
  %v3313 = vunpack.c.l.b16 %v3252
  %v3314 = vunpack.c.h.b16 %v3252
  %v3315 = vunpack.c.l.b16 %v3253
  %v3316 = vunpack.c.h.b16 %v3253
  %v3317 = vunpack.c.l.b16 %v3254
  %v3318 = vunpack.c.h.b16 %v3254
  %v3319 = vunpack.c.l.b16 %v3255
  %v3320 = vunpack.c.h.b16 %v3255
  %v3321 = vunpack.c.l.b16 %v3256
  %v3322 = vpack.c.b16 %v3279, %v3279
  %v3323 = vpack.c.b16 %v3280, %v3280
  %v3324 = vpack.c.b16 %v3281, %v3281
  %v3325 = vpack.c.b16 %v3282, %v3282
  %v3326 = vpack.c.b16 %v3283, %v3283
  %v3327 = vpack.c.b16 %v3284, %v3284
  %v3328 = vpack.c.b16 %v3285, %v3285
  %v3329 = vpack.c.b16 %v3286, %v3286
  %v3330 = vpack.c.b16 %v3287, %v3287
  %v3331 = vpack.c.b16 %v3288, %v3288
  %v3332 = vpack.c.b16 %v3289, %v3289
  %v3333 = vpack.c.b16 %v3290, %v3290
  %v3334 = vpack.c.b16 %v3291, %v3291
  %v3335 = vpack.c.b16 %v3292, %v3292
  %v3336 = vpack.c.b16 %v3293, %v3293
  %v3337 = vpack.c.b16 %v3294, %v3294
  %v3338 = vpack.c.b16 %v3295, %v3295
  %v3339 = vpack.c.b16 %v3296, %v3296
  %v3340 = vpack.c.b16 %v3297, %v3297
  %v3341 = vpack.c.b16 %v3298, %v3298
  %v3342 = vpack.c.b16 %v3299, %v3299
  %v3343 = vpack.c.b16 %v3300, %v3300
  %v3344 = vpack.c.b16 %v3301, %v3301
  %v3345 = vpack.c.b16 %v3302, %v3302
  %v3346 = vpack.c.b16 %v3303, %v3303
  %v3347 = vpack.c.b16 %v3304, %v3304
  %v3348 = vpack.c.b16 %v3305, %v3305
  %v3349 = vpack.c.b16 %v3306, %v3306
  %v3350 = vpack.c.b16 %v3307, %v3307
  %v3351 = vpack.c.b16 %v3308, %v3308
  %v3352 = vpack.c.b16 %v3309, %v3309
  %v3353 = vpack.c.b16 %v3310, %v3310
  %v3354 = vpack.c.b16 %v3311, %v3311
  %v3355 = vpack.c.b16 %v3312, %v3312
  %v3356 = vpack.c.b16 %v3313, %v3313
  %v3357 = vpack.c.b16 %v3314, %v3314
  %v3358 = vpack.c.b16 %v3315, %v3315
  %v3359 = vpack.c.b16 %v3316, %v3316
  %v3360 = vpack.c.b16 %v3317, %v3317
  %v3361 = vpack.c.b16 %v3318, %v3318
  %v3362 = vpack.c.b16 %v3319, %v3319
  %v3363 = vpack.c.b16 %v3320, %v3320
  %v3364 = vpack.c.b16 %v3321, %v3321
  %3408 = vst [vmem:[%s5] sm:$0xf] %v3322
  %3409 = vst [vmem:[%s5 + $0x4] sm:$0xf] %v3323
  %3410 = vst [vmem:[%s5 + $0x8] sm:$0xf] %v3324
  %3411 = vst [vmem:[%s5 + $0xc] sm:$0xf] %v3325
  %3412 = vst [vmem:[%s5 + $0x10] sm:$0xf] %v3326
  %3413 = vst [vmem:[%s5 + $0x14] sm:$0xf] %v3327
  %3414 = vst [vmem:[%s5 + $0x18] sm:$0xf] %v3328
  %3415 = vst [vmem:[%s5 + $0x1c] sm:$0xf] %v3329
  %3416 = vst [vmem:[%s5 + $0x20] sm:$0xf] %v3330
  %3417 = vst [vmem:[%s5 + $0x24] sm:$0xf] %v3331
  %3418 = vst [vmem:[%s5 + $0x28] sm:$0xf] %v3332
  %3419 = vst [vmem:[%s5 + $0x2c] sm:$0xf] %v3333
  %3420 = vst [vmem:[%s5 + $0x30] sm:$0xf] %v3334
  %3421 = vst [vmem:[%s5 + $0x34] sm:$0xf] %v3335
  %3422 = vst [vmem:[%s5 + $0x38] sm:$0xf] %v3336
  %3423 = vst [vmem:[%s5 + $0x3c] sm:$0xf] %v3337
  %3424 = vst [vmem:[%s5 + $0x40] sm:$0xf] %v3338
  %3425 = vst [vmem:[%s5 + $0x44] sm:$0xf] %v3339
  %3426 = vst [vmem:[%s5 + $0x48] sm:$0xf] %v3340
  %3427 = vst [vmem:[%s5 + $0x4c] sm:$0xf] %v3341
  %3428 = vst [vmem:[%s5 + $0x50] sm:$0xf] %v3342
  %3429 = vst [vmem:[%s5 + $0x54] sm:$0xf] %v3343
  %3430 = vst [vmem:[%s5 + $0x58] sm:$0xf] %v3344
  %3431 = vst [vmem:[%s5 + $0x5c] sm:$0xf] %v3345
  %3432 = vst [vmem:[%s5 + $0x60] sm:$0xf] %v3346
  %3433 = vst [vmem:[%s5 + $0x64] sm:$0xf] %v3347
  %3434 = vst [vmem:[%s5 + $0x68] sm:$0xf] %v3348
  %3435 = vst [vmem:[%s5 + $0x6c] sm:$0xf] %v3349
  %3436 = vst [vmem:[%s5 + $0x70] sm:$0xf] %v3350
  %3437 = vst [vmem:[%s5 + $0x74] sm:$0xf] %v3351
  %3438 = vst [vmem:[%s5 + $0x78] sm:$0xf] %v3352
  %3439 = vst [vmem:[%s5 + $0x7c] sm:$0xf] %v3353
  %3440 = vst [vmem:[%s5 + $0x80] sm:$0xf] %v3354
  %3441 = vst [vmem:[%s5 + $0x84] sm:$0xf] %v3355
  %3442 = vst [vmem:[%s5 + $0x88] sm:$0xf] %v3356
  %3443 = vst [vmem:[%s5 + $0x8c] sm:$0xf] %v3357
  %3444 = vst [vmem:[%s5 + $0x90] sm:$0xf] %v3358
  %3445 = vst [vmem:[%s5 + $0x94] sm:$0xf] %v3359
  %3446 = vst [vmem:[%s5 + $0x98] sm:$0xf] %v3360
  %3447 = vst [vmem:[%s5 + $0x9c] sm:$0xf] %v3361
  %3448 = vst [vmem:[%s5 + $0xa0] sm:$0xf] %v3362
  %3449 = vst [vmem:[%s5 + $0xa4] sm:$0xf] %v3363
  %3450 = vst [vmem:[%s5 + $0xa8] sm:$0x1] %v3364
  // Predicated region
  $region22: #{generator_forward.6} parent=0 // pred_check
    _
  $region23: #{generator_forward.6} parent=0 // pred_check_branch
    %3452 = sbr.rel (0) target = $region25
  $region24: #{generator_forward.6} parent=0 // pred_region
    _
  $region25: #{generator_forward.6} parent=0 // pred_fallthru
    _
  // Predicated region
  $region26: #{generator_forward.6} parent=0 // pred_check
    _
  $region27: #{generator_forward.6} parent=0 // pred_check_branch
    %3454 = sbr.rel (0) target = $region29
  $region28: #{generator_forward.6} parent=0 // pred_region
    _
  $region29: #{generator_forward.6} parent=0 // pred_fallthru
    _

// kernel: generator_forward.7
$region0: #{generator_forward.7}
  #allocation0 [shape = 'u32[]', space=smem, size = 0x4, offset = 0x4, fixed_abs, tag = 'smem constant byte address 0x4 - core index']
  #allocation1 [shape = 'u32[144,128]{1,0:T(1,128)}', space=vmem, size = 0x12000, scoped, tag = 'internal scratch']
  #allocation2 [shape = 'f32[1,1]{1,0:T(1,128)S(1)}', space=vmem, size = 0x200, scoped, tag = 'scoped memory for generator_forward.7']
  %s0 = inlined_call_operand.vmem [shape: bf16[4,256], index: 0, kind: input, shape index: {}]
  %s1 = inlined_call_operand.vmem [shape: bf16[256,392], index: 1, kind: input, shape index: {}]
  %s2 = inlined_call_operand.<no memory space> [shape: f32[1,1], index: 2, kind: input, shape index: {}]
  %s3 = inlined_call_operand.vmem [shape: f32[4,392], index: 3, kind: output, shape index: {}]
  %s4 = sld [smem:[#allocation0]]
  $region22: #{generator_forward.7} parent=0
    _
  %s6 = ssub.s32 1, %s4
  %s7 = scalar_select 0, %s6, %s4
  %v8 = vstv %s2
  %9 = vst [vmem:[#allocation2] sm:$0x1] %v8
  // Predicated region
  $region2: #{generator_forward.7} parent=0 // pred_check
    _
  $region3: #{generator_forward.7} parent=0 // pred_check_branch
    %11 = sbr.rel (0) target = $region5
  $region4: #{generator_forward.7} parent=0 // pred_region
    _
  $region5: #{generator_forward.7} parent=0 // pred_fallthru
    _
  // Predicated region
  $region6: #{generator_forward.7} parent=0 // pred_check
    _
  $region7: #{generator_forward.7} parent=0 // pred_check_branch
    %13 = sbr.rel (0) target = $region9
  $region8: #{generator_forward.7} parent=0 // pred_region
    _
  $region9: #{generator_forward.7} parent=0 // pred_fallthru
    _
  // Predicated region
  $region10: #{generator_forward.7} parent=0 // pred_check
    _
  $region11: #{generator_forward.7} parent=0 // pred_check_branch
    %15 = sbr.rel (0) target = $region13
  $region12: #{generator_forward.7} parent=0 // pred_region
    _
  $region13: #{generator_forward.7} parent=0 // pred_fallthru
    _
  %v16 = vld [vmem:[%s0] sm:$0xf]
  %v17 = vld [vmem:[%s1] sm:$0xff]
  %v18 = vld [vmem:[%s1 + $0x8] sm:$0xff]
  %v19 = vld [vmem:[%s1 + $0x10] sm:$0xff]
  %v20 = vld [vmem:[%s1 + $0x18] sm:$0xff]
  %v21 = vld [vmem:[%s1 + $0x20] sm:$0xff]
  %v22 = vld [vmem:[%s1 + $0x28] sm:$0xff]
  %v23 = vld [vmem:[%s1 + $0x30] sm:$0xff]
  %v24 = vld [vmem:[%s1 + $0x38] sm:$0xff]
  %v25 = vld [vmem:[%s1 + $0x40] sm:$0xff]
  %v26 = vld [vmem:[%s1 + $0x48] sm:$0xff]
  %v27 = vld [vmem:[%s1 + $0x50] sm:$0xff]
  %v28 = vld [vmem:[%s1 + $0x58] sm:$0xff]
  %v29 = vld [vmem:[%s1 + $0x60] sm:$0xff]
  %v30 = vld [vmem:[%s1 + $0x68] sm:$0xff]
  %v31 = vld [vmem:[%s1 + $0x70] sm:$0xff]
  %v32 = vld [vmem:[%s1 + $0x78] sm:$0xff]
  %v33 = vld [vmem:[%s1 + $0x80] sm:$0xff]
  %v34 = vld [vmem:[%s1 + $0x88] sm:$0xff]
  %v35 = vld [vmem:[%s1 + $0x90] sm:$0xff]
  %v36 = vld [vmem:[%s1 + $0x98] sm:$0xff]
  %v37 = vld [vmem:[%s1 + $0xa0] sm:$0xff]
  %v38 = vld [vmem:[%s1 + $0xa8] sm:$0xff]
  %v39 = vld [vmem:[%s1 + $0xb0] sm:$0xff]
  %v40 = vld [vmem:[%s1 + $0xb8] sm:$0xff]
  %v41 = vld [vmem:[%s1 + $0xc0] sm:$0xff]
  %v42 = vld [vmem:[%s1 + $0xc8] sm:$0xff]
  %v43 = vld [vmem:[%s1 + $0xd0] sm:$0xff]
  %v44 = vld [vmem:[%s1 + $0xd8] sm:$0xff]
  %v45 = vld [vmem:[%s1 + $0xe0] sm:$0xff]
  %v46 = vld [vmem:[%s1 + $0xe8] sm:$0xff]
  %v47 = vld [vmem:[%s1 + $0xf0] sm:$0xff]
  %v48 = vld [vmem:[%s1 + $0xf8] sm:$0xff]
  %v49 = vld [vmem:[%s1 + $0x100] sm:$0xff]
  %v50 = vld [vmem:[%s1 + $0x108] sm:$0xff]
  %v51 = vld [vmem:[%s1 + $0x110] sm:$0xff]
  %v52 = vld [vmem:[%s1 + $0x118] sm:$0xff]
  %v53 = vld [vmem:[%s1 + $0x120] sm:$0xff]
  %v54 = vld [vmem:[%s1 + $0x128] sm:$0xff]
  %v55 = vld [vmem:[%s1 + $0x130] sm:$0xff]
  %v56 = vld [vmem:[%s1 + $0x138] sm:$0xff]
  %v57 = vld [vmem:[%s1 + $0x140] sm:$0xff]
  %v58 = vld [vmem:[%s1 + $0x148] sm:$0xff]
  %v59 = vld [vmem:[%s1 + $0x150] sm:$0xff]
  %v60 = vld [vmem:[%s1 + $0x158] sm:$0xff]
  %v61 = vld [vmem:[%s1 + $0x160] sm:$0xff]
  %v62 = vld [vmem:[%s1 + $0x168] sm:$0xff]
  %v63 = vld [vmem:[%s1 + $0x170] sm:$0xff]
  %v64 = vld [vmem:[%s1 + $0x178] sm:$0xff]
  %v65 = vld [vmem:[%s1 + $0x180] sm:$0xff]
  %v66 = vld [vmem:[%s1 + $0x188] sm:$0xff]
  %v67 = vld [vmem:[%s1 + $0x190] sm:$0xff]
  %v68 = vld [vmem:[%s1 + $0x198] sm:$0xff]
  %v69 = vld [vmem:[%s1 + $0x1a0] sm:$0xff]
  %v70 = vld [vmem:[%s1 + $0x1a8] sm:$0xff]
  %v71 = vld [vmem:[%s1 + $0x1b0] sm:$0xff]
  %v72 = vld [vmem:[%s1 + $0x1b8] sm:$0xff]
  %v73 = vld [vmem:[%s1 + $0x1c0] sm:$0xff]
  %v74 = vld [vmem:[%s1 + $0x1c8] sm:$0xff]
  %v75 = vld [vmem:[%s1 + $0x1d0] sm:$0xff]
  %v76 = vld [vmem:[%s1 + $0x1d8] sm:$0xff]
  %v77 = vld [vmem:[%s1 + $0x1e0] sm:$0xff]
  %v78 = vld [vmem:[%s1 + $0x1e8] sm:$0xff]
  %v79 = vld [vmem:[%s1 + $0x1f0] sm:$0xff]
  %v80 = vld [vmem:[%s1 + $0x1f8] sm:$0xff]
  %v81 = vld [vmem:[#allocation2] sm:$0x1]
  %v83 = vlaneseq
  %v84 = vshrl.u32 %v83, 7
  %v85 = vsub.s32 0, %v84
  %v86 = vrot.slane %v81, %v85
  %87 = vset.pattern.permute.xlu0 0
  %88 = vperm.xlu0 %87, %v86
  %v89 = vpop.permute.xlu0 %88
  %v93 = vunpack.c.l.s4 1983009808
  %v94 = vunpack.c.0.s8 %v93
  %v95 = vlaneseq
  %v96 = vshrl.u32 %v95, 7
  %v97 = vsub.s32 %v94, %v96
  %v98 = vrot.slane %v16, %v97
  %v99 = vcombine.high %v98, %v98
  %v166 = vunpack.c.l.b16 %v17
  %v167 = vunpack.c.h.b16 %v17
  %v168 = vunpack.c.l.b16 %v18
  %v169 = vunpack.c.h.b16 %v18
  %v170 = vunpack.c.l.b16 %v19
  %v171 = vunpack.c.h.b16 %v19
  %v172 = vunpack.c.l.b16 %v20
  %v173 = vunpack.c.h.b16 %v20
  %v174 = vunpack.c.l.b16 %v21
  %v175 = vunpack.c.h.b16 %v21
  %v176 = vunpack.c.l.b16 %v22
  %v177 = vunpack.c.h.b16 %v22
  %v178 = vunpack.c.l.b16 %v23
  %v179 = vunpack.c.h.b16 %v23
  %v180 = vunpack.c.l.b16 %v24
  %v181 = vunpack.c.h.b16 %v24
  %v182 = vunpack.c.l.b16 %v25
  %v183 = vunpack.c.h.b16 %v25
  %v184 = vunpack.c.l.b16 %v26
  %v185 = vunpack.c.h.b16 %v26
  %v186 = vunpack.c.l.b16 %v27
  %v187 = vunpack.c.h.b16 %v27
  %v188 = vunpack.c.l.b16 %v28
  %v189 = vunpack.c.h.b16 %v28
  %v190 = vunpack.c.l.b16 %v29
  %v191 = vunpack.c.h.b16 %v29
  %v192 = vunpack.c.l.b16 %v30
  %v193 = vunpack.c.h.b16 %v30
  %v194 = vunpack.c.l.b16 %v31
  %v195 = vunpack.c.h.b16 %v31
  %v196 = vunpack.c.l.b16 %v32
  %v197 = vunpack.c.h.b16 %v32
  %v198 = vunpack.c.l.b16 %v33
  %v199 = vunpack.c.h.b16 %v33
  %v200 = vunpack.c.l.b16 %v34
  %v201 = vunpack.c.h.b16 %v34
  %v202 = vunpack.c.l.b16 %v35
  %v203 = vunpack.c.h.b16 %v35
  %v204 = vunpack.c.l.b16 %v36
  %v205 = vunpack.c.h.b16 %v36
  %v206 = vunpack.c.l.b16 %v37
  %v207 = vunpack.c.h.b16 %v37
  %v208 = vunpack.c.l.b16 %v38
  %v209 = vunpack.c.h.b16 %v38
  %v210 = vunpack.c.l.b16 %v39
  %v211 = vunpack.c.h.b16 %v39
  %v212 = vunpack.c.l.b16 %v40
  %v213 = vunpack.c.h.b16 %v40
  %v214 = vunpack.c.l.b16 %v41
  %v215 = vunpack.c.h.b16 %v41
  %v216 = vunpack.c.l.b16 %v42
  %v217 = vunpack.c.h.b16 %v42
  %v218 = vunpack.c.l.b16 %v43
  %v219 = vunpack.c.h.b16 %v43
  %v220 = vunpack.c.l.b16 %v44
  %v221 = vunpack.c.h.b16 %v44
  %v222 = vunpack.c.l.b16 %v45
  %v223 = vunpack.c.h.b16 %v45
  %v224 = vunpack.c.l.b16 %v46
  %v225 = vunpack.c.h.b16 %v46
  %v226 = vunpack.c.l.b16 %v47
  %v227 = vunpack.c.h.b16 %v47
  %v228 = vunpack.c.l.b16 %v48
  %v229 = vunpack.c.h.b16 %v48
  %v230 = vunpack.c.l.b16 %v49
  %v231 = vunpack.c.h.b16 %v49
  %v232 = vunpack.c.l.b16 %v50
  %v233 = vunpack.c.h.b16 %v50
  %v234 = vunpack.c.l.b16 %v51
  %v235 = vunpack.c.h.b16 %v51
  %v236 = vunpack.c.l.b16 %v52
  %v237 = vunpack.c.h.b16 %v52
  %v238 = vunpack.c.l.b16 %v53
  %v239 = vunpack.c.h.b16 %v53
  %v240 = vunpack.c.l.b16 %v54
  %v241 = vunpack.c.h.b16 %v54
  %v242 = vunpack.c.l.b16 %v55
  %v243 = vunpack.c.h.b16 %v55
  %v244 = vunpack.c.l.b16 %v56
  %v245 = vunpack.c.h.b16 %v56
  %v246 = vunpack.c.l.b16 %v57
  %v247 = vunpack.c.h.b16 %v57
  %v248 = vunpack.c.l.b16 %v58
  %v249 = vunpack.c.h.b16 %v58
  %v250 = vunpack.c.l.b16 %v59
  %v251 = vunpack.c.h.b16 %v59
  %v252 = vunpack.c.l.b16 %v60
  %v253 = vunpack.c.h.b16 %v60
  %v254 = vunpack.c.l.b16 %v61
  %v255 = vunpack.c.h.b16 %v61
  %v256 = vunpack.c.l.b16 %v62
  %v257 = vunpack.c.h.b16 %v62
  %v258 = vunpack.c.l.b16 %v63
  %v259 = vunpack.c.h.b16 %v63
  %v260 = vunpack.c.l.b16 %v64
  %v261 = vunpack.c.h.b16 %v64
  %v262 = vunpack.c.l.b16 %v65
  %v263 = vunpack.c.h.b16 %v65
  %v264 = vunpack.c.l.b16 %v66
  %v265 = vunpack.c.h.b16 %v66
  %v266 = vunpack.c.l.b16 %v67
  %v267 = vunpack.c.h.b16 %v67
  %v268 = vunpack.c.l.b16 %v68
  %v269 = vunpack.c.h.b16 %v68
  %v270 = vunpack.c.l.b16 %v69
  %v271 = vunpack.c.h.b16 %v69
  %v272 = vunpack.c.l.b16 %v70
  %v273 = vunpack.c.h.b16 %v70
  %v274 = vunpack.c.l.b16 %v71
  %v275 = vunpack.c.h.b16 %v71
  %v276 = vunpack.c.l.b16 %v72
  %v277 = vunpack.c.h.b16 %v72
  %v278 = vunpack.c.l.b16 %v73
  %v279 = vunpack.c.h.b16 %v73
  %v280 = vunpack.c.l.b16 %v74
  %v281 = vunpack.c.h.b16 %v74
  %v282 = vunpack.c.l.b16 %v75
  %v283 = vunpack.c.h.b16 %v75
  %v284 = vunpack.c.l.b16 %v76
  %v285 = vunpack.c.h.b16 %v76
  %v286 = vunpack.c.l.b16 %v77
  %v287 = vunpack.c.h.b16 %v77
  %v288 = vunpack.c.l.b16 %v78
  %v289 = vunpack.c.h.b16 %v78
  %v290 = vunpack.c.l.b16 %v79
  %v291 = vunpack.c.h.b16 %v79
  %v292 = vunpack.c.l.b16 %v80
  %v293 = vunpack.c.h.b16 %v80
  %v294 = vpack.c.b16 %v170, %v166
  %v295 = vpack.c.b16 %v171, %v167
  %v296 = vpack.c.b16 %v172, %v168
  %v297 = vpack.c.b16 %v173, %v169
  %v298 = vpack.c.b16 %v178, %v174
  %v299 = vpack.c.b16 %v179, %v175
  %v300 = vpack.c.b16 %v180, %v176
  %v301 = vpack.c.b16 %v181, %v177
  %v302 = vpack.c.b16 %v186, %v182
  %v303 = vpack.c.b16 %v187, %v183
  %v304 = vpack.c.b16 %v188, %v184
  %v305 = vpack.c.b16 %v189, %v185
  %v306 = vpack.c.b16 %v194, %v190
  %v307 = vpack.c.b16 %v195, %v191
  %v308 = vpack.c.b16 %v196, %v192
  %v309 = vpack.c.b16 %v197, %v193
  %v310 = vpack.c.b16 %v202, %v198
  %v311 = vpack.c.b16 %v203, %v199
  %v312 = vpack.c.b16 %v204, %v200
  %v313 = vpack.c.b16 %v205, %v201
  %v314 = vpack.c.b16 %v210, %v206
  %v315 = vpack.c.b16 %v211, %v207
  %v316 = vpack.c.b16 %v212, %v208
  %v317 = vpack.c.b16 %v213, %v209
  %v318 = vpack.c.b16 %v218, %v214
  %v319 = vpack.c.b16 %v219, %v215
  %v320 = vpack.c.b16 %v220, %v216
  %v321 = vpack.c.b16 %v221, %v217
  %v322 = vpack.c.b16 %v226, %v222
  %v323 = vpack.c.b16 %v227, %v223
  %v324 = vpack.c.b16 %v228, %v224
  %v325 = vpack.c.b16 %v229, %v225
  %v326 = vpack.c.b16 %v234, %v230
  %v327 = vpack.c.b16 %v235, %v231
  %v328 = vpack.c.b16 %v236, %v232
  %v329 = vpack.c.b16 %v237, %v233
  %v330 = vpack.c.b16 %v242, %v238
  %v331 = vpack.c.b16 %v243, %v239
  %v332 = vpack.c.b16 %v244, %v240
  %v333 = vpack.c.b16 %v245, %v241
  %v334 = vpack.c.b16 %v250, %v246
  %v335 = vpack.c.b16 %v251, %v247
  %v336 = vpack.c.b16 %v252, %v248
  %v337 = vpack.c.b16 %v253, %v249
  %v338 = vpack.c.b16 %v258, %v254
  %v339 = vpack.c.b16 %v259, %v255
  %v340 = vpack.c.b16 %v260, %v256
  %v341 = vpack.c.b16 %v261, %v257
  %v342 = vpack.c.b16 %v266, %v262
  %v343 = vpack.c.b16 %v267, %v263
  %v344 = vpack.c.b16 %v268, %v264
  %v345 = vpack.c.b16 %v269, %v265
  %v346 = vpack.c.b16 %v274, %v270
  %v347 = vpack.c.b16 %v275, %v271
  %v348 = vpack.c.b16 %v276, %v272
  %v349 = vpack.c.b16 %v277, %v273
  %v350 = vpack.c.b16 %v282, %v278
  %v351 = vpack.c.b16 %v283, %v279
  %v352 = vpack.c.b16 %v284, %v280
  %v353 = vpack.c.b16 %v285, %v281
  %v354 = vpack.c.b16 %v290, %v286
  %v355 = vpack.c.b16 %v291, %v287
  %v356 = vpack.c.b16 %v292, %v288
  %v357 = vpack.c.b16 %v293, %v289
  %422 = vmatprep.subr.bf16.mxu0 %v323
  %423 = vmatpush1.bf16.msra.mxu0 %v322
  %424 = vmatprep.subr.bf16.mxu0 %v319
  %425 = vmatpush1.bf16.msra.mxu0 %v318
  %426 = vmatprep.subr.bf16.mxu0 %v315
  %427 = vmatpush1.bf16.msra.mxu0 %v314
  %428 = vmatprep.subr.bf16.mxu0 %v311
  %429 = vmatpush1.bf16.msra.mxu0 %v310
  %430 = vmatprep.subr.bf16.mxu0 %v307
  %431 = vmatpush1.bf16.msra.mxu0 %v306
  %432 = vmatprep.subr.bf16.mxu0 %v303
  %433 = vmatpush1.bf16.msra.mxu0 %v302
  %434 = vmatprep.subr.bf16.mxu0 %v299
  %435 = vmatpush1.bf16.msra.mxu0 %v298
  %436 = vmatprep.subr.bf16.mxu0 %v295
  %437 = vmatpush1.bf16.msra.mxu0 %v294
  %438 = vmatprep.subr.bf16.mxu0 %v355
  %439 = vmatpush2.bf16.msra.mxu0 %v354
  %440 = vmatprep.subr.bf16.mxu0 %v351
  %441 = vmatpush2.bf16.msra.mxu0 %v350
  %442 = vmatprep.subr.bf16.mxu0 %v347
  %443 = vmatpush2.bf16.msra.mxu0 %v346
  %444 = vmatprep.subr.bf16.mxu0 %v343
  %445 = vmatpush2.bf16.msra.mxu0 %v342
  %446 = vmatprep.subr.bf16.mxu0 %v339
  %447 = vmatpush2.bf16.msra.mxu0 %v338
  %448 = vmatprep.subr.bf16.mxu0 %v335
  %449 = vmatpush2.bf16.msra.mxu0 %v334
  %450 = vmatprep.subr.bf16.mxu0 %v331
  %451 = vmatpush2.bf16.msra.mxu0 %v330
  %452 = vmatprep.subr.bf16.mxu0 %v327
  %453 = vmatpush2.bf16.msra.mxu0 %v326
  %454 = vmatprep.mubr.bf16.mxu0 %v99
  %455 = vmatmul.mubr.bf16.gmra.mxu0 %v98
  %v456 = vpop.f32.mrf.mxu0
  %v457 = vadd.f32 %v89, %v456
  %v458 = vpop.f32.mrf.mxu0
  %v459 = vadd.f32 %v89, %v458
  %v460 = vpop.f32.mrf.mxu0
  %v461 = vpop.f32.mrf.mxu0
  %462 = vdwg.mxu0
  %463 = vmatprep.subr.bf16.mxu0 %v325
  %464 = vmatpush1.bf16.msra.mxu0 %v324
  %465 = vmatprep.subr.bf16.mxu0 %v321
  %466 = vmatpush1.bf16.msra.mxu0 %v320
  %467 = vmatprep.subr.bf16.mxu0 %v317
  %468 = vmatpush1.bf16.msra.mxu0 %v316
  %469 = vmatprep.subr.bf16.mxu0 %v313
  %470 = vmatpush1.bf16.msra.mxu0 %v312
  %471 = vmatprep.subr.bf16.mxu0 %v309
  %472 = vmatpush1.bf16.msra.mxu0 %v308
  %473 = vmatprep.subr.bf16.mxu0 %v305
  %474 = vmatpush1.bf16.msra.mxu0 %v304
  %475 = vmatprep.subr.bf16.mxu0 %v301
  %476 = vmatpush1.bf16.msra.mxu0 %v300
  %477 = vmatprep.subr.bf16.mxu0 %v297
  %478 = vmatpush1.bf16.msra.mxu0 %v296
  %479 = vmatprep.subr.bf16.mxu0 %v357
  %480 = vmatpush2.bf16.msra.mxu0 %v356
  %481 = vmatprep.subr.bf16.mxu0 %v353
  %482 = vmatpush2.bf16.msra.mxu0 %v352
  %483 = vmatprep.subr.bf16.mxu0 %v349
  %484 = vmatpush2.bf16.msra.mxu0 %v348
  %485 = vmatprep.subr.bf16.mxu0 %v345
  %486 = vmatpush2.bf16.msra.mxu0 %v344
  %487 = vmatprep.subr.bf16.mxu0 %v341
  %488 = vmatpush2.bf16.msra.mxu0 %v340
  %489 = vmatprep.subr.bf16.mxu0 %v337
  %490 = vmatpush2.bf16.msra.mxu0 %v336
  %491 = vmatprep.subr.bf16.mxu0 %v333
  %492 = vmatpush2.bf16.msra.mxu0 %v332
  %493 = vmatprep.subr.bf16.mxu0 %v329
  %494 = vmatpush2.bf16.msra.mxu0 %v328
  %495 = vmatprep.mubr.bf16.mxu0 %v99
  %496 = vmatmul.mubr.bf16.gmra.mxu0 %v98
  %v497 = vpop.f32.mrf.mxu0
  %v498 = vadd.f32 %v89, %v497
  %v499 = vpop.f32.mrf.mxu0
  %v500 = vadd.f32 %v89, %v499
  %v501 = vpop.f32.mrf.mxu0
  %v502 = vpop.f32.mrf.mxu0
  %503 = vdwg.mxu0
  %v504 = vtanh.pop %v457
  %v505 = vtanh.pop %v459
  %v506 = vtanh.pop %v498
  %v507 = vtanh.pop %v500
  %v512 = vcombine.low %v504, %v505
  %v513 = vcombine.low %v506, %v507
  %516 = vst [vmem:[%s3] sm:$0xff] %v512
  %vm517 = vcmask 1043456
  %vm518 = vcmask 64516
  %vm519 = vmor %vm518, %vm517
  %520 = vst.msk [vmem:[%s3 + $0x8] sm:$0xff] %vm519, %v513
  // Predicated region
  $region14: #{generator_forward.7} parent=0 // pred_check
    _
  $region15: #{generator_forward.7} parent=0 // pred_check_branch
    %522 = sbr.rel (0) target = $region17
  $region16: #{generator_forward.7} parent=0 // pred_region
    _
  $region17: #{generator_forward.7} parent=0 // pred_fallthru
    _
  // Predicated region
  $region18: #{generator_forward.7} parent=0 // pred_check
    _
  $region19: #{generator_forward.7} parent=0 // pred_check_branch
    %524 = sbr.rel (0) target = $region21
  $region20: #{generator_forward.7} parent=0 // pred_region
    _
  $region21: #{generator_forward.7} parent=0 // pred_fallthru
    _

</llo_original>
